<compile_context>
chip_gen: v7x
topology: tpu7x:2x2x1
jax: 0.10.0
libtpu: 0.0.40
codegen_flags: <defaults>
</compile_context>

<pallas_src>
import functools

import jax
import jax.numpy as jnp
from jax.experimental import pallas as pl
from jax.experimental.pallas import tpu as pltpu


# ----------------------------------------------------------------------------
# Helpers
# ----------------------------------------------------------------------------
def _vmem_limit_bytes():
    """Generation-aware VMEM budget (v7x: 64 MiB physical, v5e/v6e: 128 MiB)."""
    cap = 64 * 1024 * 1024  # conservative default: assume v7x
    try:
        info_fn = getattr(pltpu, "get_tpu_info", None)
        if info_fn is not None:
            cap = int(getattr(info_fn(), "vmem_capacity_bytes", cap)) or cap
    except Exception:
        pass
    return min(cap * 3 // 4, 96 * 1024 * 1024)


def _pick_col_tile(cols):
    """Lane-dense (multiple-of-128) output-column tile, <= 256 wide; keeps
    >= 2 tiles whenever `cols` allows it so both v7x TensorCores get work."""
    if cols % 128 != 0:
        return cols                       # small / irregular: one full tile
    if cols % 256 == 0 and cols > 256:
        return 256
    if cols > 128:
        return 128
    return cols


# ----------------------------------------------------------------------------
# Pallas kernels
# ----------------------------------------------------------------------------
def _conv3x3_bn_relu_kernel(x_ref, w_ref, b_ref, g_ref, bt_ref, m_ref, o_ref,
                            *, width, lo, count, eps):
    """Fused valid 3x3 conv + train-mode BatchNorm + ReLU for one Cout tile.

      x_ref  : (N, Lin, Cin)   f32 flattened NHWC input (+2 pad rows)
      w_ref  : (9, Cin, TCo)   bf16 taps, tap index = kh*3 + kw
      b_ref  : (1, TCo)  f32   conv bias
      g_ref  : (1, TCo)  f32   BN gamma
      bt_ref : (1, TCo)  f32   BN beta
      m_ref  : (Lo, 1)   f32   1.0 on valid output rows (j < Wo), else 0.0
      o_ref  : (N, Lo, TCo) f32
    """
    n_batch = o_ref.shape[0]
    tco = o_ref.shape[2]
    mask = m_ref[...]
    bias = b_ref[...]

    s = jnp.zeros((1, tco), jnp.float32)
    ss = jnp.zeros((1, tco), jnp.float32)
    pivot = None

    for n in range(n_batch):
        acc = None
        for kh in range(3):
            for kw in range(3):
                off = kh * width + kw
                # Sublane-offset window of the single padded slab; cast to bf16
                # right before the dot so the MXU runs at bf16 rate with f32
                # accumulation.
                xs = x_ref[n, pl.ds(off, lo), :].astype(jnp.bfloat16)
                d = jnp.dot(xs, w_ref[kh * 3 + kw],
                            preferred_element_type=jnp.float32)
                acc = d if acc is None else acc + d
        y = acc + bias                                 # (Lo, TCo) f32

        # Shifted-variance pivot (row 0 is always a valid output pixel):
        # reduces E[x^2]-E[x]^2 cancellation without an extra slab sweep.
        if pivot is None:
            pivot = y[0:1, :]
        z = (y - pivot) * mask
        s = s + jnp.sum(z, axis=0, keepdims=True)
        ss = ss + jnp.sum(z * z, axis=0, keepdims=True)
        o_ref[n] = y                                   # single store sweep

    inv = 1.0 / count
    mean_z = s * inv
    var = jnp.maximum(ss * inv - mean_z * mean_z, 0.0)  # biased var (BN train)
    mean = pivot + mean_z
    scale = jax.lax.rsqrt(var + eps) * g_ref[...]
    shift = bt_ref[...] - mean * scale
    for n in range(n_batch):
        o_ref[n] = jnp.maximum(o_ref[n] * scale + shift, 0.0)


def _matmul_bias_kernel(x_ref, w_ref, b_ref, o_ref):
    """out = x @ w + b  (ConvTranspose2d as a 1x1-style matmul, batch folded
    into the row axis)."""
    o_ref[...] = (jnp.dot(x_ref[...], w_ref[...],
                          preferred_element_type=jnp.float32) + b_ref[...])


# ----------------------------------------------------------------------------
# Kernel wrappers (NHWC in / NHWC out)
# ----------------------------------------------------------------------------
def conv3x3_bn_relu_nhwc(x, w, b, gamma, beta, *, eps=1e-5):
    """x: (N, H, W, Cin) f32, w: (Cout, Cin, 3, 3) -> (N, H-2, W-2, Cout) f32."""
    n, h, wd, cin = x.shape
    cout = w.shape[0]
    ho, wo = h - 2, wd - 2
    lo = ho * wd                      # "full-width" flattened output rows
    lin = h * wd + 2                  # +2 rows keeps every tap window in range

    xf = jnp.pad(x.reshape(n, h * wd, cin), ((0, 0), (0, 2), (0, 0)))
    # taps: (Cout, Cin, 3, 3) -> (9, Cin, Cout), cast once to bf16
    w9 = jnp.transpose(w, (2, 3, 1, 0)).reshape(9, cin, cout)
    w9 = w9.astype(jnp.bfloat16)
    mask = (jnp.arange(lo, dtype=jnp.int32) % wd < wo)
    mask = mask.astype(jnp.float32).reshape(lo, 1)

    tco = _pick_col_tile(cout)
    kernel = functools.partial(_conv3x3_bn_relu_kernel, width=wd, lo=lo,
                               count=float(n * ho * wo), eps=eps)
    cost = pl.CostEstimate(
        flops=2 * n * ho * wo * cout * cin * 9,
        transcendentals=0,
        bytes_accessed=n * lin * cin * 4 + 9 * cin * cout * 2 + n * lo * cout * 4)

    # TODO(synk): very large H*W inputs would additionally need an hw (sublane)
    # tile axis; decoder-scale maps fit a single VMEM-resident slab.
    out = pl.pallas_call(
        kernel,
        out_shape=jax.ShapeDtypeStruct((n, lo, cout), jnp.float32),
        grid=(cout // tco,),
        in_specs=[
            pl.BlockSpec((n, lin, cin), lambda c: (0, 0, 0)),
            pl.BlockSpec((9, cin, tco), lambda c: (0, 0, c)),
            pl.BlockSpec((1, tco), lambda c: (0, c)),
            pl.BlockSpec((1, tco), lambda c: (0, c)),
            pl.BlockSpec((1, tco), lambda c: (0, c)),
            pl.BlockSpec((lo, 1), lambda c: (0, 0)),
        ],
        out_specs=pl.BlockSpec((n, lo, tco), lambda c: (0, 0, c)),
        compiler_params=pltpu.CompilerParams(
            dimension_semantics=("parallel",),
            vmem_limit_bytes=_vmem_limit_bytes()),
        cost_estimate=cost,
    )(xf, w9, b.reshape(1, cout), gamma.reshape(1, cout),
      beta.reshape(1, cout), mask)

    # strip the junk columns (j >= Wo) of each output row
    return out.reshape(n, ho, wd, cout)[:, :, :wo, :]


def conv_transpose2x2_nhwc(x, w, b):
    """ConvTranspose2d(k=2, s=2).  x: (N, H, W, Cin), w: (Cin, Cout, 2, 2),
    b: (Cout,) -> (N, 2H, 2W, Cout) f32."""
    n, h, wd, cin = x.shape
    cout = w.shape[1]
    l = h * wd
    c4 = 4 * cout

    xf = x.reshape(n * l, cin).astype(jnp.bfloat16)
    # columns ordered (di, dj, co)
    wp = jnp.transpose(w, (0, 2, 3, 1)).reshape(cin, c4).astype(jnp.bfloat16)
    bp = jnp.tile(b, 4).reshape(1, c4)

    tc = _pick_col_tile(c4)
    cost = pl.CostEstimate(
        flops=2 * n * l * cin * c4, transcendentals=0,
        bytes_accessed=n * l * cin * 2 + cin * c4 * 2 + n * l * c4 * 4)

    y = pl.pallas_call(
        _matmul_bias_kernel,
        out_shape=jax.ShapeDtypeStruct((n * l, c4), jnp.float32),
        grid=(c4 // tc,),
        in_specs=[
            pl.BlockSpec((n * l, cin), lambda c: (0, 0)),
            pl.BlockSpec((cin, tc), lambda c: (0, c)),
            pl.BlockSpec((1, tc), lambda c: (0, c)),
        ],
        out_specs=pl.BlockSpec((n * l, tc), lambda c: (0, c)),
        compiler_params=pltpu.CompilerParams(
            dimension_semantics=("parallel",),
            vmem_limit_bytes=_vmem_limit_bytes()),
        cost_estimate=cost,
    )(xf, wp, bp)

    y = y.reshape(n, h, wd, 2, 2, cout)            # (N, i, j, di, dj, co)
    y = jnp.transpose(y, (0, 1, 3, 2, 4, 5))       # (N, i, di, j, dj, co)
    return y.reshape(n, 2 * h, 2 * wd, cout)


# ----------------------------------------------------------------------------
# _DecoderBlock forward (NCHW in / NCHW out, matching PyTorch)
# ----------------------------------------------------------------------------
def decoder_block_forward(params, x):
    # BatchNorm uses train-mode batch statistics (the default state of a
    # freshly built nn.Module), eps=1e-5, biased variance.
    xh = jnp.transpose(x, (0, 2, 3, 1))                          # NCHW -> NHWC
    xh = conv3x3_bn_relu_nhwc(xh, params["w1"], params["b1"],
                              params["g1"], params["bt1"])
    xh = conv3x3_bn_relu_nhwc(xh, params["w2"], params["b2"],
                              params["g2"], params["bt2"])
    xh = conv_transpose2x2_nhwc(xh, params["wd"], params["bd"])
    return jnp.transpose(xh, (0, 3, 1, 2))                       # NHWC -> NCHW


# ----------------------------------------------------------------------------
# Deterministic parameter init (PyTorch-default-style, synthetic test only)
# ----------------------------------------------------------------------------
def init_decoder_params(key, in_channels, middle_channels, out_channels):
    k1, k2, k3 = jax.random.split(key, 3)

    def kaiming(kk, shape, fan_in):
        return jax.random.normal(kk, shape, jnp.float32) * (2.0 / fan_in) ** 0.5

    return {
        "w1": kaiming(k1, (middle_channels, in_channels, 3, 3), in_channels * 9),
        "b1": jnp.zeros((middle_channels,), jnp.float32),
        "g1": jnp.ones((middle_channels,), jnp.float32),
        "bt1": jnp.zeros((middle_channels,), jnp.float32),
        "w2": kaiming(k2, (middle_channels, middle_channels, 3, 3),
                      middle_channels * 9),
        "b2": jnp.zeros((middle_channels,), jnp.float32),
        "g2": jnp.ones((middle_channels,), jnp.float32),
        "bt2": jnp.zeros((middle_channels,), jnp.float32),
        "wd": kaiming(k3, (middle_channels, out_channels, 2, 2),
                      middle_channels * 4),
        "bd": jnp.zeros((out_channels,), jnp.float32),
    }


if __name__ == "__main__":
    in_channels, middle_channels, out_channels = 64, 128, 64
    batch, height, width = 2, 16, 16

    root = jax.random.PRNGKey(0)
    pkey, xkey = jax.random.split(root)
    params = init_decoder_params(pkey, in_channels, middle_channels, out_channels)
    x = jax.random.normal(xkey, (batch, in_channels, height, width), jnp.float32)

    fwd = jax.jit(decoder_block_forward)
    out = jax.block_until_ready(fwd(params, x))

    # two valid 3x3 convs: 16 -> 14 -> 12; ConvTranspose2d(k=2,s=2): 12 -> 24
    expected = (batch, out_channels, 2 * (height - 4), 2 * (width - 4))
    assert out.shape == expected, (out.shape, expected)
    assert bool(jnp.all(jnp.isfinite(out)))
    print("KERNEL_OK")
</pallas_src>

<mosaic_0001>
module attributes {stable_mosaic.version = 11 : i64} {
  func.func @_conv3x3_bn_relu_kernel(%arg0: i32, %arg1: memref<2x258x64xf32, #tpu.memory_space<vmem>>, %arg2: memref<9x64x128xbf16, #tpu.memory_space<vmem>>, %arg3: memref<1x128xf32, #tpu.memory_space<vmem>>, %arg4: memref<1x128xf32, #tpu.memory_space<vmem>>, %arg5: memref<1x128xf32, #tpu.memory_space<vmem>>, %arg6: memref<224x1xf32, #tpu.memory_space<vmem>>, %arg7: memref<2x224x128xf32, #tpu.memory_space<vmem>>) attributes {dimension_semantics = [#tpu.dimension_semantics<parallel>], iteration_bounds = array<i64: 1>, scalar_prefetch = 0 : i64, scratch_operands = 0 : i64, tpu.core_type = #tpu.core_type<tc>, window_params = [{pipeline_mode = #tpu.pipeline_mode<synchronous>, transform_indices = @transform_0, window_bounds = array<i64: 2, 258, 64>}, {transform_indices = @transform_1, window_bounds = array<i64: 9, 64, 128>}, {transform_indices = @transform_2, window_bounds = array<i64: 1, 128>}, {transform_indices = @transform_3, window_bounds = array<i64: 1, 128>}, {transform_indices = @transform_4, window_bounds = array<i64: 1, 128>}, {pipeline_mode = #tpu.pipeline_mode<synchronous>, transform_indices = @transform_5, window_bounds = array<i64: 224, 1>}, {transform_indices = @transform_6, window_bounds = array<i64: 2, 224, 128>}]} {
    %c0 = arith.constant 0 : index
    %c0_0 = arith.constant 0 : index
    %0 = vector.load %arg6[%c0, %c0_0] : memref<224x1xf32, #tpu.memory_space<vmem>>, vector<224x1xf32>
    %c0_1 = arith.constant 0 : index
    %c0_2 = arith.constant 0 : index
    %1 = vector.load %arg3[%c0_1, %c0_2] : memref<1x128xf32, #tpu.memory_space<vmem>>, vector<1x128xf32>
    %cst = arith.constant 0.000000e+00 : f32
    %2 = vector.broadcast %cst : f32 to vector<1x128xf32>
    %cst_3 = arith.constant 0.000000e+00 : f32
    %3 = vector.broadcast %cst_3 : f32 to vector<1x128xf32>
    %c0_4 = arith.constant 0 : index
    %c0_5 = arith.constant 0 : index
    %c0_6 = arith.constant 0 : index
    %4 = vector.load %arg1[%c0_4, %c0_5, %c0_6] : memref<2x258x64xf32, #tpu.memory_space<vmem>>, vector<1x224x64xf32>
    %5 = vector.shape_cast %4 : vector<1x224x64xf32> to vector<224x64xf32>
    %6 = arith.truncf %5 : vector<224x64xf32> to vector<224x64xbf16>
    %c0_7 = arith.constant 0 : index
    %c0_8 = arith.constant 0 : index
    %c0_9 = arith.constant 0 : index
    %7 = vector.load %arg2[%c0_7, %c0_8, %c0_9] : memref<9x64x128xbf16, #tpu.memory_space<vmem>>, vector<1x64x128xbf16>
    %8 = vector.shape_cast %7 : vector<1x64x128xbf16> to vector<64x128xbf16>
    %cst_10 = arith.constant dense<0.000000e+00> : vector<224x128xf32>
    %9 = tpu.matmul %6, %8, %cst_10 {dimension_numbers = #tpu.dot_dimension_numbers<[1], [0], [0], [1], [0, 0, 1, 1], [], []>} : vector<224x64xbf16>, vector<64x128xbf16>, vector<224x128xf32> -> vector<224x128xf32>
    %c0_11 = arith.constant 0 : index
    %c1 = arith.constant 1 : index
    %c0_12 = arith.constant 0 : index
    %10 = vector.load %arg1[%c0_11, %c1, %c0_12] : memref<2x258x64xf32, #tpu.memory_space<vmem>>, vector<1x224x64xf32>
    %11 = vector.shape_cast %10 : vector<1x224x64xf32> to vector<224x64xf32>
    %12 = arith.truncf %11 : vector<224x64xf32> to vector<224x64xbf16>
    %c1_13 = arith.constant 1 : index
    %c0_14 = arith.constant 0 : index
    %c0_15 = arith.constant 0 : index
    %13 = vector.load %arg2[%c1_13, %c0_14, %c0_15] : memref<9x64x128xbf16, #tpu.memory_space<vmem>>, vector<1x64x128xbf16>
    %14 = vector.shape_cast %13 : vector<1x64x128xbf16> to vector<64x128xbf16>
    %cst_16 = arith.constant dense<0.000000e+00> : vector<224x128xf32>
    %15 = tpu.matmul %12, %14, %cst_16 {dimension_numbers = #tpu.dot_dimension_numbers<[1], [0], [0], [1], [0, 0, 1, 1], [], []>} : vector<224x64xbf16>, vector<64x128xbf16>, vector<224x128xf32> -> vector<224x128xf32>
    %16 = arith.addf %9, %15 : vector<224x128xf32>
    %c0_17 = arith.constant 0 : index
    %c2 = arith.constant 2 : index
    %c0_18 = arith.constant 0 : index
    %17 = vector.load %arg1[%c0_17, %c2, %c0_18] : memref<2x258x64xf32, #tpu.memory_space<vmem>>, vector<1x224x64xf32>
    %18 = vector.shape_cast %17 : vector<1x224x64xf32> to vector<224x64xf32>
    %19 = arith.truncf %18 : vector<224x64xf32> to vector<224x64xbf16>
    %c2_19 = arith.constant 2 : index
    %c0_20 = arith.constant 0 : index
    %c0_21 = arith.constant 0 : index
    %20 = vector.load %arg2[%c2_19, %c0_20, %c0_21] : memref<9x64x128xbf16, #tpu.memory_space<vmem>>, vector<1x64x128xbf16>
    %21 = vector.shape_cast %20 : vector<1x64x128xbf16> to vector<64x128xbf16>
    %cst_22 = arith.constant dense<0.000000e+00> : vector<224x128xf32>
    %22 = tpu.matmul %19, %21, %cst_22 {dimension_numbers = #tpu.dot_dimension_numbers<[1], [0], [0], [1], [0, 0, 1, 1], [], []>} : vector<224x64xbf16>, vector<64x128xbf16>, vector<224x128xf32> -> vector<224x128xf32>
    %23 = arith.addf %16, %22 : vector<224x128xf32>
    %c0_23 = arith.constant 0 : index
    %c16 = arith.constant 16 : index
    %c0_24 = arith.constant 0 : index
    %24 = vector.load %arg1[%c0_23, %c16, %c0_24] : memref<2x258x64xf32, #tpu.memory_space<vmem>>, vector<1x224x64xf32>
    %25 = vector.shape_cast %24 : vector<1x224x64xf32> to vector<224x64xf32>
    %26 = arith.truncf %25 : vector<224x64xf32> to vector<224x64xbf16>
    %c3 = arith.constant 3 : index
    %c0_25 = arith.constant 0 : index
    %c0_26 = arith.constant 0 : index
    %27 = vector.load %arg2[%c3, %c0_25, %c0_26] : memref<9x64x128xbf16, #tpu.memory_space<vmem>>, vector<1x64x128xbf16>
    %28 = vector.shape_cast %27 : vector<1x64x128xbf16> to vector<64x128xbf16>
    %cst_27 = arith.constant dense<0.000000e+00> : vector<224x128xf32>
    %29 = tpu.matmul %26, %28, %cst_27 {dimension_numbers = #tpu.dot_dimension_numbers<[1], [0], [0], [1], [0, 0, 1, 1], [], []>} : vector<224x64xbf16>, vector<64x128xbf16>, vector<224x128xf32> -> vector<224x128xf32>
    %30 = arith.addf %23, %29 : vector<224x128xf32>
    %c0_28 = arith.constant 0 : index
    %c17 = arith.constant 17 : index
    %c0_29 = arith.constant 0 : index
    %31 = vector.load %arg1[%c0_28, %c17, %c0_29] : memref<2x258x64xf32, #tpu.memory_space<vmem>>, vector<1x224x64xf32>
    %32 = vector.shape_cast %31 : vector<1x224x64xf32> to vector<224x64xf32>
    %33 = arith.truncf %32 : vector<224x64xf32> to vector<224x64xbf16>
    %c4 = arith.constant 4 : index
    %c0_30 = arith.constant 0 : index
    %c0_31 = arith.constant 0 : index
    %34 = vector.load %arg2[%c4, %c0_30, %c0_31] : memref<9x64x128xbf16, #tpu.memory_space<vmem>>, vector<1x64x128xbf16>
    %35 = vector.shape_cast %34 : vector<1x64x128xbf16> to vector<64x128xbf16>
    %cst_32 = arith.constant dense<0.000000e+00> : vector<224x128xf32>
    %36 = tpu.matmul %33, %35, %cst_32 {dimension_numbers = #tpu.dot_dimension_numbers<[1], [0], [0], [1], [0, 0, 1, 1], [], []>} : vector<224x64xbf16>, vector<64x128xbf16>, vector<224x128xf32> -> vector<224x128xf32>
    %37 = arith.addf %30, %36 : vector<224x128xf32>
    %c0_33 = arith.constant 0 : index
    %c18 = arith.constant 18 : index
    %c0_34 = arith.constant 0 : index
    %38 = vector.load %arg1[%c0_33, %c18, %c0_34] : memref<2x258x64xf32, #tpu.memory_space<vmem>>, vector<1x224x64xf32>
    %39 = vector.shape_cast %38 : vector<1x224x64xf32> to vector<224x64xf32>
    %40 = arith.truncf %39 : vector<224x64xf32> to vector<224x64xbf16>
    %c5 = arith.constant 5 : index
    %c0_35 = arith.constant 0 : index
    %c0_36 = arith.constant 0 : index
    %41 = vector.load %arg2[%c5, %c0_35, %c0_36] : memref<9x64x128xbf16, #tpu.memory_space<vmem>>, vector<1x64x128xbf16>
    %42 = vector.shape_cast %41 : vector<1x64x128xbf16> to vector<64x128xbf16>
    %cst_37 = arith.constant dense<0.000000e+00> : vector<224x128xf32>
    %43 = tpu.matmul %40, %42, %cst_37 {dimension_numbers = #tpu.dot_dimension_numbers<[1], [0], [0], [1], [0, 0, 1, 1], [], []>} : vector<224x64xbf16>, vector<64x128xbf16>, vector<224x128xf32> -> vector<224x128xf32>
    %44 = arith.addf %37, %43 : vector<224x128xf32>
    %c0_38 = arith.constant 0 : index
    %c32 = arith.constant 32 : index
    %c0_39 = arith.constant 0 : index
    %45 = vector.load %arg1[%c0_38, %c32, %c0_39] : memref<2x258x64xf32, #tpu.memory_space<vmem>>, vector<1x224x64xf32>
    %46 = vector.shape_cast %45 : vector<1x224x64xf32> to vector<224x64xf32>
    %47 = arith.truncf %46 : vector<224x64xf32> to vector<224x64xbf16>
    %c6 = arith.constant 6 : index
    %c0_40 = arith.constant 0 : index
    %c0_41 = arith.constant 0 : index
    %48 = vector.load %arg2[%c6, %c0_40, %c0_41] : memref<9x64x128xbf16, #tpu.memory_space<vmem>>, vector<1x64x128xbf16>
    %49 = vector.shape_cast %48 : vector<1x64x128xbf16> to vector<64x128xbf16>
    %cst_42 = arith.constant dense<0.000000e+00> : vector<224x128xf32>
    %50 = tpu.matmul %47, %49, %cst_42 {dimension_numbers = #tpu.dot_dimension_numbers<[1], [0], [0], [1], [0, 0, 1, 1], [], []>} : vector<224x64xbf16>, vector<64x128xbf16>, vector<224x128xf32> -> vector<224x128xf32>
    %51 = arith.addf %44, %50 : vector<224x128xf32>
    %c0_43 = arith.constant 0 : index
    %c33 = arith.constant 33 : index
    %c0_44 = arith.constant 0 : index
    %52 = vector.load %arg1[%c0_43, %c33, %c0_44] : memref<2x258x64xf32, #tpu.memory_space<vmem>>, vector<1x224x64xf32>
    %53 = vector.shape_cast %52 : vector<1x224x64xf32> to vector<224x64xf32>
    %54 = arith.truncf %53 : vector<224x64xf32> to vector<224x64xbf16>
    %c7 = arith.constant 7 : index
    %c0_45 = arith.constant 0 : index
    %c0_46 = arith.constant 0 : index
    %55 = vector.load %arg2[%c7, %c0_45, %c0_46] : memref<9x64x128xbf16, #tpu.memory_space<vmem>>, vector<1x64x128xbf16>
    %56 = vector.shape_cast %55 : vector<1x64x128xbf16> to vector<64x128xbf16>
    %cst_47 = arith.constant dense<0.000000e+00> : vector<224x128xf32>
    %57 = tpu.matmul %54, %56, %cst_47 {dimension_numbers = #tpu.dot_dimension_numbers<[1], [0], [0], [1], [0, 0, 1, 1], [], []>} : vector<224x64xbf16>, vector<64x128xbf16>, vector<224x128xf32> -> vector<224x128xf32>
    %58 = arith.addf %51, %57 : vector<224x128xf32>
    %c0_48 = arith.constant 0 : index
    %c34 = arith.constant 34 : index
    %c0_49 = arith.constant 0 : index
    %59 = vector.load %arg1[%c0_48, %c34, %c0_49] : memref<2x258x64xf32, #tpu.memory_space<vmem>>, vector<1x224x64xf32>
    %60 = vector.shape_cast %59 : vector<1x224x64xf32> to vector<224x64xf32>
    %61 = arith.truncf %60 : vector<224x64xf32> to vector<224x64xbf16>
    %c8 = arith.constant 8 : index
    %c0_50 = arith.constant 0 : index
    %c0_51 = arith.constant 0 : index
    %62 = vector.load %arg2[%c8, %c0_50, %c0_51] : memref<9x64x128xbf16, #tpu.memory_space<vmem>>, vector<1x64x128xbf16>
    %63 = vector.shape_cast %62 : vector<1x64x128xbf16> to vector<64x128xbf16>
    %cst_52 = arith.constant dense<0.000000e+00> : vector<224x128xf32>
    %64 = tpu.matmul %61, %63, %cst_52 {dimension_numbers = #tpu.dot_dimension_numbers<[1], [0], [0], [1], [0, 0, 1, 1], [], []>} : vector<224x64xbf16>, vector<64x128xbf16>, vector<224x128xf32> -> vector<224x128xf32>
    %65 = arith.addf %58, %64 : vector<224x128xf32>
    %66 = vector.broadcast %1 : vector<1x128xf32> to vector<224x128xf32>
    %67 = arith.addf %65, %66 : vector<224x128xf32>
    %68 = vector.extract_strided_slice %67 {offsets = [0, 0], sizes = [1, 128], strides = [1, 1]} : vector<224x128xf32> to vector<1x128xf32>
    %69 = vector.broadcast %68 : vector<1x128xf32> to vector<224x128xf32>
    %70 = arith.subf %67, %69 : vector<224x128xf32>
    %71 = vector.broadcast %0 : vector<224x1xf32> to vector<224x128xf32>
    %72 = arith.mulf %70, %71 : vector<224x128xf32>
    %cst_53 = arith.constant dense<0.000000e+00> : vector<128xf32>
    %73 = vector.multi_reduction <add>, %72, %cst_53 [0] : vector<224x128xf32> to vector<128xf32>
    %74 = vector.shape_cast %73 : vector<128xf32> to vector<1x128xf32>
    %75 = arith.addf %2, %74 : vector<1x128xf32>
    %76 = arith.mulf %72, %72 : vector<224x128xf32>
    %cst_54 = arith.constant dense<0.000000e+00> : vector<128xf32>
    %77 = vector.multi_reduction <add>, %76, %cst_54 [0] : vector<224x128xf32> to vector<128xf32>
    %78 = vector.shape_cast %77 : vector<128xf32> to vector<1x128xf32>
    %79 = arith.addf %3, %78 : vector<1x128xf32>
    %c0_55 = arith.constant 0 : index
    %c0_56 = arith.constant 0 : index
    %c0_57 = arith.constant 0 : index
    %80 = vector.load %arg7[%c0_55, %c0_56, %c0_57] : memref<2x224x128xf32, #tpu.memory_space<vmem>>, vector<1x224x128xf32>
    %81 = vector.shape_cast %80 : vector<1x224x128xf32> to vector<224x128xf32>
    %82 = vector.shape_cast %67 : vector<224x128xf32> to vector<1x224x128xf32>
    tpu.vector_store %arg7[%c0_55, %c0_56, %c0_57], %82 {strides = array<i32>} : memref<2x224x128xf32, #tpu.memory_space<vmem>>, vector<1x224x128xf32>,
    %c1_58 = arith.constant 1 : index
    %c0_59 = arith.constant 0 : index
    %c0_60 = arith.constant 0 : index
    %83 = vector.load %arg1[%c1_58, %c0_59, %c0_60] : memref<2x258x64xf32, #tpu.memory_space<vmem>>, vector<1x224x64xf32>
    %84 = vector.shape_cast %83 : vector<1x224x64xf32> to vector<224x64xf32>
    %85 = arith.truncf %84 : vector<224x64xf32> to vector<224x64xbf16>
    %c0_61 = arith.constant 0 : index
    %c0_62 = arith.constant 0 : index
    %c0_63 = arith.constant 0 : index
    %86 = vector.load %arg2[%c0_61, %c0_62, %c0_63] : memref<9x64x128xbf16, #tpu.memory_space<vmem>>, vector<1x64x128xbf16>
    %87 = vector.shape_cast %86 : vector<1x64x128xbf16> to vector<64x128xbf16>
    %cst_64 = arith.constant dense<0.000000e+00> : vector<224x128xf32>
    %88 = tpu.matmul %85, %87, %cst_64 {dimension_numbers = #tpu.dot_dimension_numbers<[1], [0], [0], [1], [0, 0, 1, 1], [], []>} : vector<224x64xbf16>, vector<64x128xbf16>, vector<224x128xf32> -> vector<224x128xf32>
    %c1_65 = arith.constant 1 : index
    %c1_66 = arith.constant 1 : index
    %c0_67 = arith.constant 0 : index
    %89 = vector.load %arg1[%c1_65, %c1_66, %c0_67] : memref<2x258x64xf32, #tpu.memory_space<vmem>>, vector<1x224x64xf32>
    %90 = vector.shape_cast %89 : vector<1x224x64xf32> to vector<224x64xf32>
    %91 = arith.truncf %90 : vector<224x64xf32> to vector<224x64xbf16>
    %c1_68 = arith.constant 1 : index
    %c0_69 = arith.constant 0 : index
    %c0_70 = arith.constant 0 : index
    %92 = vector.load %arg2[%c1_68, %c0_69, %c0_70] : memref<9x64x128xbf16, #tpu.memory_space<vmem>>, vector<1x64x128xbf16>
    %93 = vector.shape_cast %92 : vector<1x64x128xbf16> to vector<64x128xbf16>
    %cst_71 = arith.constant dense<0.000000e+00> : vector<224x128xf32>
    %94 = tpu.matmul %91, %93, %cst_71 {dimension_numbers = #tpu.dot_dimension_numbers<[1], [0], [0], [1], [0, 0, 1, 1], [], []>} : vector<224x64xbf16>, vector<64x128xbf16>, vector<224x128xf32> -> vector<224x128xf32>
    %95 = arith.addf %88, %94 : vector<224x128xf32>
    %c1_72 = arith.constant 1 : index
    %c2_73 = arith.constant 2 : index
    %c0_74 = arith.constant 0 : index
    %96 = vector.load %arg1[%c1_72, %c2_73, %c0_74] : memref<2x258x64xf32, #tpu.memory_space<vmem>>, vector<1x224x64xf32>
    %97 = vector.shape_cast %96 : vector<1x224x64xf32> to vector<224x64xf32>
    %98 = arith.truncf %97 : vector<224x64xf32> to vector<224x64xbf16>
    %c2_75 = arith.constant 2 : index
    %c0_76 = arith.constant 0 : index
    %c0_77 = arith.constant 0 : index
    %99 = vector.load %arg2[%c2_75, %c0_76, %c0_77] : memref<9x64x128xbf16, #tpu.memory_space<vmem>>, vector<1x64x128xbf16>
    %100 = vector.shape_cast %99 : vector<1x64x128xbf16> to vector<64x128xbf16>
    %cst_78 = arith.constant dense<0.000000e+00> : vector<224x128xf32>
    %101 = tpu.matmul %98, %100, %cst_78 {dimension_numbers = #tpu.dot_dimension_numbers<[1], [0], [0], [1], [0, 0, 1, 1], [], []>} : vector<224x64xbf16>, vector<64x128xbf16>, vector<224x128xf32> -> vector<224x128xf32>
    %102 = arith.addf %95, %101 : vector<224x128xf32>
    %c1_79 = arith.constant 1 : index
    %c16_80 = arith.constant 16 : index
    %c0_81 = arith.constant 0 : index
    %103 = vector.load %arg1[%c1_79, %c16_80, %c0_81] : memref<2x258x64xf32, #tpu.memory_space<vmem>>, vector<1x224x64xf32>
    %104 = vector.shape_cast %103 : vector<1x224x64xf32> to vector<224x64xf32>
    %105 = arith.truncf %104 : vector<224x64xf32> to vector<224x64xbf16>
    %c3_82 = arith.constant 3 : index
    %c0_83 = arith.constant 0 : index
    %c0_84 = arith.constant 0 : index
    %106 = vector.load %arg2[%c3_82, %c0_83, %c0_84] : memref<9x64x128xbf16, #tpu.memory_space<vmem>>, vector<1x64x128xbf16>
    %107 = vector.shape_cast %106 : vector<1x64x128xbf16> to vector<64x128xbf16>
    %cst_85 = arith.constant dense<0.000000e+00> : vector<224x128xf32>
    %108 = tpu.matmul %105, %107, %cst_85 {dimension_numbers = #tpu.dot_dimension_numbers<[1], [0], [0], [1], [0, 0, 1, 1], [], []>} : vector<224x64xbf16>, vector<64x128xbf16>, vector<224x128xf32> -> vector<224x128xf32>
    %109 = arith.addf %102, %108 : vector<224x128xf32>
    %c1_86 = arith.constant 1 : index
    %c17_87 = arith.constant 17 : index
    %c0_88 = arith.constant 0 : index
    %110 = vector.load %arg1[%c1_86, %c17_87, %c0_88] : memref<2x258x64xf32, #tpu.memory_space<vmem>>, vector<1x224x64xf32>
    %111 = vector.shape_cast %110 : vector<1x224x64xf32> to vector<224x64xf32>
    %112 = arith.truncf %111 : vector<224x64xf32> to vector<224x64xbf16>
    %c4_89 = arith.constant 4 : index
    %c0_90 = arith.constant 0 : index
    %c0_91 = arith.constant 0 : index
    %113 = vector.load %arg2[%c4_89, %c0_90, %c0_91] : memref<9x64x128xbf16, #tpu.memory_space<vmem>>, vector<1x64x128xbf16>
    %114 = vector.shape_cast %113 : vector<1x64x128xbf16> to vector<64x128xbf16>
    %cst_92 = arith.constant dense<0.000000e+00> : vector<224x128xf32>
    %115 = tpu.matmul %112, %114, %cst_92 {dimension_numbers = #tpu.dot_dimension_numbers<[1], [0], [0], [1], [0, 0, 1, 1], [], []>} : vector<224x64xbf16>, vector<64x128xbf16>, vector<224x128xf32> -> vector<224x128xf32>
    %116 = arith.addf %109, %115 : vector<224x128xf32>
    %c1_93 = arith.constant 1 : index
    %c18_94 = arith.constant 18 : index
    %c0_95 = arith.constant 0 : index
    %117 = vector.load %arg1[%c1_93, %c18_94, %c0_95] : memref<2x258x64xf32, #tpu.memory_space<vmem>>, vector<1x224x64xf32>
    %118 = vector.shape_cast %117 : vector<1x224x64xf32> to vector<224x64xf32>
    %119 = arith.truncf %118 : vector<224x64xf32> to vector<224x64xbf16>
    %c5_96 = arith.constant 5 : index
    %c0_97 = arith.constant 0 : index
    %c0_98 = arith.constant 0 : index
    %120 = vector.load %arg2[%c5_96, %c0_97, %c0_98] : memref<9x64x128xbf16, #tpu.memory_space<vmem>>, vector<1x64x128xbf16>
    %121 = vector.shape_cast %120 : vector<1x64x128xbf16> to vector<64x128xbf16>
    %cst_99 = arith.constant dense<0.000000e+00> : vector<224x128xf32>
    %122 = tpu.matmul %119, %121, %cst_99 {dimension_numbers = #tpu.dot_dimension_numbers<[1], [0], [0], [1], [0, 0, 1, 1], [], []>} : vector<224x64xbf16>, vector<64x128xbf16>, vector<224x128xf32> -> vector<224x128xf32>
    %123 = arith.addf %116, %122 : vector<224x128xf32>
    %c1_100 = arith.constant 1 : index
    %c32_101 = arith.constant 32 : index
    %c0_102 = arith.constant 0 : index
    %124 = vector.load %arg1[%c1_100, %c32_101, %c0_102] : memref<2x258x64xf32, #tpu.memory_space<vmem>>, vector<1x224x64xf32>
    %125 = vector.shape_cast %124 : vector<1x224x64xf32> to vector<224x64xf32>
    %126 = arith.truncf %125 : vector<224x64xf32> to vector<224x64xbf16>
    %c6_103 = arith.constant 6 : index
    %c0_104 = arith.constant 0 : index
    %c0_105 = arith.constant 0 : index
    %127 = vector.load %arg2[%c6_103, %c0_104, %c0_105] : memref<9x64x128xbf16, #tpu.memory_space<vmem>>, vector<1x64x128xbf16>
    %128 = vector.shape_cast %127 : vector<1x64x128xbf16> to vector<64x128xbf16>
    %cst_106 = arith.constant dense<0.000000e+00> : vector<224x128xf32>
    %129 = tpu.matmul %126, %128, %cst_106 {dimension_numbers = #tpu.dot_dimension_numbers<[1], [0], [0], [1], [0, 0, 1, 1], [], []>} : vector<224x64xbf16>, vector<64x128xbf16>, vector<224x128xf32> -> vector<224x128xf32>
    %130 = arith.addf %123, %129 : vector<224x128xf32>
    %c1_107 = arith.constant 1 : index
    %c33_108 = arith.constant 33 : index
    %c0_109 = arith.constant 0 : index
    %131 = vector.load %arg1[%c1_107, %c33_108, %c0_109] : memref<2x258x64xf32, #tpu.memory_space<vmem>>, vector<1x224x64xf32>
    %132 = vector.shape_cast %131 : vector<1x224x64xf32> to vector<224x64xf32>
    %133 = arith.truncf %132 : vector<224x64xf32> to vector<224x64xbf16>
    %c7_110 = arith.constant 7 : index
    %c0_111 = arith.constant 0 : index
    %c0_112 = arith.constant 0 : index
    %134 = vector.load %arg2[%c7_110, %c0_111, %c0_112] : memref<9x64x128xbf16, #tpu.memory_space<vmem>>, vector<1x64x128xbf16>
    %135 = vector.shape_cast %134 : vector<1x64x128xbf16> to vector<64x128xbf16>
    %cst_113 = arith.constant dense<0.000000e+00> : vector<224x128xf32>
    %136 = tpu.matmul %133, %135, %cst_113 {dimension_numbers = #tpu.dot_dimension_numbers<[1], [0], [0], [1], [0, 0, 1, 1], [], []>} : vector<224x64xbf16>, vector<64x128xbf16>, vector<224x128xf32> -> vector<224x128xf32>
    %137 = arith.addf %130, %136 : vector<224x128xf32>
    %c1_114 = arith.constant 1 : index
    %c34_115 = arith.constant 34 : index
    %c0_116 = arith.constant 0 : index
    %138 = vector.load %arg1[%c1_114, %c34_115, %c0_116] : memref<2x258x64xf32, #tpu.memory_space<vmem>>, vector<1x224x64xf32>
    %139 = vector.shape_cast %138 : vector<1x224x64xf32> to vector<224x64xf32>
    %140 = arith.truncf %139 : vector<224x64xf32> to vector<224x64xbf16>
    %c8_117 = arith.constant 8 : index
    %c0_118 = arith.constant 0 : index
    %c0_119 = arith.constant 0 : index
    %141 = vector.load %arg2[%c8_117, %c0_118, %c0_119] : memref<9x64x128xbf16, #tpu.memory_space<vmem>>, vector<1x64x128xbf16>
    %142 = vector.shape_cast %141 : vector<1x64x128xbf16> to vector<64x128xbf16>
    %cst_120 = arith.constant dense<0.000000e+00> : vector<224x128xf32>
    %143 = tpu.matmul %140, %142, %cst_120 {dimension_numbers = #tpu.dot_dimension_numbers<[1], [0], [0], [1], [0, 0, 1, 1], [], []>} : vector<224x64xbf16>, vector<64x128xbf16>, vector<224x128xf32> -> vector<224x128xf32>
    %144 = arith.addf %137, %143 : vector<224x128xf32>
    %145 = vector.broadcast %1 : vector<1x128xf32> to vector<224x128xf32>
    %146 = arith.addf %144, %145 : vector<224x128xf32>
    %147 = vector.broadcast %68 : vector<1x128xf32> to vector<224x128xf32>
    %148 = arith.subf %146, %147 : vector<224x128xf32>
    %149 = vector.broadcast %0 : vector<224x1xf32> to vector<224x128xf32>
    %150 = arith.mulf %148, %149 : vector<224x128xf32>
    %cst_121 = arith.constant dense<0.000000e+00> : vector<128xf32>
    %151 = vector.multi_reduction <add>, %150, %cst_121 [0] : vector<224x128xf32> to vector<128xf32>
    %152 = vector.shape_cast %151 : vector<128xf32> to vector<1x128xf32>
    %153 = arith.addf %75, %152 : vector<1x128xf32>
    %154 = arith.mulf %150, %150 : vector<224x128xf32>
    %cst_122 = arith.constant dense<0.000000e+00> : vector<128xf32>
    %155 = vector.multi_reduction <add>, %154, %cst_122 [0] : vector<224x128xf32> to vector<128xf32>
    %156 = vector.shape_cast %155 : vector<128xf32> to vector<1x128xf32>
    %157 = arith.addf %79, %156 : vector<1x128xf32>
    %c1_123 = arith.constant 1 : index
    %c0_124 = arith.constant 0 : index
    %c0_125 = arith.constant 0 : index
    %158 = vector.load %arg7[%c1_123, %c0_124, %c0_125] : memref<2x224x128xf32, #tpu.memory_space<vmem>>, vector<1x224x128xf32>
    %159 = vector.shape_cast %158 : vector<1x224x128xf32> to vector<224x128xf32>
    %160 = vector.shape_cast %146 : vector<224x128xf32> to vector<1x224x128xf32>
    tpu.vector_store %arg7[%c1_123, %c0_124, %c0_125], %160 {strides = array<i32>} : memref<2x224x128xf32, #tpu.memory_space<vmem>>, vector<1x224x128xf32>,
    %cst_126 = arith.constant 0.00255102036 : f32
    %161 = vector.broadcast %cst_126 : f32 to vector<1x128xf32>
    %162 = arith.mulf %153, %161 : vector<1x128xf32>
    %cst_127 = arith.constant 0.00255102036 : f32
    %163 = vector.broadcast %cst_127 : f32 to vector<1x128xf32>
    %164 = arith.mulf %157, %163 : vector<1x128xf32>
    %165 = arith.mulf %162, %162 : vector<1x128xf32>
    %166 = arith.subf %164, %165 : vector<1x128xf32>
    %cst_128 = arith.constant 0.000000e+00 : f32
    %167 = vector.broadcast %cst_128 : f32 to vector<1x128xf32>
    %168 = arith.maximumf %166, %167 : vector<1x128xf32>
    %169 = arith.addf %68, %162 : vector<1x128xf32>
    %cst_129 = arith.constant 9.99999974E-6 : f32
    %170 = vector.broadcast %cst_129 : f32 to vector<1x128xf32>
    %171 = arith.addf %168, %170 : vector<1x128xf32>
    %172 = math.rsqrt %171 : vector<1x128xf32>
    %c0_130 = arith.constant 0 : index
    %c0_131 = arith.constant 0 : index
    %173 = vector.load %arg4[%c0_130, %c0_131] : memref<1x128xf32, #tpu.memory_space<vmem>>, vector<1x128xf32>
    %174 = arith.mulf %172, %173 : vector<1x128xf32>
    %c0_132 = arith.constant 0 : index
    %c0_133 = arith.constant 0 : index
    %175 = vector.load %arg5[%c0_132, %c0_133] : memref<1x128xf32, #tpu.memory_space<vmem>>, vector<1x128xf32>
    %176 = arith.mulf %169, %174 : vector<1x128xf32>
    %177 = arith.subf %175, %176 : vector<1x128xf32>
    %c0_134 = arith.constant 0 : index
    %c0_135 = arith.constant 0 : index
    %c0_136 = arith.constant 0 : index
    %178 = vector.load %arg7[%c0_134, %c0_135, %c0_136] : memref<2x224x128xf32, #tpu.memory_space<vmem>>, vector<1x224x128xf32>
    %179 = vector.shape_cast %178 : vector<1x224x128xf32> to vector<224x128xf32>
    %180 = vector.broadcast %174 : vector<1x128xf32> to vector<224x128xf32>
    %181 = arith.mulf %179, %180 : vector<224x128xf32>
    %182 = vector.broadcast %177 : vector<1x128xf32> to vector<224x128xf32>
    %183 = arith.addf %181, %182 : vector<224x128xf32>
    %cst_137 = arith.constant 0.000000e+00 : f32
    %184 = vector.broadcast %cst_137 : f32 to vector<224x128xf32>
    %185 = arith.maximumf %183, %184 : vector<224x128xf32>
    %c0_138 = arith.constant 0 : index
    %c0_139 = arith.constant 0 : index
    %c0_140 = arith.constant 0 : index
    %186 = vector.load %arg7[%c0_138, %c0_139, %c0_140] : memref<2x224x128xf32, #tpu.memory_space<vmem>>, vector<1x224x128xf32>
    %187 = vector.shape_cast %186 : vector<1x224x128xf32> to vector<224x128xf32>
    %188 = vector.shape_cast %185 : vector<224x128xf32> to vector<1x224x128xf32>
    tpu.vector_store %arg7[%c0_138, %c0_139, %c0_140], %188 {strides = array<i32>} : memref<2x224x128xf32, #tpu.memory_space<vmem>>, vector<1x224x128xf32>,
    %c1_141 = arith.constant 1 : index
    %c0_142 = arith.constant 0 : index
    %c0_143 = arith.constant 0 : index
    %189 = vector.load %arg7[%c1_141, %c0_142, %c0_143] : memref<2x224x128xf32, #tpu.memory_space<vmem>>, vector<1x224x128xf32>
    %190 = vector.shape_cast %189 : vector<1x224x128xf32> to vector<224x128xf32>
    %191 = vector.broadcast %174 : vector<1x128xf32> to vector<224x128xf32>
    %192 = arith.mulf %190, %191 : vector<224x128xf32>
    %193 = vector.broadcast %177 : vector<1x128xf32> to vector<224x128xf32>
    %194 = arith.addf %192, %193 : vector<224x128xf32>
    %cst_144 = arith.constant 0.000000e+00 : f32
    %195 = vector.broadcast %cst_144 : f32 to vector<224x128xf32>
    %196 = arith.maximumf %194, %195 : vector<224x128xf32>
    %c1_145 = arith.constant 1 : index
    %c0_146 = arith.constant 0 : index
    %c0_147 = arith.constant 0 : index
    %197 = vector.load %arg7[%c1_145, %c0_146, %c0_147] : memref<2x224x128xf32, #tpu.memory_space<vmem>>, vector<1x224x128xf32>
    %198 = vector.shape_cast %197 : vector<1x224x128xf32> to vector<224x128xf32>
    %199 = vector.shape_cast %196 : vector<224x128xf32> to vector<1x224x128xf32>
    tpu.vector_store %arg7[%c1_145, %c0_146, %c0_147], %199 {strides = array<i32>} : memref<2x224x128xf32, #tpu.memory_space<vmem>>, vector<1x224x128xf32>,
    return
  }
  func.func @transform_0(%arg0: i32) -> (i32, i32, i32) {
    %c0_i32 = arith.constant 0 : i32
    %c0_i32_0 = arith.constant 0 : i32
    %c0_i32_1 = arith.constant 0 : i32
    %c0_i32_2 = arith.constant 0 : i32
    return %c0_i32, %c0_i32_0, %c0_i32_1 : i32, i32, i32
  }
  func.func @transform_1(%arg0: i32) -> (i32, i32, i32) {
    %c0_i32 = arith.constant 0 : i32
    %c0_i32_0 = arith.constant 0 : i32
    %c0_i32_1 = arith.constant 0 : i32
    return %c0_i32, %c0_i32_0, %arg0 : i32, i32, i32
  }
  func.func @transform_2(%arg0: i32) -> (i32, i32) {
    %c0_i32 = arith.constant 0 : i32
    %c0_i32_0 = arith.constant 0 : i32
    return %c0_i32, %arg0 : i32, i32
  }
  func.func @transform_3(%arg0: i32) -> (i32, i32) {
    %c0_i32 = arith.constant 0 : i32
    %c0_i32_0 = arith.constant 0 : i32
    return %c0_i32, %arg0 : i32, i32
  }
  func.func @transform_4(%arg0: i32) -> (i32, i32) {
    %c0_i32 = arith.constant 0 : i32
    %c0_i32_0 = arith.constant 0 : i32
    return %c0_i32, %arg0 : i32, i32
  }
  func.func @transform_5(%arg0: i32) -> (i32, i32) {
    %c0_i32 = arith.constant 0 : i32
    %c0_i32_0 = arith.constant 0 : i32
    %c0_i32_1 = arith.constant 0 : i32
    return %c0_i32, %c0_i32_0 : i32, i32
  }
  func.func @transform_6(%arg0: i32) -> (i32, i32, i32) {
    %c0_i32 = arith.constant 0 : i32
    %c0_i32_0 = arith.constant 0 : i32
    %c0_i32_1 = arith.constant 0 : i32
    return %c0_i32, %c0_i32_0, %arg0 : i32, i32, i32
  }
}

module attributes {stable_mosaic.version = 11 : i64} {
  func.func @_conv3x3_bn_relu_kernel(%arg0: i32, %arg1: memref<2x198x128xf32, #tpu.memory_space<vmem>>, %arg2: memref<9x128x128xbf16, #tpu.memory_space<vmem>>, %arg3: memref<1x128xf32, #tpu.memory_space<vmem>>, %arg4: memref<1x128xf32, #tpu.memory_space<vmem>>, %arg5: memref<1x128xf32, #tpu.memory_space<vmem>>, %arg6: memref<168x1xf32, #tpu.memory_space<vmem>>, %arg7: memref<2x168x128xf32, #tpu.memory_space<vmem>>) attributes {dimension_semantics = [#tpu.dimension_semantics<parallel>], iteration_bounds = array<i64: 1>, scalar_prefetch = 0 : i64, scratch_operands = 0 : i64, tpu.core_type = #tpu.core_type<tc>, window_params = [{pipeline_mode = #tpu.pipeline_mode<synchronous>, transform_indices = @transform_0, window_bounds = array<i64: 2, 198, 128>}, {transform_indices = @transform_1, window_bounds = array<i64: 9, 128, 128>}, {transform_indices = @transform_2, window_bounds = array<i64: 1, 128>}, {transform_indices = @transform_3, window_bounds = array<i64: 1, 128>}, {transform_indices = @transform_4, window_bounds = array<i64: 1, 128>}, {pipeline_mode = #tpu.pipeline_mode<synchronous>, transform_indices = @transform_5, window_bounds = array<i64: 168, 1>}, {transform_indices = @transform_6, window_bounds = array<i64: 2, 168, 128>}]} {
    %c0 = arith.constant 0 : index
    %c0_0 = arith.constant 0 : index
    %0 = vector.load %arg6[%c0, %c0_0] : memref<168x1xf32, #tpu.memory_space<vmem>>, vector<168x1xf32>
    %c0_1 = arith.constant 0 : index
    %c0_2 = arith.constant 0 : index
    %1 = vector.load %arg3[%c0_1, %c0_2] : memref<1x128xf32, #tpu.memory_space<vmem>>, vector<1x128xf32>
    %cst = arith.constant 0.000000e+00 : f32
    %2 = vector.broadcast %cst : f32 to vector<1x128xf32>
    %cst_3 = arith.constant 0.000000e+00 : f32
    %3 = vector.broadcast %cst_3 : f32 to vector<1x128xf32>
    %c0_4 = arith.constant 0 : index
    %c0_5 = arith.constant 0 : index
    %c0_6 = arith.constant 0 : index
    %4 = vector.load %arg1[%c0_4, %c0_5, %c0_6] : memref<2x198x128xf32, #tpu.memory_space<vmem>>, vector<1x168x128xf32>
    %5 = vector.shape_cast %4 : vector<1x168x128xf32> to vector<168x128xf32>
    %6 = arith.truncf %5 : vector<168x128xf32> to vector<168x128xbf16>
    %c0_7 = arith.constant 0 : index
    %c0_8 = arith.constant 0 : index
    %c0_9 = arith.constant 0 : index
    %7 = vector.load %arg2[%c0_7, %c0_8, %c0_9] : memref<9x128x128xbf16, #tpu.memory_space<vmem>>, vector<1x128x128xbf16>
    %8 = vector.shape_cast %7 : vector<1x128x128xbf16> to vector<128x128xbf16>
    %cst_10 = arith.constant dense<0.000000e+00> : vector<168x128xf32>
    %9 = tpu.matmul %6, %8, %cst_10 {dimension_numbers = #tpu.dot_dimension_numbers<[1], [0], [0], [1], [0, 0, 1, 1], [], []>} : vector<168x128xbf16>, vector<128x128xbf16>, vector<168x128xf32> -> vector<168x128xf32>
    %c0_11 = arith.constant 0 : index
    %c1 = arith.constant 1 : index
    %c0_12 = arith.constant 0 : index
    %10 = vector.load %arg1[%c0_11, %c1, %c0_12] : memref<2x198x128xf32, #tpu.memory_space<vmem>>, vector<1x168x128xf32>
    %11 = vector.shape_cast %10 : vector<1x168x128xf32> to vector<168x128xf32>
    %12 = arith.truncf %11 : vector<168x128xf32> to vector<168x128xbf16>
    %c1_13 = arith.constant 1 : index
    %c0_14 = arith.constant 0 : index
    %c0_15 = arith.constant 0 : index
    %13 = vector.load %arg2[%c1_13, %c0_14, %c0_15] : memref<9x128x128xbf16, #tpu.memory_space<vmem>>, vector<1x128x128xbf16>
    %14 = vector.shape_cast %13 : vector<1x128x128xbf16> to vector<128x128xbf16>
    %cst_16 = arith.constant dense<0.000000e+00> : vector<168x128xf32>
    %15 = tpu.matmul %12, %14, %cst_16 {dimension_numbers = #tpu.dot_dimension_numbers<[1], [0], [0], [1], [0, 0, 1, 1], [], []>} : vector<168x128xbf16>, vector<128x128xbf16>, vector<168x128xf32> -> vector<168x128xf32>
    %16 = arith.addf %9, %15 : vector<168x128xf32>
    %c0_17 = arith.constant 0 : index
    %c2 = arith.constant 2 : index
    %c0_18 = arith.constant 0 : index
    %17 = vector.load %arg1[%c0_17, %c2, %c0_18] : memref<2x198x128xf32, #tpu.memory_space<vmem>>, vector<1x168x128xf32>
    %18 = vector.shape_cast %17 : vector<1x168x128xf32> to vector<168x128xf32>
    %19 = arith.truncf %18 : vector<168x128xf32> to vector<168x128xbf16>
    %c2_19 = arith.constant 2 : index
    %c0_20 = arith.constant 0 : index
    %c0_21 = arith.constant 0 : index
    %20 = vector.load %arg2[%c2_19, %c0_20, %c0_21] : memref<9x128x128xbf16, #tpu.memory_space<vmem>>, vector<1x128x128xbf16>
    %21 = vector.shape_cast %20 : vector<1x128x128xbf16> to vector<128x128xbf16>
    %cst_22 = arith.constant dense<0.000000e+00> : vector<168x128xf32>
    %22 = tpu.matmul %19, %21, %cst_22 {dimension_numbers = #tpu.dot_dimension_numbers<[1], [0], [0], [1], [0, 0, 1, 1], [], []>} : vector<168x128xbf16>, vector<128x128xbf16>, vector<168x128xf32> -> vector<168x128xf32>
    %23 = arith.addf %16, %22 : vector<168x128xf32>
    %c0_23 = arith.constant 0 : index
    %c14 = arith.constant 14 : index
    %c0_24 = arith.constant 0 : index
    %24 = vector.load %arg1[%c0_23, %c14, %c0_24] : memref<2x198x128xf32, #tpu.memory_space<vmem>>, vector<1x168x128xf32>
    %25 = vector.shape_cast %24 : vector<1x168x128xf32> to vector<168x128xf32>
    %26 = arith.truncf %25 : vector<168x128xf32> to vector<168x128xbf16>
    %c3 = arith.constant 3 : index
    %c0_25 = arith.constant 0 : index
    %c0_26 = arith.constant 0 : index
    %27 = vector.load %arg2[%c3, %c0_25, %c0_26] : memref<9x128x128xbf16, #tpu.memory_space<vmem>>, vector<1x128x128xbf16>
    %28 = vector.shape_cast %27 : vector<1x128x128xbf16> to vector<128x128xbf16>
    %cst_27 = arith.constant dense<0.000000e+00> : vector<168x128xf32>
    %29 = tpu.matmul %26, %28, %cst_27 {dimension_numbers = #tpu.dot_dimension_numbers<[1], [0], [0], [1], [0, 0, 1, 1], [], []>} : vector<168x128xbf16>, vector<128x128xbf16>, vector<168x128xf32> -> vector<168x128xf32>
    %30 = arith.addf %23, %29 : vector<168x128xf32>
    %c0_28 = arith.constant 0 : index
    %c15 = arith.constant 15 : index
    %c0_29 = arith.constant 0 : index
    %31 = vector.load %arg1[%c0_28, %c15, %c0_29] : memref<2x198x128xf32, #tpu.memory_space<vmem>>, vector<1x168x128xf32>
    %32 = vector.shape_cast %31 : vector<1x168x128xf32> to vector<168x128xf32>
    %33 = arith.truncf %32 : vector<168x128xf32> to vector<168x128xbf16>
    %c4 = arith.constant 4 : index
    %c0_30 = arith.constant 0 : index
    %c0_31 = arith.constant 0 : index
    %34 = vector.load %arg2[%c4, %c0_30, %c0_31] : memref<9x128x128xbf16, #tpu.memory_space<vmem>>, vector<1x128x128xbf16>
    %35 = vector.shape_cast %34 : vector<1x128x128xbf16> to vector<128x128xbf16>
    %cst_32 = arith.constant dense<0.000000e+00> : vector<168x128xf32>
    %36 = tpu.matmul %33, %35, %cst_32 {dimension_numbers = #tpu.dot_dimension_numbers<[1], [0], [0], [1], [0, 0, 1, 1], [], []>} : vector<168x128xbf16>, vector<128x128xbf16>, vector<168x128xf32> -> vector<168x128xf32>
    %37 = arith.addf %30, %36 : vector<168x128xf32>
    %c0_33 = arith.constant 0 : index
    %c16 = arith.constant 16 : index
    %c0_34 = arith.constant 0 : index
    %38 = vector.load %arg1[%c0_33, %c16, %c0_34] : memref<2x198x128xf32, #tpu.memory_space<vmem>>, vector<1x168x128xf32>
    %39 = vector.shape_cast %38 : vector<1x168x128xf32> to vector<168x128xf32>
    %40 = arith.truncf %39 : vector<168x128xf32> to vector<168x128xbf16>
    %c5 = arith.constant 5 : index
    %c0_35 = arith.constant 0 : index
    %c0_36 = arith.constant 0 : index
    %41 = vector.load %arg2[%c5, %c0_35, %c0_36] : memref<9x128x128xbf16, #tpu.memory_space<vmem>>, vector<1x128x128xbf16>
    %42 = vector.shape_cast %41 : vector<1x128x128xbf16> to vector<128x128xbf16>
    %cst_37 = arith.constant dense<0.000000e+00> : vector<168x128xf32>
    %43 = tpu.matmul %40, %42, %cst_37 {dimension_numbers = #tpu.dot_dimension_numbers<[1], [0], [0], [1], [0, 0, 1, 1], [], []>} : vector<168x128xbf16>, vector<128x128xbf16>, vector<168x128xf32> -> vector<168x128xf32>
    %44 = arith.addf %37, %43 : vector<168x128xf32>
    %c0_38 = arith.constant 0 : index
    %c28 = arith.constant 28 : index
    %c0_39 = arith.constant 0 : index
    %45 = vector.load %arg1[%c0_38, %c28, %c0_39] : memref<2x198x128xf32, #tpu.memory_space<vmem>>, vector<1x168x128xf32>
    %46 = vector.shape_cast %45 : vector<1x168x128xf32> to vector<168x128xf32>
    %47 = arith.truncf %46 : vector<168x128xf32> to vector<168x128xbf16>
    %c6 = arith.constant 6 : index
    %c0_40 = arith.constant 0 : index
    %c0_41 = arith.constant 0 : index
    %48 = vector.load %arg2[%c6, %c0_40, %c0_41] : memref<9x128x128xbf16, #tpu.memory_space<vmem>>, vector<1x128x128xbf16>
    %49 = vector.shape_cast %48 : vector<1x128x128xbf16> to vector<128x128xbf16>
    %cst_42 = arith.constant dense<0.000000e+00> : vector<168x128xf32>
    %50 = tpu.matmul %47, %49, %cst_42 {dimension_numbers = #tpu.dot_dimension_numbers<[1], [0], [0], [1], [0, 0, 1, 1], [], []>} : vector<168x128xbf16>, vector<128x128xbf16>, vector<168x128xf32> -> vector<168x128xf32>
    %51 = arith.addf %44, %50 : vector<168x128xf32>
    %c0_43 = arith.constant 0 : index
    %c29 = arith.constant 29 : index
    %c0_44 = arith.constant 0 : index
    %52 = vector.load %arg1[%c0_43, %c29, %c0_44] : memref<2x198x128xf32, #tpu.memory_space<vmem>>, vector<1x168x128xf32>
    %53 = vector.shape_cast %52 : vector<1x168x128xf32> to vector<168x128xf32>
    %54 = arith.truncf %53 : vector<168x128xf32> to vector<168x128xbf16>
    %c7 = arith.constant 7 : index
    %c0_45 = arith.constant 0 : index
    %c0_46 = arith.constant 0 : index
    %55 = vector.load %arg2[%c7, %c0_45, %c0_46] : memref<9x128x128xbf16, #tpu.memory_space<vmem>>, vector<1x128x128xbf16>
    %56 = vector.shape_cast %55 : vector<1x128x128xbf16> to vector<128x128xbf16>
    %cst_47 = arith.constant dense<0.000000e+00> : vector<168x128xf32>
    %57 = tpu.matmul %54, %56, %cst_47 {dimension_numbers = #tpu.dot_dimension_numbers<[1], [0], [0], [1], [0, 0, 1, 1], [], []>} : vector<168x128xbf16>, vector<128x128xbf16>, vector<168x128xf32> -> vector<168x128xf32>
    %58 = arith.addf %51, %57 : vector<168x128xf32>
    %c0_48 = arith.constant 0 : index
    %c30 = arith.constant 30 : index
    %c0_49 = arith.constant 0 : index
    %59 = vector.load %arg1[%c0_48, %c30, %c0_49] : memref<2x198x128xf32, #tpu.memory_space<vmem>>, vector<1x168x128xf32>
    %60 = vector.shape_cast %59 : vector<1x168x128xf32> to vector<168x128xf32>
    %61 = arith.truncf %60 : vector<168x128xf32> to vector<168x128xbf16>
    %c8 = arith.constant 8 : index
    %c0_50 = arith.constant 0 : index
    %c0_51 = arith.constant 0 : index
    %62 = vector.load %arg2[%c8, %c0_50, %c0_51] : memref<9x128x128xbf16, #tpu.memory_space<vmem>>, vector<1x128x128xbf16>
    %63 = vector.shape_cast %62 : vector<1x128x128xbf16> to vector<128x128xbf16>
    %cst_52 = arith.constant dense<0.000000e+00> : vector<168x128xf32>
    %64 = tpu.matmul %61, %63, %cst_52 {dimension_numbers = #tpu.dot_dimension_numbers<[1], [0], [0], [1], [0, 0, 1, 1], [], []>} : vector<168x128xbf16>, vector<128x128xbf16>, vector<168x128xf32> -> vector<168x128xf32>
    %65 = arith.addf %58, %64 : vector<168x128xf32>
    %66 = vector.broadcast %1 : vector<1x128xf32> to vector<168x128xf32>
    %67 = arith.addf %65, %66 : vector<168x128xf32>
    %68 = vector.extract_strided_slice %67 {offsets = [0, 0], sizes = [1, 128], strides = [1, 1]} : vector<168x128xf32> to vector<1x128xf32>
    %69 = vector.broadcast %68 : vector<1x128xf32> to vector<168x128xf32>
    %70 = arith.subf %67, %69 : vector<168x128xf32>
    %71 = vector.broadcast %0 : vector<168x1xf32> to vector<168x128xf32>
    %72 = arith.mulf %70, %71 : vector<168x128xf32>
    %cst_53 = arith.constant dense<0.000000e+00> : vector<128xf32>
    %73 = vector.multi_reduction <add>, %72, %cst_53 [0] : vector<168x128xf32> to vector<128xf32>
    %74 = vector.shape_cast %73 : vector<128xf32> to vector<1x128xf32>
    %75 = arith.addf %2, %74 : vector<1x128xf32>
    %76 = arith.mulf %72, %72 : vector<168x128xf32>
    %cst_54 = arith.constant dense<0.000000e+00> : vector<128xf32>
    %77 = vector.multi_reduction <add>, %76, %cst_54 [0] : vector<168x128xf32> to vector<128xf32>
    %78 = vector.shape_cast %77 : vector<128xf32> to vector<1x128xf32>
    %79 = arith.addf %3, %78 : vector<1x128xf32>
    %c0_55 = arith.constant 0 : index
    %c0_56 = arith.constant 0 : index
    %c0_57 = arith.constant 0 : index
    %80 = vector.load %arg7[%c0_55, %c0_56, %c0_57] : memref<2x168x128xf32, #tpu.memory_space<vmem>>, vector<1x168x128xf32>
    %81 = vector.shape_cast %80 : vector<1x168x128xf32> to vector<168x128xf32>
    %82 = vector.shape_cast %67 : vector<168x128xf32> to vector<1x168x128xf32>
    tpu.vector_store %arg7[%c0_55, %c0_56, %c0_57], %82 {strides = array<i32>} : memref<2x168x128xf32, #tpu.memory_space<vmem>>, vector<1x168x128xf32>,
    %c1_58 = arith.constant 1 : index
    %c0_59 = arith.constant 0 : index
    %c0_60 = arith.constant 0 : index
    %83 = vector.load %arg1[%c1_58, %c0_59, %c0_60] : memref<2x198x128xf32, #tpu.memory_space<vmem>>, vector<1x168x128xf32>
    %84 = vector.shape_cast %83 : vector<1x168x128xf32> to vector<168x128xf32>
    %85 = arith.truncf %84 : vector<168x128xf32> to vector<168x128xbf16>
    %c0_61 = arith.constant 0 : index
    %c0_62 = arith.constant 0 : index
    %c0_63 = arith.constant 0 : index
    %86 = vector.load %arg2[%c0_61, %c0_62, %c0_63] : memref<9x128x128xbf16, #tpu.memory_space<vmem>>, vector<1x128x128xbf16>
    %87 = vector.shape_cast %86 : vector<1x128x128xbf16> to vector<128x128xbf16>
    %cst_64 = arith.constant dense<0.000000e+00> : vector<168x128xf32>
    %88 = tpu.matmul %85, %87, %cst_64 {dimension_numbers = #tpu.dot_dimension_numbers<[1], [0], [0], [1], [0, 0, 1, 1], [], []>} : vector<168x128xbf16>, vector<128x128xbf16>, vector<168x128xf32> -> vector<168x128xf32>
    %c1_65 = arith.constant 1 : index
    %c1_66 = arith.constant 1 : index
    %c0_67 = arith.constant 0 : index
    %89 = vector.load %arg1[%c1_65, %c1_66, %c0_67] : memref<2x198x128xf32, #tpu.memory_space<vmem>>, vector<1x168x128xf32>
    %90 = vector.shape_cast %89 : vector<1x168x128xf32> to vector<168x128xf32>
    %91 = arith.truncf %90 : vector<168x128xf32> to vector<168x128xbf16>
    %c1_68 = arith.constant 1 : index
    %c0_69 = arith.constant 0 : index
    %c0_70 = arith.constant 0 : index
    %92 = vector.load %arg2[%c1_68, %c0_69, %c0_70] : memref<9x128x128xbf16, #tpu.memory_space<vmem>>, vector<1x128x128xbf16>
    %93 = vector.shape_cast %92 : vector<1x128x128xbf16> to vector<128x128xbf16>
    %cst_71 = arith.constant dense<0.000000e+00> : vector<168x128xf32>
    %94 = tpu.matmul %91, %93, %cst_71 {dimension_numbers = #tpu.dot_dimension_numbers<[1], [0], [0], [1], [0, 0, 1, 1], [], []>} : vector<168x128xbf16>, vector<128x128xbf16>, vector<168x128xf32> -> vector<168x128xf32>
    %95 = arith.addf %88, %94 : vector<168x128xf32>
    %c1_72 = arith.constant 1 : index
    %c2_73 = arith.constant 2 : index
    %c0_74 = arith.constant 0 : index
    %96 = vector.load %arg1[%c1_72, %c2_73, %c0_74] : memref<2x198x128xf32, #tpu.memory_space<vmem>>, vector<1x168x128xf32>
    %97 = vector.shape_cast %96 : vector<1x168x128xf32> to vector<168x128xf32>
    %98 = arith.truncf %97 : vector<168x128xf32> to vector<168x128xbf16>
    %c2_75 = arith.constant 2 : index
    %c0_76 = arith.constant 0 : index
    %c0_77 = arith.constant 0 : index
    %99 = vector.load %arg2[%c2_75, %c0_76, %c0_77] : memref<9x128x128xbf16, #tpu.memory_space<vmem>>, vector<1x128x128xbf16>
    %100 = vector.shape_cast %99 : vector<1x128x128xbf16> to vector<128x128xbf16>
    %cst_78 = arith.constant dense<0.000000e+00> : vector<168x128xf32>
    %101 = tpu.matmul %98, %100, %cst_78 {dimension_numbers = #tpu.dot_dimension_numbers<[1], [0], [0], [1], [0, 0, 1, 1], [], []>} : vector<168x128xbf16>, vector<128x128xbf16>, vector<168x128xf32> -> vector<168x128xf32>
    %102 = arith.addf %95, %101 : vector<168x128xf32>
    %c1_79 = arith.constant 1 : index
    %c14_80 = arith.constant 14 : index
    %c0_81 = arith.constant 0 : index
    %103 = vector.load %arg1[%c1_79, %c14_80, %c0_81] : memref<2x198x128xf32, #tpu.memory_space<vmem>>, vector<1x168x128xf32>
    %104 = vector.shape_cast %103 : vector<1x168x128xf32> to vector<168x128xf32>
    %105 = arith.truncf %104 : vector<168x128xf32> to vector<168x128xbf16>
    %c3_82 = arith.constant 3 : index
    %c0_83 = arith.constant 0 : index
    %c0_84 = arith.constant 0 : index
    %106 = vector.load %arg2[%c3_82, %c0_83, %c0_84] : memref<9x128x128xbf16, #tpu.memory_space<vmem>>, vector<1x128x128xbf16>
    %107 = vector.shape_cast %106 : vector<1x128x128xbf16> to vector<128x128xbf16>
    %cst_85 = arith.constant dense<0.000000e+00> : vector<168x128xf32>
    %108 = tpu.matmul %105, %107, %cst_85 {dimension_numbers = #tpu.dot_dimension_numbers<[1], [0], [0], [1], [0, 0, 1, 1], [], []>} : vector<168x128xbf16>, vector<128x128xbf16>, vector<168x128xf32> -> vector<168x128xf32>
    %109 = arith.addf %102, %108 : vector<168x128xf32>
    %c1_86 = arith.constant 1 : index
    %c15_87 = arith.constant 15 : index
    %c0_88 = arith.constant 0 : index
    %110 = vector.load %arg1[%c1_86, %c15_87, %c0_88] : memref<2x198x128xf32, #tpu.memory_space<vmem>>, vector<1x168x128xf32>
    %111 = vector.shape_cast %110 : vector<1x168x128xf32> to vector<168x128xf32>
    %112 = arith.truncf %111 : vector<168x128xf32> to vector<168x128xbf16>
    %c4_89 = arith.constant 4 : index
    %c0_90 = arith.constant 0 : index
    %c0_91 = arith.constant 0 : index
    %113 = vector.load %arg2[%c4_89, %c0_90, %c0_91] : memref<9x128x128xbf16, #tpu.memory_space<vmem>>, vector<1x128x128xbf16>
    %114 = vector.shape_cast %113 : vector<1x128x128xbf16> to vector<128x128xbf16>
    %cst_92 = arith.constant dense<0.000000e+00> : vector<168x128xf32>
    %115 = tpu.matmul %112, %114, %cst_92 {dimension_numbers = #tpu.dot_dimension_numbers<[1], [0], [0], [1], [0, 0, 1, 1], [], []>} : vector<168x128xbf16>, vector<128x128xbf16>, vector<168x128xf32> -> vector<168x128xf32>
    %116 = arith.addf %109, %115 : vector<168x128xf32>
    %c1_93 = arith.constant 1 : index
    %c16_94 = arith.constant 16 : index
    %c0_95 = arith.constant 0 : index
    %117 = vector.load %arg1[%c1_93, %c16_94, %c0_95] : memref<2x198x128xf32, #tpu.memory_space<vmem>>, vector<1x168x128xf32>
    %118 = vector.shape_cast %117 : vector<1x168x128xf32> to vector<168x128xf32>
    %119 = arith.truncf %118 : vector<168x128xf32> to vector<168x128xbf16>
    %c5_96 = arith.constant 5 : index
    %c0_97 = arith.constant 0 : index
    %c0_98 = arith.constant 0 : index
    %120 = vector.load %arg2[%c5_96, %c0_97, %c0_98] : memref<9x128x128xbf16, #tpu.memory_space<vmem>>, vector<1x128x128xbf16>
    %121 = vector.shape_cast %120 : vector<1x128x128xbf16> to vector<128x128xbf16>
    %cst_99 = arith.constant dense<0.000000e+00> : vector<168x128xf32>
    %122 = tpu.matmul %119, %121, %cst_99 {dimension_numbers = #tpu.dot_dimension_numbers<[1], [0], [0], [1], [0, 0, 1, 1], [], []>} : vector<168x128xbf16>, vector<128x128xbf16>, vector<168x128xf32> -> vector<168x128xf32>
    %123 = arith.addf %116, %122 : vector<168x128xf32>
    %c1_100 = arith.constant 1 : index
    %c28_101 = arith.constant 28 : index
    %c0_102 = arith.constant 0 : index
    %124 = vector.load %arg1[%c1_100, %c28_101, %c0_102] : memref<2x198x128xf32, #tpu.memory_space<vmem>>, vector<1x168x128xf32>
    %125 = vector.shape_cast %124 : vector<1x168x128xf32> to vector<168x128xf32>
    %126 = arith.truncf %125 : vector<168x128xf32> to vector<168x128xbf16>
    %c6_103 = arith.constant 6 : index
    %c0_104 = arith.constant 0 : index
    %c0_105 = arith.constant 0 : index
    %127 = vector.load %arg2[%c6_103, %c0_104, %c0_105] : memref<9x128x128xbf16, #tpu.memory_space<vmem>>, vector<1x128x128xbf16>
    %128 = vector.shape_cast %127 : vector<1x128x128xbf16> to vector<128x128xbf16>
    %cst_106 = arith.constant dense<0.000000e+00> : vector<168x128xf32>
    %129 = tpu.matmul %126, %128, %cst_106 {dimension_numbers = #tpu.dot_dimension_numbers<[1], [0], [0], [1], [0, 0, 1, 1], [], []>} : vector<168x128xbf16>, vector<128x128xbf16>, vector<168x128xf32> -> vector<168x128xf32>
    %130 = arith.addf %123, %129 : vector<168x128xf32>
    %c1_107 = arith.constant 1 : index
    %c29_108 = arith.constant 29 : index
    %c0_109 = arith.constant 0 : index
    %131 = vector.load %arg1[%c1_107, %c29_108, %c0_109] : memref<2x198x128xf32, #tpu.memory_space<vmem>>, vector<1x168x128xf32>
    %132 = vector.shape_cast %131 : vector<1x168x128xf32> to vector<168x128xf32>
    %133 = arith.truncf %132 : vector<168x128xf32> to vector<168x128xbf16>
    %c7_110 = arith.constant 7 : index
    %c0_111 = arith.constant 0 : index
    %c0_112 = arith.constant 0 : index
    %134 = vector.load %arg2[%c7_110, %c0_111, %c0_112] : memref<9x128x128xbf16, #tpu.memory_space<vmem>>, vector<1x128x128xbf16>
    %135 = vector.shape_cast %134 : vector<1x128x128xbf16> to vector<128x128xbf16>
    %cst_113 = arith.constant dense<0.000000e+00> : vector<168x128xf32>
    %136 = tpu.matmul %133, %135, %cst_113 {dimension_numbers = #tpu.dot_dimension_numbers<[1], [0], [0], [1], [0, 0, 1, 1], [], []>} : vector<168x128xbf16>, vector<128x128xbf16>, vector<168x128xf32> -> vector<168x128xf32>
    %137 = arith.addf %130, %136 : vector<168x128xf32>
    %c1_114 = arith.constant 1 : index
    %c30_115 = arith.constant 30 : index
    %c0_116 = arith.constant 0 : index
    %138 = vector.load %arg1[%c1_114, %c30_115, %c0_116] : memref<2x198x128xf32, #tpu.memory_space<vmem>>, vector<1x168x128xf32>
    %139 = vector.shape_cast %138 : vector<1x168x128xf32> to vector<168x128xf32>
    %140 = arith.truncf %139 : vector<168x128xf32> to vector<168x128xbf16>
    %c8_117 = arith.constant 8 : index
    %c0_118 = arith.constant 0 : index
    %c0_119 = arith.constant 0 : index
    %141 = vector.load %arg2[%c8_117, %c0_118, %c0_119] : memref<9x128x128xbf16, #tpu.memory_space<vmem>>, vector<1x128x128xbf16>
    %142 = vector.shape_cast %141 : vector<1x128x128xbf16> to vector<128x128xbf16>
    %cst_120 = arith.constant dense<0.000000e+00> : vector<168x128xf32>
    %143 = tpu.matmul %140, %142, %cst_120 {dimension_numbers = #tpu.dot_dimension_numbers<[1], [0], [0], [1], [0, 0, 1, 1], [], []>} : vector<168x128xbf16>, vector<128x128xbf16>, vector<168x128xf32> -> vector<168x128xf32>
    %144 = arith.addf %137, %143 : vector<168x128xf32>
    %145 = vector.broadcast %1 : vector<1x128xf32> to vector<168x128xf32>
    %146 = arith.addf %144, %145 : vector<168x128xf32>
    %147 = vector.broadcast %68 : vector<1x128xf32> to vector<168x128xf32>
    %148 = arith.subf %146, %147 : vector<168x128xf32>
    %149 = vector.broadcast %0 : vector<168x1xf32> to vector<168x128xf32>
    %150 = arith.mulf %148, %149 : vector<168x128xf32>
    %cst_121 = arith.constant dense<0.000000e+00> : vector<128xf32>
    %151 = vector.multi_reduction <add>, %150, %cst_121 [0] : vector<168x128xf32> to vector<128xf32>
    %152 = vector.shape_cast %151 : vector<128xf32> to vector<1x128xf32>
    %153 = arith.addf %75, %152 : vector<1x128xf32>
    %154 = arith.mulf %150, %150 : vector<168x128xf32>
    %cst_122 = arith.constant dense<0.000000e+00> : vector<128xf32>
    %155 = vector.multi_reduction <add>, %154, %cst_122 [0] : vector<168x128xf32> to vector<128xf32>
    %156 = vector.shape_cast %155 : vector<128xf32> to vector<1x128xf32>
    %157 = arith.addf %79, %156 : vector<1x128xf32>
    %c1_123 = arith.constant 1 : index
    %c0_124 = arith.constant 0 : index
    %c0_125 = arith.constant 0 : index
    %158 = vector.load %arg7[%c1_123, %c0_124, %c0_125] : memref<2x168x128xf32, #tpu.memory_space<vmem>>, vector<1x168x128xf32>
    %159 = vector.shape_cast %158 : vector<1x168x128xf32> to vector<168x128xf32>
    %160 = vector.shape_cast %146 : vector<168x128xf32> to vector<1x168x128xf32>
    tpu.vector_store %arg7[%c1_123, %c0_124, %c0_125], %160 {strides = array<i32>} : memref<2x168x128xf32, #tpu.memory_space<vmem>>, vector<1x168x128xf32>,
    %cst_126 = arith.constant 0.00347222225 : f32
    %161 = vector.broadcast %cst_126 : f32 to vector<1x128xf32>
    %162 = arith.mulf %153, %161 : vector<1x128xf32>
    %cst_127 = arith.constant 0.00347222225 : f32
    %163 = vector.broadcast %cst_127 : f32 to vector<1x128xf32>
    %164 = arith.mulf %157, %163 : vector<1x128xf32>
    %165 = arith.mulf %162, %162 : vector<1x128xf32>
    %166 = arith.subf %164, %165 : vector<1x128xf32>
    %cst_128 = arith.constant 0.000000e+00 : f32
    %167 = vector.broadcast %cst_128 : f32 to vector<1x128xf32>
    %168 = arith.maximumf %166, %167 : vector<1x128xf32>
    %169 = arith.addf %68, %162 : vector<1x128xf32>
    %cst_129 = arith.constant 9.99999974E-6 : f32
    %170 = vector.broadcast %cst_129 : f32 to vector<1x128xf32>
    %171 = arith.addf %168, %170 : vector<1x128xf32>
    %172 = math.rsqrt %171 : vector<1x128xf32>
    %c0_130 = arith.constant 0 : index
    %c0_131 = arith.constant 0 : index
    %173 = vector.load %arg4[%c0_130, %c0_131] : memref<1x128xf32, #tpu.memory_space<vmem>>, vector<1x128xf32>
    %174 = arith.mulf %172, %173 : vector<1x128xf32>
    %c0_132 = arith.constant 0 : index
    %c0_133 = arith.constant 0 : index
    %175 = vector.load %arg5[%c0_132, %c0_133] : memref<1x128xf32, #tpu.memory_space<vmem>>, vector<1x128xf32>
    %176 = arith.mulf %169, %174 : vector<1x128xf32>
    %177 = arith.subf %175, %176 : vector<1x128xf32>
    %c0_134 = arith.constant 0 : index
    %c0_135 = arith.constant 0 : index
    %c0_136 = arith.constant 0 : index
    %178 = vector.load %arg7[%c0_134, %c0_135, %c0_136] : memref<2x168x128xf32, #tpu.memory_space<vmem>>, vector<1x168x128xf32>
    %179 = vector.shape_cast %178 : vector<1x168x128xf32> to vector<168x128xf32>
    %180 = vector.broadcast %174 : vector<1x128xf32> to vector<168x128xf32>
    %181 = arith.mulf %179, %180 : vector<168x128xf32>
    %182 = vector.broadcast %177 : vector<1x128xf32> to vector<168x128xf32>
    %183 = arith.addf %181, %182 : vector<168x128xf32>
    %cst_137 = arith.constant 0.000000e+00 : f32
    %184 = vector.broadcast %cst_137 : f32 to vector<168x128xf32>
    %185 = arith.maximumf %183, %184 : vector<168x128xf32>
    %c0_138 = arith.constant 0 : index
    %c0_139 = arith.constant 0 : index
    %c0_140 = arith.constant 0 : index
    %186 = vector.load %arg7[%c0_138, %c0_139, %c0_140] : memref<2x168x128xf32, #tpu.memory_space<vmem>>, vector<1x168x128xf32>
    %187 = vector.shape_cast %186 : vector<1x168x128xf32> to vector<168x128xf32>
    %188 = vector.shape_cast %185 : vector<168x128xf32> to vector<1x168x128xf32>
    tpu.vector_store %arg7[%c0_138, %c0_139, %c0_140], %188 {strides = array<i32>} : memref<2x168x128xf32, #tpu.memory_space<vmem>>, vector<1x168x128xf32>,
    %c1_141 = arith.constant 1 : index
    %c0_142 = arith.constant 0 : index
    %c0_143 = arith.constant 0 : index
    %189 = vector.load %arg7[%c1_141, %c0_142, %c0_143] : memref<2x168x128xf32, #tpu.memory_space<vmem>>, vector<1x168x128xf32>
    %190 = vector.shape_cast %189 : vector<1x168x128xf32> to vector<168x128xf32>
    %191 = vector.broadcast %174 : vector<1x128xf32> to vector<168x128xf32>
    %192 = arith.mulf %190, %191 : vector<168x128xf32>
    %193 = vector.broadcast %177 : vector<1x128xf32> to vector<168x128xf32>
    %194 = arith.addf %192, %193 : vector<168x128xf32>
    %cst_144 = arith.constant 0.000000e+00 : f32
    %195 = vector.broadcast %cst_144 : f32 to vector<168x128xf32>
    %196 = arith.maximumf %194, %195 : vector<168x128xf32>
    %c1_145 = arith.constant 1 : index
    %c0_146 = arith.constant 0 : index
    %c0_147 = arith.constant 0 : index
    %197 = vector.load %arg7[%c1_145, %c0_146, %c0_147] : memref<2x168x128xf32, #tpu.memory_space<vmem>>, vector<1x168x128xf32>
    %198 = vector.shape_cast %197 : vector<1x168x128xf32> to vector<168x128xf32>
    %199 = vector.shape_cast %196 : vector<168x128xf32> to vector<1x168x128xf32>
    tpu.vector_store %arg7[%c1_145, %c0_146, %c0_147], %199 {strides = array<i32>} : memref<2x168x128xf32, #tpu.memory_space<vmem>>, vector<1x168x128xf32>,
    return
  }
  func.func @transform_0(%arg0: i32) -> (i32, i32, i32) {
    %c0_i32 = arith.constant 0 : i32
    %c0_i32_0 = arith.constant 0 : i32
    %c0_i32_1 = arith.constant 0 : i32
    %c0_i32_2 = arith.constant 0 : i32
    return %c0_i32, %c0_i32_0, %c0_i32_1 : i32, i32, i32
  }
  func.func @transform_1(%arg0: i32) -> (i32, i32, i32) {
    %c0_i32 = arith.constant 0 : i32
    %c0_i32_0 = arith.constant 0 : i32
    %c0_i32_1 = arith.constant 0 : i32
    return %c0_i32, %c0_i32_0, %arg0 : i32, i32, i32
  }
  func.func @transform_2(%arg0: i32) -> (i32, i32) {
    %c0_i32 = arith.constant 0 : i32
    %c0_i32_0 = arith.constant 0 : i32
    return %c0_i32, %arg0 : i32, i32
  }
  func.func @transform_3(%arg0: i32) -> (i32, i32) {
    %c0_i32 = arith.constant 0 : i32
    %c0_i32_0 = arith.constant 0 : i32
    return %c0_i32, %arg0 : i32, i32
  }
  func.func @transform_4(%arg0: i32) -> (i32, i32) {
    %c0_i32 = arith.constant 0 : i32
    %c0_i32_0 = arith.constant 0 : i32
    return %c0_i32, %arg0 : i32, i32
  }
  func.func @transform_5(%arg0: i32) -> (i32, i32) {
    %c0_i32 = arith.constant 0 : i32
    %c0_i32_0 = arith.constant 0 : i32
    %c0_i32_1 = arith.constant 0 : i32
    return %c0_i32, %c0_i32_0 : i32, i32
  }
  func.func @transform_6(%arg0: i32) -> (i32, i32, i32) {
    %c0_i32 = arith.constant 0 : i32
    %c0_i32_0 = arith.constant 0 : i32
    %c0_i32_1 = arith.constant 0 : i32
    return %c0_i32, %c0_i32_0, %arg0 : i32, i32, i32
  }
}

module attributes {stable_mosaic.version = 11 : i64} {
  func.func @_matmul_bias_kernel(%arg0: i32, %arg1: memref<288x128xbf16, #tpu.memory_space<vmem>>, %arg2: memref<128x128xbf16, #tpu.memory_space<vmem>>, %arg3: memref<1x128xf32, #tpu.memory_space<vmem>>, %arg4: memref<288x128xf32, #tpu.memory_space<vmem>>) attributes {dimension_semantics = [#tpu.dimension_semantics<parallel>], iteration_bounds = array<i64: 2>, scalar_prefetch = 0 : i64, scratch_operands = 0 : i64, tpu.core_type = #tpu.core_type<tc>, window_params = [{pipeline_mode = #tpu.pipeline_mode<synchronous>, transform_indices = @transform_0, window_bounds = array<i64: 288, 128>}, {transform_indices = @transform_1, window_bounds = array<i64: 128, 128>}, {transform_indices = @transform_2, window_bounds = array<i64: 1, 128>}, {transform_indices = @transform_3, window_bounds = array<i64: 288, 128>}]} {
    %c0 = arith.constant 0 : index
    %c0_0 = arith.constant 0 : index
    %0 = vector.load %arg1[%c0, %c0_0] : memref<288x128xbf16, #tpu.memory_space<vmem>>, vector<288x128xbf16>
    %c0_1 = arith.constant 0 : index
    %c0_2 = arith.constant 0 : index
    %1 = vector.load %arg2[%c0_1, %c0_2] : memref<128x128xbf16, #tpu.memory_space<vmem>>, vector<128x128xbf16>
    %cst = arith.constant dense<0.000000e+00> : vector<288x128xf32>
    %2 = tpu.matmul %0, %1, %cst {dimension_numbers = #tpu.dot_dimension_numbers<[1], [0], [0], [1], [0, 0, 1, 1], [], []>} : vector<288x128xbf16>, vector<128x128xbf16>, vector<288x128xf32> -> vector<288x128xf32>
    %c0_3 = arith.constant 0 : index
    %c0_4 = arith.constant 0 : index
    %3 = vector.load %arg3[%c0_3, %c0_4] : memref<1x128xf32, #tpu.memory_space<vmem>>, vector<1x128xf32>
    %4 = vector.broadcast %3 : vector<1x128xf32> to vector<288x128xf32>
    %5 = arith.addf %2, %4 : vector<288x128xf32>
    %c0_5 = arith.constant 0 : index
    %c0_6 = arith.constant 0 : index
    %6 = vector.load %arg4[%c0_5, %c0_6] : memref<288x128xf32, #tpu.memory_space<vmem>>, vector<288x128xf32>
    tpu.vector_store %arg4[%c0_5, %c0_6], %5 {strides = array<i32>} : memref<288x128xf32, #tpu.memory_space<vmem>>, vector<288x128xf32>,
    return
  }
  func.func @transform_0(%arg0: i32) -> (i32, i32) {
    %c0_i32 = arith.constant 0 : i32
    %c0_i32_0 = arith.constant 0 : i32
    %c0_i32_1 = arith.constant 0 : i32
    return %c0_i32, %c0_i32_0 : i32, i32
  }
  func.func @transform_1(%arg0: i32) -> (i32, i32) {
    %c0_i32 = arith.constant 0 : i32
    %c0_i32_0 = arith.constant 0 : i32
    return %c0_i32, %arg0 : i32, i32
  }
  func.func @transform_2(%arg0: i32) -> (i32, i32) {
    %c0_i32 = arith.constant 0 : i32
    %c0_i32_0 = arith.constant 0 : i32
    return %c0_i32, %arg0 : i32, i32
  }
  func.func @transform_3(%arg0: i32) -> (i32, i32) {
    %c0_i32 = arith.constant 0 : i32
    %c0_i32_0 = arith.constant 0 : i32
    return %c0_i32, %arg0 : i32, i32
  }
}

</mosaic_0001>

<llo_original>
// kernel: tile.9
$region0: #{tile.9}
  %s0 = inlined_call_operand.vmem [shape: f32[4,64], index: 0, kind: input, shape index: {}]
  %s1 = inlined_call_operand.vmem [shape: f32[1,256], index: 1, kind: output, shape index: {}]
  $region1: #{tile.9} parent=0
    #allocation0 [shape = 'u8[8192]{0}', space=vmem, size = 0x2000, scoped, tag = 'scoped mem for output reshape']
    #allocation1 [shape = 'u8[4096]{0}', space=vmem, size = 0x1000, scoped, tag = 'scoped mem for input reshape']
    %s3 = sshllo.u32 0, 4
    %v4 = vld [vmem:[%s0] sm:%s3]
    %5 = vst [vmem:[#allocation1] sm:%s3] %v4
    %s6 = smov 3
    %v7 = vld [vmem:[#allocation1] ss:$2 sm:%s6]
    %vm8 = vcmask 523264
    %9 = vst.msk [vmem:[#allocation0] ss:$8 sm:$0x3] %vm8, %v7
    %s10 = scalar_lea.vmem [#allocation1], 1
    %s11 = smov 3
    %v12 = vld [vmem:[%s10] ss:$2 sm:%s11]
    %13 = vrot.lane.b32.xlu0 %v12, 64
    %v14 = vpop.permute.xlu0 %13
    %vm15 = vcmask 1048064
    %16 = vst.msk [vmem:[#allocation0] ss:$8 sm:$0x3] %vm15, %v14
    %s18 = sshllo.u32 0, 1
    %v20 = vld [vmem:[#allocation0] sm:%s18]
    %s21 = sshllo.u32 0, 1
    %22 = vst [vmem:[%s1] sm:%s21] %v20
    %s23 = scalar_lea.vmem [#allocation0], 8
    %v24 = vld [vmem:[%s23] sm:%s18]
    %s25 = sshllo.u32 0, 1
    %s26 = scalar_lea.vmem %s1, 1
    %27 = vst [vmem:[%s26] sm:%s25] %v24

// kernel: tile.8
$region0: #{tile.8}
  #allocation2 [shape = 's32[1]{0}', space=sflag, size = 0x4, scoped, tag = 'scoped memory for tile.8']
  %s0 = inlined_call_operand.hbm [shape: f32[64], index: 0, kind: input, shape index: {}]
  %s1 = inlined_call_operand.vmem [shape: f32[4,64], index: 1, kind: output, shape index: {}]
  $region1: #{tile.8} parent=0
    #allocation0 [shape = 'u8[512]{0}', space=vmem, size = 0x400, scoped, tag = 'operand span for operand 0']
    #allocation1 [shape = 's32[1]{0}', space=sflag, size = 0x4, scoped, tag = 'scoped memory for tile.8']
    %2 = vsyncpa [#allocation1], 0
    // Predicated region
    $region2: #{tile.8} parent=1 // pred_check
      _
    $region3: #{tile.8} parent=1 // pred_check_branch
      %4 = sbr.rel (0) target = $region5
    $region4: #{tile.8} parent=1 // pred_region
      %s6 = ssub.s32 16, 16
      %7 = vsyncadd [#allocation1], %s6
      %s9 = sshll.u32 [#allocation0], 4
      %s10 = int_to_ptr.vmem [resolvable:$true] %s9
      %12 = dma.hbm_to_vmem [thread:$0]  %s0, 16, %s10, [#allocation1]
    $region5: #{tile.8} parent=1 // pred_fallthru
      _
    // Predicated region
    $region6: #{tile.8} parent=1 // pred_check
      _
    $region7: #{tile.8} parent=1 // pred_check_branch
      %14 = sbr.rel (0) target = $region9
    $region8: #{tile.8} parent=1 // pred_region
      %15 = dma.done [#allocation1], 16
    $region9: #{tile.8} parent=1 // pred_fallthru
      _
    %v16 = vld [vmem:[#allocation0] ss:$0 sm:$0xff]
    %17 = vst [vmem:[%s1] sm:$0xf] %v16
    %18 = vsyncpa [#allocation1], 1

// kernel: decoder_block_forward.5
$region0: #{decoder_block_forward.5}
  #allocation0 [shape = 'u32[]', space=smem, size = 0x4, offset = 0x4, fixed_abs, tag = 'smem constant byte address 0x4 - core index']
  #allocation1 [shape = 'u32[144,128]{1,0:T(1,128)}', space=vmem, size = 0x12000, scoped, tag = 'internal scratch']
  %s0 = inlined_call_operand.vmem [shape: bf16[288,128], index: 0, kind: input, shape index: {}]
  %s1 = inlined_call_operand.vmem [shape: bf16[128,256], index: 1, kind: input, shape index: {}]
  %s2 = inlined_call_operand.vmem [shape: f32[1,256], index: 2, kind: input, shape index: {}]
  %s3 = inlined_call_operand.vmem [shape: f32[288,256], index: 3, kind: output, shape index: {}]
  %s4 = sld [smem:[#allocation0]]
  $region120: #{decoder_block_forward.5} parent=0
    _
  %s6 = ssub.s32 1, %s4
  %s7 = scalar_select 0, %s6, %s4
  $region1: #{decoder_block_forward.5} parent=0
    #allocation2 [shape = 'u8[65536]{0}', space=vmem, size = 0x10000, scoped, tag = 'input window, operand 1']
    #allocation3 [shape = 'u8[294912]{0}', space=vmem, size = 0x48000, scoped, tag = 'output window, operand 0']
    loop: start=0, step=1, limit=4
    $region2: #{decoder_block_forward.5} parent=1 // loop_pre_header
      _
    $region3: #{decoder_block_forward.5} parent=1 // loop_header
      %s9 = sphi 0, %s13
      %p10 = scmp.ge.s32.totalorder %s9, 4
      %s17 = sphi 0, %s17
      %s19 = sphi 0, %s17
      %s20 = sphi 0, %s19
      %s34 = sphi 0, %s20
      %s40 = sphi 0, %s42
      %s43 = sphi 0, %s40
      %s44 = sphi 0, %s43
      %s60 = sphi 0, %s44
      %s66 = sphi 0, %s68
      %s69 = sphi 0, %s66
      %s70 = sphi 0, %s69
      %s86 = sphi 0, %s70
      %s92 = sphi 0, %s94
      %s95 = sphi 0, %s92
      %s96 = sphi 0, %s95
      %s112 = sphi 0, %s96
    $region4: #{decoder_block_forward.5} parent=1 // loop_header_branch
      %12 = sbr.rel (%p10) target = $region8
    $region5: #{decoder_block_forward.5} parent=1 // loop_body
      %s14 = ssub.s32 %s9, 1
      %s15 = ssub.s32 %s9, 2
      %s16 = sadd.s32 %s9, 1
      %s18 = sadd.s32 %s17, 1
      %p21 = scmp.eq.s32.totalorder %s9, 1
      %p22 = scmp.ne.s32.totalorder %s17, %s19
      %p23 = scmp.eq.s32.totalorder %s9, 0
      %p24 = por %p22, %p23
      %p25 = scmp.ne.s32.totalorder %s17, %s19
      %p26 = scmp.eq.s32.totalorder %s14, 1
      %p27 = por %p25, %p26
      %p28 = scmp.ne.s32.totalorder %s19, %s20
      %p29 = scmp.eq.s32.totalorder %s14, 0
      %p30 = por %p28, %p29
      %p31 = scmp.ne.s32.totalorder %s19, %s20
      %p32 = scmp.eq.s32.totalorder %s15, 1
      %p33 = por %p31, %p32
      %p35 = scmp.ne.s32.totalorder %s20, %s34
      %p36 = scmp.eq.s32.totalorder %s15, 0
      %p37 = por %p35, %p36
      %s38 = ssub.s32 %s9, %s16
      %p39 = scmp.eq.s32.totalorder %s38, 0
      %s41 = sadd.s32 %s40, 1
      %s42 = scalar_select %p39, %s40, %s41
      %p45 = pneg %p39
      %p46 = scmp.eq.s32.totalorder %s9, 1
      %p47 = por %p45, %p46
      %p48 = scmp.ne.s32.totalorder %s40, %s43
      %p49 = scmp.eq.s32.totalorder %s9, 0
      %p50 = por %p48, %p49
      %p51 = scmp.ne.s32.totalorder %s40, %s43
      %p52 = scmp.eq.s32.totalorder %s14, 1
      %p53 = por %p51, %p52
      %p54 = scmp.ne.s32.totalorder %s43, %s44
      %p55 = scmp.eq.s32.totalorder %s14, 0
      %p56 = por %p54, %p55
      %p57 = scmp.ne.s32.totalorder %s43, %s44
      %p58 = scmp.eq.s32.totalorder %s15, 1
      %p59 = por %p57, %p58
      %p61 = scmp.ne.s32.totalorder %s44, %s60
      %p62 = scmp.eq.s32.totalorder %s15, 0
      %p63 = por %p61, %p62
      %s64 = ssub.s32 %s9, %s16
      %p65 = scmp.eq.s32.totalorder %s64, 0
      %s67 = sadd.s32 %s66, 1
      %s68 = scalar_select %p65, %s66, %s67
      %p71 = pneg %p65
      %p72 = scmp.eq.s32.totalorder %s9, 1
      %p73 = por %p71, %p72
      %p74 = scmp.ne.s32.totalorder %s66, %s69
      %p75 = scmp.eq.s32.totalorder %s9, 0
      %p76 = por %p74, %p75
      %p77 = scmp.ne.s32.totalorder %s66, %s69
      %p78 = scmp.eq.s32.totalorder %s14, 1
      %p79 = por %p77, %p78
      %p80 = scmp.ne.s32.totalorder %s69, %s70
      %p81 = scmp.eq.s32.totalorder %s14, 0
      %p82 = por %p80, %p81
      %p83 = scmp.ne.s32.totalorder %s69, %s70
      %p84 = scmp.eq.s32.totalorder %s15, 1
      %p85 = por %p83, %p84
      %p87 = scmp.ne.s32.totalorder %s70, %s86
      %p88 = scmp.eq.s32.totalorder %s15, 0
      %p89 = por %p87, %p88
      %s90 = ssub.s32 %s9, %s16
      %p91 = scmp.eq.s32.totalorder %s90, 0
      %s93 = sadd.s32 %s92, 1
      %s94 = scalar_select %p91, %s92, %s93
      %p97 = pneg %p91
      %p98 = scmp.eq.s32.totalorder %s9, 1
      %p99 = por %p97, %p98
      %p100 = scmp.ne.s32.totalorder %s92, %s95
      %p101 = scmp.eq.s32.totalorder %s9, 0
      %p102 = por %p100, %p101
      %p103 = scmp.ne.s32.totalorder %s92, %s95
      %p104 = scmp.eq.s32.totalorder %s14, 1
      %p105 = por %p103, %p104
      %p106 = scmp.ne.s32.totalorder %s95, %s96
      %p107 = scmp.eq.s32.totalorder %s14, 0
      %p108 = por %p106, %p107
      %p109 = scmp.ne.s32.totalorder %s95, %s96
      %p110 = scmp.eq.s32.totalorder %s15, 1
      %p111 = por %p109, %p110
      %p113 = scmp.ne.s32.totalorder %s96, %s112
      %p114 = scmp.eq.s32.totalorder %s15, 0
      %p115 = por %p113, %p114
      %p116 = scmp.le.s32.totalorder 1, %s9
      %p117 = scmp.lt.s32.totalorder %s9, 3
      %p118 = pnand %p116, %p117
      %p119 = pneg %p118
      // Predicated region
      $region9: #{decoder_block_forward.5} parent=5 // pred_check
        _
      $region10: #{decoder_block_forward.5} parent=5 // pred_check_branch
        %121 = sbr.rel (%p118) target = $region12
      $region11: #{decoder_block_forward.5} parent=5 // pred_region
        %s122 = ssub.s32 %s9, 1
        // Predicated region
        $region13: #{decoder_block_forward.5} parent=11 // pred_check
          %p123 = pneg %p30
        $region14: #{decoder_block_forward.5} parent=11 // pred_check_branch
          %125 = sbr.rel (%p123) target = $region16
        $region15: #{decoder_block_forward.5} parent=11 // pred_region
          _
        $region16: #{decoder_block_forward.5} parent=11 // pred_fallthru
          _
      $region12: #{decoder_block_forward.5} parent=5 // pred_fallthru
        _
      %p126 = scmp.lt.s32.totalorder %s9, 2
      // Predicated region
      $region17: #{decoder_block_forward.5} parent=5 // pred_check
        %p127 = pneg %p126
      $region18: #{decoder_block_forward.5} parent=5 // pred_check_branch
        %129 = sbr.rel (%p127) target = $region20
      $region19: #{decoder_block_forward.5} parent=5 // pred_region
        // Predicated region
        $region21: #{decoder_block_forward.5} parent=19 // pred_check
          %p130 = pneg %p50
        $region22: #{decoder_block_forward.5} parent=19 // pred_check_branch
          %132 = sbr.rel (%p130) target = $region24
        $region23: #{decoder_block_forward.5} parent=19 // pred_region
          %s133 = sand.u32 %s40, 1
          %s134 = sand.u32 %s40, 1
          %s135 = smul.addr %s134, 64
          %s136 = scalar_lea.vmem [#allocation2], %s135
          %s137 = smul.addr %s9, 4
          %s138 = scalar_lea.vmem %s1, %s137
          // Predicated region
          $region25: #{decoder_block_forward.5} parent=23 // pred_check
            _
          $region26: #{decoder_block_forward.5} parent=23 // pred_check_branch
            %140 = sbr.rel (0) target = $region28
          $region27: #{decoder_block_forward.5} parent=23 // pred_region
            // Predicated region
            $region29: #{decoder_block_forward.5} parent=27 // pred_check
              _
            $region30: #{decoder_block_forward.5} parent=27 // pred_check_branch
              %142 = sbr.rel target = $region32
            $region31: #{decoder_block_forward.5} parent=27 // pred_region
              // Predicated region
              $region44: #{decoder_block_forward.5} parent=31 // pred_check
                _
              $region45: #{decoder_block_forward.5} parent=31 // pred_check_branch
                %187 = sbr.rel (0) target = $region47
              $region46: #{decoder_block_forward.5} parent=31 // pred_region
                loop: start=0, step=1, limit=1
                $region48: #{decoder_block_forward.5} parent=46 // loop_pre_header
                  _
                $region49: #{decoder_block_forward.5} parent=46 // loop_header
                  %s189 = sphi 0, %s193
                  %p190 = scmp.ge.s32.totalorder %s189, 1
                  %s194 = sphi %s138, %s138
                  %s195 = sphi %s136, %s136
                $region50: #{decoder_block_forward.5} parent=46 // loop_header_branch
                  %192 = sbr.rel (%p190) target = $region54
                $region51: #{decoder_block_forward.5} parent=46 // loop_body
                  _
                $region52: #{decoder_block_forward.5} parent=46 // loop_footer
                  %s193 = sadd.s32 1, %s189
                $region53: #{decoder_block_forward.5} parent=46 // loop_footer_branch
                  %188 = sbr.rel target = $region49
                $region54: #{decoder_block_forward.5} parent=46 // loop_exit
                  _
                loop: start=0, step=1, limit=1
                $region55: #{decoder_block_forward.5} parent=46 // loop_pre_header
                  _
                $region56: #{decoder_block_forward.5} parent=46 // loop_header
                  %s198 = sphi 0, %s202
                  %p199 = scmp.ge.s32.totalorder %s198, 1
                  %s203 = sphi %s138, %s138
                  %s204 = sphi %s136, %s136
                $region57: #{decoder_block_forward.5} parent=46 // loop_header_branch
                  %201 = sbr.rel (%p199) target = $region61
                $region58: #{decoder_block_forward.5} parent=46 // loop_body
                  %v205 = vld [vmem:[%s203] sm:$0xf]
                  %206 = vst [vmem:[%s204] sm:$0xf] %v205
                  %v207 = vld [vmem:[%s203 + $0x8] sm:$0xf]
                  %208 = vst [vmem:[%s204 + $0x4] sm:$0xf] %v207
                  %v209 = vld [vmem:[%s203 + $0x10] sm:$0xf]
                  %210 = vst [vmem:[%s204 + $0x8] sm:$0xf] %v209
                  %v211 = vld [vmem:[%s203 + $0x18] sm:$0xf]
                  %212 = vst [vmem:[%s204 + $0xc] sm:$0xf] %v211
                  %v213 = vld [vmem:[%s203 + $0x20] sm:$0xf]
                  %214 = vst [vmem:[%s204 + $0x10] sm:$0xf] %v213
                  %v215 = vld [vmem:[%s203 + $0x28] sm:$0xf]
                  %216 = vst [vmem:[%s204 + $0x14] sm:$0xf] %v215
                  %v217 = vld [vmem:[%s203 + $0x30] sm:$0xf]
                  %218 = vst [vmem:[%s204 + $0x18] sm:$0xf] %v217
                  %v219 = vld [vmem:[%s203 + $0x38] sm:$0xf]
                  %220 = vst [vmem:[%s204 + $0x1c] sm:$0xf] %v219
                  %v221 = vld [vmem:[%s203 + $0x40] sm:$0xf]
                  %222 = vst [vmem:[%s204 + $0x20] sm:$0xf] %v221
                  %v223 = vld [vmem:[%s203 + $0x48] sm:$0xf]
                  %224 = vst [vmem:[%s204 + $0x24] sm:$0xf] %v223
                  %v225 = vld [vmem:[%s203 + $0x50] sm:$0xf]
                  %226 = vst [vmem:[%s204 + $0x28] sm:$0xf] %v225
                  %v227 = vld [vmem:[%s203 + $0x58] sm:$0xf]
                  %228 = vst [vmem:[%s204 + $0x2c] sm:$0xf] %v227
                  %v229 = vld [vmem:[%s203 + $0x60] sm:$0xf]
                  %230 = vst [vmem:[%s204 + $0x30] sm:$0xf] %v229
                  %v231 = vld [vmem:[%s203 + $0x68] sm:$0xf]
                  %232 = vst [vmem:[%s204 + $0x34] sm:$0xf] %v231
                  %v233 = vld [vmem:[%s203 + $0x70] sm:$0xf]
                  %234 = vst [vmem:[%s204 + $0x38] sm:$0xf] %v233
                  %v235 = vld [vmem:[%s203 + $0x78] sm:$0xf]
                  %236 = vst [vmem:[%s204 + $0x3c] sm:$0xf] %v235
                $region59: #{decoder_block_forward.5} parent=46 // loop_footer
                  %s202 = sadd.s32 1, %s198
                $region60: #{decoder_block_forward.5} parent=46 // loop_footer_branch
                  %197 = sbr.rel target = $region56
                $region61: #{decoder_block_forward.5} parent=46 // loop_exit
                  _
              $region47: #{decoder_block_forward.5} parent=31 // pred_fallthru
                _
            $region32: #{decoder_block_forward.5} parent=27 // pred_fallthru
              _
            // Predicated region
            $region33: #{decoder_block_forward.5} parent=27 // pred_check
              _
            $region34: #{decoder_block_forward.5} parent=27 // pred_check_branch
              %144 = sbr.rel (0) target = $region36
            $region35: #{decoder_block_forward.5} parent=27 // pred_region
              loop: start=0, step=1, limit=1
              $region37: #{decoder_block_forward.5} parent=35 // loop_pre_header
                _
              $region38: #{decoder_block_forward.5} parent=35 // loop_header
                %s147 = sphi 0, %s151
                %p148 = scmp.ge.s32.totalorder %s147, 1
                %s152 = sphi %s138, %s138
                %s153 = sphi %s136, %s136
              $region39: #{decoder_block_forward.5} parent=35 // loop_header_branch
                %150 = sbr.rel (%p148) target = $region43
              $region40: #{decoder_block_forward.5} parent=35 // loop_body
                %v154 = vld [vmem:[%s152] sm:$0xf]
                %155 = vst [vmem:[%s153] sm:$0xf] %v154
                %v156 = vld [vmem:[%s152 + $0x8] sm:$0xf]
                %157 = vst [vmem:[%s153 + $0x4] sm:$0xf] %v156
                %v158 = vld [vmem:[%s152 + $0x10] sm:$0xf]
                %159 = vst [vmem:[%s153 + $0x8] sm:$0xf] %v158
                %v160 = vld [vmem:[%s152 + $0x18] sm:$0xf]
                %161 = vst [vmem:[%s153 + $0xc] sm:$0xf] %v160
                %v162 = vld [vmem:[%s152 + $0x20] sm:$0xf]
                %163 = vst [vmem:[%s153 + $0x10] sm:$0xf] %v162
                %v164 = vld [vmem:[%s152 + $0x28] sm:$0xf]
                %165 = vst [vmem:[%s153 + $0x14] sm:$0xf] %v164
                %v166 = vld [vmem:[%s152 + $0x30] sm:$0xf]
                %167 = vst [vmem:[%s153 + $0x18] sm:$0xf] %v166
                %v168 = vld [vmem:[%s152 + $0x38] sm:$0xf]
                %169 = vst [vmem:[%s153 + $0x1c] sm:$0xf] %v168
                %v170 = vld [vmem:[%s152 + $0x40] sm:$0xf]
                %171 = vst [vmem:[%s153 + $0x20] sm:$0xf] %v170
                %v172 = vld [vmem:[%s152 + $0x48] sm:$0xf]
                %173 = vst [vmem:[%s153 + $0x24] sm:$0xf] %v172
                %v174 = vld [vmem:[%s152 + $0x50] sm:$0xf]
                %175 = vst [vmem:[%s153 + $0x28] sm:$0xf] %v174
                %v176 = vld [vmem:[%s152 + $0x58] sm:$0xf]
                %177 = vst [vmem:[%s153 + $0x2c] sm:$0xf] %v176
                %v178 = vld [vmem:[%s152 + $0x60] sm:$0xf]
                %179 = vst [vmem:[%s153 + $0x30] sm:$0xf] %v178
                %v180 = vld [vmem:[%s152 + $0x68] sm:$0xf]
                %181 = vst [vmem:[%s153 + $0x34] sm:$0xf] %v180
                %v182 = vld [vmem:[%s152 + $0x70] sm:$0xf]
                %183 = vst [vmem:[%s153 + $0x38] sm:$0xf] %v182
                %v184 = vld [vmem:[%s152 + $0x78] sm:$0xf]
                %185 = vst [vmem:[%s153 + $0x3c] sm:$0xf] %v184
              $region41: #{decoder_block_forward.5} parent=35 // loop_footer
                %s151 = sadd.s32 1, %s147
              $region42: #{decoder_block_forward.5} parent=35 // loop_footer_branch
                %146 = sbr.rel target = $region38
              $region43: #{decoder_block_forward.5} parent=35 // loop_exit
                _
            $region36: #{decoder_block_forward.5} parent=27 // pred_fallthru
              _
          $region28: #{decoder_block_forward.5} parent=23 // pred_fallthru
            _
          %237 = vnop
        $region24: #{decoder_block_forward.5} parent=19 // pred_fallthru
          _
        // Predicated region
        $region62: #{decoder_block_forward.5} parent=19 // pred_check
          %p238 = pneg %p76
        $region63: #{decoder_block_forward.5} parent=19 // pred_check_branch
          %240 = sbr.rel (%p238) target = $region65
        $region64: #{decoder_block_forward.5} parent=19 // pred_region
          %p241 = scmp.lt.s32.totalorder %s9, 1
          %s242 = scalar_select %p241, %s9, 1
          %s243 = scalar_lea.vmem %s2, %s242
        $region65: #{decoder_block_forward.5} parent=19 // pred_fallthru
          _
      $region20: #{decoder_block_forward.5} parent=5 // pred_fallthru
        _
      %p244 = scmp.le.s32.totalorder 1, %s9
      %p245 = scmp.lt.s32.totalorder %s9, 3
      %p246 = pnand %p244, %p245
      %p247 = pneg %p246
      // Predicated region
      $region66: #{decoder_block_forward.5} parent=5 // pred_check
        _
      $region67: #{decoder_block_forward.5} parent=5 // pred_check_branch
        %249 = sbr.rel (%p246) target = $region69
      $region68: #{decoder_block_forward.5} parent=5 // pred_region
        %s250 = ssub.s32 %s9, 1
        %s251 = sand.u32 %s43, 1
        %s252 = sand.u32 %s43, 1
        %s253 = smul.addr %s252, 64
        %s254 = scalar_lea.vmem [#allocation2], %s253
        // Predicated region
        $region70: #{decoder_block_forward.5} parent=68 // pred_check
          %p255 = pneg %p56
        $region71: #{decoder_block_forward.5} parent=68 // pred_check_branch
          %257 = sbr.rel (%p255) target = $region73
        $region72: #{decoder_block_forward.5} parent=68 // pred_region
          _
        $region73: #{decoder_block_forward.5} parent=68 // pred_fallthru
          _
        %p258 = pneg %p30
        %p259 = pneg %p27
        %s260 = sand.u32 %s43, 1
        %s261 = sand.u32 %s43, 1
        %s262 = smul.addr %s261, 64
        %s263 = scalar_lea.vmem [#allocation2], %s262
        %p264 = pneg %p56
        %p265 = pneg %p53
        %p266 = scmp.lt.s32.totalorder %s14, 1
        %s267 = scalar_select %p266, %s14, 1
        %s268 = scalar_lea.vmem %s2, %s267
        %p269 = pneg %p82
        %p270 = pneg %p79
        %p271 = pneg %p108
        %p272 = pneg %p105
        %s273 = sand.u32 %s95, 1
        %s274 = sand.u32 %s95, 1
        %s275 = smul.addr %s274, 288
        %s276 = scalar_lea.vmem [#allocation3], %s275
        %p277 = scmp.lt.s32.totalorder %s14, 1
        %s278 = scalar_select %p277, %s14, 1
        %s279 = scalar_lea.vmem %s2, %s278
        %v281 = vld [vmem:[%s0] sm:$0xf]
        %v282 = vld [vmem:[%s0 + $0x4] sm:$0xf]
        %v283 = vld [vmem:[%s0 + $0x8] sm:$0xf]
        %v284 = vld [vmem:[%s0 + $0xc] sm:$0xf]
        %v285 = vld [vmem:[%s0 + $0x10] sm:$0xf]
        %v286 = vld [vmem:[%s0 + $0x14] sm:$0xf]
        %v287 = vld [vmem:[%s0 + $0x18] sm:$0xf]
        %v288 = vld [vmem:[%s0 + $0x1c] sm:$0xf]
        %v289 = vld [vmem:[%s0 + $0x20] sm:$0xf]
        %v290 = vld [vmem:[%s0 + $0x24] sm:$0xf]
        %v291 = vld [vmem:[%s0 + $0x28] sm:$0xf]
        %v292 = vld [vmem:[%s0 + $0x2c] sm:$0xf]
        %v293 = vld [vmem:[%s0 + $0x30] sm:$0xf]
        %v294 = vld [vmem:[%s0 + $0x34] sm:$0xf]
        %v295 = vld [vmem:[%s0 + $0x38] sm:$0xf]
        %v296 = vld [vmem:[%s0 + $0x3c] sm:$0xf]
        %v297 = vld [vmem:[%s0 + $0x40] sm:$0xf]
        %v298 = vld [vmem:[%s0 + $0x44] sm:$0xf]
        %v299 = vld [vmem:[%s0 + $0x48] sm:$0xf]
        %v300 = vld [vmem:[%s0 + $0x4c] sm:$0xf]
        %v301 = vld [vmem:[%s0 + $0x50] sm:$0xf]
        %v302 = vld [vmem:[%s0 + $0x54] sm:$0xf]
        %v303 = vld [vmem:[%s0 + $0x58] sm:$0xf]
        %v304 = vld [vmem:[%s0 + $0x5c] sm:$0xf]
        %v305 = vld [vmem:[%s0 + $0x60] sm:$0xf]
        %v306 = vld [vmem:[%s0 + $0x64] sm:$0xf]
        %v307 = vld [vmem:[%s0 + $0x68] sm:$0xf]
        %v308 = vld [vmem:[%s0 + $0x6c] sm:$0xf]
        %v309 = vld [vmem:[%s0 + $0x70] sm:$0xf]
        %v310 = vld [vmem:[%s0 + $0x74] sm:$0xf]
        %v311 = vld [vmem:[%s0 + $0x78] sm:$0xf]
        %v312 = vld [vmem:[%s0 + $0x7c] sm:$0xf]
        %v313 = vld [vmem:[%s0 + $0x80] sm:$0xf]
        %v314 = vld [vmem:[%s0 + $0x84] sm:$0xf]
        %v315 = vld [vmem:[%s0 + $0x88] sm:$0xf]
        %v316 = vld [vmem:[%s0 + $0x8c] sm:$0xf]
        %v317 = vld [vmem:[%s254] sm:$0xf]
        %v318 = vld [vmem:[%s254 + $0x4] sm:$0xf]
        %v319 = vld [vmem:[%s254 + $0x8] sm:$0xf]
        %v320 = vld [vmem:[%s254 + $0xc] sm:$0xf]
        %v321 = vld [vmem:[%s254 + $0x10] sm:$0xf]
        %v322 = vld [vmem:[%s254 + $0x14] sm:$0xf]
        %v323 = vld [vmem:[%s254 + $0x18] sm:$0xf]
        %v324 = vld [vmem:[%s254 + $0x1c] sm:$0xf]
        %v325 = vld [vmem:[%s254 + $0x20] sm:$0xf]
        %v326 = vld [vmem:[%s254 + $0x24] sm:$0xf]
        %v327 = vld [vmem:[%s254 + $0x28] sm:$0xf]
        %v328 = vld [vmem:[%s254 + $0x2c] sm:$0xf]
        %v329 = vld [vmem:[%s254 + $0x30] sm:$0xf]
        %v330 = vld [vmem:[%s254 + $0x34] sm:$0xf]
        %v331 = vld [vmem:[%s254 + $0x38] sm:$0xf]
        %v332 = vld [vmem:[%s254 + $0x3c] sm:$0xf]
        %v333 = vld [vmem:[%s279] sm:$0x1]
        %v335 = vlaneseq
        %v336 = vshrl.u32 %v335, 7
        %v337 = vsub.s32 0, %v336
        %v338 = vrot.slane %v333, %v337
        %v376 = vunpack.c.l.b16 %v281
        %v377 = vunpack.c.l.b16 %v282
        %v378 = vunpack.c.l.b16 %v283
        %v379 = vunpack.c.l.b16 %v284
        %v380 = vunpack.c.l.b16 %v285
        %v381 = vunpack.c.l.b16 %v286
        %v382 = vunpack.c.l.b16 %v287
        %v383 = vunpack.c.l.b16 %v288
        %v384 = vunpack.c.l.b16 %v289
        %v385 = vunpack.c.l.b16 %v290
        %v386 = vunpack.c.l.b16 %v291
        %v387 = vunpack.c.l.b16 %v292
        %v388 = vunpack.c.l.b16 %v293
        %v389 = vunpack.c.l.b16 %v294
        %v390 = vunpack.c.l.b16 %v295
        %v391 = vunpack.c.l.b16 %v296
        %v392 = vunpack.c.l.b16 %v297
        %v393 = vunpack.c.l.b16 %v298
        %v394 = vunpack.c.l.b16 %v299
        %v395 = vunpack.c.l.b16 %v300
        %v396 = vunpack.c.l.b16 %v301
        %v397 = vunpack.c.l.b16 %v302
        %v398 = vunpack.c.l.b16 %v303
        %v399 = vunpack.c.l.b16 %v304
        %v400 = vunpack.c.l.b16 %v305
        %v401 = vunpack.c.l.b16 %v306
        %v402 = vunpack.c.l.b16 %v307
        %v403 = vunpack.c.l.b16 %v308
        %v404 = vunpack.c.l.b16 %v309
        %v405 = vunpack.c.l.b16 %v310
        %v406 = vunpack.c.l.b16 %v311
        %v407 = vunpack.c.l.b16 %v312
        %v408 = vunpack.c.l.b16 %v313
        %v409 = vunpack.c.l.b16 %v314
        %v410 = vunpack.c.l.b16 %v315
        %v411 = vunpack.c.l.b16 %v316
        %v412 = vpack.c.b16 %v377, %v376
        %v413 = vpack.c.b16 %v379, %v378
        %v414 = vpack.c.b16 %v381, %v380
        %v415 = vpack.c.b16 %v383, %v382
        %v416 = vpack.c.b16 %v385, %v384
        %v417 = vpack.c.b16 %v387, %v386
        %v418 = vpack.c.b16 %v389, %v388
        %v419 = vpack.c.b16 %v391, %v390
        %v420 = vpack.c.b16 %v393, %v392
        %v421 = vpack.c.b16 %v395, %v394
        %v422 = vpack.c.b16 %v397, %v396
        %v423 = vpack.c.b16 %v399, %v398
        %v424 = vpack.c.b16 %v401, %v400
        %v425 = vpack.c.b16 %v403, %v402
        %v426 = vpack.c.b16 %v405, %v404
        %v427 = vpack.c.b16 %v407, %v406
        %v428 = vpack.c.b16 %v409, %v408
        %v429 = vpack.c.b16 %v411, %v410
        %v464 = vunpack.c.l.b16 %v317
        %v465 = vunpack.c.l.b16 %v318
        %v466 = vunpack.c.l.b16 %v319
        %v467 = vunpack.c.l.b16 %v320
        %v468 = vunpack.c.l.b16 %v321
        %v469 = vunpack.c.l.b16 %v322
        %v470 = vunpack.c.l.b16 %v323
        %v471 = vunpack.c.l.b16 %v324
        %v472 = vunpack.c.l.b16 %v325
        %v473 = vunpack.c.l.b16 %v326
        %v474 = vunpack.c.l.b16 %v327
        %v475 = vunpack.c.l.b16 %v328
        %v476 = vunpack.c.l.b16 %v329
        %v477 = vunpack.c.l.b16 %v330
        %v478 = vunpack.c.l.b16 %v331
        %v479 = vunpack.c.l.b16 %v332
        %v480 = vpack.c.b16 %v465, %v464
        %v481 = vpack.c.b16 %v467, %v466
        %v482 = vpack.c.b16 %v469, %v468
        %v483 = vpack.c.b16 %v471, %v470
        %v484 = vpack.c.b16 %v473, %v472
        %v485 = vpack.c.b16 %v475, %v474
        %v486 = vpack.c.b16 %v477, %v476
        %v487 = vpack.c.b16 %v479, %v478
        %496 = vmatprep.subr.bf16.mxu0 0
        %497 = vmatpush1.bf16.msra.mxu0 %v480
        %498 = vmatprep.subr.bf16.mxu0 0
        %499 = vmatpush1.bf16.msra.mxu0 %v481
        %500 = vmatprep.subr.bf16.mxu0 0
        %501 = vmatpush1.bf16.msra.mxu0 %v482
        %502 = vmatprep.subr.bf16.mxu0 0
        %503 = vmatpush1.bf16.msra.mxu0 %v483
        %504 = vmatprep.subr.bf16.mxu0 0
        %505 = vmatpush1.bf16.msra.mxu0 %v484
        %506 = vmatprep.subr.bf16.mxu0 0
        %507 = vmatpush1.bf16.msra.mxu0 %v485
        %508 = vmatprep.subr.bf16.mxu0 0
        %509 = vmatpush1.bf16.msra.mxu0 %v486
        %510 = vmatprep.subr.bf16.mxu0 0
        %511 = vmatpush1.bf16.msra.mxu0 %v487
        %512 = vmatprep.subr.bf16.mxu0 0
        %513 = vmatpush1.bf16.msra.mxu0 0
        %514 = vmatprep.subr.bf16.mxu0 0
        %515 = vmatpush1.bf16.msra.mxu0 0
        %516 = vmatprep.subr.bf16.mxu0 0
        %517 = vmatpush1.bf16.msra.mxu0 0
        %518 = vmatprep.subr.bf16.mxu0 0
        %519 = vmatpush1.bf16.msra.mxu0 0
        %520 = vmatprep.subr.bf16.mxu0 0
        %521 = vmatpush1.bf16.msra.mxu0 0
        %522 = vmatprep.subr.bf16.mxu0 0
        %523 = vmatpush1.bf16.msra.mxu0 0
        %524 = vmatprep.subr.bf16.mxu0 0
        %525 = vmatpush1.bf16.msra.mxu0 0
        %526 = vmatprep.subr.bf16.mxu0 0
        %527 = vmatpush1.bf16.msra.mxu0 0
        %528 = vmatprep.mubr.bf16.mxu0 0
        %529 = vmatmul.mubr.bf16.gmra.mrb[0].mxu0 %v412
        %v530 = vpop.f32.mrb[0].mxu0
        %v531 = vadd.f32 %v338, %v530
        %v532 = vpop.f32.mrb[0].mxu0
        %v533 = vpop.f32.mrb[0].mxu0
        %v534 = vadd.f32 %v338, %v533
        %v535 = vpop.f32.mrb[0].mxu0
        %536 = vmatprep.mubr.bf16.mxu0 0
        %537 = vmatmul.mubr.bf16.gmra.mrb[0].mxu0 %v413
        %v538 = vpop.f32.mrb[0].mxu0
        %v539 = vadd.f32 %v338, %v538
        %v540 = vpop.f32.mrb[0].mxu0
        %v541 = vpop.f32.mrb[0].mxu0
        %v542 = vadd.f32 %v338, %v541
        %v543 = vpop.f32.mrb[0].mxu0
        %544 = vmatprep.mubr.bf16.mxu0 0
        %545 = vmatmul.mubr.bf16.gmra.mrb[0].mxu0 %v414
        %v546 = vpop.f32.mrb[0].mxu0
        %v547 = vadd.f32 %v338, %v546
        %v548 = vpop.f32.mrb[0].mxu0
        %v549 = vpop.f32.mrb[0].mxu0
        %v550 = vadd.f32 %v338, %v549
        %v551 = vpop.f32.mrb[0].mxu0
        %552 = vmatprep.mubr.bf16.mxu0 0
        %553 = vmatmul.mubr.bf16.gmra.mrb[0].mxu0 %v415
        %v554 = vpop.f32.mrb[0].mxu0
        %v555 = vadd.f32 %v338, %v554
        %v556 = vpop.f32.mrb[0].mxu0
        %v557 = vpop.f32.mrb[0].mxu0
        %v558 = vadd.f32 %v338, %v557
        %v559 = vpop.f32.mrb[0].mxu0
        %560 = vmatprep.mubr.bf16.mxu0 0
        %561 = vmatmul.mubr.bf16.gmra.mrb[0].mxu0 %v416
        %v562 = vpop.f32.mrb[0].mxu0
        %v563 = vadd.f32 %v338, %v562
        %v564 = vpop.f32.mrb[0].mxu0
        %v565 = vpop.f32.mrb[0].mxu0
        %v566 = vadd.f32 %v338, %v565
        %v567 = vpop.f32.mrb[0].mxu0
        %568 = vmatprep.mubr.bf16.mxu0 0
        %569 = vmatmul.mubr.bf16.gmra.mrb[0].mxu0 %v417
        %v570 = vpop.f32.mrb[0].mxu0
        %v571 = vadd.f32 %v338, %v570
        %v572 = vpop.f32.mrb[0].mxu0
        %v573 = vpop.f32.mrb[0].mxu0
        %v574 = vadd.f32 %v338, %v573
        %v575 = vpop.f32.mrb[0].mxu0
        %576 = vmatprep.mubr.bf16.mxu0 0
        %577 = vmatmul.mubr.bf16.gmra.mrb[0].mxu0 %v418
        %v578 = vpop.f32.mrb[0].mxu0
        %v579 = vadd.f32 %v338, %v578
        %v580 = vpop.f32.mrb[0].mxu0
        %v581 = vpop.f32.mrb[0].mxu0
        %v582 = vadd.f32 %v338, %v581
        %v583 = vpop.f32.mrb[0].mxu0
        %584 = vmatprep.mubr.bf16.mxu0 0
        %585 = vmatmul.mubr.bf16.gmra.mrb[0].mxu0 %v419
        %v586 = vpop.f32.mrb[0].mxu0
        %v587 = vadd.f32 %v338, %v586
        %v588 = vpop.f32.mrb[0].mxu0
        %v589 = vpop.f32.mrb[0].mxu0
        %v590 = vadd.f32 %v338, %v589
        %v591 = vpop.f32.mrb[0].mxu0
        %592 = vmatprep.mubr.bf16.mxu0 0
        %593 = vmatmul.mubr.bf16.gmra.mrb[0].mxu0 %v420
        %v594 = vpop.f32.mrb[0].mxu0
        %v595 = vadd.f32 %v338, %v594
        %v596 = vpop.f32.mrb[0].mxu0
        %v597 = vpop.f32.mrb[0].mxu0
        %v598 = vadd.f32 %v338, %v597
        %v599 = vpop.f32.mrb[0].mxu0
        %600 = vmatprep.mubr.bf16.mxu0 0
        %601 = vmatmul.mubr.bf16.gmra.mrb[0].mxu0 %v421
        %v602 = vpop.f32.mrb[0].mxu0
        %v603 = vadd.f32 %v338, %v602
        %v604 = vpop.f32.mrb[0].mxu0
        %v605 = vpop.f32.mrb[0].mxu0
        %v606 = vadd.f32 %v338, %v605
        %v607 = vpop.f32.mrb[0].mxu0
        %608 = vmatprep.mubr.bf16.mxu0 0
        %609 = vmatmul.mubr.bf16.gmra.mrb[0].mxu0 %v422
        %v610 = vpop.f32.mrb[0].mxu0
        %v611 = vadd.f32 %v338, %v610
        %v612 = vpop.f32.mrb[0].mxu0
        %v613 = vpop.f32.mrb[0].mxu0
        %v614 = vadd.f32 %v338, %v613
        %v615 = vpop.f32.mrb[0].mxu0
        %616 = vmatprep.mubr.bf16.mxu0 0
        %617 = vmatmul.mubr.bf16.gmra.mrb[0].mxu0 %v423
        %v618 = vpop.f32.mrb[0].mxu0
        %v619 = vadd.f32 %v338, %v618
        %v620 = vpop.f32.mrb[0].mxu0
        %v621 = vpop.f32.mrb[0].mxu0
        %v622 = vadd.f32 %v338, %v621
        %v623 = vpop.f32.mrb[0].mxu0
        %624 = vmatprep.mubr.bf16.mxu0 0
        %625 = vmatmul.mubr.bf16.gmra.mrb[0].mxu0 %v424
        %v626 = vpop.f32.mrb[0].mxu0
        %v627 = vadd.f32 %v338, %v626
        %v628 = vpop.f32.mrb[0].mxu0
        %v629 = vpop.f32.mrb[0].mxu0
        %v630 = vadd.f32 %v338, %v629
        %v631 = vpop.f32.mrb[0].mxu0
        %632 = vmatprep.mubr.bf16.mxu0 0
        %633 = vmatmul.mubr.bf16.gmra.mrb[0].mxu0 %v425
        %v634 = vpop.f32.mrb[0].mxu0
        %v635 = vadd.f32 %v338, %v634
        %v636 = vpop.f32.mrb[0].mxu0
        %v637 = vpop.f32.mrb[0].mxu0
        %v638 = vadd.f32 %v338, %v637
        %v639 = vpop.f32.mrb[0].mxu0
        %640 = vmatprep.mubr.bf16.mxu0 0
        %641 = vmatmul.mubr.bf16.gmra.mrb[0].mxu0 %v426
        %v642 = vpop.f32.mrb[0].mxu0
        %v643 = vadd.f32 %v338, %v642
        %v644 = vpop.f32.mrb[0].mxu0
        %v645 = vpop.f32.mrb[0].mxu0
        %v646 = vadd.f32 %v338, %v645
        %v647 = vpop.f32.mrb[0].mxu0
        %648 = vmatprep.mubr.bf16.mxu0 0
        %649 = vmatmul.mubr.bf16.gmra.mrb[0].mxu0 %v427
        %v650 = vpop.f32.mrb[0].mxu0
        %v651 = vadd.f32 %v338, %v650
        %v652 = vpop.f32.mrb[0].mxu0
        %v653 = vpop.f32.mrb[0].mxu0
        %v654 = vadd.f32 %v338, %v653
        %v655 = vpop.f32.mrb[0].mxu0
        %656 = vmatprep.mubr.bf16.mxu0 0
        %657 = vmatmul.mubr.bf16.gmra.mrb[0].mxu0 %v428
        %v658 = vpop.f32.mrb[0].mxu0
        %v659 = vadd.f32 %v338, %v658
        %v660 = vpop.f32.mrb[0].mxu0
        %v661 = vpop.f32.mrb[0].mxu0
        %v662 = vadd.f32 %v338, %v661
        %v663 = vpop.f32.mrb[0].mxu0
        %664 = vmatprep.mubr.bf16.mxu0 0
        %665 = vmatmul.mubr.bf16.gmra.mrb[0].mxu0 %v429
        %v666 = vpop.f32.mrb[0].mxu0
        %v667 = vadd.f32 %v338, %v666
        %v668 = vpop.f32.mrb[0].mxu0
        %v669 = vpop.f32.mrb[0].mxu0
        %v670 = vadd.f32 %v338, %v669
        %v671 = vpop.f32.mrb[0].mxu0
        %672 = vdwg.mxu0
        %673 = vst [vmem:[%s276] sm:$0xff] %v531
        %674 = vst [vmem:[%s276 + $0x8] sm:$0xff] %v534
        %675 = vst [vmem:[%s276 + $0x10] sm:$0xff] %v539
        %676 = vst [vmem:[%s276 + $0x18] sm:$0xff] %v542
        %677 = vst [vmem:[%s276 + $0x20] sm:$0xff] %v547
        %678 = vst [vmem:[%s276 + $0x28] sm:$0xff] %v550
        %679 = vst [vmem:[%s276 + $0x30] sm:$0xff] %v555
        %680 = vst [vmem:[%s276 + $0x38] sm:$0xff] %v558
        %681 = vst [vmem:[%s276 + $0x40] sm:$0xff] %v563
        %682 = vst [vmem:[%s276 + $0x48] sm:$0xff] %v566
        %683 = vst [vmem:[%s276 + $0x50] sm:$0xff] %v571
        %684 = vst [vmem:[%s276 + $0x58] sm:$0xff] %v574
        %685 = vst [vmem:[%s276 + $0x60] sm:$0xff] %v579
        %686 = vst [vmem:[%s276 + $0x68] sm:$0xff] %v582
        %687 = vst [vmem:[%s276 + $0x70] sm:$0xff] %v587
        %688 = vst [vmem:[%s276 + $0x78] sm:$0xff] %v590
        %689 = vst [vmem:[%s276 + $0x80] sm:$0xff] %v595
        %690 = vst [vmem:[%s276 + $0x88] sm:$0xff] %v598
        %691 = vst [vmem:[%s276 + $0x90] sm:$0xff] %v603
        %692 = vst [vmem:[%s276 + $0x98] sm:$0xff] %v606
        %693 = vst [vmem:[%s276 + $0xa0] sm:$0xff] %v611
        %694 = vst [vmem:[%s276 + $0xa8] sm:$0xff] %v614
        %695 = vst [vmem:[%s276 + $0xb0] sm:$0xff] %v619
        %696 = vst [vmem:[%s276 + $0xb8] sm:$0xff] %v622
        %697 = vst [vmem:[%s276 + $0xc0] sm:$0xff] %v627
        %698 = vst [vmem:[%s276 + $0xc8] sm:$0xff] %v630
        %699 = vst [vmem:[%s276 + $0xd0] sm:$0xff] %v635
        %700 = vst [vmem:[%s276 + $0xd8] sm:$0xff] %v638
        %701 = vst [vmem:[%s276 + $0xe0] sm:$0xff] %v643
        %702 = vst [vmem:[%s276 + $0xe8] sm:$0xff] %v646
        %703 = vst [vmem:[%s276 + $0xf0] sm:$0xff] %v651
        %704 = vst [vmem:[%s276 + $0xf8] sm:$0xff] %v654
        %705 = vst [vmem:[%s276 + $0x100] sm:$0xff] %v659
        %706 = vst [vmem:[%s276 + $0x108] sm:$0xff] %v662
        %707 = vst [vmem:[%s276 + $0x110] sm:$0xff] %v667
        %708 = vst [vmem:[%s276 + $0x118] sm:$0xff] %v670
        %s709 = sand.u32 %s95, 1
        %s710 = sand.u32 %s95, 1
        %s711 = smul.addr %s710, 288
        %s712 = scalar_lea.vmem [#allocation3], %s711
        // Predicated region
        $region74: #{decoder_block_forward.5} parent=68 // pred_check
          %p713 = pneg %p105
        $region75: #{decoder_block_forward.5} parent=68 // pred_check_branch
          %715 = sbr.rel (%p713) target = $region77
        $region76: #{decoder_block_forward.5} parent=68 // pred_region
          %s716 = smul.addr %s14, 8
          %s717 = scalar_lea.vmem %s3, %s716
          // Predicated region
          $region78: #{decoder_block_forward.5} parent=76 // pred_check
            _
          $region79: #{decoder_block_forward.5} parent=76 // pred_check_branch
            %719 = sbr.rel (0) target = $region81
          $region80: #{decoder_block_forward.5} parent=76 // pred_region
            // Predicated region
            $region82: #{decoder_block_forward.5} parent=80 // pred_check
              _
            $region83: #{decoder_block_forward.5} parent=80 // pred_check_branch
              %721 = sbr.rel (0) target = $region85
            $region84: #{decoder_block_forward.5} parent=80 // pred_region
              // Predicated region
              $region97: #{decoder_block_forward.5} parent=84 // pred_check
                _
              $region98: #{decoder_block_forward.5} parent=84 // pred_check_branch
                %806 = sbr.rel (0) target = $region100
              $region99: #{decoder_block_forward.5} parent=84 // pred_region
                loop: start=0, step=1, limit=1
                $region101: #{decoder_block_forward.5} parent=99 // loop_pre_header
                  _
                $region102: #{decoder_block_forward.5} parent=99 // loop_header
                  %s808 = sphi 0, %s812
                  %p809 = scmp.ge.s32.totalorder %s808, 1
                  %s813 = sphi %s712, %s712
                  %s814 = sphi %s717, %s717
                $region103: #{decoder_block_forward.5} parent=99 // loop_header_branch
                  %811 = sbr.rel (%p809) target = $region107
                $region104: #{decoder_block_forward.5} parent=99 // loop_body
                  %v815 = vld [vmem:[%s813] sm:$0xff]
                  %816 = vst [vmem:[%s814] sm:$0xff] %v815
                  %v817 = vld [vmem:[%s813 + $0x8] sm:$0xff]
                  %818 = vst [vmem:[%s814 + $0x10] sm:$0xff] %v817
                  %v819 = vld [vmem:[%s813 + $0x10] sm:$0xff]
                  %820 = vst [vmem:[%s814 + $0x20] sm:$0xff] %v819
                  %v821 = vld [vmem:[%s813 + $0x18] sm:$0xff]
                  %822 = vst [vmem:[%s814 + $0x30] sm:$0xff] %v821
                  %v823 = vld [vmem:[%s813 + $0x20] sm:$0xff]
                  %824 = vst [vmem:[%s814 + $0x40] sm:$0xff] %v823
                  %v825 = vld [vmem:[%s813 + $0x28] sm:$0xff]
                  %826 = vst [vmem:[%s814 + $0x50] sm:$0xff] %v825
                  %v827 = vld [vmem:[%s813 + $0x30] sm:$0xff]
                  %828 = vst [vmem:[%s814 + $0x60] sm:$0xff] %v827
                  %v829 = vld [vmem:[%s813 + $0x38] sm:$0xff]
                  %830 = vst [vmem:[%s814 + $0x70] sm:$0xff] %v829
                  %v831 = vld [vmem:[%s813 + $0x40] sm:$0xff]
                  %832 = vst [vmem:[%s814 + $0x80] sm:$0xff] %v831
                  %v833 = vld [vmem:[%s813 + $0x48] sm:$0xff]
                  %834 = vst [vmem:[%s814 + $0x90] sm:$0xff] %v833
                  %v835 = vld [vmem:[%s813 + $0x50] sm:$0xff]
                  %836 = vst [vmem:[%s814 + $0xa0] sm:$0xff] %v835
                  %v837 = vld [vmem:[%s813 + $0x58] sm:$0xff]
                  %838 = vst [vmem:[%s814 + $0xb0] sm:$0xff] %v837
                  %v839 = vld [vmem:[%s813 + $0x60] sm:$0xff]
                  %840 = vst [vmem:[%s814 + $0xc0] sm:$0xff] %v839
                  %v841 = vld [vmem:[%s813 + $0x68] sm:$0xff]
                  %842 = vst [vmem:[%s814 + $0xd0] sm:$0xff] %v841
                  %v843 = vld [vmem:[%s813 + $0x70] sm:$0xff]
                  %844 = vst [vmem:[%s814 + $0xe0] sm:$0xff] %v843
                  %v845 = vld [vmem:[%s813 + $0x78] sm:$0xff]
                  %846 = vst [vmem:[%s814 + $0xf0] sm:$0xff] %v845
                  %v847 = vld [vmem:[%s813 + $0x80] sm:$0xff]
                  %848 = vst [vmem:[%s814 + $0x100] sm:$0xff] %v847
                  %v849 = vld [vmem:[%s813 + $0x88] sm:$0xff]
                  %850 = vst [vmem:[%s814 + $0x110] sm:$0xff] %v849
                  %v851 = vld [vmem:[%s813 + $0x90] sm:$0xff]
                  %852 = vst [vmem:[%s814 + $0x120] sm:$0xff] %v851
                  %v853 = vld [vmem:[%s813 + $0x98] sm:$0xff]
                  %854 = vst [vmem:[%s814 + $0x130] sm:$0xff] %v853
                  %v855 = vld [vmem:[%s813 + $0xa0] sm:$0xff]
                  %856 = vst [vmem:[%s814 + $0x140] sm:$0xff] %v855
                  %v857 = vld [vmem:[%s813 + $0xa8] sm:$0xff]
                  %858 = vst [vmem:[%s814 + $0x150] sm:$0xff] %v857
                  %v859 = vld [vmem:[%s813 + $0xb0] sm:$0xff]
                  %860 = vst [vmem:[%s814 + $0x160] sm:$0xff] %v859
                  %v861 = vld [vmem:[%s813 + $0xb8] sm:$0xff]
                  %862 = vst [vmem:[%s814 + $0x170] sm:$0xff] %v861
                  %v863 = vld [vmem:[%s813 + $0xc0] sm:$0xff]
                  %864 = vst [vmem:[%s814 + $0x180] sm:$0xff] %v863
                  %v865 = vld [vmem:[%s813 + $0xc8] sm:$0xff]
                  %866 = vst [vmem:[%s814 + $0x190] sm:$0xff] %v865
                  %v867 = vld [vmem:[%s813 + $0xd0] sm:$0xff]
                  %868 = vst [vmem:[%s814 + $0x1a0] sm:$0xff] %v867
                  %v869 = vld [vmem:[%s813 + $0xd8] sm:$0xff]
                  %870 = vst [vmem:[%s814 + $0x1b0] sm:$0xff] %v869
                  %v871 = vld [vmem:[%s813 + $0xe0] sm:$0xff]
                  %872 = vst [vmem:[%s814 + $0x1c0] sm:$0xff] %v871
                  %v873 = vld [vmem:[%s813 + $0xe8] sm:$0xff]
                  %874 = vst [vmem:[%s814 + $0x1d0] sm:$0xff] %v873
                  %v875 = vld [vmem:[%s813 + $0xf0] sm:$0xff]
                  %876 = vst [vmem:[%s814 + $0x1e0] sm:$0xff] %v875
                  %v877 = vld [vmem:[%s813 + $0xf8] sm:$0xff]
                  %878 = vst [vmem:[%s814 + $0x1f0] sm:$0xff] %v877
                  %v879 = vld [vmem:[%s813 + $0x100] sm:$0xff]
                  %880 = vst [vmem:[%s814 + $0x200] sm:$0xff] %v879
                  %v881 = vld [vmem:[%s813 + $0x108] sm:$0xff]
                  %882 = vst [vmem:[%s814 + $0x210] sm:$0xff] %v881
                  %v883 = vld [vmem:[%s813 + $0x110] sm:$0xff]
                  %884 = vst [vmem:[%s814 + $0x220] sm:$0xff] %v883
                  %v885 = vld [vmem:[%s813 + $0x118] sm:$0xff]
                  %886 = vst [vmem:[%s814 + $0x230] sm:$0xff] %v885
                $region105: #{decoder_block_forward.5} parent=99 // loop_footer
                  %s812 = sadd.s32 1, %s808
                $region106: #{decoder_block_forward.5} parent=99 // loop_footer_branch
                  %807 = sbr.rel target = $region102
                $region107: #{decoder_block_forward.5} parent=99 // loop_exit
                  _
              $region100: #{decoder_block_forward.5} parent=84 // pred_fallthru
                _
              // Predicated region
              $region108: #{decoder_block_forward.5} parent=84 // pred_check
                _
              $region109: #{decoder_block_forward.5} parent=84 // pred_check_branch
                %888 = sbr.rel target = $region111
              $region110: #{decoder_block_forward.5} parent=84 // pred_region
                _
              $region111: #{decoder_block_forward.5} parent=84 // pred_fallthru
                _
            $region85: #{decoder_block_forward.5} parent=80 // pred_fallthru
              _
            // Predicated region
            $region86: #{decoder_block_forward.5} parent=80 // pred_check
              _
            $region87: #{decoder_block_forward.5} parent=80 // pred_check_branch
              %723 = sbr.rel target = $region89
            $region88: #{decoder_block_forward.5} parent=80 // pred_region
              loop: start=0, step=1, limit=1
              $region90: #{decoder_block_forward.5} parent=88 // loop_pre_header
                _
              $region91: #{decoder_block_forward.5} parent=88 // loop_header
                %s726 = sphi 0, %s730
                %p727 = scmp.ge.s32.totalorder %s726, 1
                %s731 = sphi %s712, %s712
                %s732 = sphi %s717, %s717
              $region92: #{decoder_block_forward.5} parent=88 // loop_header_branch
                %729 = sbr.rel (%p727) target = $region96
              $region93: #{decoder_block_forward.5} parent=88 // loop_body
                %v733 = vld [vmem:[%s731] sm:$0xff]
                %734 = vst [vmem:[%s732] sm:$0xff] %v733
                %v735 = vld [vmem:[%s731 + $0x8] sm:$0xff]
                %736 = vst [vmem:[%s732 + $0x10] sm:$0xff] %v735
                %v737 = vld [vmem:[%s731 + $0x10] sm:$0xff]
                %738 = vst [vmem:[%s732 + $0x20] sm:$0xff] %v737
                %v739 = vld [vmem:[%s731 + $0x18] sm:$0xff]
                %740 = vst [vmem:[%s732 + $0x30] sm:$0xff] %v739
                %v741 = vld [vmem:[%s731 + $0x20] sm:$0xff]
                %742 = vst [vmem:[%s732 + $0x40] sm:$0xff] %v741
                %v743 = vld [vmem:[%s731 + $0x28] sm:$0xff]
                %744 = vst [vmem:[%s732 + $0x50] sm:$0xff] %v743
                %v745 = vld [vmem:[%s731 + $0x30] sm:$0xff]
                %746 = vst [vmem:[%s732 + $0x60] sm:$0xff] %v745
                %v747 = vld [vmem:[%s731 + $0x38] sm:$0xff]
                %748 = vst [vmem:[%s732 + $0x70] sm:$0xff] %v747
                %v749 = vld [vmem:[%s731 + $0x40] sm:$0xff]
                %750 = vst [vmem:[%s732 + $0x80] sm:$0xff] %v749
                %v751 = vld [vmem:[%s731 + $0x48] sm:$0xff]
                %752 = vst [vmem:[%s732 + $0x90] sm:$0xff] %v751
                %v753 = vld [vmem:[%s731 + $0x50] sm:$0xff]
                %754 = vst [vmem:[%s732 + $0xa0] sm:$0xff] %v753
                %v755 = vld [vmem:[%s731 + $0x58] sm:$0xff]
                %756 = vst [vmem:[%s732 + $0xb0] sm:$0xff] %v755
                %v757 = vld [vmem:[%s731 + $0x60] sm:$0xff]
                %758 = vst [vmem:[%s732 + $0xc0] sm:$0xff] %v757
                %v759 = vld [vmem:[%s731 + $0x68] sm:$0xff]
                %760 = vst [vmem:[%s732 + $0xd0] sm:$0xff] %v759
                %v761 = vld [vmem:[%s731 + $0x70] sm:$0xff]
                %762 = vst [vmem:[%s732 + $0xe0] sm:$0xff] %v761
                %v763 = vld [vmem:[%s731 + $0x78] sm:$0xff]
                %764 = vst [vmem:[%s732 + $0xf0] sm:$0xff] %v763
                %v765 = vld [vmem:[%s731 + $0x80] sm:$0xff]
                %766 = vst [vmem:[%s732 + $0x100] sm:$0xff] %v765
                %v767 = vld [vmem:[%s731 + $0x88] sm:$0xff]
                %768 = vst [vmem:[%s732 + $0x110] sm:$0xff] %v767
                %v769 = vld [vmem:[%s731 + $0x90] sm:$0xff]
                %770 = vst [vmem:[%s732 + $0x120] sm:$0xff] %v769
                %v771 = vld [vmem:[%s731 + $0x98] sm:$0xff]
                %772 = vst [vmem:[%s732 + $0x130] sm:$0xff] %v771
                %v773 = vld [vmem:[%s731 + $0xa0] sm:$0xff]
                %774 = vst [vmem:[%s732 + $0x140] sm:$0xff] %v773
                %v775 = vld [vmem:[%s731 + $0xa8] sm:$0xff]
                %776 = vst [vmem:[%s732 + $0x150] sm:$0xff] %v775
                %v777 = vld [vmem:[%s731 + $0xb0] sm:$0xff]
                %778 = vst [vmem:[%s732 + $0x160] sm:$0xff] %v777
                %v779 = vld [vmem:[%s731 + $0xb8] sm:$0xff]
                %780 = vst [vmem:[%s732 + $0x170] sm:$0xff] %v779
                %v781 = vld [vmem:[%s731 + $0xc0] sm:$0xff]
                %782 = vst [vmem:[%s732 + $0x180] sm:$0xff] %v781
                %v783 = vld [vmem:[%s731 + $0xc8] sm:$0xff]
                %784 = vst [vmem:[%s732 + $0x190] sm:$0xff] %v783
                %v785 = vld [vmem:[%s731 + $0xd0] sm:$0xff]
                %786 = vst [vmem:[%s732 + $0x1a0] sm:$0xff] %v785
                %v787 = vld [vmem:[%s731 + $0xd8] sm:$0xff]
                %788 = vst [vmem:[%s732 + $0x1b0] sm:$0xff] %v787
                %v789 = vld [vmem:[%s731 + $0xe0] sm:$0xff]
                %790 = vst [vmem:[%s732 + $0x1c0] sm:$0xff] %v789
                %v791 = vld [vmem:[%s731 + $0xe8] sm:$0xff]
                %792 = vst [vmem:[%s732 + $0x1d0] sm:$0xff] %v791
                %v793 = vld [vmem:[%s731 + $0xf0] sm:$0xff]
                %794 = vst [vmem:[%s732 + $0x1e0] sm:$0xff] %v793
                %v795 = vld [vmem:[%s731 + $0xf8] sm:$0xff]
                %796 = vst [vmem:[%s732 + $0x1f0] sm:$0xff] %v795
                %v797 = vld [vmem:[%s731 + $0x100] sm:$0xff]
                %798 = vst [vmem:[%s732 + $0x200] sm:$0xff] %v797
                %v799 = vld [vmem:[%s731 + $0x108] sm:$0xff]
                %800 = vst [vmem:[%s732 + $0x210] sm:$0xff] %v799
                %v801 = vld [vmem:[%s731 + $0x110] sm:$0xff]
                %802 = vst [vmem:[%s732 + $0x220] sm:$0xff] %v801
                %v803 = vld [vmem:[%s731 + $0x118] sm:$0xff]
                %804 = vst [vmem:[%s732 + $0x230] sm:$0xff] %v803
              $region94: #{decoder_block_forward.5} parent=88 // loop_footer
                %s730 = sadd.s32 1, %s726
              $region95: #{decoder_block_forward.5} parent=88 // loop_footer_branch
                %725 = sbr.rel target = $region91
              $region96: #{decoder_block_forward.5} parent=88 // loop_exit
                _
            $region89: #{decoder_block_forward.5} parent=80 // pred_fallthru
              _
          $region81: #{decoder_block_forward.5} parent=76 // pred_fallthru
            _
          %889 = vnop
        $region77: #{decoder_block_forward.5} parent=68 // pred_fallthru
          _
      $region69: #{decoder_block_forward.5} parent=5 // pred_fallthru
        _
      %p890 = scmp.le.s32.totalorder 2, %s9
      // Predicated region
      $region112: #{decoder_block_forward.5} parent=5 // pred_check
        %p891 = pneg %p890
      $region113: #{decoder_block_forward.5} parent=5 // pred_check_branch
        %893 = sbr.rel (%p891) target = $region115
      $region114: #{decoder_block_forward.5} parent=5 // pred_region
        %s894 = ssub.s32 %s9, 2
        // Predicated region
        $region116: #{decoder_block_forward.5} parent=114 // pred_check
          %p895 = pneg %p111
        $region117: #{decoder_block_forward.5} parent=114 // pred_check_branch
          %897 = sbr.rel (%p895) target = $region119
        $region118: #{decoder_block_forward.5} parent=114 // pred_region
          %s898 = sand.u32 %s96, 1
          %s899 = sand.u32 %s96, 1
          %s900 = smul.addr %s899, 288
          %s901 = scalar_lea.vmem [#allocation3], %s900
        $region119: #{decoder_block_forward.5} parent=114 // pred_fallthru
          _
      $region115: #{decoder_block_forward.5} parent=5 // pred_fallthru
        _
    $region6: #{decoder_block_forward.5} parent=1 // loop_footer
      %s13 = sadd.s32 1, %s9
    $region7: #{decoder_block_forward.5} parent=1 // loop_footer_branch
      %8 = sbr.rel target = $region3
    $region8: #{decoder_block_forward.5} parent=1 // loop_exit
      _

// kernel: decoder_block_forward.3
$region0: #{decoder_block_forward.3}
  #allocation0 [shape = 'u32[]', space=smem, size = 0x4, offset = 0x4, fixed_abs, tag = 'smem constant byte address 0x4 - core index']
  #allocation1 [shape = 'u32[144,128]{1,0:T(1,128)}', space=vmem, size = 0x12000, scoped, tag = 'internal scratch']
  %s0 = inlined_call_operand.vmem [shape: f32[2,258,64], index: 0, kind: input, shape index: {}]
  %s1 = inlined_call_operand.vmem [shape: bf16[9,64,128], index: 1, kind: input, shape index: {}]
  %s2 = inlined_call_operand.vmem [shape: f32[1,128], index: 2, kind: input, shape index: {}]
  %s3 = inlined_call_operand.vmem [shape: f32[1,128], index: 3, kind: input, shape index: {}]
  %s4 = inlined_call_operand.vmem [shape: f32[1,128], index: 4, kind: input, shape index: {}]
  %s5 = inlined_call_operand.vmem [shape: f32[224,1], index: 5, kind: input, shape index: {}]
  %s6 = inlined_call_operand.vmem [shape: f32[2,224,128], index: 6, kind: output, shape index: {}]
  %s7 = sld [smem:[#allocation0]]
  $region34: #{decoder_block_forward.3} parent=0
    _
  %s9 = ssub.s32 1, %s7
  %s10 = scalar_select 0, %s9, %s7
  // Predicated region
  $region2: #{decoder_block_forward.3} parent=0 // pred_check
    _
  $region3: #{decoder_block_forward.3} parent=0 // pred_check_branch
    %12 = sbr.rel (0) target = $region5
  $region4: #{decoder_block_forward.3} parent=0 // pred_region
    _
  $region5: #{decoder_block_forward.3} parent=0 // pred_fallthru
    _
  // Predicated region
  $region6: #{decoder_block_forward.3} parent=0 // pred_check
    _
  $region7: #{decoder_block_forward.3} parent=0 // pred_check_branch
    %14 = sbr.rel (0) target = $region9
  $region8: #{decoder_block_forward.3} parent=0 // pred_region
    _
  $region9: #{decoder_block_forward.3} parent=0 // pred_fallthru
    _
  // Predicated region
  $region10: #{decoder_block_forward.3} parent=0 // pred_check
    _
  $region11: #{decoder_block_forward.3} parent=0 // pred_check_branch
    %16 = sbr.rel (0) target = $region13
  $region12: #{decoder_block_forward.3} parent=0 // pred_region
    _
  $region13: #{decoder_block_forward.3} parent=0 // pred_fallthru
    _
  // Predicated region
  $region14: #{decoder_block_forward.3} parent=0 // pred_check
    _
  $region15: #{decoder_block_forward.3} parent=0 // pred_check_branch
    %18 = sbr.rel (0) target = $region17
  $region16: #{decoder_block_forward.3} parent=0 // pred_region
    _
  $region17: #{decoder_block_forward.3} parent=0 // pred_fallthru
    _
  // Predicated region
  $region18: #{decoder_block_forward.3} parent=0 // pred_check
    _
  $region19: #{decoder_block_forward.3} parent=0 // pred_check_branch
    %20 = sbr.rel (0) target = $region21
  $region20: #{decoder_block_forward.3} parent=0 // pred_region
    _
  $region21: #{decoder_block_forward.3} parent=0 // pred_fallthru
    _
  // Predicated region
  $region22: #{decoder_block_forward.3} parent=0 // pred_check
    _
  $region23: #{decoder_block_forward.3} parent=0 // pred_check_branch
    %22 = sbr.rel (0) target = $region25
  $region24: #{decoder_block_forward.3} parent=0 // pred_region
    _
  $region25: #{decoder_block_forward.3} parent=0 // pred_fallthru
    _
  %v24 = vld [vmem:[%s5] sm:$0xff]
  %v25 = vld [vmem:[%s5 + $0x8] sm:$0xff]
  %v26 = vld [vmem:[%s5 + $0x10] sm:$0xff]
  %v27 = vld [vmem:[%s5 + $0x18] sm:$0xff]
  %v28 = vld [vmem:[%s5 + $0x20] sm:$0xff]
  %v29 = vld [vmem:[%s5 + $0x28] sm:$0xff]
  %v30 = vld [vmem:[%s5 + $0x30] sm:$0xff]
  %v31 = vld [vmem:[%s5 + $0x38] sm:$0xff]
  %v32 = vld [vmem:[%s5 + $0x40] sm:$0xff]
  %v33 = vld [vmem:[%s5 + $0x48] sm:$0xff]
  %v34 = vld [vmem:[%s5 + $0x50] sm:$0xff]
  %v35 = vld [vmem:[%s5 + $0x58] sm:$0xff]
  %v36 = vld [vmem:[%s5 + $0x60] sm:$0xff]
  %v37 = vld [vmem:[%s5 + $0x68] sm:$0xff]
  %v38 = vld [vmem:[%s5 + $0x70] sm:$0xff]
  %v39 = vld [vmem:[%s5 + $0x78] sm:$0xff]
  %v40 = vld [vmem:[%s5 + $0x80] sm:$0xff]
  %v41 = vld [vmem:[%s5 + $0x88] sm:$0xff]
  %v42 = vld [vmem:[%s5 + $0x90] sm:$0xff]
  %v43 = vld [vmem:[%s5 + $0x98] sm:$0xff]
  %v44 = vld [vmem:[%s5 + $0xa0] sm:$0xff]
  %v45 = vld [vmem:[%s5 + $0xa8] sm:$0xff]
  %v46 = vld [vmem:[%s5 + $0xb0] sm:$0xff]
  %v47 = vld [vmem:[%s5 + $0xb8] sm:$0xff]
  %v48 = vld [vmem:[%s5 + $0xc0] sm:$0xff]
  %v49 = vld [vmem:[%s5 + $0xc8] sm:$0xff]
  %v50 = vld [vmem:[%s5 + $0xd0] sm:$0xff]
  %v51 = vld [vmem:[%s5 + $0xd8] sm:$0xff]
  %v52 = vld [vmem:[%s2] sm:$0x1]
  %v53 = vld [vmem:[%s0] sm:$0xff]
  %v54 = vld [vmem:[%s0 + $0x8] sm:$0xff]
  %v55 = vld [vmem:[%s0 + $0x10] sm:$0xff]
  %v56 = vld [vmem:[%s0 + $0x18] sm:$0xff]
  %v57 = vld [vmem:[%s0 + $0x20] sm:$0xff]
  %v58 = vld [vmem:[%s0 + $0x28] sm:$0xff]
  %v59 = vld [vmem:[%s0 + $0x30] sm:$0xff]
  %v60 = vld [vmem:[%s0 + $0x38] sm:$0xff]
  %v61 = vld [vmem:[%s0 + $0x40] sm:$0xff]
  %v62 = vld [vmem:[%s0 + $0x48] sm:$0xff]
  %v63 = vld [vmem:[%s0 + $0x50] sm:$0xff]
  %v64 = vld [vmem:[%s0 + $0x58] sm:$0xff]
  %v65 = vld [vmem:[%s0 + $0x60] sm:$0xff]
  %v66 = vld [vmem:[%s0 + $0x68] sm:$0xff]
  %v67 = vld [vmem:[%s0 + $0x70] sm:$0xff]
  %v68 = vld [vmem:[%s0 + $0x78] sm:$0xff]
  %v69 = vld [vmem:[%s0 + $0x80] sm:$0xff]
  %v70 = vld [vmem:[%s0 + $0x88] sm:$0xff]
  %v71 = vld [vmem:[%s0 + $0x90] sm:$0xff]
  %v72 = vld [vmem:[%s0 + $0x98] sm:$0xff]
  %v73 = vld [vmem:[%s0 + $0xa0] sm:$0xff]
  %v74 = vld [vmem:[%s0 + $0xa8] sm:$0xff]
  %v75 = vld [vmem:[%s0 + $0xb0] sm:$0xff]
  %v76 = vld [vmem:[%s0 + $0xb8] sm:$0xff]
  %v77 = vld [vmem:[%s0 + $0xc0] sm:$0xff]
  %v78 = vld [vmem:[%s0 + $0xc8] sm:$0xff]
  %v79 = vld [vmem:[%s0 + $0xd0] sm:$0xff]
  %v80 = vld [vmem:[%s0 + $0xd8] sm:$0xff]
  %v81 = vpack.c.bf16 %v54, %v53
  %v82 = vpack.c.bf16 %v56, %v55
  %v83 = vpack.c.bf16 %v58, %v57
  %v84 = vpack.c.bf16 %v60, %v59
  %v85 = vpack.c.bf16 %v62, %v61
  %v86 = vpack.c.bf16 %v64, %v63
  %v87 = vpack.c.bf16 %v66, %v65
  %v88 = vpack.c.bf16 %v68, %v67
  %v89 = vpack.c.bf16 %v70, %v69
  %v90 = vpack.c.bf16 %v72, %v71
  %v91 = vpack.c.bf16 %v74, %v73
  %v92 = vpack.c.bf16 %v76, %v75
  %v93 = vpack.c.bf16 %v78, %v77
  %v94 = vpack.c.bf16 %v80, %v79
  %v95 = vld [vmem:[%s1] sm:$0xf]
  %v96 = vld [vmem:[%s1 + $0x4] sm:$0xf]
  %v97 = vld [vmem:[%s1 + $0x8] sm:$0xf]
  %v98 = vld [vmem:[%s1 + $0xc] sm:$0xf]
  %v99 = vld [vmem:[%s1 + $0x10] sm:$0xf]
  %v100 = vld [vmem:[%s1 + $0x14] sm:$0xf]
  %v101 = vld [vmem:[%s1 + $0x18] sm:$0xf]
  %v102 = vld [vmem:[%s1 + $0x1c] sm:$0xf]
  %v103 = vld [vmem:[%s0 + $0x1] sm:$0xff]
  %v104 = vld [vmem:[%s0 + $0x9] sm:$0xff]
  %v105 = vld [vmem:[%s0 + $0x11] sm:$0xff]
  %v106 = vld [vmem:[%s0 + $0x19] sm:$0xff]
  %v107 = vld [vmem:[%s0 + $0x21] sm:$0xff]
  %v108 = vld [vmem:[%s0 + $0x29] sm:$0xff]
  %v109 = vld [vmem:[%s0 + $0x31] sm:$0xff]
  %v110 = vld [vmem:[%s0 + $0x39] sm:$0xff]
  %v111 = vld [vmem:[%s0 + $0x41] sm:$0xff]
  %v112 = vld [vmem:[%s0 + $0x49] sm:$0xff]
  %v113 = vld [vmem:[%s0 + $0x51] sm:$0xff]
  %v114 = vld [vmem:[%s0 + $0x59] sm:$0xff]
  %v115 = vld [vmem:[%s0 + $0x61] sm:$0xff]
  %v116 = vld [vmem:[%s0 + $0x69] sm:$0xff]
  %v117 = vld [vmem:[%s0 + $0x71] sm:$0xff]
  %v118 = vld [vmem:[%s0 + $0x79] sm:$0xff]
  %v119 = vld [vmem:[%s0 + $0x81] sm:$0xff]
  %v120 = vld [vmem:[%s0 + $0x89] sm:$0xff]
  %v121 = vld [vmem:[%s0 + $0x91] sm:$0xff]
  %v122 = vld [vmem:[%s0 + $0x99] sm:$0xff]
  %v123 = vld [vmem:[%s0 + $0xa1] sm:$0xff]
  %v124 = vld [vmem:[%s0 + $0xa9] sm:$0xff]
  %v125 = vld [vmem:[%s0 + $0xb1] sm:$0xff]
  %v126 = vld [vmem:[%s0 + $0xb9] sm:$0xff]
  %v127 = vld [vmem:[%s0 + $0xc1] sm:$0xff]
  %v128 = vld [vmem:[%s0 + $0xc9] sm:$0xff]
  %v129 = vld [vmem:[%s0 + $0xd1] sm:$0xff]
  %v130 = vld [vmem:[%s0 + $0xd9] sm:$0xff]
  %v131 = vpack.c.bf16 %v104, %v103
  %v132 = vpack.c.bf16 %v106, %v105
  %v133 = vpack.c.bf16 %v108, %v107
  %v134 = vpack.c.bf16 %v110, %v109
  %v135 = vpack.c.bf16 %v112, %v111
  %v136 = vpack.c.bf16 %v114, %v113
  %v137 = vpack.c.bf16 %v116, %v115
  %v138 = vpack.c.bf16 %v118, %v117
  %v139 = vpack.c.bf16 %v120, %v119
  %v140 = vpack.c.bf16 %v122, %v121
  %v141 = vpack.c.bf16 %v124, %v123
  %v142 = vpack.c.bf16 %v126, %v125
  %v143 = vpack.c.bf16 %v128, %v127
  %v144 = vpack.c.bf16 %v130, %v129
  %s145 = scalar_lea.vmem %s1, 32
  %v146 = vld [vmem:[%s145] sm:$0xf]
  %v147 = vld [vmem:[%s145 + $0x4] sm:$0xf]
  %v148 = vld [vmem:[%s145 + $0x8] sm:$0xf]
  %v149 = vld [vmem:[%s145 + $0xc] sm:$0xf]
  %v150 = vld [vmem:[%s145 + $0x10] sm:$0xf]
  %v151 = vld [vmem:[%s145 + $0x14] sm:$0xf]
  %v152 = vld [vmem:[%s145 + $0x18] sm:$0xf]
  %v153 = vld [vmem:[%s145 + $0x1c] sm:$0xf]
  %v162 = vunpack.c.l.b16 %v146
  %v163 = vunpack.c.l.b16 %v147
  %v164 = vunpack.c.l.b16 %v148
  %v165 = vunpack.c.l.b16 %v149
  %v166 = vunpack.c.l.b16 %v150
  %v167 = vunpack.c.l.b16 %v151
  %v168 = vunpack.c.l.b16 %v152
  %v169 = vunpack.c.l.b16 %v153
  %v170 = vpack.c.b16 %v163, %v162
  %v171 = vpack.c.b16 %v165, %v164
  %v172 = vpack.c.b16 %v167, %v166
  %v173 = vpack.c.b16 %v169, %v168
  %vm178 = vcmask 523264
  %v180 = vsel %vm178, %v131, 0
  %v183 = vsel %vm178, %v132, 0
  %v186 = vsel %vm178, %v133, 0
  %v189 = vsel %vm178, %v134, 0
  %v192 = vsel %vm178, %v135, 0
  %v195 = vsel %vm178, %v136, 0
  %v198 = vsel %vm178, %v137, 0
  %v201 = vsel %vm178, %v138, 0
  %v204 = vsel %vm178, %v139, 0
  %v207 = vsel %vm178, %v140, 0
  %v210 = vsel %vm178, %v141, 0
  %v213 = vsel %vm178, %v142, 0
  %v216 = vsel %vm178, %v143, 0
  %v219 = vsel %vm178, %v144, 0
  %221 = vmatprep.subr.bf16.mxu0 0
  %222 = vmatpush1.bf16.msra.mxu0 %v170
  %223 = vmatprep.subr.bf16.mxu0 0
  %224 = vmatpush1.bf16.msra.mxu0 %v171
  %225 = vmatprep.subr.bf16.mxu0 0
  %226 = vmatpush1.bf16.msra.mxu0 %v172
  %227 = vmatprep.subr.bf16.mxu0 0
  %228 = vmatpush1.bf16.msra.mxu0 %v173
  %229 = vmatprep.subr.bf16.mxu0 0
  %230 = vmatpush1.bf16.msra.mxu0 0
  %231 = vmatprep.subr.bf16.mxu0 0
  %232 = vmatpush1.bf16.msra.mxu0 0
  %233 = vmatprep.subr.bf16.mxu0 0
  %234 = vmatpush1.bf16.msra.mxu0 0
  %235 = vmatprep.subr.bf16.mxu0 0
  %236 = vmatpush1.bf16.msra.mxu0 0
  %237 = vmatprep.subr.bf16.mxu0 0
  %238 = vmatpush1.bf16.msra.mxu0 0
  %239 = vmatprep.subr.bf16.mxu0 0
  %240 = vmatpush1.bf16.msra.mxu0 0
  %241 = vmatprep.subr.bf16.mxu0 0
  %242 = vmatpush1.bf16.msra.mxu0 0
  %243 = vmatprep.subr.bf16.mxu0 0
  %244 = vmatpush1.bf16.msra.mxu0 0
  %245 = vmatprep.subr.bf16.mxu0 0
  %246 = vmatpush1.bf16.msra.mxu0 0
  %247 = vmatprep.subr.bf16.mxu0 0
  %248 = vmatpush1.bf16.msra.mxu0 0
  %249 = vmatprep.subr.bf16.mxu0 0
  %250 = vmatpush1.bf16.msra.mxu0 0
  %251 = vmatprep.subr.bf16.mxu0 0
  %252 = vmatpush1.bf16.msra.mxu0 0
  %253 = vmatprep.mubr.bf16.mxu0 0
  %254 = vmatmul.mubr.bf16.gmra.mrb[0].mxu0 %v180
  %v255 = vpop.f32.mrb[0].mxu0
  %v256 = vadd.f32 0.0, %v255
  %v257 = vpop.f32.mrb[0].mxu0
  %v258 = vpop.f32.mrb[0].mxu0
  %v259 = vadd.f32 0.0, %v258
  %v260 = vpop.f32.mrb[0].mxu0
  %261 = vmatprep.mubr.bf16.mxu0 0
  %262 = vmatmul.mubr.bf16.gmra.mrb[0].mxu0 %v183
  %v263 = vpop.f32.mrb[0].mxu0
  %v264 = vadd.f32 0.0, %v263
  %v265 = vpop.f32.mrb[0].mxu0
  %v266 = vpop.f32.mrb[0].mxu0
  %v267 = vadd.f32 0.0, %v266
  %v268 = vpop.f32.mrb[0].mxu0
  %269 = vmatprep.mubr.bf16.mxu0 0
  %270 = vmatmul.mubr.bf16.gmra.mrb[0].mxu0 %v186
  %v271 = vpop.f32.mrb[0].mxu0
  %v272 = vadd.f32 0.0, %v271
  %v273 = vpop.f32.mrb[0].mxu0
  %v274 = vpop.f32.mrb[0].mxu0
  %v275 = vadd.f32 0.0, %v274
  %v276 = vpop.f32.mrb[0].mxu0
  %277 = vmatprep.mubr.bf16.mxu0 0
  %278 = vmatmul.mubr.bf16.gmra.mrb[0].mxu0 %v189
  %v279 = vpop.f32.mrb[0].mxu0
  %v280 = vadd.f32 0.0, %v279
  %v281 = vpop.f32.mrb[0].mxu0
  %v282 = vpop.f32.mrb[0].mxu0
  %v283 = vadd.f32 0.0, %v282
  %v284 = vpop.f32.mrb[0].mxu0
  %285 = vmatprep.mubr.bf16.mxu0 0
  %286 = vmatmul.mubr.bf16.gmra.mrb[0].mxu0 %v192
  %v287 = vpop.f32.mrb[0].mxu0
  %v288 = vadd.f32 0.0, %v287
  %v289 = vpop.f32.mrb[0].mxu0
  %v290 = vpop.f32.mrb[0].mxu0
  %v291 = vadd.f32 0.0, %v290
  %v292 = vpop.f32.mrb[0].mxu0
  %293 = vmatprep.mubr.bf16.mxu0 0
  %294 = vmatmul.mubr.bf16.gmra.mrb[0].mxu0 %v195
  %v295 = vpop.f32.mrb[0].mxu0
  %v296 = vadd.f32 0.0, %v295
  %v297 = vpop.f32.mrb[0].mxu0
  %v298 = vpop.f32.mrb[0].mxu0
  %v299 = vadd.f32 0.0, %v298
  %v300 = vpop.f32.mrb[0].mxu0
  %301 = vmatprep.mubr.bf16.mxu0 0
  %302 = vmatmul.mubr.bf16.gmra.mrb[0].mxu0 %v198
  %v303 = vpop.f32.mrb[0].mxu0
  %v304 = vadd.f32 0.0, %v303
  %v305 = vpop.f32.mrb[0].mxu0
  %v306 = vpop.f32.mrb[0].mxu0
  %v307 = vadd.f32 0.0, %v306
  %v308 = vpop.f32.mrb[0].mxu0
  %309 = vmatprep.mubr.bf16.mxu0 0
  %310 = vmatmul.mubr.bf16.gmra.mrb[0].mxu0 %v201
  %v311 = vpop.f32.mrb[0].mxu0
  %v312 = vadd.f32 0.0, %v311
  %v313 = vpop.f32.mrb[0].mxu0
  %v314 = vpop.f32.mrb[0].mxu0
  %v315 = vadd.f32 0.0, %v314
  %v316 = vpop.f32.mrb[0].mxu0
  %317 = vmatprep.mubr.bf16.mxu0 0
  %318 = vmatmul.mubr.bf16.gmra.mrb[0].mxu0 %v204
  %v319 = vpop.f32.mrb[0].mxu0
  %v320 = vadd.f32 0.0, %v319
  %v321 = vpop.f32.mrb[0].mxu0
  %v322 = vpop.f32.mrb[0].mxu0
  %v323 = vadd.f32 0.0, %v322
  %v324 = vpop.f32.mrb[0].mxu0
  %325 = vmatprep.mubr.bf16.mxu0 0
  %326 = vmatmul.mubr.bf16.gmra.mrb[0].mxu0 %v207
  %v327 = vpop.f32.mrb[0].mxu0
  %v328 = vadd.f32 0.0, %v327
  %v329 = vpop.f32.mrb[0].mxu0
  %v330 = vpop.f32.mrb[0].mxu0
  %v331 = vadd.f32 0.0, %v330
  %v332 = vpop.f32.mrb[0].mxu0
  %333 = vmatprep.mubr.bf16.mxu0 0
  %334 = vmatmul.mubr.bf16.gmra.mrb[0].mxu0 %v210
  %v335 = vpop.f32.mrb[0].mxu0
  %v336 = vadd.f32 0.0, %v335
  %v337 = vpop.f32.mrb[0].mxu0
  %v338 = vpop.f32.mrb[0].mxu0
  %v339 = vadd.f32 0.0, %v338
  %v340 = vpop.f32.mrb[0].mxu0
  %341 = vmatprep.mubr.bf16.mxu0 0
  %342 = vmatmul.mubr.bf16.gmra.mrb[0].mxu0 %v213
  %v343 = vpop.f32.mrb[0].mxu0
  %v344 = vadd.f32 0.0, %v343
  %v345 = vpop.f32.mrb[0].mxu0
  %v346 = vpop.f32.mrb[0].mxu0
  %v347 = vadd.f32 0.0, %v346
  %v348 = vpop.f32.mrb[0].mxu0
  %349 = vmatprep.mubr.bf16.mxu0 0
  %350 = vmatmul.mubr.bf16.gmra.mrb[0].mxu0 %v216
  %v351 = vpop.f32.mrb[0].mxu0
  %v352 = vadd.f32 0.0, %v351
  %v353 = vpop.f32.mrb[0].mxu0
  %v354 = vpop.f32.mrb[0].mxu0
  %v355 = vadd.f32 0.0, %v354
  %v356 = vpop.f32.mrb[0].mxu0
  %357 = vmatprep.mubr.bf16.mxu0 0
  %358 = vmatmul.mubr.bf16.gmra.mrb[0].mxu0 %v219
  %v359 = vpop.f32.mrb[0].mxu0
  %v360 = vadd.f32 0.0, %v359
  %v361 = vpop.f32.mrb[0].mxu0
  %v362 = vpop.f32.mrb[0].mxu0
  %v363 = vadd.f32 0.0, %v362
  %v364 = vpop.f32.mrb[0].mxu0
  %365 = vdwg.mxu0
  %v374 = vunpack.c.l.b16 %v95
  %v375 = vunpack.c.l.b16 %v96
  %v376 = vunpack.c.l.b16 %v97
  %v377 = vunpack.c.l.b16 %v98
  %v378 = vunpack.c.l.b16 %v99
  %v379 = vunpack.c.l.b16 %v100
  %v380 = vunpack.c.l.b16 %v101
  %v381 = vunpack.c.l.b16 %v102
  %v382 = vpack.c.b16 %v375, %v374
  %v383 = vpack.c.b16 %v377, %v376
  %v384 = vpack.c.b16 %v379, %v378
  %v385 = vpack.c.b16 %v381, %v380
  %v391 = vsel %vm178, %v81, 0
  %v394 = vsel %vm178, %v82, 0
  %v397 = vsel %vm178, %v83, 0
  %v400 = vsel %vm178, %v84, 0
  %v403 = vsel %vm178, %v85, 0
  %v406 = vsel %vm178, %v86, 0
  %v409 = vsel %vm178, %v87, 0
  %v412 = vsel %vm178, %v88, 0
  %v415 = vsel %vm178, %v89, 0
  %v418 = vsel %vm178, %v90, 0
  %v421 = vsel %vm178, %v91, 0
  %v424 = vsel %vm178, %v92, 0
  %v427 = vsel %vm178, %v93, 0
  %v430 = vsel %vm178, %v94, 0
  %432 = vmatprep.subr.bf16.mxu0 0
  %433 = vmatpush1.bf16.msra.mxu0 %v382
  %434 = vmatprep.subr.bf16.mxu0 0
  %435 = vmatpush1.bf16.msra.mxu0 %v383
  %436 = vmatprep.subr.bf16.mxu0 0
  %437 = vmatpush1.bf16.msra.mxu0 %v384
  %438 = vmatprep.subr.bf16.mxu0 0
  %439 = vmatpush1.bf16.msra.mxu0 %v385
  %440 = vmatprep.subr.bf16.mxu0 0
  %441 = vmatpush1.bf16.msra.mxu0 0
  %442 = vmatprep.subr.bf16.mxu0 0
  %443 = vmatpush1.bf16.msra.mxu0 0
  %444 = vmatprep.subr.bf16.mxu0 0
  %445 = vmatpush1.bf16.msra.mxu0 0
  %446 = vmatprep.subr.bf16.mxu0 0
  %447 = vmatpush1.bf16.msra.mxu0 0
  %448 = vmatprep.subr.bf16.mxu0 0
  %449 = vmatpush1.bf16.msra.mxu0 0
  %450 = vmatprep.subr.bf16.mxu0 0
  %451 = vmatpush1.bf16.msra.mxu0 0
  %452 = vmatprep.subr.bf16.mxu0 0
  %453 = vmatpush1.bf16.msra.mxu0 0
  %454 = vmatprep.subr.bf16.mxu0 0
  %455 = vmatpush1.bf16.msra.mxu0 0
  %456 = vmatprep.subr.bf16.mxu0 0
  %457 = vmatpush1.bf16.msra.mxu0 0
  %458 = vmatprep.subr.bf16.mxu0 0
  %459 = vmatpush1.bf16.msra.mxu0 0
  %460 = vmatprep.subr.bf16.mxu0 0
  %461 = vmatpush1.bf16.msra.mxu0 0
  %462 = vmatprep.subr.bf16.mxu0 0
  %463 = vmatpush1.bf16.msra.mxu0 0
  %464 = vmatprep.mubr.bf16.mxu0 0
  %465 = vmatmul.mubr.bf16.gmra.mrb[0].mxu0 %v391
  %v466 = vpop.f32.mrb[0].mxu0
  %v467 = vadd.f32 %v256, %v466
  %v468 = vpop.f32.mrb[0].mxu0
  %v469 = vpop.f32.mrb[0].mxu0
  %v470 = vadd.f32 %v259, %v469
  %v471 = vpop.f32.mrb[0].mxu0
  %472 = vmatprep.mubr.bf16.mxu0 0
  %473 = vmatmul.mubr.bf16.gmra.mrb[0].mxu0 %v394
  %v474 = vpop.f32.mrb[0].mxu0
  %v475 = vadd.f32 %v264, %v474
  %v476 = vpop.f32.mrb[0].mxu0
  %v477 = vpop.f32.mrb[0].mxu0
  %v478 = vadd.f32 %v267, %v477
  %v479 = vpop.f32.mrb[0].mxu0
  %480 = vmatprep.mubr.bf16.mxu0 0
  %481 = vmatmul.mubr.bf16.gmra.mrb[0].mxu0 %v397
  %v482 = vpop.f32.mrb[0].mxu0
  %v483 = vadd.f32 %v272, %v482
  %v484 = vpop.f32.mrb[0].mxu0
  %v485 = vpop.f32.mrb[0].mxu0
  %v486 = vadd.f32 %v275, %v485
  %v487 = vpop.f32.mrb[0].mxu0
  %488 = vmatprep.mubr.bf16.mxu0 0
  %489 = vmatmul.mubr.bf16.gmra.mrb[0].mxu0 %v400
  %v490 = vpop.f32.mrb[0].mxu0
  %v491 = vadd.f32 %v280, %v490
  %v492 = vpop.f32.mrb[0].mxu0
  %v493 = vpop.f32.mrb[0].mxu0
  %v494 = vadd.f32 %v283, %v493
  %v495 = vpop.f32.mrb[0].mxu0
  %496 = vmatprep.mubr.bf16.mxu0 0
  %497 = vmatmul.mubr.bf16.gmra.mrb[0].mxu0 %v403
  %v498 = vpop.f32.mrb[0].mxu0
  %v499 = vadd.f32 %v288, %v498
  %v500 = vpop.f32.mrb[0].mxu0
  %v501 = vpop.f32.mrb[0].mxu0
  %v502 = vadd.f32 %v291, %v501
  %v503 = vpop.f32.mrb[0].mxu0
  %504 = vmatprep.mubr.bf16.mxu0 0
  %505 = vmatmul.mubr.bf16.gmra.mrb[0].mxu0 %v406
  %v506 = vpop.f32.mrb[0].mxu0
  %v507 = vadd.f32 %v296, %v506
  %v508 = vpop.f32.mrb[0].mxu0
  %v509 = vpop.f32.mrb[0].mxu0
  %v510 = vadd.f32 %v299, %v509
  %v511 = vpop.f32.mrb[0].mxu0
  %512 = vmatprep.mubr.bf16.mxu0 0
  %513 = vmatmul.mubr.bf16.gmra.mrb[0].mxu0 %v409
  %v514 = vpop.f32.mrb[0].mxu0
  %v515 = vadd.f32 %v304, %v514
  %v516 = vpop.f32.mrb[0].mxu0
  %v517 = vpop.f32.mrb[0].mxu0
  %v518 = vadd.f32 %v307, %v517
  %v519 = vpop.f32.mrb[0].mxu0
  %520 = vmatprep.mubr.bf16.mxu0 0
  %521 = vmatmul.mubr.bf16.gmra.mrb[0].mxu0 %v412
  %v522 = vpop.f32.mrb[0].mxu0
  %v523 = vadd.f32 %v312, %v522
  %v524 = vpop.f32.mrb[0].mxu0
  %v525 = vpop.f32.mrb[0].mxu0
  %v526 = vadd.f32 %v315, %v525
  %v527 = vpop.f32.mrb[0].mxu0
  %528 = vmatprep.mubr.bf16.mxu0 0
  %529 = vmatmul.mubr.bf16.gmra.mrb[0].mxu0 %v415
  %v530 = vpop.f32.mrb[0].mxu0
  %v531 = vadd.f32 %v320, %v530
  %v532 = vpop.f32.mrb[0].mxu0
  %v533 = vpop.f32.mrb[0].mxu0
  %v534 = vadd.f32 %v323, %v533
  %v535 = vpop.f32.mrb[0].mxu0
  %536 = vmatprep.mubr.bf16.mxu0 0
  %537 = vmatmul.mubr.bf16.gmra.mrb[0].mxu0 %v418
  %v538 = vpop.f32.mrb[0].mxu0
  %v539 = vadd.f32 %v328, %v538
  %v540 = vpop.f32.mrb[0].mxu0
  %v541 = vpop.f32.mrb[0].mxu0
  %v542 = vadd.f32 %v331, %v541
  %v543 = vpop.f32.mrb[0].mxu0
  %544 = vmatprep.mubr.bf16.mxu0 0
  %545 = vmatmul.mubr.bf16.gmra.mrb[0].mxu0 %v421
  %v546 = vpop.f32.mrb[0].mxu0
  %v547 = vadd.f32 %v336, %v546
  %v548 = vpop.f32.mrb[0].mxu0
  %v549 = vpop.f32.mrb[0].mxu0
  %v550 = vadd.f32 %v339, %v549
  %v551 = vpop.f32.mrb[0].mxu0
  %552 = vmatprep.mubr.bf16.mxu0 0
  %553 = vmatmul.mubr.bf16.gmra.mrb[0].mxu0 %v424
  %v554 = vpop.f32.mrb[0].mxu0
  %v555 = vadd.f32 %v344, %v554
  %v556 = vpop.f32.mrb[0].mxu0
  %v557 = vpop.f32.mrb[0].mxu0
  %v558 = vadd.f32 %v347, %v557
  %v559 = vpop.f32.mrb[0].mxu0
  %560 = vmatprep.mubr.bf16.mxu0 0
  %561 = vmatmul.mubr.bf16.gmra.mrb[0].mxu0 %v427
  %v562 = vpop.f32.mrb[0].mxu0
  %v563 = vadd.f32 %v352, %v562
  %v564 = vpop.f32.mrb[0].mxu0
  %v565 = vpop.f32.mrb[0].mxu0
  %v566 = vadd.f32 %v355, %v565
  %v567 = vpop.f32.mrb[0].mxu0
  %568 = vmatprep.mubr.bf16.mxu0 0
  %569 = vmatmul.mubr.bf16.gmra.mrb[0].mxu0 %v430
  %v570 = vpop.f32.mrb[0].mxu0
  %v571 = vadd.f32 %v360, %v570
  %v572 = vpop.f32.mrb[0].mxu0
  %v573 = vpop.f32.mrb[0].mxu0
  %v574 = vadd.f32 %v363, %v573
  %v575 = vpop.f32.mrb[0].mxu0
  %576 = vdwg.mxu0
  %v577 = vld [vmem:[%s0 + $0x2] sm:$0xff]
  %v578 = vld [vmem:[%s0 + $0xa] sm:$0xff]
  %v579 = vld [vmem:[%s0 + $0x12] sm:$0xff]
  %v580 = vld [vmem:[%s0 + $0x1a] sm:$0xff]
  %v581 = vld [vmem:[%s0 + $0x22] sm:$0xff]
  %v582 = vld [vmem:[%s0 + $0x2a] sm:$0xff]
  %v583 = vld [vmem:[%s0 + $0x32] sm:$0xff]
  %v584 = vld [vmem:[%s0 + $0x3a] sm:$0xff]
  %v585 = vld [vmem:[%s0 + $0x42] sm:$0xff]
  %v586 = vld [vmem:[%s0 + $0x4a] sm:$0xff]
  %v587 = vld [vmem:[%s0 + $0x52] sm:$0xff]
  %v588 = vld [vmem:[%s0 + $0x5a] sm:$0xff]
  %v589 = vld [vmem:[%s0 + $0x62] sm:$0xff]
  %v590 = vld [vmem:[%s0 + $0x6a] sm:$0xff]
  %v591 = vld [vmem:[%s0 + $0x72] sm:$0xff]
  %v592 = vld [vmem:[%s0 + $0x7a] sm:$0xff]
  %v593 = vld [vmem:[%s0 + $0x82] sm:$0xff]
  %v594 = vld [vmem:[%s0 + $0x8a] sm:$0xff]
  %v595 = vld [vmem:[%s0 + $0x92] sm:$0xff]
  %v596 = vld [vmem:[%s0 + $0x9a] sm:$0xff]
  %v597 = vld [vmem:[%s0 + $0xa2] sm:$0xff]
  %v598 = vld [vmem:[%s0 + $0xaa] sm:$0xff]
  %v599 = vld [vmem:[%s0 + $0xb2] sm:$0xff]
  %v600 = vld [vmem:[%s0 + $0xba] sm:$0xff]
  %v601 = vld [vmem:[%s0 + $0xc2] sm:$0xff]
  %v602 = vld [vmem:[%s0 + $0xca] sm:$0xff]
  %v603 = vld [vmem:[%s0 + $0xd2] sm:$0xff]
  %v604 = vld [vmem:[%s0 + $0xda] sm:$0xff]
  %v605 = vpack.c.bf16 %v578, %v577
  %v606 = vpack.c.bf16 %v580, %v579
  %v607 = vpack.c.bf16 %v582, %v581
  %v608 = vpack.c.bf16 %v584, %v583
  %v609 = vpack.c.bf16 %v586, %v585
  %v610 = vpack.c.bf16 %v588, %v587
  %v611 = vpack.c.bf16 %v590, %v589
  %v612 = vpack.c.bf16 %v592, %v591
  %v613 = vpack.c.bf16 %v594, %v593
  %v614 = vpack.c.bf16 %v596, %v595
  %v615 = vpack.c.bf16 %v598, %v597
  %v616 = vpack.c.bf16 %v600, %v599
  %v617 = vpack.c.bf16 %v602, %v601
  %v618 = vpack.c.bf16 %v604, %v603
  %s619 = scalar_lea.vmem %s1, 64
  %v620 = vld [vmem:[%s619] sm:$0xf]
  %v621 = vld [vmem:[%s619 + $0x4] sm:$0xf]
  %v622 = vld [vmem:[%s619 + $0x8] sm:$0xf]
  %v623 = vld [vmem:[%s619 + $0xc] sm:$0xf]
  %v624 = vld [vmem:[%s619 + $0x10] sm:$0xf]
  %v625 = vld [vmem:[%s619 + $0x14] sm:$0xf]
  %v626 = vld [vmem:[%s619 + $0x18] sm:$0xf]
  %v627 = vld [vmem:[%s619 + $0x1c] sm:$0xf]
  %v636 = vunpack.c.l.b16 %v620
  %v637 = vunpack.c.l.b16 %v621
  %v638 = vunpack.c.l.b16 %v622
  %v639 = vunpack.c.l.b16 %v623
  %v640 = vunpack.c.l.b16 %v624
  %v641 = vunpack.c.l.b16 %v625
  %v642 = vunpack.c.l.b16 %v626
  %v643 = vunpack.c.l.b16 %v627
  %v644 = vpack.c.b16 %v637, %v636
  %v645 = vpack.c.b16 %v639, %v638
  %v646 = vpack.c.b16 %v641, %v640
  %v647 = vpack.c.b16 %v643, %v642
  %v653 = vsel %vm178, %v605, 0
  %v656 = vsel %vm178, %v606, 0
  %v659 = vsel %vm178, %v607, 0
  %v662 = vsel %vm178, %v608, 0
  %v665 = vsel %vm178, %v609, 0
  %v668 = vsel %vm178, %v610, 0
  %v671 = vsel %vm178, %v611, 0
  %v674 = vsel %vm178, %v612, 0
  %v677 = vsel %vm178, %v613, 0
  %v680 = vsel %vm178, %v614, 0
  %v683 = vsel %vm178, %v615, 0
  %v686 = vsel %vm178, %v616, 0
  %v689 = vsel %vm178, %v617, 0
  %v692 = vsel %vm178, %v618, 0
  %694 = vmatprep.subr.bf16.mxu0 0
  %695 = vmatpush1.bf16.msra.mxu0 %v644
  %696 = vmatprep.subr.bf16.mxu0 0
  %697 = vmatpush1.bf16.msra.mxu0 %v645
  %698 = vmatprep.subr.bf16.mxu0 0
  %699 = vmatpush1.bf16.msra.mxu0 %v646
  %700 = vmatprep.subr.bf16.mxu0 0
  %701 = vmatpush1.bf16.msra.mxu0 %v647
  %702 = vmatprep.subr.bf16.mxu0 0
  %703 = vmatpush1.bf16.msra.mxu0 0
  %704 = vmatprep.subr.bf16.mxu0 0
  %705 = vmatpush1.bf16.msra.mxu0 0
  %706 = vmatprep.subr.bf16.mxu0 0
  %707 = vmatpush1.bf16.msra.mxu0 0
  %708 = vmatprep.subr.bf16.mxu0 0
  %709 = vmatpush1.bf16.msra.mxu0 0
  %710 = vmatprep.subr.bf16.mxu0 0
  %711 = vmatpush1.bf16.msra.mxu0 0
  %712 = vmatprep.subr.bf16.mxu0 0
  %713 = vmatpush1.bf16.msra.mxu0 0
  %714 = vmatprep.subr.bf16.mxu0 0
  %715 = vmatpush1.bf16.msra.mxu0 0
  %716 = vmatprep.subr.bf16.mxu0 0
  %717 = vmatpush1.bf16.msra.mxu0 0
  %718 = vmatprep.subr.bf16.mxu0 0
  %719 = vmatpush1.bf16.msra.mxu0 0
  %720 = vmatprep.subr.bf16.mxu0 0
  %721 = vmatpush1.bf16.msra.mxu0 0
  %722 = vmatprep.subr.bf16.mxu0 0
  %723 = vmatpush1.bf16.msra.mxu0 0
  %724 = vmatprep.subr.bf16.mxu0 0
  %725 = vmatpush1.bf16.msra.mxu0 0
  %726 = vmatprep.mubr.bf16.mxu0 0
  %727 = vmatmul.mubr.bf16.gmra.mrb[0].mxu0 %v653
  %v728 = vpop.f32.mrb[0].mxu0
  %v729 = vadd.f32 0.0, %v728
  %v730 = vpop.f32.mrb[0].mxu0
  %v731 = vpop.f32.mrb[0].mxu0
  %v732 = vadd.f32 0.0, %v731
  %v733 = vpop.f32.mrb[0].mxu0
  %734 = vmatprep.mubr.bf16.mxu0 0
  %735 = vmatmul.mubr.bf16.gmra.mrb[0].mxu0 %v656
  %v736 = vpop.f32.mrb[0].mxu0
  %v737 = vadd.f32 0.0, %v736
  %v738 = vpop.f32.mrb[0].mxu0
  %v739 = vpop.f32.mrb[0].mxu0
  %v740 = vadd.f32 0.0, %v739
  %v741 = vpop.f32.mrb[0].mxu0
  %742 = vmatprep.mubr.bf16.mxu0 0
  %743 = vmatmul.mubr.bf16.gmra.mrb[0].mxu0 %v659
  %v744 = vpop.f32.mrb[0].mxu0
  %v745 = vadd.f32 0.0, %v744
  %v746 = vpop.f32.mrb[0].mxu0
  %v747 = vpop.f32.mrb[0].mxu0
  %v748 = vadd.f32 0.0, %v747
  %v749 = vpop.f32.mrb[0].mxu0
  %750 = vmatprep.mubr.bf16.mxu0 0
  %751 = vmatmul.mubr.bf16.gmra.mrb[0].mxu0 %v662
  %v752 = vpop.f32.mrb[0].mxu0
  %v753 = vadd.f32 0.0, %v752
  %v754 = vpop.f32.mrb[0].mxu0
  %v755 = vpop.f32.mrb[0].mxu0
  %v756 = vadd.f32 0.0, %v755
  %v757 = vpop.f32.mrb[0].mxu0
  %758 = vmatprep.mubr.bf16.mxu0 0
  %759 = vmatmul.mubr.bf16.gmra.mrb[0].mxu0 %v665
  %v760 = vpop.f32.mrb[0].mxu0
  %v761 = vadd.f32 0.0, %v760
  %v762 = vpop.f32.mrb[0].mxu0
  %v763 = vpop.f32.mrb[0].mxu0
  %v764 = vadd.f32 0.0, %v763
  %v765 = vpop.f32.mrb[0].mxu0
  %766 = vmatprep.mubr.bf16.mxu0 0
  %767 = vmatmul.mubr.bf16.gmra.mrb[0].mxu0 %v668
  %v768 = vpop.f32.mrb[0].mxu0
  %v769 = vadd.f32 0.0, %v768
  %v770 = vpop.f32.mrb[0].mxu0
  %v771 = vpop.f32.mrb[0].mxu0
  %v772 = vadd.f32 0.0, %v771
  %v773 = vpop.f32.mrb[0].mxu0
  %774 = vmatprep.mubr.bf16.mxu0 0
  %775 = vmatmul.mubr.bf16.gmra.mrb[0].mxu0 %v671
  %v776 = vpop.f32.mrb[0].mxu0
  %v777 = vadd.f32 0.0, %v776
  %v778 = vpop.f32.mrb[0].mxu0
  %v779 = vpop.f32.mrb[0].mxu0
  %v780 = vadd.f32 0.0, %v779
  %v781 = vpop.f32.mrb[0].mxu0
  %782 = vmatprep.mubr.bf16.mxu0 0
  %783 = vmatmul.mubr.bf16.gmra.mrb[0].mxu0 %v674
  %v784 = vpop.f32.mrb[0].mxu0
  %v785 = vadd.f32 0.0, %v784
  %v786 = vpop.f32.mrb[0].mxu0
  %v787 = vpop.f32.mrb[0].mxu0
  %v788 = vadd.f32 0.0, %v787
  %v789 = vpop.f32.mrb[0].mxu0
  %790 = vmatprep.mubr.bf16.mxu0 0
  %791 = vmatmul.mubr.bf16.gmra.mrb[0].mxu0 %v677
  %v792 = vpop.f32.mrb[0].mxu0
  %v793 = vadd.f32 0.0, %v792
  %v794 = vpop.f32.mrb[0].mxu0
  %v795 = vpop.f32.mrb[0].mxu0
  %v796 = vadd.f32 0.0, %v795
  %v797 = vpop.f32.mrb[0].mxu0
  %798 = vmatprep.mubr.bf16.mxu0 0
  %799 = vmatmul.mubr.bf16.gmra.mrb[0].mxu0 %v680
  %v800 = vpop.f32.mrb[0].mxu0
  %v801 = vadd.f32 0.0, %v800
  %v802 = vpop.f32.mrb[0].mxu0
  %v803 = vpop.f32.mrb[0].mxu0
  %v804 = vadd.f32 0.0, %v803
  %v805 = vpop.f32.mrb[0].mxu0
  %806 = vmatprep.mubr.bf16.mxu0 0
  %807 = vmatmul.mubr.bf16.gmra.mrb[0].mxu0 %v683
  %v808 = vpop.f32.mrb[0].mxu0
  %v809 = vadd.f32 0.0, %v808
  %v810 = vpop.f32.mrb[0].mxu0
  %v811 = vpop.f32.mrb[0].mxu0
  %v812 = vadd.f32 0.0, %v811
  %v813 = vpop.f32.mrb[0].mxu0
  %814 = vmatprep.mubr.bf16.mxu0 0
  %815 = vmatmul.mubr.bf16.gmra.mrb[0].mxu0 %v686
  %v816 = vpop.f32.mrb[0].mxu0
  %v817 = vadd.f32 0.0, %v816
  %v818 = vpop.f32.mrb[0].mxu0
  %v819 = vpop.f32.mrb[0].mxu0
  %v820 = vadd.f32 0.0, %v819
  %v821 = vpop.f32.mrb[0].mxu0
  %822 = vmatprep.mubr.bf16.mxu0 0
  %823 = vmatmul.mubr.bf16.gmra.mrb[0].mxu0 %v689
  %v824 = vpop.f32.mrb[0].mxu0
  %v825 = vadd.f32 0.0, %v824
  %v826 = vpop.f32.mrb[0].mxu0
  %v827 = vpop.f32.mrb[0].mxu0
  %v828 = vadd.f32 0.0, %v827
  %v829 = vpop.f32.mrb[0].mxu0
  %830 = vmatprep.mubr.bf16.mxu0 0
  %831 = vmatmul.mubr.bf16.gmra.mrb[0].mxu0 %v692
  %v832 = vpop.f32.mrb[0].mxu0
  %v833 = vadd.f32 0.0, %v832
  %v834 = vpop.f32.mrb[0].mxu0
  %v835 = vpop.f32.mrb[0].mxu0
  %v836 = vadd.f32 0.0, %v835
  %v837 = vpop.f32.mrb[0].mxu0
  %838 = vdwg.mxu0
  %v839 = vadd.f32 %v467, %v729
  %v840 = vadd.f32 %v470, %v732
  %v841 = vadd.f32 %v475, %v737
  %v842 = vadd.f32 %v478, %v740
  %v843 = vadd.f32 %v483, %v745
  %v844 = vadd.f32 %v486, %v748
  %v845 = vadd.f32 %v491, %v753
  %v846 = vadd.f32 %v494, %v756
  %v847 = vadd.f32 %v499, %v761
  %v848 = vadd.f32 %v502, %v764
  %v849 = vadd.f32 %v507, %v769
  %v850 = vadd.f32 %v510, %v772
  %v851 = vadd.f32 %v515, %v777
  %v852 = vadd.f32 %v518, %v780
  %v853 = vadd.f32 %v523, %v785
  %v854 = vadd.f32 %v526, %v788
  %v855 = vadd.f32 %v531, %v793
  %v856 = vadd.f32 %v534, %v796
  %v857 = vadd.f32 %v539, %v801
  %v858 = vadd.f32 %v542, %v804
  %v859 = vadd.f32 %v547, %v809
  %v860 = vadd.f32 %v550, %v812
  %v861 = vadd.f32 %v555, %v817
  %v862 = vadd.f32 %v558, %v820
  %v863 = vadd.f32 %v563, %v825
  %v864 = vadd.f32 %v566, %v828
  %v865 = vadd.f32 %v571, %v833
  %v866 = vadd.f32 %v574, %v836
  %v867 = vld [vmem:[%s0 + $0x10] sm:$0xff]
  %v868 = vld [vmem:[%s0 + $0x18] sm:$0xff]
  %v869 = vld [vmem:[%s0 + $0x20] sm:$0xff]
  %v870 = vld [vmem:[%s0 + $0x28] sm:$0xff]
  %v871 = vld [vmem:[%s0 + $0x30] sm:$0xff]
  %v872 = vld [vmem:[%s0 + $0x38] sm:$0xff]
  %v873 = vld [vmem:[%s0 + $0x40] sm:$0xff]
  %v874 = vld [vmem:[%s0 + $0x48] sm:$0xff]
  %v875 = vld [vmem:[%s0 + $0x50] sm:$0xff]
  %v876 = vld [vmem:[%s0 + $0x58] sm:$0xff]
  %v877 = vld [vmem:[%s0 + $0x60] sm:$0xff]
  %v878 = vld [vmem:[%s0 + $0x68] sm:$0xff]
  %v879 = vld [vmem:[%s0 + $0x70] sm:$0xff]
  %v880 = vld [vmem:[%s0 + $0x78] sm:$0xff]
  %v881 = vld [vmem:[%s0 + $0x80] sm:$0xff]
  %v882 = vld [vmem:[%s0 + $0x88] sm:$0xff]
  %v883 = vld [vmem:[%s0 + $0x90] sm:$0xff]
  %v884 = vld [vmem:[%s0 + $0x98] sm:$0xff]
  %v885 = vld [vmem:[%s0 + $0xa0] sm:$0xff]
  %v886 = vld [vmem:[%s0 + $0xa8] sm:$0xff]
  %v887 = vld [vmem:[%s0 + $0xb0] sm:$0xff]
  %v888 = vld [vmem:[%s0 + $0xb8] sm:$0xff]
  %v889 = vld [vmem:[%s0 + $0xc0] sm:$0xff]
  %v890 = vld [vmem:[%s0 + $0xc8] sm:$0xff]
  %v891 = vld [vmem:[%s0 + $0xd0] sm:$0xff]
  %v892 = vld [vmem:[%s0 + $0xd8] sm:$0xff]
  %v893 = vld [vmem:[%s0 + $0xe0] sm:$0xff]
  %v894 = vld [vmem:[%s0 + $0xe8] sm:$0xff]
  %v895 = vpack.c.bf16 %v868, %v867
  %v896 = vpack.c.bf16 %v870, %v869
  %v897 = vpack.c.bf16 %v872, %v871
  %v898 = vpack.c.bf16 %v874, %v873
  %v899 = vpack.c.bf16 %v876, %v875
  %v900 = vpack.c.bf16 %v878, %v877
  %v901 = vpack.c.bf16 %v880, %v879
  %v902 = vpack.c.bf16 %v882, %v881
  %v903 = vpack.c.bf16 %v884, %v883
  %v904 = vpack.c.bf16 %v886, %v885
  %v905 = vpack.c.bf16 %v888, %v887
  %v906 = vpack.c.bf16 %v890, %v889
  %v907 = vpack.c.bf16 %v892, %v891
  %v908 = vpack.c.bf16 %v894, %v893
  %s909 = scalar_lea.vmem %s1, 96
  %v910 = vld [vmem:[%s909] sm:$0xf]
  %v911 = vld [vmem:[%s909 + $0x4] sm:$0xf]
  %v912 = vld [vmem:[%s909 + $0x8] sm:$0xf]
  %v913 = vld [vmem:[%s909 + $0xc] sm:$0xf]
  %v914 = vld [vmem:[%s909 + $0x10] sm:$0xf]
  %v915 = vld [vmem:[%s909 + $0x14] sm:$0xf]
  %v916 = vld [vmem:[%s909 + $0x18] sm:$0xf]
  %v917 = vld [vmem:[%s909 + $0x1c] sm:$0xf]
  %v926 = vunpack.c.l.b16 %v910
  %v927 = vunpack.c.l.b16 %v911
  %v928 = vunpack.c.l.b16 %v912
  %v929 = vunpack.c.l.b16 %v913
  %v930 = vunpack.c.l.b16 %v914
  %v931 = vunpack.c.l.b16 %v915
  %v932 = vunpack.c.l.b16 %v916
  %v933 = vunpack.c.l.b16 %v917
  %v934 = vpack.c.b16 %v927, %v926
  %v935 = vpack.c.b16 %v929, %v928
  %v936 = vpack.c.b16 %v931, %v930
  %v937 = vpack.c.b16 %v933, %v932
  %v943 = vsel %vm178, %v895, 0
  %v946 = vsel %vm178, %v896, 0
  %v949 = vsel %vm178, %v897, 0
  %v952 = vsel %vm178, %v898, 0
  %v955 = vsel %vm178, %v899, 0
  %v958 = vsel %vm178, %v900, 0
  %v961 = vsel %vm178, %v901, 0
  %v964 = vsel %vm178, %v902, 0
  %v967 = vsel %vm178, %v903, 0
  %v970 = vsel %vm178, %v904, 0
  %v973 = vsel %vm178, %v905, 0
  %v976 = vsel %vm178, %v906, 0
  %v979 = vsel %vm178, %v907, 0
  %v982 = vsel %vm178, %v908, 0
  %984 = vmatprep.subr.bf16.mxu0 0
  %985 = vmatpush1.bf16.msra.mxu0 %v934
  %986 = vmatprep.subr.bf16.mxu0 0
  %987 = vmatpush1.bf16.msra.mxu0 %v935
  %988 = vmatprep.subr.bf16.mxu0 0
  %989 = vmatpush1.bf16.msra.mxu0 %v936
  %990 = vmatprep.subr.bf16.mxu0 0
  %991 = vmatpush1.bf16.msra.mxu0 %v937
  %992 = vmatprep.subr.bf16.mxu0 0
  %993 = vmatpush1.bf16.msra.mxu0 0
  %994 = vmatprep.subr.bf16.mxu0 0
  %995 = vmatpush1.bf16.msra.mxu0 0
  %996 = vmatprep.subr.bf16.mxu0 0
  %997 = vmatpush1.bf16.msra.mxu0 0
  %998 = vmatprep.subr.bf16.mxu0 0
  %999 = vmatpush1.bf16.msra.mxu0 0
  %1000 = vmatprep.subr.bf16.mxu0 0
  %1001 = vmatpush1.bf16.msra.mxu0 0
  %1002 = vmatprep.subr.bf16.mxu0 0
  %1003 = vmatpush1.bf16.msra.mxu0 0
  %1004 = vmatprep.subr.bf16.mxu0 0
  %1005 = vmatpush1.bf16.msra.mxu0 0
  %1006 = vmatprep.subr.bf16.mxu0 0
  %1007 = vmatpush1.bf16.msra.mxu0 0
  %1008 = vmatprep.subr.bf16.mxu0 0
  %1009 = vmatpush1.bf16.msra.mxu0 0
  %1010 = vmatprep.subr.bf16.mxu0 0
  %1011 = vmatpush1.bf16.msra.mxu0 0
  %1012 = vmatprep.subr.bf16.mxu0 0
  %1013 = vmatpush1.bf16.msra.mxu0 0
  %1014 = vmatprep.subr.bf16.mxu0 0
  %1015 = vmatpush1.bf16.msra.mxu0 0
  %1016 = vmatprep.mubr.bf16.mxu0 0
  %1017 = vmatmul.mubr.bf16.gmra.mrb[0].mxu0 %v943
  %v1018 = vpop.f32.mrb[0].mxu0
  %v1019 = vadd.f32 0.0, %v1018
  %v1020 = vpop.f32.mrb[0].mxu0
  %v1021 = vpop.f32.mrb[0].mxu0
  %v1022 = vadd.f32 0.0, %v1021
  %v1023 = vpop.f32.mrb[0].mxu0
  %1024 = vmatprep.mubr.bf16.mxu0 0
  %1025 = vmatmul.mubr.bf16.gmra.mrb[0].mxu0 %v946
  %v1026 = vpop.f32.mrb[0].mxu0
  %v1027 = vadd.f32 0.0, %v1026
  %v1028 = vpop.f32.mrb[0].mxu0
  %v1029 = vpop.f32.mrb[0].mxu0
  %v1030 = vadd.f32 0.0, %v1029
  %v1031 = vpop.f32.mrb[0].mxu0
  %1032 = vmatprep.mubr.bf16.mxu0 0
  %1033 = vmatmul.mubr.bf16.gmra.mrb[0].mxu0 %v949
  %v1034 = vpop.f32.mrb[0].mxu0
  %v1035 = vadd.f32 0.0, %v1034
  %v1036 = vpop.f32.mrb[0].mxu0
  %v1037 = vpop.f32.mrb[0].mxu0
  %v1038 = vadd.f32 0.0, %v1037
  %v1039 = vpop.f32.mrb[0].mxu0
  %1040 = vmatprep.mubr.bf16.mxu0 0
  %1041 = vmatmul.mubr.bf16.gmra.mrb[0].mxu0 %v952
  %v1042 = vpop.f32.mrb[0].mxu0
  %v1043 = vadd.f32 0.0, %v1042
  %v1044 = vpop.f32.mrb[0].mxu0
  %v1045 = vpop.f32.mrb[0].mxu0
  %v1046 = vadd.f32 0.0, %v1045
  %v1047 = vpop.f32.mrb[0].mxu0
  %1048 = vmatprep.mubr.bf16.mxu0 0
  %1049 = vmatmul.mubr.bf16.gmra.mrb[0].mxu0 %v955
  %v1050 = vpop.f32.mrb[0].mxu0
  %v1051 = vadd.f32 0.0, %v1050
  %v1052 = vpop.f32.mrb[0].mxu0
  %v1053 = vpop.f32.mrb[0].mxu0
  %v1054 = vadd.f32 0.0, %v1053
  %v1055 = vpop.f32.mrb[0].mxu0
  %1056 = vmatprep.mubr.bf16.mxu0 0
  %1057 = vmatmul.mubr.bf16.gmra.mrb[0].mxu0 %v958
  %v1058 = vpop.f32.mrb[0].mxu0
  %v1059 = vadd.f32 0.0, %v1058
  %v1060 = vpop.f32.mrb[0].mxu0
  %v1061 = vpop.f32.mrb[0].mxu0
  %v1062 = vadd.f32 0.0, %v1061
  %v1063 = vpop.f32.mrb[0].mxu0
  %1064 = vmatprep.mubr.bf16.mxu0 0
  %1065 = vmatmul.mubr.bf16.gmra.mrb[0].mxu0 %v961
  %v1066 = vpop.f32.mrb[0].mxu0
  %v1067 = vadd.f32 0.0, %v1066
  %v1068 = vpop.f32.mrb[0].mxu0
  %v1069 = vpop.f32.mrb[0].mxu0
  %v1070 = vadd.f32 0.0, %v1069
  %v1071 = vpop.f32.mrb[0].mxu0
  %1072 = vmatprep.mubr.bf16.mxu0 0
  %1073 = vmatmul.mubr.bf16.gmra.mrb[0].mxu0 %v964
  %v1074 = vpop.f32.mrb[0].mxu0
  %v1075 = vadd.f32 0.0, %v1074
  %v1076 = vpop.f32.mrb[0].mxu0
  %v1077 = vpop.f32.mrb[0].mxu0
  %v1078 = vadd.f32 0.0, %v1077
  %v1079 = vpop.f32.mrb[0].mxu0
  %1080 = vmatprep.mubr.bf16.mxu0 0
  %1081 = vmatmul.mubr.bf16.gmra.mrb[0].mxu0 %v967
  %v1082 = vpop.f32.mrb[0].mxu0
  %v1083 = vadd.f32 0.0, %v1082
  %v1084 = vpop.f32.mrb[0].mxu0
  %v1085 = vpop.f32.mrb[0].mxu0
  %v1086 = vadd.f32 0.0, %v1085
  %v1087 = vpop.f32.mrb[0].mxu0
  %1088 = vmatprep.mubr.bf16.mxu0 0
  %1089 = vmatmul.mubr.bf16.gmra.mrb[0].mxu0 %v970
  %v1090 = vpop.f32.mrb[0].mxu0
  %v1091 = vadd.f32 0.0, %v1090
  %v1092 = vpop.f32.mrb[0].mxu0
  %v1093 = vpop.f32.mrb[0].mxu0
  %v1094 = vadd.f32 0.0, %v1093
  %v1095 = vpop.f32.mrb[0].mxu0
  %1096 = vmatprep.mubr.bf16.mxu0 0
  %1097 = vmatmul.mubr.bf16.gmra.mrb[0].mxu0 %v973
  %v1098 = vpop.f32.mrb[0].mxu0
  %v1099 = vadd.f32 0.0, %v1098
  %v1100 = vpop.f32.mrb[0].mxu0
  %v1101 = vpop.f32.mrb[0].mxu0
  %v1102 = vadd.f32 0.0, %v1101
  %v1103 = vpop.f32.mrb[0].mxu0
  %1104 = vmatprep.mubr.bf16.mxu0 0
  %1105 = vmatmul.mubr.bf16.gmra.mrb[0].mxu0 %v976
  %v1106 = vpop.f32.mrb[0].mxu0
  %v1107 = vadd.f32 0.0, %v1106
  %v1108 = vpop.f32.mrb[0].mxu0
  %v1109 = vpop.f32.mrb[0].mxu0
  %v1110 = vadd.f32 0.0, %v1109
  %v1111 = vpop.f32.mrb[0].mxu0
  %1112 = vmatprep.mubr.bf16.mxu0 0
  %1113 = vmatmul.mubr.bf16.gmra.mrb[0].mxu0 %v979
  %v1114 = vpop.f32.mrb[0].mxu0
  %v1115 = vadd.f32 0.0, %v1114
  %v1116 = vpop.f32.mrb[0].mxu0
  %v1117 = vpop.f32.mrb[0].mxu0
  %v1118 = vadd.f32 0.0, %v1117
  %v1119 = vpop.f32.mrb[0].mxu0
  %1120 = vmatprep.mubr.bf16.mxu0 0
  %1121 = vmatmul.mubr.bf16.gmra.mrb[0].mxu0 %v982
  %v1122 = vpop.f32.mrb[0].mxu0
  %v1123 = vadd.f32 0.0, %v1122
  %v1124 = vpop.f32.mrb[0].mxu0
  %v1125 = vpop.f32.mrb[0].mxu0
  %v1126 = vadd.f32 0.0, %v1125
  %v1127 = vpop.f32.mrb[0].mxu0
  %1128 = vdwg.mxu0
  %v1129 = vadd.f32 %v839, %v1019
  %v1130 = vadd.f32 %v840, %v1022
  %v1131 = vadd.f32 %v841, %v1027
  %v1132 = vadd.f32 %v842, %v1030
  %v1133 = vadd.f32 %v843, %v1035
  %v1134 = vadd.f32 %v844, %v1038
  %v1135 = vadd.f32 %v845, %v1043
  %v1136 = vadd.f32 %v846, %v1046
  %v1137 = vadd.f32 %v847, %v1051
  %v1138 = vadd.f32 %v848, %v1054
  %v1139 = vadd.f32 %v849, %v1059
  %v1140 = vadd.f32 %v850, %v1062
  %v1141 = vadd.f32 %v851, %v1067
  %v1142 = vadd.f32 %v852, %v1070
  %v1143 = vadd.f32 %v853, %v1075
  %v1144 = vadd.f32 %v854, %v1078
  %v1145 = vadd.f32 %v855, %v1083
  %v1146 = vadd.f32 %v856, %v1086
  %v1147 = vadd.f32 %v857, %v1091
  %v1148 = vadd.f32 %v858, %v1094
  %v1149 = vadd.f32 %v859, %v1099
  %v1150 = vadd.f32 %v860, %v1102
  %v1151 = vadd.f32 %v861, %v1107
  %v1152 = vadd.f32 %v862, %v1110
  %v1153 = vadd.f32 %v863, %v1115
  %v1154 = vadd.f32 %v864, %v1118
  %v1155 = vadd.f32 %v865, %v1123
  %v1156 = vadd.f32 %v866, %v1126
  %v1157 = vld [vmem:[%s0 + $0x11] sm:$0xff]
  %v1158 = vld [vmem:[%s0 + $0x19] sm:$0xff]
  %v1159 = vld [vmem:[%s0 + $0x21] sm:$0xff]
  %v1160 = vld [vmem:[%s0 + $0x29] sm:$0xff]
  %v1161 = vld [vmem:[%s0 + $0x31] sm:$0xff]
  %v1162 = vld [vmem:[%s0 + $0x39] sm:$0xff]
  %v1163 = vld [vmem:[%s0 + $0x41] sm:$0xff]
  %v1164 = vld [vmem:[%s0 + $0x49] sm:$0xff]
  %v1165 = vld [vmem:[%s0 + $0x51] sm:$0xff]
  %v1166 = vld [vmem:[%s0 + $0x59] sm:$0xff]
  %v1167 = vld [vmem:[%s0 + $0x61] sm:$0xff]
  %v1168 = vld [vmem:[%s0 + $0x69] sm:$0xff]
  %v1169 = vld [vmem:[%s0 + $0x71] sm:$0xff]
  %v1170 = vld [vmem:[%s0 + $0x79] sm:$0xff]
  %v1171 = vld [vmem:[%s0 + $0x81] sm:$0xff]
  %v1172 = vld [vmem:[%s0 + $0x89] sm:$0xff]
  %v1173 = vld [vmem:[%s0 + $0x91] sm:$0xff]
  %v1174 = vld [vmem:[%s0 + $0x99] sm:$0xff]
  %v1175 = vld [vmem:[%s0 + $0xa1] sm:$0xff]
  %v1176 = vld [vmem:[%s0 + $0xa9] sm:$0xff]
  %v1177 = vld [vmem:[%s0 + $0xb1] sm:$0xff]
  %v1178 = vld [vmem:[%s0 + $0xb9] sm:$0xff]
  %v1179 = vld [vmem:[%s0 + $0xc1] sm:$0xff]
  %v1180 = vld [vmem:[%s0 + $0xc9] sm:$0xff]
  %v1181 = vld [vmem:[%s0 + $0xd1] sm:$0xff]
  %v1182 = vld [vmem:[%s0 + $0xd9] sm:$0xff]
  %v1183 = vld [vmem:[%s0 + $0xe1] sm:$0xff]
  %v1184 = vld [vmem:[%s0 + $0xe9] sm:$0xff]
  %v1185 = vpack.c.bf16 %v1158, %v1157
  %v1186 = vpack.c.bf16 %v1160, %v1159
  %v1187 = vpack.c.bf16 %v1162, %v1161
  %v1188 = vpack.c.bf16 %v1164, %v1163
  %v1189 = vpack.c.bf16 %v1166, %v1165
  %v1190 = vpack.c.bf16 %v1168, %v1167
  %v1191 = vpack.c.bf16 %v1170, %v1169
  %v1192 = vpack.c.bf16 %v1172, %v1171
  %v1193 = vpack.c.bf16 %v1174, %v1173
  %v1194 = vpack.c.bf16 %v1176, %v1175
  %v1195 = vpack.c.bf16 %v1178, %v1177
  %v1196 = vpack.c.bf16 %v1180, %v1179
  %v1197 = vpack.c.bf16 %v1182, %v1181
  %v1198 = vpack.c.bf16 %v1184, %v1183
  %s1199 = scalar_lea.vmem %s1, 128
  %v1200 = vld [vmem:[%s1199] sm:$0xf]
  %v1201 = vld [vmem:[%s1199 + $0x4] sm:$0xf]
  %v1202 = vld [vmem:[%s1199 + $0x8] sm:$0xf]
  %v1203 = vld [vmem:[%s1199 + $0xc] sm:$0xf]
  %v1204 = vld [vmem:[%s1199 + $0x10] sm:$0xf]
  %v1205 = vld [vmem:[%s1199 + $0x14] sm:$0xf]
  %v1206 = vld [vmem:[%s1199 + $0x18] sm:$0xf]
  %v1207 = vld [vmem:[%s1199 + $0x1c] sm:$0xf]
  %v1216 = vunpack.c.l.b16 %v1200
  %v1217 = vunpack.c.l.b16 %v1201
  %v1218 = vunpack.c.l.b16 %v1202
  %v1219 = vunpack.c.l.b16 %v1203
  %v1220 = vunpack.c.l.b16 %v1204
  %v1221 = vunpack.c.l.b16 %v1205
  %v1222 = vunpack.c.l.b16 %v1206
  %v1223 = vunpack.c.l.b16 %v1207
  %v1224 = vpack.c.b16 %v1217, %v1216
  %v1225 = vpack.c.b16 %v1219, %v1218
  %v1226 = vpack.c.b16 %v1221, %v1220
  %v1227 = vpack.c.b16 %v1223, %v1222
  %v1233 = vsel %vm178, %v1185, 0
  %v1236 = vsel %vm178, %v1186, 0
  %v1239 = vsel %vm178, %v1187, 0
  %v1242 = vsel %vm178, %v1188, 0
  %v1245 = vsel %vm178, %v1189, 0
  %v1248 = vsel %vm178, %v1190, 0
  %v1251 = vsel %vm178, %v1191, 0
  %v1254 = vsel %vm178, %v1192, 0
  %v1257 = vsel %vm178, %v1193, 0
  %v1260 = vsel %vm178, %v1194, 0
  %v1263 = vsel %vm178, %v1195, 0
  %v1266 = vsel %vm178, %v1196, 0
  %v1269 = vsel %vm178, %v1197, 0
  %v1272 = vsel %vm178, %v1198, 0
  %1274 = vmatprep.subr.bf16.mxu0 0
  %1275 = vmatpush1.bf16.msra.mxu0 %v1224
  %1276 = vmatprep.subr.bf16.mxu0 0
  %1277 = vmatpush1.bf16.msra.mxu0 %v1225
  %1278 = vmatprep.subr.bf16.mxu0 0
  %1279 = vmatpush1.bf16.msra.mxu0 %v1226
  %1280 = vmatprep.subr.bf16.mxu0 0
  %1281 = vmatpush1.bf16.msra.mxu0 %v1227
  %1282 = vmatprep.subr.bf16.mxu0 0
  %1283 = vmatpush1.bf16.msra.mxu0 0
  %1284 = vmatprep.subr.bf16.mxu0 0
  %1285 = vmatpush1.bf16.msra.mxu0 0
  %1286 = vmatprep.subr.bf16.mxu0 0
  %1287 = vmatpush1.bf16.msra.mxu0 0
  %1288 = vmatprep.subr.bf16.mxu0 0
  %1289 = vmatpush1.bf16.msra.mxu0 0
  %1290 = vmatprep.subr.bf16.mxu0 0
  %1291 = vmatpush1.bf16.msra.mxu0 0
  %1292 = vmatprep.subr.bf16.mxu0 0
  %1293 = vmatpush1.bf16.msra.mxu0 0
  %1294 = vmatprep.subr.bf16.mxu0 0
  %1295 = vmatpush1.bf16.msra.mxu0 0
  %1296 = vmatprep.subr.bf16.mxu0 0
  %1297 = vmatpush1.bf16.msra.mxu0 0
  %1298 = vmatprep.subr.bf16.mxu0 0
  %1299 = vmatpush1.bf16.msra.mxu0 0
  %1300 = vmatprep.subr.bf16.mxu0 0
  %1301 = vmatpush1.bf16.msra.mxu0 0
  %1302 = vmatprep.subr.bf16.mxu0 0
  %1303 = vmatpush1.bf16.msra.mxu0 0
  %1304 = vmatprep.subr.bf16.mxu0 0
  %1305 = vmatpush1.bf16.msra.mxu0 0
  %1306 = vmatprep.mubr.bf16.mxu0 0
  %1307 = vmatmul.mubr.bf16.gmra.mrb[0].mxu0 %v1233
  %v1308 = vpop.f32.mrb[0].mxu0
  %v1309 = vadd.f32 0.0, %v1308
  %v1310 = vpop.f32.mrb[0].mxu0
  %v1311 = vpop.f32.mrb[0].mxu0
  %v1312 = vadd.f32 0.0, %v1311
  %v1313 = vpop.f32.mrb[0].mxu0
  %1314 = vmatprep.mubr.bf16.mxu0 0
  %1315 = vmatmul.mubr.bf16.gmra.mrb[0].mxu0 %v1236
  %v1316 = vpop.f32.mrb[0].mxu0
  %v1317 = vadd.f32 0.0, %v1316
  %v1318 = vpop.f32.mrb[0].mxu0
  %v1319 = vpop.f32.mrb[0].mxu0
  %v1320 = vadd.f32 0.0, %v1319
  %v1321 = vpop.f32.mrb[0].mxu0
  %1322 = vmatprep.mubr.bf16.mxu0 0
  %1323 = vmatmul.mubr.bf16.gmra.mrb[0].mxu0 %v1239
  %v1324 = vpop.f32.mrb[0].mxu0
  %v1325 = vadd.f32 0.0, %v1324
  %v1326 = vpop.f32.mrb[0].mxu0
  %v1327 = vpop.f32.mrb[0].mxu0
  %v1328 = vadd.f32 0.0, %v1327
  %v1329 = vpop.f32.mrb[0].mxu0
  %1330 = vmatprep.mubr.bf16.mxu0 0
  %1331 = vmatmul.mubr.bf16.gmra.mrb[0].mxu0 %v1242
  %v1332 = vpop.f32.mrb[0].mxu0
  %v1333 = vadd.f32 0.0, %v1332
  %v1334 = vpop.f32.mrb[0].mxu0
  %v1335 = vpop.f32.mrb[0].mxu0
  %v1336 = vadd.f32 0.0, %v1335
  %v1337 = vpop.f32.mrb[0].mxu0
  %1338 = vmatprep.mubr.bf16.mxu0 0
  %1339 = vmatmul.mubr.bf16.gmra.mrb[0].mxu0 %v1245
  %v1340 = vpop.f32.mrb[0].mxu0
  %v1341 = vadd.f32 0.0, %v1340
  %v1342 = vpop.f32.mrb[0].mxu0
  %v1343 = vpop.f32.mrb[0].mxu0
  %v1344 = vadd.f32 0.0, %v1343
  %v1345 = vpop.f32.mrb[0].mxu0
  %1346 = vmatprep.mubr.bf16.mxu0 0
  %1347 = vmatmul.mubr.bf16.gmra.mrb[0].mxu0 %v1248
  %v1348 = vpop.f32.mrb[0].mxu0
  %v1349 = vadd.f32 0.0, %v1348
  %v1350 = vpop.f32.mrb[0].mxu0
  %v1351 = vpop.f32.mrb[0].mxu0
  %v1352 = vadd.f32 0.0, %v1351
  %v1353 = vpop.f32.mrb[0].mxu0
  %1354 = vmatprep.mubr.bf16.mxu0 0
  %1355 = vmatmul.mubr.bf16.gmra.mrb[0].mxu0 %v1251
  %v1356 = vpop.f32.mrb[0].mxu0
  %v1357 = vadd.f32 0.0, %v1356
  %v1358 = vpop.f32.mrb[0].mxu0
  %v1359 = vpop.f32.mrb[0].mxu0
  %v1360 = vadd.f32 0.0, %v1359
  %v1361 = vpop.f32.mrb[0].mxu0
  %1362 = vmatprep.mubr.bf16.mxu0 0
  %1363 = vmatmul.mubr.bf16.gmra.mrb[0].mxu0 %v1254
  %v1364 = vpop.f32.mrb[0].mxu0
  %v1365 = vadd.f32 0.0, %v1364
  %v1366 = vpop.f32.mrb[0].mxu0
  %v1367 = vpop.f32.mrb[0].mxu0
  %v1368 = vadd.f32 0.0, %v1367
  %v1369 = vpop.f32.mrb[0].mxu0
  %1370 = vmatprep.mubr.bf16.mxu0 0
  %1371 = vmatmul.mubr.bf16.gmra.mrb[0].mxu0 %v1257
  %v1372 = vpop.f32.mrb[0].mxu0
  %v1373 = vadd.f32 0.0, %v1372
  %v1374 = vpop.f32.mrb[0].mxu0
  %v1375 = vpop.f32.mrb[0].mxu0
  %v1376 = vadd.f32 0.0, %v1375
  %v1377 = vpop.f32.mrb[0].mxu0
  %1378 = vmatprep.mubr.bf16.mxu0 0
  %1379 = vmatmul.mubr.bf16.gmra.mrb[0].mxu0 %v1260
  %v1380 = vpop.f32.mrb[0].mxu0
  %v1381 = vadd.f32 0.0, %v1380
  %v1382 = vpop.f32.mrb[0].mxu0
  %v1383 = vpop.f32.mrb[0].mxu0
  %v1384 = vadd.f32 0.0, %v1383
  %v1385 = vpop.f32.mrb[0].mxu0
  %1386 = vmatprep.mubr.bf16.mxu0 0
  %1387 = vmatmul.mubr.bf16.gmra.mrb[0].mxu0 %v1263
  %v1388 = vpop.f32.mrb[0].mxu0
  %v1389 = vadd.f32 0.0, %v1388
  %v1390 = vpop.f32.mrb[0].mxu0
  %v1391 = vpop.f32.mrb[0].mxu0
  %v1392 = vadd.f32 0.0, %v1391
  %v1393 = vpop.f32.mrb[0].mxu0
  %1394 = vmatprep.mubr.bf16.mxu0 0
  %1395 = vmatmul.mubr.bf16.gmra.mrb[0].mxu0 %v1266
  %v1396 = vpop.f32.mrb[0].mxu0
  %v1397 = vadd.f32 0.0, %v1396
  %v1398 = vpop.f32.mrb[0].mxu0
  %v1399 = vpop.f32.mrb[0].mxu0
  %v1400 = vadd.f32 0.0, %v1399
  %v1401 = vpop.f32.mrb[0].mxu0
  %1402 = vmatprep.mubr.bf16.mxu0 0
  %1403 = vmatmul.mubr.bf16.gmra.mrb[0].mxu0 %v1269
  %v1404 = vpop.f32.mrb[0].mxu0
  %v1405 = vadd.f32 0.0, %v1404
  %v1406 = vpop.f32.mrb[0].mxu0
  %v1407 = vpop.f32.mrb[0].mxu0
  %v1408 = vadd.f32 0.0, %v1407
  %v1409 = vpop.f32.mrb[0].mxu0
  %1410 = vmatprep.mubr.bf16.mxu0 0
  %1411 = vmatmul.mubr.bf16.gmra.mrb[0].mxu0 %v1272
  %v1412 = vpop.f32.mrb[0].mxu0
  %v1413 = vadd.f32 0.0, %v1412
  %v1414 = vpop.f32.mrb[0].mxu0
  %v1415 = vpop.f32.mrb[0].mxu0
  %v1416 = vadd.f32 0.0, %v1415
  %v1417 = vpop.f32.mrb[0].mxu0
  %1418 = vdwg.mxu0
  %v1419 = vadd.f32 %v1129, %v1309
  %v1420 = vadd.f32 %v1130, %v1312
  %v1421 = vadd.f32 %v1131, %v1317
  %v1422 = vadd.f32 %v1132, %v1320
  %v1423 = vadd.f32 %v1133, %v1325
  %v1424 = vadd.f32 %v1134, %v1328
  %v1425 = vadd.f32 %v1135, %v1333
  %v1426 = vadd.f32 %v1136, %v1336
  %v1427 = vadd.f32 %v1137, %v1341
  %v1428 = vadd.f32 %v1138, %v1344
  %v1429 = vadd.f32 %v1139, %v1349
  %v1430 = vadd.f32 %v1140, %v1352
  %v1431 = vadd.f32 %v1141, %v1357
  %v1432 = vadd.f32 %v1142, %v1360
  %v1433 = vadd.f32 %v1143, %v1365
  %v1434 = vadd.f32 %v1144, %v1368
  %v1435 = vadd.f32 %v1145, %v1373
  %v1436 = vadd.f32 %v1146, %v1376
  %v1437 = vadd.f32 %v1147, %v1381
  %v1438 = vadd.f32 %v1148, %v1384
  %v1439 = vadd.f32 %v1149, %v1389
  %v1440 = vadd.f32 %v1150, %v1392
  %v1441 = vadd.f32 %v1151, %v1397
  %v1442 = vadd.f32 %v1152, %v1400
  %v1443 = vadd.f32 %v1153, %v1405
  %v1444 = vadd.f32 %v1154, %v1408
  %v1445 = vadd.f32 %v1155, %v1413
  %v1446 = vadd.f32 %v1156, %v1416
  %v1447 = vld [vmem:[%s0 + $0x12] sm:$0xff]
  %v1448 = vld [vmem:[%s0 + $0x1a] sm:$0xff]
  %v1449 = vld [vmem:[%s0 + $0x22] sm:$0xff]
  %v1450 = vld [vmem:[%s0 + $0x2a] sm:$0xff]
  %v1451 = vld [vmem:[%s0 + $0x32] sm:$0xff]
  %v1452 = vld [vmem:[%s0 + $0x3a] sm:$0xff]
  %v1453 = vld [vmem:[%s0 + $0x42] sm:$0xff]
  %v1454 = vld [vmem:[%s0 + $0x4a] sm:$0xff]
  %v1455 = vld [vmem:[%s0 + $0x52] sm:$0xff]
  %v1456 = vld [vmem:[%s0 + $0x5a] sm:$0xff]
  %v1457 = vld [vmem:[%s0 + $0x62] sm:$0xff]
  %v1458 = vld [vmem:[%s0 + $0x6a] sm:$0xff]
  %v1459 = vld [vmem:[%s0 + $0x72] sm:$0xff]
  %v1460 = vld [vmem:[%s0 + $0x7a] sm:$0xff]
  %v1461 = vld [vmem:[%s0 + $0x82] sm:$0xff]
  %v1462 = vld [vmem:[%s0 + $0x8a] sm:$0xff]
  %v1463 = vld [vmem:[%s0 + $0x92] sm:$0xff]
  %v1464 = vld [vmem:[%s0 + $0x9a] sm:$0xff]
  %v1465 = vld [vmem:[%s0 + $0xa2] sm:$0xff]
  %v1466 = vld [vmem:[%s0 + $0xaa] sm:$0xff]
  %v1467 = vld [vmem:[%s0 + $0xb2] sm:$0xff]
  %v1468 = vld [vmem:[%s0 + $0xba] sm:$0xff]
  %v1469 = vld [vmem:[%s0 + $0xc2] sm:$0xff]
  %v1470 = vld [vmem:[%s0 + $0xca] sm:$0xff]
  %v1471 = vld [vmem:[%s0 + $0xd2] sm:$0xff]
  %v1472 = vld [vmem:[%s0 + $0xda] sm:$0xff]
  %v1473 = vld [vmem:[%s0 + $0xe2] sm:$0xff]
  %v1474 = vld [vmem:[%s0 + $0xea] sm:$0xff]
  %v1475 = vpack.c.bf16 %v1448, %v1447
  %v1476 = vpack.c.bf16 %v1450, %v1449
  %v1477 = vpack.c.bf16 %v1452, %v1451
  %v1478 = vpack.c.bf16 %v1454, %v1453
  %v1479 = vpack.c.bf16 %v1456, %v1455
  %v1480 = vpack.c.bf16 %v1458, %v1457
  %v1481 = vpack.c.bf16 %v1460, %v1459
  %v1482 = vpack.c.bf16 %v1462, %v1461
  %v1483 = vpack.c.bf16 %v1464, %v1463
  %v1484 = vpack.c.bf16 %v1466, %v1465
  %v1485 = vpack.c.bf16 %v1468, %v1467
  %v1486 = vpack.c.bf16 %v1470, %v1469
  %v1487 = vpack.c.bf16 %v1472, %v1471
  %v1488 = vpack.c.bf16 %v1474, %v1473
  %s1489 = scalar_lea.vmem %s1, 160
  %v1490 = vld [vmem:[%s1489] sm:$0xf]
  %v1491 = vld [vmem:[%s1489 + $0x4] sm:$0xf]
  %v1492 = vld [vmem:[%s1489 + $0x8] sm:$0xf]
  %v1493 = vld [vmem:[%s1489 + $0xc] sm:$0xf]
  %v1494 = vld [vmem:[%s1489 + $0x10] sm:$0xf]
  %v1495 = vld [vmem:[%s1489 + $0x14] sm:$0xf]
  %v1496 = vld [vmem:[%s1489 + $0x18] sm:$0xf]
  %v1497 = vld [vmem:[%s1489 + $0x1c] sm:$0xf]
  %v1506 = vunpack.c.l.b16 %v1490
  %v1507 = vunpack.c.l.b16 %v1491
  %v1508 = vunpack.c.l.b16 %v1492
  %v1509 = vunpack.c.l.b16 %v1493
  %v1510 = vunpack.c.l.b16 %v1494
  %v1511 = vunpack.c.l.b16 %v1495
  %v1512 = vunpack.c.l.b16 %v1496
  %v1513 = vunpack.c.l.b16 %v1497
  %v1514 = vpack.c.b16 %v1507, %v1506
  %v1515 = vpack.c.b16 %v1509, %v1508
  %v1516 = vpack.c.b16 %v1511, %v1510
  %v1517 = vpack.c.b16 %v1513, %v1512
  %v1523 = vsel %vm178, %v1475, 0
  %v1526 = vsel %vm178, %v1476, 0
  %v1529 = vsel %vm178, %v1477, 0
  %v1532 = vsel %vm178, %v1478, 0
  %v1535 = vsel %vm178, %v1479, 0
  %v1538 = vsel %vm178, %v1480, 0
  %v1541 = vsel %vm178, %v1481, 0
  %v1544 = vsel %vm178, %v1482, 0
  %v1547 = vsel %vm178, %v1483, 0
  %v1550 = vsel %vm178, %v1484, 0
  %v1553 = vsel %vm178, %v1485, 0
  %v1556 = vsel %vm178, %v1486, 0
  %v1559 = vsel %vm178, %v1487, 0
  %v1562 = vsel %vm178, %v1488, 0
  %1564 = vmatprep.subr.bf16.mxu0 0
  %1565 = vmatpush1.bf16.msra.mxu0 %v1514
  %1566 = vmatprep.subr.bf16.mxu0 0
  %1567 = vmatpush1.bf16.msra.mxu0 %v1515
  %1568 = vmatprep.subr.bf16.mxu0 0
  %1569 = vmatpush1.bf16.msra.mxu0 %v1516
  %1570 = vmatprep.subr.bf16.mxu0 0
  %1571 = vmatpush1.bf16.msra.mxu0 %v1517
  %1572 = vmatprep.subr.bf16.mxu0 0
  %1573 = vmatpush1.bf16.msra.mxu0 0
  %1574 = vmatprep.subr.bf16.mxu0 0
  %1575 = vmatpush1.bf16.msra.mxu0 0
  %1576 = vmatprep.subr.bf16.mxu0 0
  %1577 = vmatpush1.bf16.msra.mxu0 0
  %1578 = vmatprep.subr.bf16.mxu0 0
  %1579 = vmatpush1.bf16.msra.mxu0 0
  %1580 = vmatprep.subr.bf16.mxu0 0
  %1581 = vmatpush1.bf16.msra.mxu0 0
  %1582 = vmatprep.subr.bf16.mxu0 0
  %1583 = vmatpush1.bf16.msra.mxu0 0
  %1584 = vmatprep.subr.bf16.mxu0 0
  %1585 = vmatpush1.bf16.msra.mxu0 0
  %1586 = vmatprep.subr.bf16.mxu0 0
  %1587 = vmatpush1.bf16.msra.mxu0 0
  %1588 = vmatprep.subr.bf16.mxu0 0
  %1589 = vmatpush1.bf16.msra.mxu0 0
  %1590 = vmatprep.subr.bf16.mxu0 0
  %1591 = vmatpush1.bf16.msra.mxu0 0
  %1592 = vmatprep.subr.bf16.mxu0 0
  %1593 = vmatpush1.bf16.msra.mxu0 0
  %1594 = vmatprep.subr.bf16.mxu0 0
  %1595 = vmatpush1.bf16.msra.mxu0 0
  %1596 = vmatprep.mubr.bf16.mxu0 0
  %1597 = vmatmul.mubr.bf16.gmra.mrb[0].mxu0 %v1523
  %v1598 = vpop.f32.mrb[0].mxu0
  %v1599 = vadd.f32 0.0, %v1598
  %v1600 = vpop.f32.mrb[0].mxu0
  %v1601 = vpop.f32.mrb[0].mxu0
  %v1602 = vadd.f32 0.0, %v1601
  %v1603 = vpop.f32.mrb[0].mxu0
  %1604 = vmatprep.mubr.bf16.mxu0 0
  %1605 = vmatmul.mubr.bf16.gmra.mrb[0].mxu0 %v1526
  %v1606 = vpop.f32.mrb[0].mxu0
  %v1607 = vadd.f32 0.0, %v1606
  %v1608 = vpop.f32.mrb[0].mxu0
  %v1609 = vpop.f32.mrb[0].mxu0
  %v1610 = vadd.f32 0.0, %v1609
  %v1611 = vpop.f32.mrb[0].mxu0
  %1612 = vmatprep.mubr.bf16.mxu0 0
  %1613 = vmatmul.mubr.bf16.gmra.mrb[0].mxu0 %v1529
  %v1614 = vpop.f32.mrb[0].mxu0
  %v1615 = vadd.f32 0.0, %v1614
  %v1616 = vpop.f32.mrb[0].mxu0
  %v1617 = vpop.f32.mrb[0].mxu0
  %v1618 = vadd.f32 0.0, %v1617
  %v1619 = vpop.f32.mrb[0].mxu0
  %1620 = vmatprep.mubr.bf16.mxu0 0
  %1621 = vmatmul.mubr.bf16.gmra.mrb[0].mxu0 %v1532
  %v1622 = vpop.f32.mrb[0].mxu0
  %v1623 = vadd.f32 0.0, %v1622
  %v1624 = vpop.f32.mrb[0].mxu0
  %v1625 = vpop.f32.mrb[0].mxu0
  %v1626 = vadd.f32 0.0, %v1625
  %v1627 = vpop.f32.mrb[0].mxu0
  %1628 = vmatprep.mubr.bf16.mxu0 0
  %1629 = vmatmul.mubr.bf16.gmra.mrb[0].mxu0 %v1535
  %v1630 = vpop.f32.mrb[0].mxu0
  %v1631 = vadd.f32 0.0, %v1630
  %v1632 = vpop.f32.mrb[0].mxu0
  %v1633 = vpop.f32.mrb[0].mxu0
  %v1634 = vadd.f32 0.0, %v1633
  %v1635 = vpop.f32.mrb[0].mxu0
  %1636 = vmatprep.mubr.bf16.mxu0 0
  %1637 = vmatmul.mubr.bf16.gmra.mrb[0].mxu0 %v1538
  %v1638 = vpop.f32.mrb[0].mxu0
  %v1639 = vadd.f32 0.0, %v1638
  %v1640 = vpop.f32.mrb[0].mxu0
  %v1641 = vpop.f32.mrb[0].mxu0
  %v1642 = vadd.f32 0.0, %v1641
  %v1643 = vpop.f32.mrb[0].mxu0
  %1644 = vmatprep.mubr.bf16.mxu0 0
  %1645 = vmatmul.mubr.bf16.gmra.mrb[0].mxu0 %v1541
  %v1646 = vpop.f32.mrb[0].mxu0
  %v1647 = vadd.f32 0.0, %v1646
  %v1648 = vpop.f32.mrb[0].mxu0
  %v1649 = vpop.f32.mrb[0].mxu0
  %v1650 = vadd.f32 0.0, %v1649
  %v1651 = vpop.f32.mrb[0].mxu0
  %1652 = vmatprep.mubr.bf16.mxu0 0
  %1653 = vmatmul.mubr.bf16.gmra.mrb[0].mxu0 %v1544
  %v1654 = vpop.f32.mrb[0].mxu0
  %v1655 = vadd.f32 0.0, %v1654
  %v1656 = vpop.f32.mrb[0].mxu0
  %v1657 = vpop.f32.mrb[0].mxu0
  %v1658 = vadd.f32 0.0, %v1657
  %v1659 = vpop.f32.mrb[0].mxu0
  %1660 = vmatprep.mubr.bf16.mxu0 0
  %1661 = vmatmul.mubr.bf16.gmra.mrb[0].mxu0 %v1547
  %v1662 = vpop.f32.mrb[0].mxu0
  %v1663 = vadd.f32 0.0, %v1662
  %v1664 = vpop.f32.mrb[0].mxu0
  %v1665 = vpop.f32.mrb[0].mxu0
  %v1666 = vadd.f32 0.0, %v1665
  %v1667 = vpop.f32.mrb[0].mxu0
  %1668 = vmatprep.mubr.bf16.mxu0 0
  %1669 = vmatmul.mubr.bf16.gmra.mrb[0].mxu0 %v1550
  %v1670 = vpop.f32.mrb[0].mxu0
  %v1671 = vadd.f32 0.0, %v1670
  %v1672 = vpop.f32.mrb[0].mxu0
  %v1673 = vpop.f32.mrb[0].mxu0
  %v1674 = vadd.f32 0.0, %v1673
  %v1675 = vpop.f32.mrb[0].mxu0
  %1676 = vmatprep.mubr.bf16.mxu0 0
  %1677 = vmatmul.mubr.bf16.gmra.mrb[0].mxu0 %v1553
  %v1678 = vpop.f32.mrb[0].mxu0
  %v1679 = vadd.f32 0.0, %v1678
  %v1680 = vpop.f32.mrb[0].mxu0
  %v1681 = vpop.f32.mrb[0].mxu0
  %v1682 = vadd.f32 0.0, %v1681
  %v1683 = vpop.f32.mrb[0].mxu0
  %1684 = vmatprep.mubr.bf16.mxu0 0
  %1685 = vmatmul.mubr.bf16.gmra.mrb[0].mxu0 %v1556
  %v1686 = vpop.f32.mrb[0].mxu0
  %v1687 = vadd.f32 0.0, %v1686
  %v1688 = vpop.f32.mrb[0].mxu0
  %v1689 = vpop.f32.mrb[0].mxu0
  %v1690 = vadd.f32 0.0, %v1689
  %v1691 = vpop.f32.mrb[0].mxu0
  %1692 = vmatprep.mubr.bf16.mxu0 0
  %1693 = vmatmul.mubr.bf16.gmra.mrb[0].mxu0 %v1559
  %v1694 = vpop.f32.mrb[0].mxu0
  %v1695 = vadd.f32 0.0, %v1694
  %v1696 = vpop.f32.mrb[0].mxu0
  %v1697 = vpop.f32.mrb[0].mxu0
  %v1698 = vadd.f32 0.0, %v1697
  %v1699 = vpop.f32.mrb[0].mxu0
  %1700 = vmatprep.mubr.bf16.mxu0 0
  %1701 = vmatmul.mubr.bf16.gmra.mrb[0].mxu0 %v1562
  %v1702 = vpop.f32.mrb[0].mxu0
  %v1703 = vadd.f32 0.0, %v1702
  %v1704 = vpop.f32.mrb[0].mxu0
  %v1705 = vpop.f32.mrb[0].mxu0
  %v1706 = vadd.f32 0.0, %v1705
  %v1707 = vpop.f32.mrb[0].mxu0
  %1708 = vdwg.mxu0
  %v1709 = vadd.f32 %v1419, %v1599
  %v1710 = vadd.f32 %v1420, %v1602
  %v1711 = vadd.f32 %v1421, %v1607
  %v1712 = vadd.f32 %v1422, %v1610
  %v1713 = vadd.f32 %v1423, %v1615
  %v1714 = vadd.f32 %v1424, %v1618
  %v1715 = vadd.f32 %v1425, %v1623
  %v1716 = vadd.f32 %v1426, %v1626
  %v1717 = vadd.f32 %v1427, %v1631
  %v1718 = vadd.f32 %v1428, %v1634
  %v1719 = vadd.f32 %v1429, %v1639
  %v1720 = vadd.f32 %v1430, %v1642
  %v1721 = vadd.f32 %v1431, %v1647
  %v1722 = vadd.f32 %v1432, %v1650
  %v1723 = vadd.f32 %v1433, %v1655
  %v1724 = vadd.f32 %v1434, %v1658
  %v1725 = vadd.f32 %v1435, %v1663
  %v1726 = vadd.f32 %v1436, %v1666
  %v1727 = vadd.f32 %v1437, %v1671
  %v1728 = vadd.f32 %v1438, %v1674
  %v1729 = vadd.f32 %v1439, %v1679
  %v1730 = vadd.f32 %v1440, %v1682
  %v1731 = vadd.f32 %v1441, %v1687
  %v1732 = vadd.f32 %v1442, %v1690
  %v1733 = vadd.f32 %v1443, %v1695
  %v1734 = vadd.f32 %v1444, %v1698
  %v1735 = vadd.f32 %v1445, %v1703
  %v1736 = vadd.f32 %v1446, %v1706
  %v1737 = vld [vmem:[%s0 + $0x20] sm:$0xff]
  %v1738 = vld [vmem:[%s0 + $0x28] sm:$0xff]
  %v1739 = vld [vmem:[%s0 + $0x30] sm:$0xff]
  %v1740 = vld [vmem:[%s0 + $0x38] sm:$0xff]
  %v1741 = vld [vmem:[%s0 + $0x40] sm:$0xff]
  %v1742 = vld [vmem:[%s0 + $0x48] sm:$0xff]
  %v1743 = vld [vmem:[%s0 + $0x50] sm:$0xff]
  %v1744 = vld [vmem:[%s0 + $0x58] sm:$0xff]
  %v1745 = vld [vmem:[%s0 + $0x60] sm:$0xff]
  %v1746 = vld [vmem:[%s0 + $0x68] sm:$0xff]
  %v1747 = vld [vmem:[%s0 + $0x70] sm:$0xff]
  %v1748 = vld [vmem:[%s0 + $0x78] sm:$0xff]
  %v1749 = vld [vmem:[%s0 + $0x80] sm:$0xff]
  %v1750 = vld [vmem:[%s0 + $0x88] sm:$0xff]
  %v1751 = vld [vmem:[%s0 + $0x90] sm:$0xff]
  %v1752 = vld [vmem:[%s0 + $0x98] sm:$0xff]
  %v1753 = vld [vmem:[%s0 + $0xa0] sm:$0xff]
  %v1754 = vld [vmem:[%s0 + $0xa8] sm:$0xff]
  %v1755 = vld [vmem:[%s0 + $0xb0] sm:$0xff]
  %v1756 = vld [vmem:[%s0 + $0xb8] sm:$0xff]
  %v1757 = vld [vmem:[%s0 + $0xc0] sm:$0xff]
  %v1758 = vld [vmem:[%s0 + $0xc8] sm:$0xff]
  %v1759 = vld [vmem:[%s0 + $0xd0] sm:$0xff]
  %v1760 = vld [vmem:[%s0 + $0xd8] sm:$0xff]
  %v1761 = vld [vmem:[%s0 + $0xe0] sm:$0xff]
  %v1762 = vld [vmem:[%s0 + $0xe8] sm:$0xff]
  %v1763 = vld [vmem:[%s0 + $0xf0] sm:$0xff]
  %v1764 = vld [vmem:[%s0 + $0xf8] sm:$0xff]
  %v1765 = vpack.c.bf16 %v1738, %v1737
  %v1766 = vpack.c.bf16 %v1740, %v1739
  %v1767 = vpack.c.bf16 %v1742, %v1741
  %v1768 = vpack.c.bf16 %v1744, %v1743
  %v1769 = vpack.c.bf16 %v1746, %v1745
  %v1770 = vpack.c.bf16 %v1748, %v1747
  %v1771 = vpack.c.bf16 %v1750, %v1749
  %v1772 = vpack.c.bf16 %v1752, %v1751
  %v1773 = vpack.c.bf16 %v1754, %v1753
  %v1774 = vpack.c.bf16 %v1756, %v1755
  %v1775 = vpack.c.bf16 %v1758, %v1757
  %v1776 = vpack.c.bf16 %v1760, %v1759
  %v1777 = vpack.c.bf16 %v1762, %v1761
  %v1778 = vpack.c.bf16 %v1764, %v1763
  %s1779 = scalar_lea.vmem %s1, 192
  %v1780 = vld [vmem:[%s1779] sm:$0xf]
  %v1781 = vld [vmem:[%s1779 + $0x4] sm:$0xf]
  %v1782 = vld [vmem:[%s1779 + $0x8] sm:$0xf]
  %v1783 = vld [vmem:[%s1779 + $0xc] sm:$0xf]
  %v1784 = vld [vmem:[%s1779 + $0x10] sm:$0xf]
  %v1785 = vld [vmem:[%s1779 + $0x14] sm:$0xf]
  %v1786 = vld [vmem:[%s1779 + $0x18] sm:$0xf]
  %v1787 = vld [vmem:[%s1779 + $0x1c] sm:$0xf]
  %v1796 = vunpack.c.l.b16 %v1780
  %v1797 = vunpack.c.l.b16 %v1781
  %v1798 = vunpack.c.l.b16 %v1782
  %v1799 = vunpack.c.l.b16 %v1783
  %v1800 = vunpack.c.l.b16 %v1784
  %v1801 = vunpack.c.l.b16 %v1785
  %v1802 = vunpack.c.l.b16 %v1786
  %v1803 = vunpack.c.l.b16 %v1787
  %v1804 = vpack.c.b16 %v1797, %v1796
  %v1805 = vpack.c.b16 %v1799, %v1798
  %v1806 = vpack.c.b16 %v1801, %v1800
  %v1807 = vpack.c.b16 %v1803, %v1802
  %v1813 = vsel %vm178, %v1765, 0
  %v1816 = vsel %vm178, %v1766, 0
  %v1819 = vsel %vm178, %v1767, 0
  %v1822 = vsel %vm178, %v1768, 0
  %v1825 = vsel %vm178, %v1769, 0
  %v1828 = vsel %vm178, %v1770, 0
  %v1831 = vsel %vm178, %v1771, 0
  %v1834 = vsel %vm178, %v1772, 0
  %v1837 = vsel %vm178, %v1773, 0
  %v1840 = vsel %vm178, %v1774, 0
  %v1843 = vsel %vm178, %v1775, 0
  %v1846 = vsel %vm178, %v1776, 0
  %v1849 = vsel %vm178, %v1777, 0
  %v1852 = vsel %vm178, %v1778, 0
  %1854 = vmatprep.subr.bf16.mxu0 0
  %1855 = vmatpush1.bf16.msra.mxu0 %v1804
  %1856 = vmatprep.subr.bf16.mxu0 0
  %1857 = vmatpush1.bf16.msra.mxu0 %v1805
  %1858 = vmatprep.subr.bf16.mxu0 0
  %1859 = vmatpush1.bf16.msra.mxu0 %v1806
  %1860 = vmatprep.subr.bf16.mxu0 0
  %1861 = vmatpush1.bf16.msra.mxu0 %v1807
  %1862 = vmatprep.subr.bf16.mxu0 0
  %1863 = vmatpush1.bf16.msra.mxu0 0
  %1864 = vmatprep.subr.bf16.mxu0 0
  %1865 = vmatpush1.bf16.msra.mxu0 0
  %1866 = vmatprep.subr.bf16.mxu0 0
  %1867 = vmatpush1.bf16.msra.mxu0 0
  %1868 = vmatprep.subr.bf16.mxu0 0
  %1869 = vmatpush1.bf16.msra.mxu0 0
  %1870 = vmatprep.subr.bf16.mxu0 0
  %1871 = vmatpush1.bf16.msra.mxu0 0
  %1872 = vmatprep.subr.bf16.mxu0 0
  %1873 = vmatpush1.bf16.msra.mxu0 0
  %1874 = vmatprep.subr.bf16.mxu0 0
  %1875 = vmatpush1.bf16.msra.mxu0 0
  %1876 = vmatprep.subr.bf16.mxu0 0
  %1877 = vmatpush1.bf16.msra.mxu0 0
  %1878 = vmatprep.subr.bf16.mxu0 0
  %1879 = vmatpush1.bf16.msra.mxu0 0
  %1880 = vmatprep.subr.bf16.mxu0 0
  %1881 = vmatpush1.bf16.msra.mxu0 0
  %1882 = vmatprep.subr.bf16.mxu0 0
  %1883 = vmatpush1.bf16.msra.mxu0 0
  %1884 = vmatprep.subr.bf16.mxu0 0
  %1885 = vmatpush1.bf16.msra.mxu0 0
  %1886 = vmatprep.mubr.bf16.mxu0 0
  %1887 = vmatmul.mubr.bf16.gmra.mrb[0].mxu0 %v1813
  %v1888 = vpop.f32.mrb[0].mxu0
  %v1889 = vadd.f32 0.0, %v1888
  %v1890 = vpop.f32.mrb[0].mxu0
  %v1891 = vpop.f32.mrb[0].mxu0
  %v1892 = vadd.f32 0.0, %v1891
  %v1893 = vpop.f32.mrb[0].mxu0
  %1894 = vmatprep.mubr.bf16.mxu0 0
  %1895 = vmatmul.mubr.bf16.gmra.mrb[0].mxu0 %v1816
  %v1896 = vpop.f32.mrb[0].mxu0
  %v1897 = vadd.f32 0.0, %v1896
  %v1898 = vpop.f32.mrb[0].mxu0
  %v1899 = vpop.f32.mrb[0].mxu0
  %v1900 = vadd.f32 0.0, %v1899
  %v1901 = vpop.f32.mrb[0].mxu0
  %1902 = vmatprep.mubr.bf16.mxu0 0
  %1903 = vmatmul.mubr.bf16.gmra.mrb[0].mxu0 %v1819
  %v1904 = vpop.f32.mrb[0].mxu0
  %v1905 = vadd.f32 0.0, %v1904
  %v1906 = vpop.f32.mrb[0].mxu0
  %v1907 = vpop.f32.mrb[0].mxu0
  %v1908 = vadd.f32 0.0, %v1907
  %v1909 = vpop.f32.mrb[0].mxu0
  %1910 = vmatprep.mubr.bf16.mxu0 0
  %1911 = vmatmul.mubr.bf16.gmra.mrb[0].mxu0 %v1822
  %v1912 = vpop.f32.mrb[0].mxu0
  %v1913 = vadd.f32 0.0, %v1912
  %v1914 = vpop.f32.mrb[0].mxu0
  %v1915 = vpop.f32.mrb[0].mxu0
  %v1916 = vadd.f32 0.0, %v1915
  %v1917 = vpop.f32.mrb[0].mxu0
  %1918 = vmatprep.mubr.bf16.mxu0 0
  %1919 = vmatmul.mubr.bf16.gmra.mrb[0].mxu0 %v1825
  %v1920 = vpop.f32.mrb[0].mxu0
  %v1921 = vadd.f32 0.0, %v1920
  %v1922 = vpop.f32.mrb[0].mxu0
  %v1923 = vpop.f32.mrb[0].mxu0
  %v1924 = vadd.f32 0.0, %v1923
  %v1925 = vpop.f32.mrb[0].mxu0
  %1926 = vmatprep.mubr.bf16.mxu0 0
  %1927 = vmatmul.mubr.bf16.gmra.mrb[0].mxu0 %v1828
  %v1928 = vpop.f32.mrb[0].mxu0
  %v1929 = vadd.f32 0.0, %v1928
  %v1930 = vpop.f32.mrb[0].mxu0
  %v1931 = vpop.f32.mrb[0].mxu0
  %v1932 = vadd.f32 0.0, %v1931
  %v1933 = vpop.f32.mrb[0].mxu0
  %1934 = vmatprep.mubr.bf16.mxu0 0
  %1935 = vmatmul.mubr.bf16.gmra.mrb[0].mxu0 %v1831
  %v1936 = vpop.f32.mrb[0].mxu0
  %v1937 = vadd.f32 0.0, %v1936
  %v1938 = vpop.f32.mrb[0].mxu0
  %v1939 = vpop.f32.mrb[0].mxu0
  %v1940 = vadd.f32 0.0, %v1939
  %v1941 = vpop.f32.mrb[0].mxu0
  %1942 = vmatprep.mubr.bf16.mxu0 0
  %1943 = vmatmul.mubr.bf16.gmra.mrb[0].mxu0 %v1834
  %v1944 = vpop.f32.mrb[0].mxu0
  %v1945 = vadd.f32 0.0, %v1944
  %v1946 = vpop.f32.mrb[0].mxu0
  %v1947 = vpop.f32.mrb[0].mxu0
  %v1948 = vadd.f32 0.0, %v1947
  %v1949 = vpop.f32.mrb[0].mxu0
  %1950 = vmatprep.mubr.bf16.mxu0 0
  %1951 = vmatmul.mubr.bf16.gmra.mrb[0].mxu0 %v1837
  %v1952 = vpop.f32.mrb[0].mxu0
  %v1953 = vadd.f32 0.0, %v1952
  %v1954 = vpop.f32.mrb[0].mxu0
  %v1955 = vpop.f32.mrb[0].mxu0
  %v1956 = vadd.f32 0.0, %v1955
  %v1957 = vpop.f32.mrb[0].mxu0
  %1958 = vmatprep.mubr.bf16.mxu0 0
  %1959 = vmatmul.mubr.bf16.gmra.mrb[0].mxu0 %v1840
  %v1960 = vpop.f32.mrb[0].mxu0
  %v1961 = vadd.f32 0.0, %v1960
  %v1962 = vpop.f32.mrb[0].mxu0
  %v1963 = vpop.f32.mrb[0].mxu0
  %v1964 = vadd.f32 0.0, %v1963
  %v1965 = vpop.f32.mrb[0].mxu0
  %1966 = vmatprep.mubr.bf16.mxu0 0
  %1967 = vmatmul.mubr.bf16.gmra.mrb[0].mxu0 %v1843
  %v1968 = vpop.f32.mrb[0].mxu0
  %v1969 = vadd.f32 0.0, %v1968
  %v1970 = vpop.f32.mrb[0].mxu0
  %v1971 = vpop.f32.mrb[0].mxu0
  %v1972 = vadd.f32 0.0, %v1971
  %v1973 = vpop.f32.mrb[0].mxu0
  %1974 = vmatprep.mubr.bf16.mxu0 0
  %1975 = vmatmul.mubr.bf16.gmra.mrb[0].mxu0 %v1846
  %v1976 = vpop.f32.mrb[0].mxu0
  %v1977 = vadd.f32 0.0, %v1976
  %v1978 = vpop.f32.mrb[0].mxu0
  %v1979 = vpop.f32.mrb[0].mxu0
  %v1980 = vadd.f32 0.0, %v1979
  %v1981 = vpop.f32.mrb[0].mxu0
  %1982 = vmatprep.mubr.bf16.mxu0 0
  %1983 = vmatmul.mubr.bf16.gmra.mrb[0].mxu0 %v1849
  %v1984 = vpop.f32.mrb[0].mxu0
  %v1985 = vadd.f32 0.0, %v1984
  %v1986 = vpop.f32.mrb[0].mxu0
  %v1987 = vpop.f32.mrb[0].mxu0
  %v1988 = vadd.f32 0.0, %v1987
  %v1989 = vpop.f32.mrb[0].mxu0
  %1990 = vmatprep.mubr.bf16.mxu0 0
  %1991 = vmatmul.mubr.bf16.gmra.mrb[0].mxu0 %v1852
  %v1992 = vpop.f32.mrb[0].mxu0
  %v1993 = vadd.f32 0.0, %v1992
  %v1994 = vpop.f32.mrb[0].mxu0
  %v1995 = vpop.f32.mrb[0].mxu0
  %v1996 = vadd.f32 0.0, %v1995
  %v1997 = vpop.f32.mrb[0].mxu0
  %1998 = vdwg.mxu0
  %v1999 = vadd.f32 %v1709, %v1889
  %v2000 = vadd.f32 %v1710, %v1892
  %v2001 = vadd.f32 %v1711, %v1897
  %v2002 = vadd.f32 %v1712, %v1900
  %v2003 = vadd.f32 %v1713, %v1905
  %v2004 = vadd.f32 %v1714, %v1908
  %v2005 = vadd.f32 %v1715, %v1913
  %v2006 = vadd.f32 %v1716, %v1916
  %v2007 = vadd.f32 %v1717, %v1921
  %v2008 = vadd.f32 %v1718, %v1924
  %v2009 = vadd.f32 %v1719, %v1929
  %v2010 = vadd.f32 %v1720, %v1932
  %v2011 = vadd.f32 %v1721, %v1937
  %v2012 = vadd.f32 %v1722, %v1940
  %v2013 = vadd.f32 %v1723, %v1945
  %v2014 = vadd.f32 %v1724, %v1948
  %v2015 = vadd.f32 %v1725, %v1953
  %v2016 = vadd.f32 %v1726, %v1956
  %v2017 = vadd.f32 %v1727, %v1961
  %v2018 = vadd.f32 %v1728, %v1964
  %v2019 = vadd.f32 %v1729, %v1969
  %v2020 = vadd.f32 %v1730, %v1972
  %v2021 = vadd.f32 %v1731, %v1977
  %v2022 = vadd.f32 %v1732, %v1980
  %v2023 = vadd.f32 %v1733, %v1985
  %v2024 = vadd.f32 %v1734, %v1988
  %v2025 = vadd.f32 %v1735, %v1993
  %v2026 = vadd.f32 %v1736, %v1996
  %v2027 = vld [vmem:[%s0 + $0x21] sm:$0xff]
  %v2028 = vld [vmem:[%s0 + $0x29] sm:$0xff]
  %v2029 = vld [vmem:[%s0 + $0x31] sm:$0xff]
  %v2030 = vld [vmem:[%s0 + $0x39] sm:$0xff]
  %v2031 = vld [vmem:[%s0 + $0x41] sm:$0xff]
  %v2032 = vld [vmem:[%s0 + $0x49] sm:$0xff]
  %v2033 = vld [vmem:[%s0 + $0x51] sm:$0xff]
  %v2034 = vld [vmem:[%s0 + $0x59] sm:$0xff]
  %v2035 = vld [vmem:[%s0 + $0x61] sm:$0xff]
  %v2036 = vld [vmem:[%s0 + $0x69] sm:$0xff]
  %v2037 = vld [vmem:[%s0 + $0x71] sm:$0xff]
  %v2038 = vld [vmem:[%s0 + $0x79] sm:$0xff]
  %v2039 = vld [vmem:[%s0 + $0x81] sm:$0xff]
  %v2040 = vld [vmem:[%s0 + $0x89] sm:$0xff]
  %v2041 = vld [vmem:[%s0 + $0x91] sm:$0xff]
  %v2042 = vld [vmem:[%s0 + $0x99] sm:$0xff]
  %v2043 = vld [vmem:[%s0 + $0xa1] sm:$0xff]
  %v2044 = vld [vmem:[%s0 + $0xa9] sm:$0xff]
  %v2045 = vld [vmem:[%s0 + $0xb1] sm:$0xff]
  %v2046 = vld [vmem:[%s0 + $0xb9] sm:$0xff]
  %v2047 = vld [vmem:[%s0 + $0xc1] sm:$0xff]
  %v2048 = vld [vmem:[%s0 + $0xc9] sm:$0xff]
  %v2049 = vld [vmem:[%s0 + $0xd1] sm:$0xff]
  %v2050 = vld [vmem:[%s0 + $0xd9] sm:$0xff]
  %v2051 = vld [vmem:[%s0 + $0xe1] sm:$0xff]
  %v2052 = vld [vmem:[%s0 + $0xe9] sm:$0xff]
  %v2053 = vld [vmem:[%s0 + $0xf1] sm:$0xff]
  %v2054 = vld [vmem:[%s0 + $0xf9] sm:$0xff]
  %v2055 = vpack.c.bf16 %v2028, %v2027
  %v2056 = vpack.c.bf16 %v2030, %v2029
  %v2057 = vpack.c.bf16 %v2032, %v2031
  %v2058 = vpack.c.bf16 %v2034, %v2033
  %v2059 = vpack.c.bf16 %v2036, %v2035
  %v2060 = vpack.c.bf16 %v2038, %v2037
  %v2061 = vpack.c.bf16 %v2040, %v2039
  %v2062 = vpack.c.bf16 %v2042, %v2041
  %v2063 = vpack.c.bf16 %v2044, %v2043
  %v2064 = vpack.c.bf16 %v2046, %v2045
  %v2065 = vpack.c.bf16 %v2048, %v2047
  %v2066 = vpack.c.bf16 %v2050, %v2049
  %v2067 = vpack.c.bf16 %v2052, %v2051
  %v2068 = vpack.c.bf16 %v2054, %v2053
  %s2069 = scalar_lea.vmem %s1, 224
  %v2070 = vld [vmem:[%s2069] sm:$0xf]
  %v2071 = vld [vmem:[%s2069 + $0x4] sm:$0xf]
  %v2072 = vld [vmem:[%s2069 + $0x8] sm:$0xf]
  %v2073 = vld [vmem:[%s2069 + $0xc] sm:$0xf]
  %v2074 = vld [vmem:[%s2069 + $0x10] sm:$0xf]
  %v2075 = vld [vmem:[%s2069 + $0x14] sm:$0xf]
  %v2076 = vld [vmem:[%s2069 + $0x18] sm:$0xf]
  %v2077 = vld [vmem:[%s2069 + $0x1c] sm:$0xf]
  %v2086 = vunpack.c.l.b16 %v2070
  %v2087 = vunpack.c.l.b16 %v2071
  %v2088 = vunpack.c.l.b16 %v2072
  %v2089 = vunpack.c.l.b16 %v2073
  %v2090 = vunpack.c.l.b16 %v2074
  %v2091 = vunpack.c.l.b16 %v2075
  %v2092 = vunpack.c.l.b16 %v2076
  %v2093 = vunpack.c.l.b16 %v2077
  %v2094 = vpack.c.b16 %v2087, %v2086
  %v2095 = vpack.c.b16 %v2089, %v2088
  %v2096 = vpack.c.b16 %v2091, %v2090
  %v2097 = vpack.c.b16 %v2093, %v2092
  %v2103 = vsel %vm178, %v2055, 0
  %v2106 = vsel %vm178, %v2056, 0
  %v2109 = vsel %vm178, %v2057, 0
  %v2112 = vsel %vm178, %v2058, 0
  %v2115 = vsel %vm178, %v2059, 0
  %v2118 = vsel %vm178, %v2060, 0
  %v2121 = vsel %vm178, %v2061, 0
  %v2124 = vsel %vm178, %v2062, 0
  %v2127 = vsel %vm178, %v2063, 0
  %v2130 = vsel %vm178, %v2064, 0
  %v2133 = vsel %vm178, %v2065, 0
  %v2136 = vsel %vm178, %v2066, 0
  %v2139 = vsel %vm178, %v2067, 0
  %v2142 = vsel %vm178, %v2068, 0
  %2144 = vmatprep.subr.bf16.mxu0 0
  %2145 = vmatpush1.bf16.msra.mxu0 %v2094
  %2146 = vmatprep.subr.bf16.mxu0 0
  %2147 = vmatpush1.bf16.msra.mxu0 %v2095
  %2148 = vmatprep.subr.bf16.mxu0 0
  %2149 = vmatpush1.bf16.msra.mxu0 %v2096
  %2150 = vmatprep.subr.bf16.mxu0 0
  %2151 = vmatpush1.bf16.msra.mxu0 %v2097
  %2152 = vmatprep.subr.bf16.mxu0 0
  %2153 = vmatpush1.bf16.msra.mxu0 0
  %2154 = vmatprep.subr.bf16.mxu0 0
  %2155 = vmatpush1.bf16.msra.mxu0 0
  %2156 = vmatprep.subr.bf16.mxu0 0
  %2157 = vmatpush1.bf16.msra.mxu0 0
  %2158 = vmatprep.subr.bf16.mxu0 0
  %2159 = vmatpush1.bf16.msra.mxu0 0
  %2160 = vmatprep.subr.bf16.mxu0 0
  %2161 = vmatpush1.bf16.msra.mxu0 0
  %2162 = vmatprep.subr.bf16.mxu0 0
  %2163 = vmatpush1.bf16.msra.mxu0 0
  %2164 = vmatprep.subr.bf16.mxu0 0
  %2165 = vmatpush1.bf16.msra.mxu0 0
  %2166 = vmatprep.subr.bf16.mxu0 0
  %2167 = vmatpush1.bf16.msra.mxu0 0
  %2168 = vmatprep.subr.bf16.mxu0 0
  %2169 = vmatpush1.bf16.msra.mxu0 0
  %2170 = vmatprep.subr.bf16.mxu0 0
  %2171 = vmatpush1.bf16.msra.mxu0 0
  %2172 = vmatprep.subr.bf16.mxu0 0
  %2173 = vmatpush1.bf16.msra.mxu0 0
  %2174 = vmatprep.subr.bf16.mxu0 0
  %2175 = vmatpush1.bf16.msra.mxu0 0
  %2176 = vmatprep.mubr.bf16.mxu0 0
  %2177 = vmatmul.mubr.bf16.gmra.mrb[0].mxu0 %v2103
  %v2178 = vpop.f32.mrb[0].mxu0
  %v2179 = vadd.f32 0.0, %v2178
  %v2180 = vpop.f32.mrb[0].mxu0
  %v2181 = vpop.f32.mrb[0].mxu0
  %v2182 = vadd.f32 0.0, %v2181
  %v2183 = vpop.f32.mrb[0].mxu0
  %2184 = vmatprep.mubr.bf16.mxu0 0
  %2185 = vmatmul.mubr.bf16.gmra.mrb[0].mxu0 %v2106
  %v2186 = vpop.f32.mrb[0].mxu0
  %v2187 = vadd.f32 0.0, %v2186
  %v2188 = vpop.f32.mrb[0].mxu0
  %v2189 = vpop.f32.mrb[0].mxu0
  %v2190 = vadd.f32 0.0, %v2189
  %v2191 = vpop.f32.mrb[0].mxu0
  %2192 = vmatprep.mubr.bf16.mxu0 0
  %2193 = vmatmul.mubr.bf16.gmra.mrb[0].mxu0 %v2109
  %v2194 = vpop.f32.mrb[0].mxu0
  %v2195 = vadd.f32 0.0, %v2194
  %v2196 = vpop.f32.mrb[0].mxu0
  %v2197 = vpop.f32.mrb[0].mxu0
  %v2198 = vadd.f32 0.0, %v2197
  %v2199 = vpop.f32.mrb[0].mxu0
  %2200 = vmatprep.mubr.bf16.mxu0 0
  %2201 = vmatmul.mubr.bf16.gmra.mrb[0].mxu0 %v2112
  %v2202 = vpop.f32.mrb[0].mxu0
  %v2203 = vadd.f32 0.0, %v2202
  %v2204 = vpop.f32.mrb[0].mxu0
  %v2205 = vpop.f32.mrb[0].mxu0
  %v2206 = vadd.f32 0.0, %v2205
  %v2207 = vpop.f32.mrb[0].mxu0
  %2208 = vmatprep.mubr.bf16.mxu0 0
  %2209 = vmatmul.mubr.bf16.gmra.mrb[0].mxu0 %v2115
  %v2210 = vpop.f32.mrb[0].mxu0
  %v2211 = vadd.f32 0.0, %v2210
  %v2212 = vpop.f32.mrb[0].mxu0
  %v2213 = vpop.f32.mrb[0].mxu0
  %v2214 = vadd.f32 0.0, %v2213
  %v2215 = vpop.f32.mrb[0].mxu0
  %2216 = vmatprep.mubr.bf16.mxu0 0
  %2217 = vmatmul.mubr.bf16.gmra.mrb[0].mxu0 %v2118
  %v2218 = vpop.f32.mrb[0].mxu0
  %v2219 = vadd.f32 0.0, %v2218
  %v2220 = vpop.f32.mrb[0].mxu0
  %v2221 = vpop.f32.mrb[0].mxu0
  %v2222 = vadd.f32 0.0, %v2221
  %v2223 = vpop.f32.mrb[0].mxu0
  %2224 = vmatprep.mubr.bf16.mxu0 0
  %2225 = vmatmul.mubr.bf16.gmra.mrb[0].mxu0 %v2121
  %v2226 = vpop.f32.mrb[0].mxu0
  %v2227 = vadd.f32 0.0, %v2226
  %v2228 = vpop.f32.mrb[0].mxu0
  %v2229 = vpop.f32.mrb[0].mxu0
  %v2230 = vadd.f32 0.0, %v2229
  %v2231 = vpop.f32.mrb[0].mxu0
  %2232 = vmatprep.mubr.bf16.mxu0 0
  %2233 = vmatmul.mubr.bf16.gmra.mrb[0].mxu0 %v2124
  %v2234 = vpop.f32.mrb[0].mxu0
  %v2235 = vadd.f32 0.0, %v2234
  %v2236 = vpop.f32.mrb[0].mxu0
  %v2237 = vpop.f32.mrb[0].mxu0
  %v2238 = vadd.f32 0.0, %v2237
  %v2239 = vpop.f32.mrb[0].mxu0
  %2240 = vmatprep.mubr.bf16.mxu0 0
  %2241 = vmatmul.mubr.bf16.gmra.mrb[0].mxu0 %v2127
  %v2242 = vpop.f32.mrb[0].mxu0
  %v2243 = vadd.f32 0.0, %v2242
  %v2244 = vpop.f32.mrb[0].mxu0
  %v2245 = vpop.f32.mrb[0].mxu0
  %v2246 = vadd.f32 0.0, %v2245
  %v2247 = vpop.f32.mrb[0].mxu0
  %2248 = vmatprep.mubr.bf16.mxu0 0
  %2249 = vmatmul.mubr.bf16.gmra.mrb[0].mxu0 %v2130
  %v2250 = vpop.f32.mrb[0].mxu0
  %v2251 = vadd.f32 0.0, %v2250
  %v2252 = vpop.f32.mrb[0].mxu0
  %v2253 = vpop.f32.mrb[0].mxu0
  %v2254 = vadd.f32 0.0, %v2253
  %v2255 = vpop.f32.mrb[0].mxu0
  %2256 = vmatprep.mubr.bf16.mxu0 0
  %2257 = vmatmul.mubr.bf16.gmra.mrb[0].mxu0 %v2133
  %v2258 = vpop.f32.mrb[0].mxu0
  %v2259 = vadd.f32 0.0, %v2258
  %v2260 = vpop.f32.mrb[0].mxu0
  %v2261 = vpop.f32.mrb[0].mxu0
  %v2262 = vadd.f32 0.0, %v2261
  %v2263 = vpop.f32.mrb[0].mxu0
  %2264 = vmatprep.mubr.bf16.mxu0 0
  %2265 = vmatmul.mubr.bf16.gmra.mrb[0].mxu0 %v2136
  %v2266 = vpop.f32.mrb[0].mxu0
  %v2267 = vadd.f32 0.0, %v2266
  %v2268 = vpop.f32.mrb[0].mxu0
  %v2269 = vpop.f32.mrb[0].mxu0
  %v2270 = vadd.f32 0.0, %v2269
  %v2271 = vpop.f32.mrb[0].mxu0
  %2272 = vmatprep.mubr.bf16.mxu0 0
  %2273 = vmatmul.mubr.bf16.gmra.mrb[0].mxu0 %v2139
  %v2274 = vpop.f32.mrb[0].mxu0
  %v2275 = vadd.f32 0.0, %v2274
  %v2276 = vpop.f32.mrb[0].mxu0
  %v2277 = vpop.f32.mrb[0].mxu0
  %v2278 = vadd.f32 0.0, %v2277
  %v2279 = vpop.f32.mrb[0].mxu0
  %2280 = vmatprep.mubr.bf16.mxu0 0
  %2281 = vmatmul.mubr.bf16.gmra.mrb[0].mxu0 %v2142
  %v2282 = vpop.f32.mrb[0].mxu0
  %v2283 = vadd.f32 0.0, %v2282
  %v2284 = vpop.f32.mrb[0].mxu0
  %v2285 = vpop.f32.mrb[0].mxu0
  %v2286 = vadd.f32 0.0, %v2285
  %v2287 = vpop.f32.mrb[0].mxu0
  %2288 = vdwg.mxu0
  %v2289 = vadd.f32 %v1999, %v2179
  %v2290 = vadd.f32 %v2000, %v2182
  %v2291 = vadd.f32 %v2001, %v2187
  %v2292 = vadd.f32 %v2002, %v2190
  %v2293 = vadd.f32 %v2003, %v2195
  %v2294 = vadd.f32 %v2004, %v2198
  %v2295 = vadd.f32 %v2005, %v2203
  %v2296 = vadd.f32 %v2006, %v2206
  %v2297 = vadd.f32 %v2007, %v2211
  %v2298 = vadd.f32 %v2008, %v2214
  %v2299 = vadd.f32 %v2009, %v2219
  %v2300 = vadd.f32 %v2010, %v2222
  %v2301 = vadd.f32 %v2011, %v2227
  %v2302 = vadd.f32 %v2012, %v2230
  %v2303 = vadd.f32 %v2013, %v2235
  %v2304 = vadd.f32 %v2014, %v2238
  %v2305 = vadd.f32 %v2015, %v2243
  %v2306 = vadd.f32 %v2016, %v2246
  %v2307 = vadd.f32 %v2017, %v2251
  %v2308 = vadd.f32 %v2018, %v2254
  %v2309 = vadd.f32 %v2019, %v2259
  %v2310 = vadd.f32 %v2020, %v2262
  %v2311 = vadd.f32 %v2021, %v2267
  %v2312 = vadd.f32 %v2022, %v2270
  %v2313 = vadd.f32 %v2023, %v2275
  %v2314 = vadd.f32 %v2024, %v2278
  %v2315 = vadd.f32 %v2025, %v2283
  %v2316 = vadd.f32 %v2026, %v2286
  %v2317 = vld [vmem:[%s0 + $0x22] sm:$0xff]
  %v2318 = vld [vmem:[%s0 + $0x2a] sm:$0xff]
  %v2319 = vld [vmem:[%s0 + $0x32] sm:$0xff]
  %v2320 = vld [vmem:[%s0 + $0x3a] sm:$0xff]
  %v2321 = vld [vmem:[%s0 + $0x42] sm:$0xff]
  %v2322 = vld [vmem:[%s0 + $0x4a] sm:$0xff]
  %v2323 = vld [vmem:[%s0 + $0x52] sm:$0xff]
  %v2324 = vld [vmem:[%s0 + $0x5a] sm:$0xff]
  %v2325 = vld [vmem:[%s0 + $0x62] sm:$0xff]
  %v2326 = vld [vmem:[%s0 + $0x6a] sm:$0xff]
  %v2327 = vld [vmem:[%s0 + $0x72] sm:$0xff]
  %v2328 = vld [vmem:[%s0 + $0x7a] sm:$0xff]
  %v2329 = vld [vmem:[%s0 + $0x82] sm:$0xff]
  %v2330 = vld [vmem:[%s0 + $0x8a] sm:$0xff]
  %v2331 = vld [vmem:[%s0 + $0x92] sm:$0xff]
  %v2332 = vld [vmem:[%s0 + $0x9a] sm:$0xff]
  %v2333 = vld [vmem:[%s0 + $0xa2] sm:$0xff]
  %v2334 = vld [vmem:[%s0 + $0xaa] sm:$0xff]
  %v2335 = vld [vmem:[%s0 + $0xb2] sm:$0xff]
  %v2336 = vld [vmem:[%s0 + $0xba] sm:$0xff]
  %v2337 = vld [vmem:[%s0 + $0xc2] sm:$0xff]
  %v2338 = vld [vmem:[%s0 + $0xca] sm:$0xff]
  %v2339 = vld [vmem:[%s0 + $0xd2] sm:$0xff]
  %v2340 = vld [vmem:[%s0 + $0xda] sm:$0xff]
  %v2341 = vld [vmem:[%s0 + $0xe2] sm:$0xff]
  %v2342 = vld [vmem:[%s0 + $0xea] sm:$0xff]
  %v2343 = vld [vmem:[%s0 + $0xf2] sm:$0xff]
  %v2344 = vld [vmem:[%s0 + $0xfa] sm:$0xff]
  %v2345 = vpack.c.bf16 %v2318, %v2317
  %v2346 = vpack.c.bf16 %v2320, %v2319
  %v2347 = vpack.c.bf16 %v2322, %v2321
  %v2348 = vpack.c.bf16 %v2324, %v2323
  %v2349 = vpack.c.bf16 %v2326, %v2325
  %v2350 = vpack.c.bf16 %v2328, %v2327
  %v2351 = vpack.c.bf16 %v2330, %v2329
  %v2352 = vpack.c.bf16 %v2332, %v2331
  %v2353 = vpack.c.bf16 %v2334, %v2333
  %v2354 = vpack.c.bf16 %v2336, %v2335
  %v2355 = vpack.c.bf16 %v2338, %v2337
  %v2356 = vpack.c.bf16 %v2340, %v2339
  %v2357 = vpack.c.bf16 %v2342, %v2341
  %v2358 = vpack.c.bf16 %v2344, %v2343
  %s2359 = scalar_lea.vmem %s1, 256
  %v2360 = vld [vmem:[%s2359] sm:$0xf]
  %v2361 = vld [vmem:[%s2359 + $0x4] sm:$0xf]
  %v2362 = vld [vmem:[%s2359 + $0x8] sm:$0xf]
  %v2363 = vld [vmem:[%s2359 + $0xc] sm:$0xf]
  %v2364 = vld [vmem:[%s2359 + $0x10] sm:$0xf]
  %v2365 = vld [vmem:[%s2359 + $0x14] sm:$0xf]
  %v2366 = vld [vmem:[%s2359 + $0x18] sm:$0xf]
  %v2367 = vld [vmem:[%s2359 + $0x1c] sm:$0xf]
  %v2376 = vunpack.c.l.b16 %v2360
  %v2377 = vunpack.c.l.b16 %v2361
  %v2378 = vunpack.c.l.b16 %v2362
  %v2379 = vunpack.c.l.b16 %v2363
  %v2380 = vunpack.c.l.b16 %v2364
  %v2381 = vunpack.c.l.b16 %v2365
  %v2382 = vunpack.c.l.b16 %v2366
  %v2383 = vunpack.c.l.b16 %v2367
  %v2384 = vpack.c.b16 %v2377, %v2376
  %v2385 = vpack.c.b16 %v2379, %v2378
  %v2386 = vpack.c.b16 %v2381, %v2380
  %v2387 = vpack.c.b16 %v2383, %v2382
  %v2393 = vsel %vm178, %v2345, 0
  %v2396 = vsel %vm178, %v2346, 0
  %v2399 = vsel %vm178, %v2347, 0
  %v2402 = vsel %vm178, %v2348, 0
  %v2405 = vsel %vm178, %v2349, 0
  %v2408 = vsel %vm178, %v2350, 0
  %v2411 = vsel %vm178, %v2351, 0
  %v2414 = vsel %vm178, %v2352, 0
  %v2417 = vsel %vm178, %v2353, 0
  %v2420 = vsel %vm178, %v2354, 0
  %v2423 = vsel %vm178, %v2355, 0
  %v2426 = vsel %vm178, %v2356, 0
  %v2429 = vsel %vm178, %v2357, 0
  %v2432 = vsel %vm178, %v2358, 0
  %2434 = vmatprep.subr.bf16.mxu0 0
  %2435 = vmatpush1.bf16.msra.mxu0 %v2384
  %2436 = vmatprep.subr.bf16.mxu0 0
  %2437 = vmatpush1.bf16.msra.mxu0 %v2385
  %2438 = vmatprep.subr.bf16.mxu0 0
  %2439 = vmatpush1.bf16.msra.mxu0 %v2386
  %2440 = vmatprep.subr.bf16.mxu0 0
  %2441 = vmatpush1.bf16.msra.mxu0 %v2387
  %2442 = vmatprep.subr.bf16.mxu0 0
  %2443 = vmatpush1.bf16.msra.mxu0 0
  %2444 = vmatprep.subr.bf16.mxu0 0
  %2445 = vmatpush1.bf16.msra.mxu0 0
  %2446 = vmatprep.subr.bf16.mxu0 0
  %2447 = vmatpush1.bf16.msra.mxu0 0
  %2448 = vmatprep.subr.bf16.mxu0 0
  %2449 = vmatpush1.bf16.msra.mxu0 0
  %2450 = vmatprep.subr.bf16.mxu0 0
  %2451 = vmatpush1.bf16.msra.mxu0 0
  %2452 = vmatprep.subr.bf16.mxu0 0
  %2453 = vmatpush1.bf16.msra.mxu0 0
  %2454 = vmatprep.subr.bf16.mxu0 0
  %2455 = vmatpush1.bf16.msra.mxu0 0
  %2456 = vmatprep.subr.bf16.mxu0 0
  %2457 = vmatpush1.bf16.msra.mxu0 0
  %2458 = vmatprep.subr.bf16.mxu0 0
  %2459 = vmatpush1.bf16.msra.mxu0 0
  %2460 = vmatprep.subr.bf16.mxu0 0
  %2461 = vmatpush1.bf16.msra.mxu0 0
  %2462 = vmatprep.subr.bf16.mxu0 0
  %2463 = vmatpush1.bf16.msra.mxu0 0
  %2464 = vmatprep.subr.bf16.mxu0 0
  %2465 = vmatpush1.bf16.msra.mxu0 0
  %2466 = vmatprep.mubr.bf16.mxu0 0
  %2467 = vmatmul.mubr.bf16.gmra.mrb[0].mxu0 %v2393
  %v2468 = vpop.f32.mrb[0].mxu0
  %v2469 = vadd.f32 0.0, %v2468
  %v2470 = vpop.f32.mrb[0].mxu0
  %v2471 = vpop.f32.mrb[0].mxu0
  %v2472 = vadd.f32 0.0, %v2471
  %v2473 = vpop.f32.mrb[0].mxu0
  %2474 = vmatprep.mubr.bf16.mxu0 0
  %2475 = vmatmul.mubr.bf16.gmra.mrb[0].mxu0 %v2396
  %v2476 = vpop.f32.mrb[0].mxu0
  %v2477 = vadd.f32 0.0, %v2476
  %v2478 = vpop.f32.mrb[0].mxu0
  %v2479 = vpop.f32.mrb[0].mxu0
  %v2480 = vadd.f32 0.0, %v2479
  %v2481 = vpop.f32.mrb[0].mxu0
  %2482 = vmatprep.mubr.bf16.mxu0 0
  %2483 = vmatmul.mubr.bf16.gmra.mrb[0].mxu0 %v2399
  %v2484 = vpop.f32.mrb[0].mxu0
  %v2485 = vadd.f32 0.0, %v2484
  %v2486 = vpop.f32.mrb[0].mxu0
  %v2487 = vpop.f32.mrb[0].mxu0
  %v2488 = vadd.f32 0.0, %v2487
  %v2489 = vpop.f32.mrb[0].mxu0
  %2490 = vmatprep.mubr.bf16.mxu0 0
  %2491 = vmatmul.mubr.bf16.gmra.mrb[0].mxu0 %v2402
  %v2492 = vpop.f32.mrb[0].mxu0
  %v2493 = vadd.f32 0.0, %v2492
  %v2494 = vpop.f32.mrb[0].mxu0
  %v2495 = vpop.f32.mrb[0].mxu0
  %v2496 = vadd.f32 0.0, %v2495
  %v2497 = vpop.f32.mrb[0].mxu0
  %2498 = vmatprep.mubr.bf16.mxu0 0
  %2499 = vmatmul.mubr.bf16.gmra.mrb[0].mxu0 %v2405
  %v2500 = vpop.f32.mrb[0].mxu0
  %v2501 = vadd.f32 0.0, %v2500
  %v2502 = vpop.f32.mrb[0].mxu0
  %v2503 = vpop.f32.mrb[0].mxu0
  %v2504 = vadd.f32 0.0, %v2503
  %v2505 = vpop.f32.mrb[0].mxu0
  %2506 = vmatprep.mubr.bf16.mxu0 0
  %2507 = vmatmul.mubr.bf16.gmra.mrb[0].mxu0 %v2408
  %v2508 = vpop.f32.mrb[0].mxu0
  %v2509 = vadd.f32 0.0, %v2508
  %v2510 = vpop.f32.mrb[0].mxu0
  %v2511 = vpop.f32.mrb[0].mxu0
  %v2512 = vadd.f32 0.0, %v2511
  %v2513 = vpop.f32.mrb[0].mxu0
  %2514 = vmatprep.mubr.bf16.mxu0 0
  %2515 = vmatmul.mubr.bf16.gmra.mrb[0].mxu0 %v2411
  %v2516 = vpop.f32.mrb[0].mxu0
  %v2517 = vadd.f32 0.0, %v2516
  %v2518 = vpop.f32.mrb[0].mxu0
  %v2519 = vpop.f32.mrb[0].mxu0
  %v2520 = vadd.f32 0.0, %v2519
  %v2521 = vpop.f32.mrb[0].mxu0
  %2522 = vmatprep.mubr.bf16.mxu0 0
  %2523 = vmatmul.mubr.bf16.gmra.mrb[0].mxu0 %v2414
  %v2524 = vpop.f32.mrb[0].mxu0
  %v2525 = vadd.f32 0.0, %v2524
  %v2526 = vpop.f32.mrb[0].mxu0
  %v2527 = vpop.f32.mrb[0].mxu0
  %v2528 = vadd.f32 0.0, %v2527
  %v2529 = vpop.f32.mrb[0].mxu0
  %2530 = vmatprep.mubr.bf16.mxu0 0
  %2531 = vmatmul.mubr.bf16.gmra.mrb[0].mxu0 %v2417
  %v2532 = vpop.f32.mrb[0].mxu0
  %v2533 = vadd.f32 0.0, %v2532
  %v2534 = vpop.f32.mrb[0].mxu0
  %v2535 = vpop.f32.mrb[0].mxu0
  %v2536 = vadd.f32 0.0, %v2535
  %v2537 = vpop.f32.mrb[0].mxu0
  %2538 = vmatprep.mubr.bf16.mxu0 0
  %2539 = vmatmul.mubr.bf16.gmra.mrb[0].mxu0 %v2420
  %v2540 = vpop.f32.mrb[0].mxu0
  %v2541 = vadd.f32 0.0, %v2540
  %v2542 = vpop.f32.mrb[0].mxu0
  %v2543 = vpop.f32.mrb[0].mxu0
  %v2544 = vadd.f32 0.0, %v2543
  %v2545 = vpop.f32.mrb[0].mxu0
  %2546 = vmatprep.mubr.bf16.mxu0 0
  %2547 = vmatmul.mubr.bf16.gmra.mrb[0].mxu0 %v2423
  %v2548 = vpop.f32.mrb[0].mxu0
  %v2549 = vadd.f32 0.0, %v2548
  %v2550 = vpop.f32.mrb[0].mxu0
  %v2551 = vpop.f32.mrb[0].mxu0
  %v2552 = vadd.f32 0.0, %v2551
  %v2553 = vpop.f32.mrb[0].mxu0
  %2554 = vmatprep.mubr.bf16.mxu0 0
  %2555 = vmatmul.mubr.bf16.gmra.mrb[0].mxu0 %v2426
  %v2556 = vpop.f32.mrb[0].mxu0
  %v2557 = vadd.f32 0.0, %v2556
  %v2558 = vpop.f32.mrb[0].mxu0
  %v2559 = vpop.f32.mrb[0].mxu0
  %v2560 = vadd.f32 0.0, %v2559
  %v2561 = vpop.f32.mrb[0].mxu0
  %2562 = vmatprep.mubr.bf16.mxu0 0
  %2563 = vmatmul.mubr.bf16.gmra.mrb[0].mxu0 %v2429
  %v2564 = vpop.f32.mrb[0].mxu0
  %v2565 = vadd.f32 0.0, %v2564
  %v2566 = vpop.f32.mrb[0].mxu0
  %v2567 = vpop.f32.mrb[0].mxu0
  %v2568 = vadd.f32 0.0, %v2567
  %v2569 = vpop.f32.mrb[0].mxu0
  %2570 = vmatprep.mubr.bf16.mxu0 0
  %2571 = vmatmul.mubr.bf16.gmra.mrb[0].mxu0 %v2432
  %v2572 = vpop.f32.mrb[0].mxu0
  %v2573 = vadd.f32 0.0, %v2572
  %v2574 = vpop.f32.mrb[0].mxu0
  %v2575 = vpop.f32.mrb[0].mxu0
  %v2576 = vadd.f32 0.0, %v2575
  %v2577 = vpop.f32.mrb[0].mxu0
  %2578 = vdwg.mxu0
  %v2579 = vadd.f32 %v2289, %v2469
  %v2580 = vadd.f32 %v2290, %v2472
  %v2581 = vadd.f32 %v2291, %v2477
  %v2582 = vadd.f32 %v2292, %v2480
  %v2583 = vadd.f32 %v2293, %v2485
  %v2584 = vadd.f32 %v2294, %v2488
  %v2585 = vadd.f32 %v2295, %v2493
  %v2586 = vadd.f32 %v2296, %v2496
  %v2587 = vadd.f32 %v2297, %v2501
  %v2588 = vadd.f32 %v2298, %v2504
  %v2589 = vadd.f32 %v2299, %v2509
  %v2590 = vadd.f32 %v2300, %v2512
  %v2591 = vadd.f32 %v2301, %v2517
  %v2592 = vadd.f32 %v2302, %v2520
  %v2593 = vadd.f32 %v2303, %v2525
  %v2594 = vadd.f32 %v2304, %v2528
  %v2595 = vadd.f32 %v2305, %v2533
  %v2596 = vadd.f32 %v2306, %v2536
  %v2597 = vadd.f32 %v2307, %v2541
  %v2598 = vadd.f32 %v2308, %v2544
  %v2599 = vadd.f32 %v2309, %v2549
  %v2600 = vadd.f32 %v2310, %v2552
  %v2601 = vadd.f32 %v2311, %v2557
  %v2602 = vadd.f32 %v2312, %v2560
  %v2603 = vadd.f32 %v2313, %v2565
  %v2604 = vadd.f32 %v2314, %v2568
  %v2605 = vadd.f32 %v2315, %v2573
  %v2606 = vadd.f32 %v2316, %v2576
  %v2608 = vlaneseq
  %v2609 = vshrl.u32 %v2608, 7
  %v2610 = vsub.s32 0, %v2609
  %v2611 = vrot.slane %v52, %v2610
  %v2613 = vadd.f32 %v2579, %v2611
  %v2614 = vadd.f32 %v2580, %v2611
  %v2615 = vadd.f32 %v2581, %v2611
  %v2616 = vadd.f32 %v2582, %v2611
  %v2617 = vadd.f32 %v2583, %v2611
  %v2618 = vadd.f32 %v2584, %v2611
  %v2619 = vadd.f32 %v2585, %v2611
  %v2620 = vadd.f32 %v2586, %v2611
  %v2621 = vadd.f32 %v2587, %v2611
  %v2622 = vadd.f32 %v2588, %v2611
  %v2623 = vadd.f32 %v2589, %v2611
  %v2624 = vadd.f32 %v2590, %v2611
  %v2625 = vadd.f32 %v2591, %v2611
  %v2626 = vadd.f32 %v2592, %v2611
  %v2627 = vadd.f32 %v2593, %v2611
  %v2628 = vadd.f32 %v2594, %v2611
  %v2629 = vadd.f32 %v2595, %v2611
  %v2630 = vadd.f32 %v2596, %v2611
  %v2631 = vadd.f32 %v2597, %v2611
  %v2632 = vadd.f32 %v2598, %v2611
  %v2633 = vadd.f32 %v2599, %v2611
  %v2634 = vadd.f32 %v2600, %v2611
  %v2635 = vadd.f32 %v2601, %v2611
  %v2636 = vadd.f32 %v2602, %v2611
  %v2637 = vadd.f32 %v2603, %v2611
  %v2638 = vadd.f32 %v2604, %v2611
  %v2639 = vadd.f32 %v2605, %v2611
  %v2640 = vadd.f32 %v2606, %v2611
  %v2641 = vlaneseq
  %v2642 = vshrl.u32 %v2641, 7
  %v2643 = vsub.s32 0, %v2642
  %v2644 = vrot.slane %v2613, %v2643
  %v2645 = vsub.f32 %v2613, %v2644
  %v2646 = vsub.f32 %v2614, %v2644
  %v2647 = vsub.f32 %v2615, %v2644
  %v2648 = vsub.f32 %v2616, %v2644
  %v2649 = vsub.f32 %v2617, %v2644
  %v2650 = vsub.f32 %v2618, %v2644
  %v2651 = vsub.f32 %v2619, %v2644
  %v2652 = vsub.f32 %v2620, %v2644
  %v2653 = vsub.f32 %v2621, %v2644
  %v2654 = vsub.f32 %v2622, %v2644
  %v2655 = vsub.f32 %v2623, %v2644
  %v2656 = vsub.f32 %v2624, %v2644
  %v2657 = vsub.f32 %v2625, %v2644
  %v2658 = vsub.f32 %v2626, %v2644
  %v2659 = vsub.f32 %v2627, %v2644
  %v2660 = vsub.f32 %v2628, %v2644
  %v2661 = vsub.f32 %v2629, %v2644
  %v2662 = vsub.f32 %v2630, %v2644
  %v2663 = vsub.f32 %v2631, %v2644
  %v2664 = vsub.f32 %v2632, %v2644
  %v2665 = vsub.f32 %v2633, %v2644
  %v2666 = vsub.f32 %v2634, %v2644
  %v2667 = vsub.f32 %v2635, %v2644
  %v2668 = vsub.f32 %v2636, %v2644
  %v2669 = vsub.f32 %v2637, %v2644
  %v2670 = vsub.f32 %v2638, %v2644
  %v2671 = vsub.f32 %v2639, %v2644
  %v2672 = vsub.f32 %v2640, %v2644
  %2674 = vset.pattern.permute.xlu0 0
  %2675 = vperm.xlu0 %2674, %v24
  %v2676 = vpop.permute.xlu0 %2675
  %2679 = vset.pattern.permute.xlu0 0
  %2680 = vperm.xlu0 %2679, %v25
  %v2681 = vpop.permute.xlu0 %2680
  %2684 = vset.pattern.permute.xlu0 0
  %2685 = vperm.xlu0 %2684, %v26
  %v2686 = vpop.permute.xlu0 %2685
  %2689 = vset.pattern.permute.xlu0 0
  %2690 = vperm.xlu0 %2689, %v27
  %v2691 = vpop.permute.xlu0 %2690
  %2694 = vset.pattern.permute.xlu0 0
  %2695 = vperm.xlu0 %2694, %v28
  %v2696 = vpop.permute.xlu0 %2695
  %2699 = vset.pattern.permute.xlu0 0
  %2700 = vperm.xlu0 %2699, %v29
  %v2701 = vpop.permute.xlu0 %2700
  %2704 = vset.pattern.permute.xlu0 0
  %2705 = vperm.xlu0 %2704, %v30
  %v2706 = vpop.permute.xlu0 %2705
  %2709 = vset.pattern.permute.xlu0 0
  %2710 = vperm.xlu0 %2709, %v31
  %v2711 = vpop.permute.xlu0 %2710
  %2714 = vset.pattern.permute.xlu0 0
  %2715 = vperm.xlu0 %2714, %v32
  %v2716 = vpop.permute.xlu0 %2715
  %2719 = vset.pattern.permute.xlu0 0
  %2720 = vperm.xlu0 %2719, %v33
  %v2721 = vpop.permute.xlu0 %2720
  %2724 = vset.pattern.permute.xlu0 0
  %2725 = vperm.xlu0 %2724, %v34
  %v2726 = vpop.permute.xlu0 %2725
  %2729 = vset.pattern.permute.xlu0 0
  %2730 = vperm.xlu0 %2729, %v35
  %v2731 = vpop.permute.xlu0 %2730
  %2734 = vset.pattern.permute.xlu0 0
  %2735 = vperm.xlu0 %2734, %v36
  %v2736 = vpop.permute.xlu0 %2735
  %2739 = vset.pattern.permute.xlu0 0
  %2740 = vperm.xlu0 %2739, %v37
  %v2741 = vpop.permute.xlu0 %2740
  %2744 = vset.pattern.permute.xlu0 0
  %2745 = vperm.xlu0 %2744, %v38
  %v2746 = vpop.permute.xlu0 %2745
  %2749 = vset.pattern.permute.xlu0 0
  %2750 = vperm.xlu0 %2749, %v39
  %v2751 = vpop.permute.xlu0 %2750
  %2754 = vset.pattern.permute.xlu0 0
  %2755 = vperm.xlu0 %2754, %v40
  %v2756 = vpop.permute.xlu0 %2755
  %2759 = vset.pattern.permute.xlu0 0
  %2760 = vperm.xlu0 %2759, %v41
  %v2761 = vpop.permute.xlu0 %2760
  %2764 = vset.pattern.permute.xlu0 0
  %2765 = vperm.xlu0 %2764, %v42
  %v2766 = vpop.permute.xlu0 %2765
  %2769 = vset.pattern.permute.xlu0 0
  %2770 = vperm.xlu0 %2769, %v43
  %v2771 = vpop.permute.xlu0 %2770
  %2774 = vset.pattern.permute.xlu0 0
  %2775 = vperm.xlu0 %2774, %v44
  %v2776 = vpop.permute.xlu0 %2775
  %2779 = vset.pattern.permute.xlu0 0
  %2780 = vperm.xlu0 %2779, %v45
  %v2781 = vpop.permute.xlu0 %2780
  %2784 = vset.pattern.permute.xlu0 0
  %2785 = vperm.xlu0 %2784, %v46
  %v2786 = vpop.permute.xlu0 %2785
  %2789 = vset.pattern.permute.xlu0 0
  %2790 = vperm.xlu0 %2789, %v47
  %v2791 = vpop.permute.xlu0 %2790
  %2794 = vset.pattern.permute.xlu0 0
  %2795 = vperm.xlu0 %2794, %v48
  %v2796 = vpop.permute.xlu0 %2795
  %2799 = vset.pattern.permute.xlu0 0
  %2800 = vperm.xlu0 %2799, %v49
  %v2801 = vpop.permute.xlu0 %2800
  %2804 = vset.pattern.permute.xlu0 0
  %2805 = vperm.xlu0 %2804, %v50
  %v2806 = vpop.permute.xlu0 %2805
  %2809 = vset.pattern.permute.xlu0 0
  %2810 = vperm.xlu0 %2809, %v51
  %v2811 = vpop.permute.xlu0 %2810
  %v2813 = vmul.f32 %v2645, %v2676
  %v2814 = vmul.f32 %v2646, %v2681
  %v2815 = vmul.f32 %v2647, %v2686
  %v2816 = vmul.f32 %v2648, %v2691
  %v2817 = vmul.f32 %v2649, %v2696
  %v2818 = vmul.f32 %v2650, %v2701
  %v2819 = vmul.f32 %v2651, %v2706
  %v2820 = vmul.f32 %v2652, %v2711
  %v2821 = vmul.f32 %v2653, %v2716
  %v2822 = vmul.f32 %v2654, %v2721
  %v2823 = vmul.f32 %v2655, %v2726
  %v2824 = vmul.f32 %v2656, %v2731
  %v2825 = vmul.f32 %v2657, %v2736
  %v2826 = vmul.f32 %v2658, %v2741
  %v2827 = vmul.f32 %v2659, %v2746
  %v2828 = vmul.f32 %v2660, %v2751
  %v2829 = vmul.f32 %v2661, %v2756
  %v2830 = vmul.f32 %v2662, %v2761
  %v2831 = vmul.f32 %v2663, %v2766
  %v2832 = vmul.f32 %v2664, %v2771
  %v2833 = vmul.f32 %v2665, %v2776
  %v2834 = vmul.f32 %v2666, %v2781
  %v2835 = vmul.f32 %v2667, %v2786
  %v2836 = vmul.f32 %v2668, %v2791
  %v2837 = vmul.f32 %v2669, %v2796
  %v2838 = vmul.f32 %v2670, %v2801
  %v2839 = vmul.f32 %v2671, %v2806
  %v2840 = vmul.f32 %v2672, %v2811
  %v2841 = vadd.f32 %v2813, %v2814
  %v2842 = vadd.f32 %v2841, %v2815
  %v2843 = vadd.f32 %v2842, %v2816
  %v2844 = vadd.f32 %v2843, %v2817
  %v2845 = vadd.f32 %v2844, %v2818
  %v2846 = vadd.f32 %v2845, %v2819
  %v2847 = vadd.f32 %v2846, %v2820
  %v2848 = vadd.f32 %v2847, %v2821
  %v2849 = vadd.f32 %v2848, %v2822
  %v2850 = vadd.f32 %v2849, %v2823
  %v2851 = vadd.f32 %v2850, %v2824
  %v2852 = vadd.f32 %v2851, %v2825
  %v2853 = vadd.f32 %v2852, %v2826
  %v2854 = vadd.f32 %v2853, %v2827
  %v2855 = vadd.f32 %v2854, %v2828
  %v2856 = vadd.f32 %v2855, %v2829
  %v2857 = vadd.f32 %v2856, %v2830
  %v2858 = vadd.f32 %v2857, %v2831
  %v2859 = vadd.f32 %v2858, %v2832
  %v2860 = vadd.f32 %v2859, %v2833
  %v2861 = vadd.f32 %v2860, %v2834
  %v2862 = vadd.f32 %v2861, %v2835
  %v2863 = vadd.f32 %v2862, %v2836
  %v2864 = vadd.f32 %v2863, %v2837
  %v2865 = vadd.f32 %v2864, %v2838
  %v2866 = vadd.f32 %v2865, %v2839
  %v2867 = vadd.f32 %v2866, %v2840
  %v2868 = vrot.slane %v2867, 4
  %v2869 = vadd.f32 %v2867, %v2868
  %v2870 = vrot.slane %v2869, 2
  %v2871 = vadd.f32 %v2869, %v2870
  %v2872 = vrot.slane %v2871, 1
  %v2873 = vadd.f32 %v2871, %v2872
  %v2874 = vadd.f32 %v2873, 0.0
  %v2875 = vmul.f32 %v2813, %v2813
  %v2876 = vmul.f32 %v2814, %v2814
  %v2877 = vmul.f32 %v2815, %v2815
  %v2878 = vmul.f32 %v2816, %v2816
  %v2879 = vmul.f32 %v2817, %v2817
  %v2880 = vmul.f32 %v2818, %v2818
  %v2881 = vmul.f32 %v2819, %v2819
  %v2882 = vmul.f32 %v2820, %v2820
  %v2883 = vmul.f32 %v2821, %v2821
  %v2884 = vmul.f32 %v2822, %v2822
  %v2885 = vmul.f32 %v2823, %v2823
  %v2886 = vmul.f32 %v2824, %v2824
  %v2887 = vmul.f32 %v2825, %v2825
  %v2888 = vmul.f32 %v2826, %v2826
  %v2889 = vmul.f32 %v2827, %v2827
  %v2890 = vmul.f32 %v2828, %v2828
  %v2891 = vmul.f32 %v2829, %v2829
  %v2892 = vmul.f32 %v2830, %v2830
  %v2893 = vmul.f32 %v2831, %v2831
  %v2894 = vmul.f32 %v2832, %v2832
  %v2895 = vmul.f32 %v2833, %v2833
  %v2896 = vmul.f32 %v2834, %v2834
  %v2897 = vmul.f32 %v2835, %v2835
  %v2898 = vmul.f32 %v2836, %v2836
  %v2899 = vmul.f32 %v2837, %v2837
  %v2900 = vmul.f32 %v2838, %v2838
  %v2901 = vmul.f32 %v2839, %v2839
  %v2902 = vmul.f32 %v2840, %v2840
  %v2903 = vadd.f32 %v2875, %v2876
  %v2904 = vadd.f32 %v2903, %v2877
  %v2905 = vadd.f32 %v2904, %v2878
  %v2906 = vadd.f32 %v2905, %v2879
  %v2907 = vadd.f32 %v2906, %v2880
  %v2908 = vadd.f32 %v2907, %v2881
  %v2909 = vadd.f32 %v2908, %v2882
  %v2910 = vadd.f32 %v2909, %v2883
  %v2911 = vadd.f32 %v2910, %v2884
  %v2912 = vadd.f32 %v2911, %v2885
  %v2913 = vadd.f32 %v2912, %v2886
  %v2914 = vadd.f32 %v2913, %v2887
  %v2915 = vadd.f32 %v2914, %v2888
  %v2916 = vadd.f32 %v2915, %v2889
  %v2917 = vadd.f32 %v2916, %v2890
  %v2918 = vadd.f32 %v2917, %v2891
  %v2919 = vadd.f32 %v2918, %v2892
  %v2920 = vadd.f32 %v2919, %v2893
  %v2921 = vadd.f32 %v2920, %v2894
  %v2922 = vadd.f32 %v2921, %v2895
  %v2923 = vadd.f32 %v2922, %v2896
  %v2924 = vadd.f32 %v2923, %v2897
  %v2925 = vadd.f32 %v2924, %v2898
  %v2926 = vadd.f32 %v2925, %v2899
  %v2927 = vadd.f32 %v2926, %v2900
  %v2928 = vadd.f32 %v2927, %v2901
  %v2929 = vadd.f32 %v2928, %v2902
  %v2930 = vrot.slane %v2929, 4
  %v2931 = vadd.f32 %v2929, %v2930
  %v2932 = vrot.slane %v2931, 2
  %v2933 = vadd.f32 %v2931, %v2932
  %v2934 = vrot.slane %v2933, 1
  %v2935 = vadd.f32 %v2933, %v2934
  %v2936 = vadd.f32 %v2935, 0.0
  %2937 = vst [vmem:[%s6] sm:$0xff] %v2613
  %2938 = vst [vmem:[%s6 + $0x8] sm:$0xff] %v2614
  %2939 = vst [vmem:[%s6 + $0x10] sm:$0xff] %v2615
  %2940 = vst [vmem:[%s6 + $0x18] sm:$0xff] %v2616
  %2941 = vst [vmem:[%s6 + $0x20] sm:$0xff] %v2617
  %2942 = vst [vmem:[%s6 + $0x28] sm:$0xff] %v2618
  %2943 = vst [vmem:[%s6 + $0x30] sm:$0xff] %v2619
  %2944 = vst [vmem:[%s6 + $0x38] sm:$0xff] %v2620
  %2945 = vst [vmem:[%s6 + $0x40] sm:$0xff] %v2621
  %2946 = vst [vmem:[%s6 + $0x48] sm:$0xff] %v2622
  %2947 = vst [vmem:[%s6 + $0x50] sm:$0xff] %v2623
  %2948 = vst [vmem:[%s6 + $0x58] sm:$0xff] %v2624
  %2949 = vst [vmem:[%s6 + $0x60] sm:$0xff] %v2625
  %2950 = vst [vmem:[%s6 + $0x68] sm:$0xff] %v2626
  %2951 = vst [vmem:[%s6 + $0x70] sm:$0xff] %v2627
  %2952 = vst [vmem:[%s6 + $0x78] sm:$0xff] %v2628
  %2953 = vst [vmem:[%s6 + $0x80] sm:$0xff] %v2629
  %2954 = vst [vmem:[%s6 + $0x88] sm:$0xff] %v2630
  %2955 = vst [vmem:[%s6 + $0x90] sm:$0xff] %v2631
  %2956 = vst [vmem:[%s6 + $0x98] sm:$0xff] %v2632
  %2957 = vst [vmem:[%s6 + $0xa0] sm:$0xff] %v2633
  %2958 = vst [vmem:[%s6 + $0xa8] sm:$0xff] %v2634
  %2959 = vst [vmem:[%s6 + $0xb0] sm:$0xff] %v2635
  %2960 = vst [vmem:[%s6 + $0xb8] sm:$0xff] %v2636
  %2961 = vst [vmem:[%s6 + $0xc0] sm:$0xff] %v2637
  %2962 = vst [vmem:[%s6 + $0xc8] sm:$0xff] %v2638
  %2963 = vst [vmem:[%s6 + $0xd0] sm:$0xff] %v2639
  %2964 = vst [vmem:[%s6 + $0xd8] sm:$0xff] %v2640
  %s2965 = scalar_lea.vmem %s0, 264
  %v2966 = vld [vmem:[%s2965] sm:$0xff]
  %v2967 = vld [vmem:[%s2965 + $0x8] sm:$0xff]
  %v2968 = vld [vmem:[%s2965 + $0x10] sm:$0xff]
  %v2969 = vld [vmem:[%s2965 + $0x18] sm:$0xff]
  %v2970 = vld [vmem:[%s2965 + $0x20] sm:$0xff]
  %v2971 = vld [vmem:[%s2965 + $0x28] sm:$0xff]
  %v2972 = vld [vmem:[%s2965 + $0x30] sm:$0xff]
  %v2973 = vld [vmem:[%s2965 + $0x38] sm:$0xff]
  %v2974 = vld [vmem:[%s2965 + $0x40] sm:$0xff]
  %v2975 = vld [vmem:[%s2965 + $0x48] sm:$0xff]
  %v2976 = vld [vmem:[%s2965 + $0x50] sm:$0xff]
  %v2977 = vld [vmem:[%s2965 + $0x58] sm:$0xff]
  %v2978 = vld [vmem:[%s2965 + $0x60] sm:$0xff]
  %v2979 = vld [vmem:[%s2965 + $0x68] sm:$0xff]
  %v2980 = vld [vmem:[%s2965 + $0x70] sm:$0xff]
  %v2981 = vld [vmem:[%s2965 + $0x78] sm:$0xff]
  %v2982 = vld [vmem:[%s2965 + $0x80] sm:$0xff]
  %v2983 = vld [vmem:[%s2965 + $0x88] sm:$0xff]
  %v2984 = vld [vmem:[%s2965 + $0x90] sm:$0xff]
  %v2985 = vld [vmem:[%s2965 + $0x98] sm:$0xff]
  %v2986 = vld [vmem:[%s2965 + $0xa0] sm:$0xff]
  %v2987 = vld [vmem:[%s2965 + $0xa8] sm:$0xff]
  %v2988 = vld [vmem:[%s2965 + $0xb0] sm:$0xff]
  %v2989 = vld [vmem:[%s2965 + $0xb8] sm:$0xff]
  %v2990 = vld [vmem:[%s2965 + $0xc0] sm:$0xff]
  %v2991 = vld [vmem:[%s2965 + $0xc8] sm:$0xff]
  %v2992 = vld [vmem:[%s2965 + $0xd0] sm:$0xff]
  %v2993 = vld [vmem:[%s2965 + $0xd8] sm:$0xff]
  %v2994 = vpack.c.bf16 %v2967, %v2966
  %v2995 = vpack.c.bf16 %v2969, %v2968
  %v2996 = vpack.c.bf16 %v2971, %v2970
  %v2997 = vpack.c.bf16 %v2973, %v2972
  %v2998 = vpack.c.bf16 %v2975, %v2974
  %v2999 = vpack.c.bf16 %v2977, %v2976
  %v3000 = vpack.c.bf16 %v2979, %v2978
  %v3001 = vpack.c.bf16 %v2981, %v2980
  %v3002 = vpack.c.bf16 %v2983, %v2982
  %v3003 = vpack.c.bf16 %v2985, %v2984
  %v3004 = vpack.c.bf16 %v2987, %v2986
  %v3005 = vpack.c.bf16 %v2989, %v2988
  %v3006 = vpack.c.bf16 %v2991, %v2990
  %v3007 = vpack.c.bf16 %v2993, %v2992
  %v3008 = vld [vmem:[%s1] sm:$0xf]
  %v3009 = vld [vmem:[%s1 + $0x4] sm:$0xf]
  %v3010 = vld [vmem:[%s1 + $0x8] sm:$0xf]
  %v3011 = vld [vmem:[%s1 + $0xc] sm:$0xf]
  %v3012 = vld [vmem:[%s1 + $0x10] sm:$0xf]
  %v3013 = vld [vmem:[%s1 + $0x14] sm:$0xf]
  %v3014 = vld [vmem:[%s1 + $0x18] sm:$0xf]
  %v3015 = vld [vmem:[%s1 + $0x1c] sm:$0xf]
  %v3016 = vld [vmem:[%s2965 + $0x1] sm:$0xff]
  %v3017 = vld [vmem:[%s2965 + $0x9] sm:$0xff]
  %v3018 = vld [vmem:[%s2965 + $0x11] sm:$0xff]
  %v3019 = vld [vmem:[%s2965 + $0x19] sm:$0xff]
  %v3020 = vld [vmem:[%s2965 + $0x21] sm:$0xff]
  %v3021 = vld [vmem:[%s2965 + $0x29] sm:$0xff]
  %v3022 = vld [vmem:[%s2965 + $0x31] sm:$0xff]
  %v3023 = vld [vmem:[%s2965 + $0x39] sm:$0xff]
  %v3024 = vld [vmem:[%s2965 + $0x41] sm:$0xff]
  %v3025 = vld [vmem:[%s2965 + $0x49] sm:$0xff]
  %v3026 = vld [vmem:[%s2965 + $0x51] sm:$0xff]
  %v3027 = vld [vmem:[%s2965 + $0x59] sm:$0xff]
  %v3028 = vld [vmem:[%s2965 + $0x61] sm:$0xff]
  %v3029 = vld [vmem:[%s2965 + $0x69] sm:$0xff]
  %v3030 = vld [vmem:[%s2965 + $0x71] sm:$0xff]
  %v3031 = vld [vmem:[%s2965 + $0x79] sm:$0xff]
  %v3032 = vld [vmem:[%s2965 + $0x81] sm:$0xff]
  %v3033 = vld [vmem:[%s2965 + $0x89] sm:$0xff]
  %v3034 = vld [vmem:[%s2965 + $0x91] sm:$0xff]
  %v3035 = vld [vmem:[%s2965 + $0x99] sm:$0xff]
  %v3036 = vld [vmem:[%s2965 + $0xa1] sm:$0xff]
  %v3037 = vld [vmem:[%s2965 + $0xa9] sm:$0xff]
  %v3038 = vld [vmem:[%s2965 + $0xb1] sm:$0xff]
  %v3039 = vld [vmem:[%s2965 + $0xb9] sm:$0xff]
  %v3040 = vld [vmem:[%s2965 + $0xc1] sm:$0xff]
  %v3041 = vld [vmem:[%s2965 + $0xc9] sm:$0xff]
  %v3042 = vld [vmem:[%s2965 + $0xd1] sm:$0xff]
  %v3043 = vld [vmem:[%s2965 + $0xd9] sm:$0xff]
  %v3044 = vpack.c.bf16 %v3017, %v3016
  %v3045 = vpack.c.bf16 %v3019, %v3018
  %v3046 = vpack.c.bf16 %v3021, %v3020
  %v3047 = vpack.c.bf16 %v3023, %v3022
  %v3048 = vpack.c.bf16 %v3025, %v3024
  %v3049 = vpack.c.bf16 %v3027, %v3026
  %v3050 = vpack.c.bf16 %v3029, %v3028
  %v3051 = vpack.c.bf16 %v3031, %v3030
  %v3052 = vpack.c.bf16 %v3033, %v3032
  %v3053 = vpack.c.bf16 %v3035, %v3034
  %v3054 = vpack.c.bf16 %v3037, %v3036
  %v3055 = vpack.c.bf16 %v3039, %v3038
  %v3056 = vpack.c.bf16 %v3041, %v3040
  %v3057 = vpack.c.bf16 %v3043, %v3042
  %v3058 = vld [vmem:[%s145] sm:$0xf]
  %v3059 = vld [vmem:[%s145 + $0x4] sm:$0xf]
  %v3060 = vld [vmem:[%s145 + $0x8] sm:$0xf]
  %v3061 = vld [vmem:[%s145 + $0xc] sm:$0xf]
  %v3062 = vld [vmem:[%s145 + $0x10] sm:$0xf]
  %v3063 = vld [vmem:[%s145 + $0x14] sm:$0xf]
  %v3064 = vld [vmem:[%s145 + $0x18] sm:$0xf]
  %v3065 = vld [vmem:[%s145 + $0x1c] sm:$0xf]
  %v3074 = vunpack.c.l.b16 %v3058
  %v3075 = vunpack.c.l.b16 %v3059
  %v3076 = vunpack.c.l.b16 %v3060
  %v3077 = vunpack.c.l.b16 %v3061
  %v3078 = vunpack.c.l.b16 %v3062
  %v3079 = vunpack.c.l.b16 %v3063
  %v3080 = vunpack.c.l.b16 %v3064
  %v3081 = vunpack.c.l.b16 %v3065
  %v3082 = vpack.c.b16 %v3075, %v3074
  %v3083 = vpack.c.b16 %v3077, %v3076
  %v3084 = vpack.c.b16 %v3079, %v3078
  %v3085 = vpack.c.b16 %v3081, %v3080
  %v3091 = vsel %vm178, %v3044, 0
  %v3094 = vsel %vm178, %v3045, 0
  %v3097 = vsel %vm178, %v3046, 0
  %v3100 = vsel %vm178, %v3047, 0
  %v3103 = vsel %vm178, %v3048, 0
  %v3106 = vsel %vm178, %v3049, 0
  %v3109 = vsel %vm178, %v3050, 0
  %v3112 = vsel %vm178, %v3051, 0
  %v3115 = vsel %vm178, %v3052, 0
  %v3118 = vsel %vm178, %v3053, 0
  %v3121 = vsel %vm178, %v3054, 0
  %v3124 = vsel %vm178, %v3055, 0
  %v3127 = vsel %vm178, %v3056, 0
  %v3130 = vsel %vm178, %v3057, 0
  %3132 = vmatprep.subr.bf16.mxu0 0
  %3133 = vmatpush1.bf16.msra.mxu0 %v3082
  %3134 = vmatprep.subr.bf16.mxu0 0
  %3135 = vmatpush1.bf16.msra.mxu0 %v3083
  %3136 = vmatprep.subr.bf16.mxu0 0
  %3137 = vmatpush1.bf16.msra.mxu0 %v3084
  %3138 = vmatprep.subr.bf16.mxu0 0
  %3139 = vmatpush1.bf16.msra.mxu0 %v3085
  %3140 = vmatprep.subr.bf16.mxu0 0
  %3141 = vmatpush1.bf16.msra.mxu0 0
  %3142 = vmatprep.subr.bf16.mxu0 0
  %3143 = vmatpush1.bf16.msra.mxu0 0
  %3144 = vmatprep.subr.bf16.mxu0 0
  %3145 = vmatpush1.bf16.msra.mxu0 0
  %3146 = vmatprep.subr.bf16.mxu0 0
  %3147 = vmatpush1.bf16.msra.mxu0 0
  %3148 = vmatprep.subr.bf16.mxu0 0
  %3149 = vmatpush1.bf16.msra.mxu0 0
  %3150 = vmatprep.subr.bf16.mxu0 0
  %3151 = vmatpush1.bf16.msra.mxu0 0
  %3152 = vmatprep.subr.bf16.mxu0 0
  %3153 = vmatpush1.bf16.msra.mxu0 0
  %3154 = vmatprep.subr.bf16.mxu0 0
  %3155 = vmatpush1.bf16.msra.mxu0 0
  %3156 = vmatprep.subr.bf16.mxu0 0
  %3157 = vmatpush1.bf16.msra.mxu0 0
  %3158 = vmatprep.subr.bf16.mxu0 0
  %3159 = vmatpush1.bf16.msra.mxu0 0
  %3160 = vmatprep.subr.bf16.mxu0 0
  %3161 = vmatpush1.bf16.msra.mxu0 0
  %3162 = vmatprep.subr.bf16.mxu0 0
  %3163 = vmatpush1.bf16.msra.mxu0 0
  %3164 = vmatprep.mubr.bf16.mxu0 0
  %3165 = vmatmul.mubr.bf16.gmra.mrb[0].mxu0 %v3091
  %v3166 = vpop.f32.mrb[0].mxu0
  %v3167 = vadd.f32 0.0, %v3166
  %v3168 = vpop.f32.mrb[0].mxu0
  %v3169 = vpop.f32.mrb[0].mxu0
  %v3170 = vadd.f32 0.0, %v3169
  %v3171 = vpop.f32.mrb[0].mxu0
  %3172 = vmatprep.mubr.bf16.mxu0 0
  %3173 = vmatmul.mubr.bf16.gmra.mrb[0].mxu0 %v3094
  %v3174 = vpop.f32.mrb[0].mxu0
  %v3175 = vadd.f32 0.0, %v3174
  %v3176 = vpop.f32.mrb[0].mxu0
  %v3177 = vpop.f32.mrb[0].mxu0
  %v3178 = vadd.f32 0.0, %v3177
  %v3179 = vpop.f32.mrb[0].mxu0
  %3180 = vmatprep.mubr.bf16.mxu0 0
  %3181 = vmatmul.mubr.bf16.gmra.mrb[0].mxu0 %v3097
  %v3182 = vpop.f32.mrb[0].mxu0
  %v3183 = vadd.f32 0.0, %v3182
  %v3184 = vpop.f32.mrb[0].mxu0
  %v3185 = vpop.f32.mrb[0].mxu0
  %v3186 = vadd.f32 0.0, %v3185
  %v3187 = vpop.f32.mrb[0].mxu0
  %3188 = vmatprep.mubr.bf16.mxu0 0
  %3189 = vmatmul.mubr.bf16.gmra.mrb[0].mxu0 %v3100
  %v3190 = vpop.f32.mrb[0].mxu0
  %v3191 = vadd.f32 0.0, %v3190
  %v3192 = vpop.f32.mrb[0].mxu0
  %v3193 = vpop.f32.mrb[0].mxu0
  %v3194 = vadd.f32 0.0, %v3193
  %v3195 = vpop.f32.mrb[0].mxu0
  %3196 = vmatprep.mubr.bf16.mxu0 0
  %3197 = vmatmul.mubr.bf16.gmra.mrb[0].mxu0 %v3103
  %v3198 = vpop.f32.mrb[0].mxu0
  %v3199 = vadd.f32 0.0, %v3198
  %v3200 = vpop.f32.mrb[0].mxu0
  %v3201 = vpop.f32.mrb[0].mxu0
  %v3202 = vadd.f32 0.0, %v3201
  %v3203 = vpop.f32.mrb[0].mxu0
  %3204 = vmatprep.mubr.bf16.mxu0 0
  %3205 = vmatmul.mubr.bf16.gmra.mrb[0].mxu0 %v3106
  %v3206 = vpop.f32.mrb[0].mxu0
  %v3207 = vadd.f32 0.0, %v3206
  %v3208 = vpop.f32.mrb[0].mxu0
  %v3209 = vpop.f32.mrb[0].mxu0
  %v3210 = vadd.f32 0.0, %v3209
  %v3211 = vpop.f32.mrb[0].mxu0
  %3212 = vmatprep.mubr.bf16.mxu0 0
  %3213 = vmatmul.mubr.bf16.gmra.mrb[0].mxu0 %v3109
  %v3214 = vpop.f32.mrb[0].mxu0
  %v3215 = vadd.f32 0.0, %v3214
  %v3216 = vpop.f32.mrb[0].mxu0
  %v3217 = vpop.f32.mrb[0].mxu0
  %v3218 = vadd.f32 0.0, %v3217
  %v3219 = vpop.f32.mrb[0].mxu0
  %3220 = vmatprep.mubr.bf16.mxu0 0
  %3221 = vmatmul.mubr.bf16.gmra.mrb[0].mxu0 %v3112
  %v3222 = vpop.f32.mrb[0].mxu0
  %v3223 = vadd.f32 0.0, %v3222
  %v3224 = vpop.f32.mrb[0].mxu0
  %v3225 = vpop.f32.mrb[0].mxu0
  %v3226 = vadd.f32 0.0, %v3225
  %v3227 = vpop.f32.mrb[0].mxu0
  %3228 = vmatprep.mubr.bf16.mxu0 0
  %3229 = vmatmul.mubr.bf16.gmra.mrb[0].mxu0 %v3115
  %v3230 = vpop.f32.mrb[0].mxu0
  %v3231 = vadd.f32 0.0, %v3230
  %v3232 = vpop.f32.mrb[0].mxu0
  %v3233 = vpop.f32.mrb[0].mxu0
  %v3234 = vadd.f32 0.0, %v3233
  %v3235 = vpop.f32.mrb[0].mxu0
  %3236 = vmatprep.mubr.bf16.mxu0 0
  %3237 = vmatmul.mubr.bf16.gmra.mrb[0].mxu0 %v3118
  %v3238 = vpop.f32.mrb[0].mxu0
  %v3239 = vadd.f32 0.0, %v3238
  %v3240 = vpop.f32.mrb[0].mxu0
  %v3241 = vpop.f32.mrb[0].mxu0
  %v3242 = vadd.f32 0.0, %v3241
  %v3243 = vpop.f32.mrb[0].mxu0
  %3244 = vmatprep.mubr.bf16.mxu0 0
  %3245 = vmatmul.mubr.bf16.gmra.mrb[0].mxu0 %v3121
  %v3246 = vpop.f32.mrb[0].mxu0
  %v3247 = vadd.f32 0.0, %v3246
  %v3248 = vpop.f32.mrb[0].mxu0
  %v3249 = vpop.f32.mrb[0].mxu0
  %v3250 = vadd.f32 0.0, %v3249
  %v3251 = vpop.f32.mrb[0].mxu0
  %3252 = vmatprep.mubr.bf16.mxu0 0
  %3253 = vmatmul.mubr.bf16.gmra.mrb[0].mxu0 %v3124
  %v3254 = vpop.f32.mrb[0].mxu0
  %v3255 = vadd.f32 0.0, %v3254
  %v3256 = vpop.f32.mrb[0].mxu0
  %v3257 = vpop.f32.mrb[0].mxu0
  %v3258 = vadd.f32 0.0, %v3257
  %v3259 = vpop.f32.mrb[0].mxu0
  %3260 = vmatprep.mubr.bf16.mxu0 0
  %3261 = vmatmul.mubr.bf16.gmra.mrb[0].mxu0 %v3127
  %v3262 = vpop.f32.mrb[0].mxu0
  %v3263 = vadd.f32 0.0, %v3262
  %v3264 = vpop.f32.mrb[0].mxu0
  %v3265 = vpop.f32.mrb[0].mxu0
  %v3266 = vadd.f32 0.0, %v3265
  %v3267 = vpop.f32.mrb[0].mxu0
  %3268 = vmatprep.mubr.bf16.mxu0 0
  %3269 = vmatmul.mubr.bf16.gmra.mrb[0].mxu0 %v3130
  %v3270 = vpop.f32.mrb[0].mxu0
  %v3271 = vadd.f32 0.0, %v3270
  %v3272 = vpop.f32.mrb[0].mxu0
  %v3273 = vpop.f32.mrb[0].mxu0
  %v3274 = vadd.f32 0.0, %v3273
  %v3275 = vpop.f32.mrb[0].mxu0
  %3276 = vdwg.mxu0
  %v3285 = vunpack.c.l.b16 %v3008
  %v3286 = vunpack.c.l.b16 %v3009
  %v3287 = vunpack.c.l.b16 %v3010
  %v3288 = vunpack.c.l.b16 %v3011
  %v3289 = vunpack.c.l.b16 %v3012
  %v3290 = vunpack.c.l.b16 %v3013
  %v3291 = vunpack.c.l.b16 %v3014
  %v3292 = vunpack.c.l.b16 %v3015
  %v3293 = vpack.c.b16 %v3286, %v3285
  %v3294 = vpack.c.b16 %v3288, %v3287
  %v3295 = vpack.c.b16 %v3290, %v3289
  %v3296 = vpack.c.b16 %v3292, %v3291
  %v3302 = vsel %vm178, %v2994, 0
  %v3305 = vsel %vm178, %v2995, 0
  %v3308 = vsel %vm178, %v2996, 0
  %v3311 = vsel %vm178, %v2997, 0
  %v3314 = vsel %vm178, %v2998, 0
  %v3317 = vsel %vm178, %v2999, 0
  %v3320 = vsel %vm178, %v3000, 0
  %v3323 = vsel %vm178, %v3001, 0
  %v3326 = vsel %vm178, %v3002, 0
  %v3329 = vsel %vm178, %v3003, 0
  %v3332 = vsel %vm178, %v3004, 0
  %v3335 = vsel %vm178, %v3005, 0
  %v3338 = vsel %vm178, %v3006, 0
  %v3341 = vsel %vm178, %v3007, 0
  %3343 = vmatprep.subr.bf16.mxu0 0
  %3344 = vmatpush1.bf16.msra.mxu0 %v3293
  %3345 = vmatprep.subr.bf16.mxu0 0
  %3346 = vmatpush1.bf16.msra.mxu0 %v3294
  %3347 = vmatprep.subr.bf16.mxu0 0
  %3348 = vmatpush1.bf16.msra.mxu0 %v3295
  %3349 = vmatprep.subr.bf16.mxu0 0
  %3350 = vmatpush1.bf16.msra.mxu0 %v3296
  %3351 = vmatprep.subr.bf16.mxu0 0
  %3352 = vmatpush1.bf16.msra.mxu0 0
  %3353 = vmatprep.subr.bf16.mxu0 0
  %3354 = vmatpush1.bf16.msra.mxu0 0
  %3355 = vmatprep.subr.bf16.mxu0 0
  %3356 = vmatpush1.bf16.msra.mxu0 0
  %3357 = vmatprep.subr.bf16.mxu0 0
  %3358 = vmatpush1.bf16.msra.mxu0 0
  %3359 = vmatprep.subr.bf16.mxu0 0
  %3360 = vmatpush1.bf16.msra.mxu0 0
  %3361 = vmatprep.subr.bf16.mxu0 0
  %3362 = vmatpush1.bf16.msra.mxu0 0
  %3363 = vmatprep.subr.bf16.mxu0 0
  %3364 = vmatpush1.bf16.msra.mxu0 0
  %3365 = vmatprep.subr.bf16.mxu0 0
  %3366 = vmatpush1.bf16.msra.mxu0 0
  %3367 = vmatprep.subr.bf16.mxu0 0
  %3368 = vmatpush1.bf16.msra.mxu0 0
  %3369 = vmatprep.subr.bf16.mxu0 0
  %3370 = vmatpush1.bf16.msra.mxu0 0
  %3371 = vmatprep.subr.bf16.mxu0 0
  %3372 = vmatpush1.bf16.msra.mxu0 0
  %3373 = vmatprep.subr.bf16.mxu0 0
  %3374 = vmatpush1.bf16.msra.mxu0 0
  %3375 = vmatprep.mubr.bf16.mxu0 0
  %3376 = vmatmul.mubr.bf16.gmra.mrb[0].mxu0 %v3302
  %v3377 = vpop.f32.mrb[0].mxu0
  %v3378 = vadd.f32 %v3167, %v3377
  %v3379 = vpop.f32.mrb[0].mxu0
  %v3380 = vpop.f32.mrb[0].mxu0
  %v3381 = vadd.f32 %v3170, %v3380
  %v3382 = vpop.f32.mrb[0].mxu0
  %3383 = vmatprep.mubr.bf16.mxu0 0
  %3384 = vmatmul.mubr.bf16.gmra.mrb[0].mxu0 %v3305
  %v3385 = vpop.f32.mrb[0].mxu0
  %v3386 = vadd.f32 %v3175, %v3385
  %v3387 = vpop.f32.mrb[0].mxu0
  %v3388 = vpop.f32.mrb[0].mxu0
  %v3389 = vadd.f32 %v3178, %v3388
  %v3390 = vpop.f32.mrb[0].mxu0
  %3391 = vmatprep.mubr.bf16.mxu0 0
  %3392 = vmatmul.mubr.bf16.gmra.mrb[0].mxu0 %v3308
  %v3393 = vpop.f32.mrb[0].mxu0
  %v3394 = vadd.f32 %v3183, %v3393
  %v3395 = vpop.f32.mrb[0].mxu0
  %v3396 = vpop.f32.mrb[0].mxu0
  %v3397 = vadd.f32 %v3186, %v3396
  %v3398 = vpop.f32.mrb[0].mxu0
  %3399 = vmatprep.mubr.bf16.mxu0 0
  %3400 = vmatmul.mubr.bf16.gmra.mrb[0].mxu0 %v3311
  %v3401 = vpop.f32.mrb[0].mxu0
  %v3402 = vadd.f32 %v3191, %v3401
  %v3403 = vpop.f32.mrb[0].mxu0
  %v3404 = vpop.f32.mrb[0].mxu0
  %v3405 = vadd.f32 %v3194, %v3404
  %v3406 = vpop.f32.mrb[0].mxu0
  %3407 = vmatprep.mubr.bf16.mxu0 0
  %3408 = vmatmul.mubr.bf16.gmra.mrb[0].mxu0 %v3314
  %v3409 = vpop.f32.mrb[0].mxu0
  %v3410 = vadd.f32 %v3199, %v3409
  %v3411 = vpop.f32.mrb[0].mxu0
  %v3412 = vpop.f32.mrb[0].mxu0
  %v3413 = vadd.f32 %v3202, %v3412
  %v3414 = vpop.f32.mrb[0].mxu0
  %3415 = vmatprep.mubr.bf16.mxu0 0
  %3416 = vmatmul.mubr.bf16.gmra.mrb[0].mxu0 %v3317
  %v3417 = vpop.f32.mrb[0].mxu0
  %v3418 = vadd.f32 %v3207, %v3417
  %v3419 = vpop.f32.mrb[0].mxu0
  %v3420 = vpop.f32.mrb[0].mxu0
  %v3421 = vadd.f32 %v3210, %v3420
  %v3422 = vpop.f32.mrb[0].mxu0
  %3423 = vmatprep.mubr.bf16.mxu0 0
  %3424 = vmatmul.mubr.bf16.gmra.mrb[0].mxu0 %v3320
  %v3425 = vpop.f32.mrb[0].mxu0
  %v3426 = vadd.f32 %v3215, %v3425
  %v3427 = vpop.f32.mrb[0].mxu0
  %v3428 = vpop.f32.mrb[0].mxu0
  %v3429 = vadd.f32 %v3218, %v3428
  %v3430 = vpop.f32.mrb[0].mxu0
  %3431 = vmatprep.mubr.bf16.mxu0 0
  %3432 = vmatmul.mubr.bf16.gmra.mrb[0].mxu0 %v3323
  %v3433 = vpop.f32.mrb[0].mxu0
  %v3434 = vadd.f32 %v3223, %v3433
  %v3435 = vpop.f32.mrb[0].mxu0
  %v3436 = vpop.f32.mrb[0].mxu0
  %v3437 = vadd.f32 %v3226, %v3436
  %v3438 = vpop.f32.mrb[0].mxu0
  %3439 = vmatprep.mubr.bf16.mxu0 0
  %3440 = vmatmul.mubr.bf16.gmra.mrb[0].mxu0 %v3326
  %v3441 = vpop.f32.mrb[0].mxu0
  %v3442 = vadd.f32 %v3231, %v3441
  %v3443 = vpop.f32.mrb[0].mxu0
  %v3444 = vpop.f32.mrb[0].mxu0
  %v3445 = vadd.f32 %v3234, %v3444
  %v3446 = vpop.f32.mrb[0].mxu0
  %3447 = vmatprep.mubr.bf16.mxu0 0
  %3448 = vmatmul.mubr.bf16.gmra.mrb[0].mxu0 %v3329
  %v3449 = vpop.f32.mrb[0].mxu0
  %v3450 = vadd.f32 %v3239, %v3449
  %v3451 = vpop.f32.mrb[0].mxu0
  %v3452 = vpop.f32.mrb[0].mxu0
  %v3453 = vadd.f32 %v3242, %v3452
  %v3454 = vpop.f32.mrb[0].mxu0
  %3455 = vmatprep.mubr.bf16.mxu0 0
  %3456 = vmatmul.mubr.bf16.gmra.mrb[0].mxu0 %v3332
  %v3457 = vpop.f32.mrb[0].mxu0
  %v3458 = vadd.f32 %v3247, %v3457
  %v3459 = vpop.f32.mrb[0].mxu0
  %v3460 = vpop.f32.mrb[0].mxu0
  %v3461 = vadd.f32 %v3250, %v3460
  %v3462 = vpop.f32.mrb[0].mxu0
  %3463 = vmatprep.mubr.bf16.mxu0 0
  %3464 = vmatmul.mubr.bf16.gmra.mrb[0].mxu0 %v3335
  %v3465 = vpop.f32.mrb[0].mxu0
  %v3466 = vadd.f32 %v3255, %v3465
  %v3467 = vpop.f32.mrb[0].mxu0
  %v3468 = vpop.f32.mrb[0].mxu0
  %v3469 = vadd.f32 %v3258, %v3468
  %v3470 = vpop.f32.mrb[0].mxu0
  %3471 = vmatprep.mubr.bf16.mxu0 0
  %3472 = vmatmul.mubr.bf16.gmra.mrb[0].mxu0 %v3338
  %v3473 = vpop.f32.mrb[0].mxu0
  %v3474 = vadd.f32 %v3263, %v3473
  %v3475 = vpop.f32.mrb[0].mxu0
  %v3476 = vpop.f32.mrb[0].mxu0
  %v3477 = vadd.f32 %v3266, %v3476
  %v3478 = vpop.f32.mrb[0].mxu0
  %3479 = vmatprep.mubr.bf16.mxu0 0
  %3480 = vmatmul.mubr.bf16.gmra.mrb[0].mxu0 %v3341
  %v3481 = vpop.f32.mrb[0].mxu0
  %v3482 = vadd.f32 %v3271, %v3481
  %v3483 = vpop.f32.mrb[0].mxu0
  %v3484 = vpop.f32.mrb[0].mxu0
  %v3485 = vadd.f32 %v3274, %v3484
  %v3486 = vpop.f32.mrb[0].mxu0
  %3487 = vdwg.mxu0
  %v3488 = vld [vmem:[%s2965 + $0x2] sm:$0xff]
  %v3489 = vld [vmem:[%s2965 + $0xa] sm:$0xff]
  %v3490 = vld [vmem:[%s2965 + $0x12] sm:$0xff]
  %v3491 = vld [vmem:[%s2965 + $0x1a] sm:$0xff]
  %v3492 = vld [vmem:[%s2965 + $0x22] sm:$0xff]
  %v3493 = vld [vmem:[%s2965 + $0x2a] sm:$0xff]
  %v3494 = vld [vmem:[%s2965 + $0x32] sm:$0xff]
  %v3495 = vld [vmem:[%s2965 + $0x3a] sm:$0xff]
  %v3496 = vld [vmem:[%s2965 + $0x42] sm:$0xff]
  %v3497 = vld [vmem:[%s2965 + $0x4a] sm:$0xff]
  %v3498 = vld [vmem:[%s2965 + $0x52] sm:$0xff]
  %v3499 = vld [vmem:[%s2965 + $0x5a] sm:$0xff]
  %v3500 = vld [vmem:[%s2965 + $0x62] sm:$0xff]
  %v3501 = vld [vmem:[%s2965 + $0x6a] sm:$0xff]
  %v3502 = vld [vmem:[%s2965 + $0x72] sm:$0xff]
  %v3503 = vld [vmem:[%s2965 + $0x7a] sm:$0xff]
  %v3504 = vld [vmem:[%s2965 + $0x82] sm:$0xff]
  %v3505 = vld [vmem:[%s2965 + $0x8a] sm:$0xff]
  %v3506 = vld [vmem:[%s2965 + $0x92] sm:$0xff]
  %v3507 = vld [vmem:[%s2965 + $0x9a] sm:$0xff]
  %v3508 = vld [vmem:[%s2965 + $0xa2] sm:$0xff]
  %v3509 = vld [vmem:[%s2965 + $0xaa] sm:$0xff]
  %v3510 = vld [vmem:[%s2965 + $0xb2] sm:$0xff]
  %v3511 = vld [vmem:[%s2965 + $0xba] sm:$0xff]
  %v3512 = vld [vmem:[%s2965 + $0xc2] sm:$0xff]
  %v3513 = vld [vmem:[%s2965 + $0xca] sm:$0xff]
  %v3514 = vld [vmem:[%s2965 + $0xd2] sm:$0xff]
  %v3515 = vld [vmem:[%s2965 + $0xda] sm:$0xff]
  %v3516 = vpack.c.bf16 %v3489, %v3488
  %v3517 = vpack.c.bf16 %v3491, %v3490
  %v3518 = vpack.c.bf16 %v3493, %v3492
  %v3519 = vpack.c.bf16 %v3495, %v3494
  %v3520 = vpack.c.bf16 %v3497, %v3496
  %v3521 = vpack.c.bf16 %v3499, %v3498
  %v3522 = vpack.c.bf16 %v3501, %v3500
  %v3523 = vpack.c.bf16 %v3503, %v3502
  %v3524 = vpack.c.bf16 %v3505, %v3504
  %v3525 = vpack.c.bf16 %v3507, %v3506
  %v3526 = vpack.c.bf16 %v3509, %v3508
  %v3527 = vpack.c.bf16 %v3511, %v3510
  %v3528 = vpack.c.bf16 %v3513, %v3512
  %v3529 = vpack.c.bf16 %v3515, %v3514
  %v3530 = vld [vmem:[%s619] sm:$0xf]
  %v3531 = vld [vmem:[%s619 + $0x4] sm:$0xf]
  %v3532 = vld [vmem:[%s619 + $0x8] sm:$0xf]
  %v3533 = vld [vmem:[%s619 + $0xc] sm:$0xf]
  %v3534 = vld [vmem:[%s619 + $0x10] sm:$0xf]
  %v3535 = vld [vmem:[%s619 + $0x14] sm:$0xf]
  %v3536 = vld [vmem:[%s619 + $0x18] sm:$0xf]
  %v3537 = vld [vmem:[%s619 + $0x1c] sm:$0xf]
  %v3546 = vunpack.c.l.b16 %v3530
  %v3547 = vunpack.c.l.b16 %v3531
  %v3548 = vunpack.c.l.b16 %v3532
  %v3549 = vunpack.c.l.b16 %v3533
  %v3550 = vunpack.c.l.b16 %v3534
  %v3551 = vunpack.c.l.b16 %v3535
  %v3552 = vunpack.c.l.b16 %v3536
  %v3553 = vunpack.c.l.b16 %v3537
  %v3554 = vpack.c.b16 %v3547, %v3546
  %v3555 = vpack.c.b16 %v3549, %v3548
  %v3556 = vpack.c.b16 %v3551, %v3550
  %v3557 = vpack.c.b16 %v3553, %v3552
  %v3563 = vsel %vm178, %v3516, 0
  %v3566 = vsel %vm178, %v3517, 0
  %v3569 = vsel %vm178, %v3518, 0
  %v3572 = vsel %vm178, %v3519, 0
  %v3575 = vsel %vm178, %v3520, 0
  %v3578 = vsel %vm178, %v3521, 0
  %v3581 = vsel %vm178, %v3522, 0
  %v3584 = vsel %vm178, %v3523, 0
  %v3587 = vsel %vm178, %v3524, 0
  %v3590 = vsel %vm178, %v3525, 0
  %v3593 = vsel %vm178, %v3526, 0
  %v3596 = vsel %vm178, %v3527, 0
  %v3599 = vsel %vm178, %v3528, 0
  %v3602 = vsel %vm178, %v3529, 0
  %3604 = vmatprep.subr.bf16.mxu0 0
  %3605 = vmatpush1.bf16.msra.mxu0 %v3554
  %3606 = vmatprep.subr.bf16.mxu0 0
  %3607 = vmatpush1.bf16.msra.mxu0 %v3555
  %3608 = vmatprep.subr.bf16.mxu0 0
  %3609 = vmatpush1.bf16.msra.mxu0 %v3556
  %3610 = vmatprep.subr.bf16.mxu0 0
  %3611 = vmatpush1.bf16.msra.mxu0 %v3557
  %3612 = vmatprep.subr.bf16.mxu0 0
  %3613 = vmatpush1.bf16.msra.mxu0 0
  %3614 = vmatprep.subr.bf16.mxu0 0
  %3615 = vmatpush1.bf16.msra.mxu0 0
  %3616 = vmatprep.subr.bf16.mxu0 0
  %3617 = vmatpush1.bf16.msra.mxu0 0
  %3618 = vmatprep.subr.bf16.mxu0 0
  %3619 = vmatpush1.bf16.msra.mxu0 0
  %3620 = vmatprep.subr.bf16.mxu0 0
  %3621 = vmatpush1.bf16.msra.mxu0 0
  %3622 = vmatprep.subr.bf16.mxu0 0
  %3623 = vmatpush1.bf16.msra.mxu0 0
  %3624 = vmatprep.subr.bf16.mxu0 0
  %3625 = vmatpush1.bf16.msra.mxu0 0
  %3626 = vmatprep.subr.bf16.mxu0 0
  %3627 = vmatpush1.bf16.msra.mxu0 0
  %3628 = vmatprep.subr.bf16.mxu0 0
  %3629 = vmatpush1.bf16.msra.mxu0 0
  %3630 = vmatprep.subr.bf16.mxu0 0
  %3631 = vmatpush1.bf16.msra.mxu0 0
  %3632 = vmatprep.subr.bf16.mxu0 0
  %3633 = vmatpush1.bf16.msra.mxu0 0
  %3634 = vmatprep.subr.bf16.mxu0 0
  %3635 = vmatpush1.bf16.msra.mxu0 0
  %3636 = vmatprep.mubr.bf16.mxu0 0
  %3637 = vmatmul.mubr.bf16.gmra.mrb[0].mxu0 %v3563
  %v3638 = vpop.f32.mrb[0].mxu0
  %v3639 = vadd.f32 0.0, %v3638
  %v3640 = vpop.f32.mrb[0].mxu0
  %v3641 = vpop.f32.mrb[0].mxu0
  %v3642 = vadd.f32 0.0, %v3641
  %v3643 = vpop.f32.mrb[0].mxu0
  %3644 = vmatprep.mubr.bf16.mxu0 0
  %3645 = vmatmul.mubr.bf16.gmra.mrb[0].mxu0 %v3566
  %v3646 = vpop.f32.mrb[0].mxu0
  %v3647 = vadd.f32 0.0, %v3646
  %v3648 = vpop.f32.mrb[0].mxu0
  %v3649 = vpop.f32.mrb[0].mxu0
  %v3650 = vadd.f32 0.0, %v3649
  %v3651 = vpop.f32.mrb[0].mxu0
  %3652 = vmatprep.mubr.bf16.mxu0 0
  %3653 = vmatmul.mubr.bf16.gmra.mrb[0].mxu0 %v3569
  %v3654 = vpop.f32.mrb[0].mxu0
  %v3655 = vadd.f32 0.0, %v3654
  %v3656 = vpop.f32.mrb[0].mxu0
  %v3657 = vpop.f32.mrb[0].mxu0
  %v3658 = vadd.f32 0.0, %v3657
  %v3659 = vpop.f32.mrb[0].mxu0
  %3660 = vmatprep.mubr.bf16.mxu0 0
  %3661 = vmatmul.mubr.bf16.gmra.mrb[0].mxu0 %v3572
  %v3662 = vpop.f32.mrb[0].mxu0
  %v3663 = vadd.f32 0.0, %v3662
  %v3664 = vpop.f32.mrb[0].mxu0
  %v3665 = vpop.f32.mrb[0].mxu0
  %v3666 = vadd.f32 0.0, %v3665
  %v3667 = vpop.f32.mrb[0].mxu0
  %3668 = vmatprep.mubr.bf16.mxu0 0
  %3669 = vmatmul.mubr.bf16.gmra.mrb[0].mxu0 %v3575
  %v3670 = vpop.f32.mrb[0].mxu0
  %v3671 = vadd.f32 0.0, %v3670
  %v3672 = vpop.f32.mrb[0].mxu0
  %v3673 = vpop.f32.mrb[0].mxu0
  %v3674 = vadd.f32 0.0, %v3673
  %v3675 = vpop.f32.mrb[0].mxu0
  %3676 = vmatprep.mubr.bf16.mxu0 0
  %3677 = vmatmul.mubr.bf16.gmra.mrb[0].mxu0 %v3578
  %v3678 = vpop.f32.mrb[0].mxu0
  %v3679 = vadd.f32 0.0, %v3678
  %v3680 = vpop.f32.mrb[0].mxu0
  %v3681 = vpop.f32.mrb[0].mxu0
  %v3682 = vadd.f32 0.0, %v3681
  %v3683 = vpop.f32.mrb[0].mxu0
  %3684 = vmatprep.mubr.bf16.mxu0 0
  %3685 = vmatmul.mubr.bf16.gmra.mrb[0].mxu0 %v3581
  %v3686 = vpop.f32.mrb[0].mxu0
  %v3687 = vadd.f32 0.0, %v3686
  %v3688 = vpop.f32.mrb[0].mxu0
  %v3689 = vpop.f32.mrb[0].mxu0
  %v3690 = vadd.f32 0.0, %v3689
  %v3691 = vpop.f32.mrb[0].mxu0
  %3692 = vmatprep.mubr.bf16.mxu0 0
  %3693 = vmatmul.mubr.bf16.gmra.mrb[0].mxu0 %v3584
  %v3694 = vpop.f32.mrb[0].mxu0
  %v3695 = vadd.f32 0.0, %v3694
  %v3696 = vpop.f32.mrb[0].mxu0
  %v3697 = vpop.f32.mrb[0].mxu0
  %v3698 = vadd.f32 0.0, %v3697
  %v3699 = vpop.f32.mrb[0].mxu0
  %3700 = vmatprep.mubr.bf16.mxu0 0
  %3701 = vmatmul.mubr.bf16.gmra.mrb[0].mxu0 %v3587
  %v3702 = vpop.f32.mrb[0].mxu0
  %v3703 = vadd.f32 0.0, %v3702
  %v3704 = vpop.f32.mrb[0].mxu0
  %v3705 = vpop.f32.mrb[0].mxu0
  %v3706 = vadd.f32 0.0, %v3705
  %v3707 = vpop.f32.mrb[0].mxu0
  %3708 = vmatprep.mubr.bf16.mxu0 0
  %3709 = vmatmul.mubr.bf16.gmra.mrb[0].mxu0 %v3590
  %v3710 = vpop.f32.mrb[0].mxu0
  %v3711 = vadd.f32 0.0, %v3710
  %v3712 = vpop.f32.mrb[0].mxu0
  %v3713 = vpop.f32.mrb[0].mxu0
  %v3714 = vadd.f32 0.0, %v3713
  %v3715 = vpop.f32.mrb[0].mxu0
  %3716 = vmatprep.mubr.bf16.mxu0 0
  %3717 = vmatmul.mubr.bf16.gmra.mrb[0].mxu0 %v3593
  %v3718 = vpop.f32.mrb[0].mxu0
  %v3719 = vadd.f32 0.0, %v3718
  %v3720 = vpop.f32.mrb[0].mxu0
  %v3721 = vpop.f32.mrb[0].mxu0
  %v3722 = vadd.f32 0.0, %v3721
  %v3723 = vpop.f32.mrb[0].mxu0
  %3724 = vmatprep.mubr.bf16.mxu0 0
  %3725 = vmatmul.mubr.bf16.gmra.mrb[0].mxu0 %v3596
  %v3726 = vpop.f32.mrb[0].mxu0
  %v3727 = vadd.f32 0.0, %v3726
  %v3728 = vpop.f32.mrb[0].mxu0
  %v3729 = vpop.f32.mrb[0].mxu0
  %v3730 = vadd.f32 0.0, %v3729
  %v3731 = vpop.f32.mrb[0].mxu0
  %3732 = vmatprep.mubr.bf16.mxu0 0
  %3733 = vmatmul.mubr.bf16.gmra.mrb[0].mxu0 %v3599
  %v3734 = vpop.f32.mrb[0].mxu0
  %v3735 = vadd.f32 0.0, %v3734
  %v3736 = vpop.f32.mrb[0].mxu0
  %v3737 = vpop.f32.mrb[0].mxu0
  %v3738 = vadd.f32 0.0, %v3737
  %v3739 = vpop.f32.mrb[0].mxu0
  %3740 = vmatprep.mubr.bf16.mxu0 0
  %3741 = vmatmul.mubr.bf16.gmra.mrb[0].mxu0 %v3602
  %v3742 = vpop.f32.mrb[0].mxu0
  %v3743 = vadd.f32 0.0, %v3742
  %v3744 = vpop.f32.mrb[0].mxu0
  %v3745 = vpop.f32.mrb[0].mxu0
  %v3746 = vadd.f32 0.0, %v3745
  %v3747 = vpop.f32.mrb[0].mxu0
  %3748 = vdwg.mxu0
  %v3749 = vadd.f32 %v3378, %v3639
  %v3750 = vadd.f32 %v3381, %v3642
  %v3751 = vadd.f32 %v3386, %v3647
  %v3752 = vadd.f32 %v3389, %v3650
  %v3753 = vadd.f32 %v3394, %v3655
  %v3754 = vadd.f32 %v3397, %v3658
  %v3755 = vadd.f32 %v3402, %v3663
  %v3756 = vadd.f32 %v3405, %v3666
  %v3757 = vadd.f32 %v3410, %v3671
  %v3758 = vadd.f32 %v3413, %v3674
  %v3759 = vadd.f32 %v3418, %v3679
  %v3760 = vadd.f32 %v3421, %v3682
  %v3761 = vadd.f32 %v3426, %v3687
  %v3762 = vadd.f32 %v3429, %v3690
  %v3763 = vadd.f32 %v3434, %v3695
  %v3764 = vadd.f32 %v3437, %v3698
  %v3765 = vadd.f32 %v3442, %v3703
  %v3766 = vadd.f32 %v3445, %v3706
  %v3767 = vadd.f32 %v3450, %v3711
  %v3768 = vadd.f32 %v3453, %v3714
  %v3769 = vadd.f32 %v3458, %v3719
  %v3770 = vadd.f32 %v3461, %v3722
  %v3771 = vadd.f32 %v3466, %v3727
  %v3772 = vadd.f32 %v3469, %v3730
  %v3773 = vadd.f32 %v3474, %v3735
  %v3774 = vadd.f32 %v3477, %v3738
  %v3775 = vadd.f32 %v3482, %v3743
  %v3776 = vadd.f32 %v3485, %v3746
  %v3777 = vld [vmem:[%s2965 + $0x10] sm:$0xff]
  %v3778 = vld [vmem:[%s2965 + $0x18] sm:$0xff]
  %v3779 = vld [vmem:[%s2965 + $0x20] sm:$0xff]
  %v3780 = vld [vmem:[%s2965 + $0x28] sm:$0xff]
  %v3781 = vld [vmem:[%s2965 + $0x30] sm:$0xff]
  %v3782 = vld [vmem:[%s2965 + $0x38] sm:$0xff]
  %v3783 = vld [vmem:[%s2965 + $0x40] sm:$0xff]
  %v3784 = vld [vmem:[%s2965 + $0x48] sm:$0xff]
  %v3785 = vld [vmem:[%s2965 + $0x50] sm:$0xff]
  %v3786 = vld [vmem:[%s2965 + $0x58] sm:$0xff]
  %v3787 = vld [vmem:[%s2965 + $0x60] sm:$0xff]
  %v3788 = vld [vmem:[%s2965 + $0x68] sm:$0xff]
  %v3789 = vld [vmem:[%s2965 + $0x70] sm:$0xff]
  %v3790 = vld [vmem:[%s2965 + $0x78] sm:$0xff]
  %v3791 = vld [vmem:[%s2965 + $0x80] sm:$0xff]
  %v3792 = vld [vmem:[%s2965 + $0x88] sm:$0xff]
  %v3793 = vld [vmem:[%s2965 + $0x90] sm:$0xff]
  %v3794 = vld [vmem:[%s2965 + $0x98] sm:$0xff]
  %v3795 = vld [vmem:[%s2965 + $0xa0] sm:$0xff]
  %v3796 = vld [vmem:[%s2965 + $0xa8] sm:$0xff]
  %v3797 = vld [vmem:[%s2965 + $0xb0] sm:$0xff]
  %v3798 = vld [vmem:[%s2965 + $0xb8] sm:$0xff]
  %v3799 = vld [vmem:[%s2965 + $0xc0] sm:$0xff]
  %v3800 = vld [vmem:[%s2965 + $0xc8] sm:$0xff]
  %v3801 = vld [vmem:[%s2965 + $0xd0] sm:$0xff]
  %v3802 = vld [vmem:[%s2965 + $0xd8] sm:$0xff]
  %v3803 = vld [vmem:[%s2965 + $0xe0] sm:$0xff]
  %v3804 = vld [vmem:[%s2965 + $0xe8] sm:$0xff]
  %v3805 = vpack.c.bf16 %v3778, %v3777
  %v3806 = vpack.c.bf16 %v3780, %v3779
  %v3807 = vpack.c.bf16 %v3782, %v3781
  %v3808 = vpack.c.bf16 %v3784, %v3783
  %v3809 = vpack.c.bf16 %v3786, %v3785
  %v3810 = vpack.c.bf16 %v3788, %v3787
  %v3811 = vpack.c.bf16 %v3790, %v3789
  %v3812 = vpack.c.bf16 %v3792, %v3791
  %v3813 = vpack.c.bf16 %v3794, %v3793
  %v3814 = vpack.c.bf16 %v3796, %v3795
  %v3815 = vpack.c.bf16 %v3798, %v3797
  %v3816 = vpack.c.bf16 %v3800, %v3799
  %v3817 = vpack.c.bf16 %v3802, %v3801
  %v3818 = vpack.c.bf16 %v3804, %v3803
  %v3819 = vld [vmem:[%s909] sm:$0xf]
  %v3820 = vld [vmem:[%s909 + $0x4] sm:$0xf]
  %v3821 = vld [vmem:[%s909 + $0x8] sm:$0xf]
  %v3822 = vld [vmem:[%s909 + $0xc] sm:$0xf]
  %v3823 = vld [vmem:[%s909 + $0x10] sm:$0xf]
  %v3824 = vld [vmem:[%s909 + $0x14] sm:$0xf]
  %v3825 = vld [vmem:[%s909 + $0x18] sm:$0xf]
  %v3826 = vld [vmem:[%s909 + $0x1c] sm:$0xf]
  %v3835 = vunpack.c.l.b16 %v3819
  %v3836 = vunpack.c.l.b16 %v3820
  %v3837 = vunpack.c.l.b16 %v3821
  %v3838 = vunpack.c.l.b16 %v3822
  %v3839 = vunpack.c.l.b16 %v3823
  %v3840 = vunpack.c.l.b16 %v3824
  %v3841 = vunpack.c.l.b16 %v3825
  %v3842 = vunpack.c.l.b16 %v3826
  %v3843 = vpack.c.b16 %v3836, %v3835
  %v3844 = vpack.c.b16 %v3838, %v3837
  %v3845 = vpack.c.b16 %v3840, %v3839
  %v3846 = vpack.c.b16 %v3842, %v3841
  %v3852 = vsel %vm178, %v3805, 0
  %v3855 = vsel %vm178, %v3806, 0
  %v3858 = vsel %vm178, %v3807, 0
  %v3861 = vsel %vm178, %v3808, 0
  %v3864 = vsel %vm178, %v3809, 0
  %v3867 = vsel %vm178, %v3810, 0
  %v3870 = vsel %vm178, %v3811, 0
  %v3873 = vsel %vm178, %v3812, 0
  %v3876 = vsel %vm178, %v3813, 0
  %v3879 = vsel %vm178, %v3814, 0
  %v3882 = vsel %vm178, %v3815, 0
  %v3885 = vsel %vm178, %v3816, 0
  %v3888 = vsel %vm178, %v3817, 0
  %v3891 = vsel %vm178, %v3818, 0
  %3893 = vmatprep.subr.bf16.mxu0 0
  %3894 = vmatpush1.bf16.msra.mxu0 %v3843
  %3895 = vmatprep.subr.bf16.mxu0 0
  %3896 = vmatpush1.bf16.msra.mxu0 %v3844
  %3897 = vmatprep.subr.bf16.mxu0 0
  %3898 = vmatpush1.bf16.msra.mxu0 %v3845
  %3899 = vmatprep.subr.bf16.mxu0 0
  %3900 = vmatpush1.bf16.msra.mxu0 %v3846
  %3901 = vmatprep.subr.bf16.mxu0 0
  %3902 = vmatpush1.bf16.msra.mxu0 0
  %3903 = vmatprep.subr.bf16.mxu0 0
  %3904 = vmatpush1.bf16.msra.mxu0 0
  %3905 = vmatprep.subr.bf16.mxu0 0
  %3906 = vmatpush1.bf16.msra.mxu0 0
  %3907 = vmatprep.subr.bf16.mxu0 0
  %3908 = vmatpush1.bf16.msra.mxu0 0
  %3909 = vmatprep.subr.bf16.mxu0 0
  %3910 = vmatpush1.bf16.msra.mxu0 0
  %3911 = vmatprep.subr.bf16.mxu0 0
  %3912 = vmatpush1.bf16.msra.mxu0 0
  %3913 = vmatprep.subr.bf16.mxu0 0
  %3914 = vmatpush1.bf16.msra.mxu0 0
  %3915 = vmatprep.subr.bf16.mxu0 0
  %3916 = vmatpush1.bf16.msra.mxu0 0
  %3917 = vmatprep.subr.bf16.mxu0 0
  %3918 = vmatpush1.bf16.msra.mxu0 0
  %3919 = vmatprep.subr.bf16.mxu0 0
  %3920 = vmatpush1.bf16.msra.mxu0 0
  %3921 = vmatprep.subr.bf16.mxu0 0
  %3922 = vmatpush1.bf16.msra.mxu0 0
  %3923 = vmatprep.subr.bf16.mxu0 0
  %3924 = vmatpush1.bf16.msra.mxu0 0
  %3925 = vmatprep.mubr.bf16.mxu0 0
  %3926 = vmatmul.mubr.bf16.gmra.mrb[0].mxu0 %v3852
  %v3927 = vpop.f32.mrb[0].mxu0
  %v3928 = vadd.f32 0.0, %v3927
  %v3929 = vpop.f32.mrb[0].mxu0
  %v3930 = vpop.f32.mrb[0].mxu0
  %v3931 = vadd.f32 0.0, %v3930
  %v3932 = vpop.f32.mrb[0].mxu0
  %3933 = vmatprep.mubr.bf16.mxu0 0
  %3934 = vmatmul.mubr.bf16.gmra.mrb[0].mxu0 %v3855
  %v3935 = vpop.f32.mrb[0].mxu0
  %v3936 = vadd.f32 0.0, %v3935
  %v3937 = vpop.f32.mrb[0].mxu0
  %v3938 = vpop.f32.mrb[0].mxu0
  %v3939 = vadd.f32 0.0, %v3938
  %v3940 = vpop.f32.mrb[0].mxu0
  %3941 = vmatprep.mubr.bf16.mxu0 0
  %3942 = vmatmul.mubr.bf16.gmra.mrb[0].mxu0 %v3858
  %v3943 = vpop.f32.mrb[0].mxu0
  %v3944 = vadd.f32 0.0, %v3943
  %v3945 = vpop.f32.mrb[0].mxu0
  %v3946 = vpop.f32.mrb[0].mxu0
  %v3947 = vadd.f32 0.0, %v3946
  %v3948 = vpop.f32.mrb[0].mxu0
  %3949 = vmatprep.mubr.bf16.mxu0 0
  %3950 = vmatmul.mubr.bf16.gmra.mrb[0].mxu0 %v3861
  %v3951 = vpop.f32.mrb[0].mxu0
  %v3952 = vadd.f32 0.0, %v3951
  %v3953 = vpop.f32.mrb[0].mxu0
  %v3954 = vpop.f32.mrb[0].mxu0
  %v3955 = vadd.f32 0.0, %v3954
  %v3956 = vpop.f32.mrb[0].mxu0
  %3957 = vmatprep.mubr.bf16.mxu0 0
  %3958 = vmatmul.mubr.bf16.gmra.mrb[0].mxu0 %v3864
  %v3959 = vpop.f32.mrb[0].mxu0
  %v3960 = vadd.f32 0.0, %v3959
  %v3961 = vpop.f32.mrb[0].mxu0
  %v3962 = vpop.f32.mrb[0].mxu0
  %v3963 = vadd.f32 0.0, %v3962
  %v3964 = vpop.f32.mrb[0].mxu0
  %3965 = vmatprep.mubr.bf16.mxu0 0
  %3966 = vmatmul.mubr.bf16.gmra.mrb[0].mxu0 %v3867
  %v3967 = vpop.f32.mrb[0].mxu0
  %v3968 = vadd.f32 0.0, %v3967
  %v3969 = vpop.f32.mrb[0].mxu0
  %v3970 = vpop.f32.mrb[0].mxu0
  %v3971 = vadd.f32 0.0, %v3970
  %v3972 = vpop.f32.mrb[0].mxu0
  %3973 = vmatprep.mubr.bf16.mxu0 0
  %3974 = vmatmul.mubr.bf16.gmra.mrb[0].mxu0 %v3870
  %v3975 = vpop.f32.mrb[0].mxu0
  %v3976 = vadd.f32 0.0, %v3975
  %v3977 = vpop.f32.mrb[0].mxu0
  %v3978 = vpop.f32.mrb[0].mxu0
  %v3979 = vadd.f32 0.0, %v3978
  %v3980 = vpop.f32.mrb[0].mxu0
  %3981 = vmatprep.mubr.bf16.mxu0 0
  %3982 = vmatmul.mubr.bf16.gmra.mrb[0].mxu0 %v3873
  %v3983 = vpop.f32.mrb[0].mxu0
  %v3984 = vadd.f32 0.0, %v3983
  %v3985 = vpop.f32.mrb[0].mxu0
  %v3986 = vpop.f32.mrb[0].mxu0
  %v3987 = vadd.f32 0.0, %v3986
  %v3988 = vpop.f32.mrb[0].mxu0
  %3989 = vmatprep.mubr.bf16.mxu0 0
  %3990 = vmatmul.mubr.bf16.gmra.mrb[0].mxu0 %v3876
  %v3991 = vpop.f32.mrb[0].mxu0
  %v3992 = vadd.f32 0.0, %v3991
  %v3993 = vpop.f32.mrb[0].mxu0
  %v3994 = vpop.f32.mrb[0].mxu0
  %v3995 = vadd.f32 0.0, %v3994
  %v3996 = vpop.f32.mrb[0].mxu0
  %3997 = vmatprep.mubr.bf16.mxu0 0
  %3998 = vmatmul.mubr.bf16.gmra.mrb[0].mxu0 %v3879
  %v3999 = vpop.f32.mrb[0].mxu0
  %v4000 = vadd.f32 0.0, %v3999
  %v4001 = vpop.f32.mrb[0].mxu0
  %v4002 = vpop.f32.mrb[0].mxu0
  %v4003 = vadd.f32 0.0, %v4002
  %v4004 = vpop.f32.mrb[0].mxu0
  %4005 = vmatprep.mubr.bf16.mxu0 0
  %4006 = vmatmul.mubr.bf16.gmra.mrb[0].mxu0 %v3882
  %v4007 = vpop.f32.mrb[0].mxu0
  %v4008 = vadd.f32 0.0, %v4007
  %v4009 = vpop.f32.mrb[0].mxu0
  %v4010 = vpop.f32.mrb[0].mxu0
  %v4011 = vadd.f32 0.0, %v4010
  %v4012 = vpop.f32.mrb[0].mxu0
  %4013 = vmatprep.mubr.bf16.mxu0 0
  %4014 = vmatmul.mubr.bf16.gmra.mrb[0].mxu0 %v3885
  %v4015 = vpop.f32.mrb[0].mxu0
  %v4016 = vadd.f32 0.0, %v4015
  %v4017 = vpop.f32.mrb[0].mxu0
  %v4018 = vpop.f32.mrb[0].mxu0
  %v4019 = vadd.f32 0.0, %v4018
  %v4020 = vpop.f32.mrb[0].mxu0
  %4021 = vmatprep.mubr.bf16.mxu0 0
  %4022 = vmatmul.mubr.bf16.gmra.mrb[0].mxu0 %v3888
  %v4023 = vpop.f32.mrb[0].mxu0
  %v4024 = vadd.f32 0.0, %v4023
  %v4025 = vpop.f32.mrb[0].mxu0
  %v4026 = vpop.f32.mrb[0].mxu0
  %v4027 = vadd.f32 0.0, %v4026
  %v4028 = vpop.f32.mrb[0].mxu0
  %4029 = vmatprep.mubr.bf16.mxu0 0
  %4030 = vmatmul.mubr.bf16.gmra.mrb[0].mxu0 %v3891
  %v4031 = vpop.f32.mrb[0].mxu0
  %v4032 = vadd.f32 0.0, %v4031
  %v4033 = vpop.f32.mrb[0].mxu0
  %v4034 = vpop.f32.mrb[0].mxu0
  %v4035 = vadd.f32 0.0, %v4034
  %v4036 = vpop.f32.mrb[0].mxu0
  %4037 = vdwg.mxu0
  %v4038 = vadd.f32 %v3749, %v3928
  %v4039 = vadd.f32 %v3750, %v3931
  %v4040 = vadd.f32 %v3751, %v3936
  %v4041 = vadd.f32 %v3752, %v3939
  %v4042 = vadd.f32 %v3753, %v3944
  %v4043 = vadd.f32 %v3754, %v3947
  %v4044 = vadd.f32 %v3755, %v3952
  %v4045 = vadd.f32 %v3756, %v3955
  %v4046 = vadd.f32 %v3757, %v3960
  %v4047 = vadd.f32 %v3758, %v3963
  %v4048 = vadd.f32 %v3759, %v3968
  %v4049 = vadd.f32 %v3760, %v3971
  %v4050 = vadd.f32 %v3761, %v3976
  %v4051 = vadd.f32 %v3762, %v3979
  %v4052 = vadd.f32 %v3763, %v3984
  %v4053 = vadd.f32 %v3764, %v3987
  %v4054 = vadd.f32 %v3765, %v3992
  %v4055 = vadd.f32 %v3766, %v3995
  %v4056 = vadd.f32 %v3767, %v4000
  %v4057 = vadd.f32 %v3768, %v4003
  %v4058 = vadd.f32 %v3769, %v4008
  %v4059 = vadd.f32 %v3770, %v4011
  %v4060 = vadd.f32 %v3771, %v4016
  %v4061 = vadd.f32 %v3772, %v4019
  %v4062 = vadd.f32 %v3773, %v4024
  %v4063 = vadd.f32 %v3774, %v4027
  %v4064 = vadd.f32 %v3775, %v4032
  %v4065 = vadd.f32 %v3776, %v4035
  %v4066 = vld [vmem:[%s2965 + $0x11] sm:$0xff]
  %v4067 = vld [vmem:[%s2965 + $0x19] sm:$0xff]
  %v4068 = vld [vmem:[%s2965 + $0x21] sm:$0xff]
  %v4069 = vld [vmem:[%s2965 + $0x29] sm:$0xff]
  %v4070 = vld [vmem:[%s2965 + $0x31] sm:$0xff]
  %v4071 = vld [vmem:[%s2965 + $0x39] sm:$0xff]
  %v4072 = vld [vmem:[%s2965 + $0x41] sm:$0xff]
  %v4073 = vld [vmem:[%s2965 + $0x49] sm:$0xff]
  %v4074 = vld [vmem:[%s2965 + $0x51] sm:$0xff]
  %v4075 = vld [vmem:[%s2965 + $0x59] sm:$0xff]
  %v4076 = vld [vmem:[%s2965 + $0x61] sm:$0xff]
  %v4077 = vld [vmem:[%s2965 + $0x69] sm:$0xff]
  %v4078 = vld [vmem:[%s2965 + $0x71] sm:$0xff]
  %v4079 = vld [vmem:[%s2965 + $0x79] sm:$0xff]
  %v4080 = vld [vmem:[%s2965 + $0x81] sm:$0xff]
  %v4081 = vld [vmem:[%s2965 + $0x89] sm:$0xff]
  %v4082 = vld [vmem:[%s2965 + $0x91] sm:$0xff]
  %v4083 = vld [vmem:[%s2965 + $0x99] sm:$0xff]
  %v4084 = vld [vmem:[%s2965 + $0xa1] sm:$0xff]
  %v4085 = vld [vmem:[%s2965 + $0xa9] sm:$0xff]
  %v4086 = vld [vmem:[%s2965 + $0xb1] sm:$0xff]
  %v4087 = vld [vmem:[%s2965 + $0xb9] sm:$0xff]
  %v4088 = vld [vmem:[%s2965 + $0xc1] sm:$0xff]
  %v4089 = vld [vmem:[%s2965 + $0xc9] sm:$0xff]
  %v4090 = vld [vmem:[%s2965 + $0xd1] sm:$0xff]
  %v4091 = vld [vmem:[%s2965 + $0xd9] sm:$0xff]
  %v4092 = vld [vmem:[%s2965 + $0xe1] sm:$0xff]
  %v4093 = vld [vmem:[%s2965 + $0xe9] sm:$0xff]
  %v4094 = vpack.c.bf16 %v4067, %v4066
  %v4095 = vpack.c.bf16 %v4069, %v4068
  %v4096 = vpack.c.bf16 %v4071, %v4070
  %v4097 = vpack.c.bf16 %v4073, %v4072
  %v4098 = vpack.c.bf16 %v4075, %v4074
  %v4099 = vpack.c.bf16 %v4077, %v4076
  %v4100 = vpack.c.bf16 %v4079, %v4078
  %v4101 = vpack.c.bf16 %v4081, %v4080
  %v4102 = vpack.c.bf16 %v4083, %v4082
  %v4103 = vpack.c.bf16 %v4085, %v4084
  %v4104 = vpack.c.bf16 %v4087, %v4086
  %v4105 = vpack.c.bf16 %v4089, %v4088
  %v4106 = vpack.c.bf16 %v4091, %v4090
  %v4107 = vpack.c.bf16 %v4093, %v4092
  %v4108 = vld [vmem:[%s1199] sm:$0xf]
  %v4109 = vld [vmem:[%s1199 + $0x4] sm:$0xf]
  %v4110 = vld [vmem:[%s1199 + $0x8] sm:$0xf]
  %v4111 = vld [vmem:[%s1199 + $0xc] sm:$0xf]
  %v4112 = vld [vmem:[%s1199 + $0x10] sm:$0xf]
  %v4113 = vld [vmem:[%s1199 + $0x14] sm:$0xf]
  %v4114 = vld [vmem:[%s1199 + $0x18] sm:$0xf]
  %v4115 = vld [vmem:[%s1199 + $0x1c] sm:$0xf]
  %v4124 = vunpack.c.l.b16 %v4108
  %v4125 = vunpack.c.l.b16 %v4109
  %v4126 = vunpack.c.l.b16 %v4110
  %v4127 = vunpack.c.l.b16 %v4111
  %v4128 = vunpack.c.l.b16 %v4112
  %v4129 = vunpack.c.l.b16 %v4113
  %v4130 = vunpack.c.l.b16 %v4114
  %v4131 = vunpack.c.l.b16 %v4115
  %v4132 = vpack.c.b16 %v4125, %v4124
  %v4133 = vpack.c.b16 %v4127, %v4126
  %v4134 = vpack.c.b16 %v4129, %v4128
  %v4135 = vpack.c.b16 %v4131, %v4130
  %v4141 = vsel %vm178, %v4094, 0
  %v4144 = vsel %vm178, %v4095, 0
  %v4147 = vsel %vm178, %v4096, 0
  %v4150 = vsel %vm178, %v4097, 0
  %v4153 = vsel %vm178, %v4098, 0
  %v4156 = vsel %vm178, %v4099, 0
  %v4159 = vsel %vm178, %v4100, 0
  %v4162 = vsel %vm178, %v4101, 0
  %v4165 = vsel %vm178, %v4102, 0
  %v4168 = vsel %vm178, %v4103, 0
  %v4171 = vsel %vm178, %v4104, 0
  %v4174 = vsel %vm178, %v4105, 0
  %v4177 = vsel %vm178, %v4106, 0
  %v4180 = vsel %vm178, %v4107, 0
  %4182 = vmatprep.subr.bf16.mxu0 0
  %4183 = vmatpush1.bf16.msra.mxu0 %v4132
  %4184 = vmatprep.subr.bf16.mxu0 0
  %4185 = vmatpush1.bf16.msra.mxu0 %v4133
  %4186 = vmatprep.subr.bf16.mxu0 0
  %4187 = vmatpush1.bf16.msra.mxu0 %v4134
  %4188 = vmatprep.subr.bf16.mxu0 0
  %4189 = vmatpush1.bf16.msra.mxu0 %v4135
  %4190 = vmatprep.subr.bf16.mxu0 0
  %4191 = vmatpush1.bf16.msra.mxu0 0
  %4192 = vmatprep.subr.bf16.mxu0 0
  %4193 = vmatpush1.bf16.msra.mxu0 0
  %4194 = vmatprep.subr.bf16.mxu0 0
  %4195 = vmatpush1.bf16.msra.mxu0 0
  %4196 = vmatprep.subr.bf16.mxu0 0
  %4197 = vmatpush1.bf16.msra.mxu0 0
  %4198 = vmatprep.subr.bf16.mxu0 0
  %4199 = vmatpush1.bf16.msra.mxu0 0
  %4200 = vmatprep.subr.bf16.mxu0 0
  %4201 = vmatpush1.bf16.msra.mxu0 0
  %4202 = vmatprep.subr.bf16.mxu0 0
  %4203 = vmatpush1.bf16.msra.mxu0 0
  %4204 = vmatprep.subr.bf16.mxu0 0
  %4205 = vmatpush1.bf16.msra.mxu0 0
  %4206 = vmatprep.subr.bf16.mxu0 0
  %4207 = vmatpush1.bf16.msra.mxu0 0
  %4208 = vmatprep.subr.bf16.mxu0 0
  %4209 = vmatpush1.bf16.msra.mxu0 0
  %4210 = vmatprep.subr.bf16.mxu0 0
  %4211 = vmatpush1.bf16.msra.mxu0 0
  %4212 = vmatprep.subr.bf16.mxu0 0
  %4213 = vmatpush1.bf16.msra.mxu0 0
  %4214 = vmatprep.mubr.bf16.mxu0 0
  %4215 = vmatmul.mubr.bf16.gmra.mrb[0].mxu0 %v4141
  %v4216 = vpop.f32.mrb[0].mxu0
  %v4217 = vadd.f32 0.0, %v4216
  %v4218 = vpop.f32.mrb[0].mxu0
  %v4219 = vpop.f32.mrb[0].mxu0
  %v4220 = vadd.f32 0.0, %v4219
  %v4221 = vpop.f32.mrb[0].mxu0
  %4222 = vmatprep.mubr.bf16.mxu0 0
  %4223 = vmatmul.mubr.bf16.gmra.mrb[0].mxu0 %v4144
  %v4224 = vpop.f32.mrb[0].mxu0
  %v4225 = vadd.f32 0.0, %v4224
  %v4226 = vpop.f32.mrb[0].mxu0
  %v4227 = vpop.f32.mrb[0].mxu0
  %v4228 = vadd.f32 0.0, %v4227
  %v4229 = vpop.f32.mrb[0].mxu0
  %4230 = vmatprep.mubr.bf16.mxu0 0
  %4231 = vmatmul.mubr.bf16.gmra.mrb[0].mxu0 %v4147
  %v4232 = vpop.f32.mrb[0].mxu0
  %v4233 = vadd.f32 0.0, %v4232
  %v4234 = vpop.f32.mrb[0].mxu0
  %v4235 = vpop.f32.mrb[0].mxu0
  %v4236 = vadd.f32 0.0, %v4235
  %v4237 = vpop.f32.mrb[0].mxu0
  %4238 = vmatprep.mubr.bf16.mxu0 0
  %4239 = vmatmul.mubr.bf16.gmra.mrb[0].mxu0 %v4150
  %v4240 = vpop.f32.mrb[0].mxu0
  %v4241 = vadd.f32 0.0, %v4240
  %v4242 = vpop.f32.mrb[0].mxu0
  %v4243 = vpop.f32.mrb[0].mxu0
  %v4244 = vadd.f32 0.0, %v4243
  %v4245 = vpop.f32.mrb[0].mxu0
  %4246 = vmatprep.mubr.bf16.mxu0 0
  %4247 = vmatmul.mubr.bf16.gmra.mrb[0].mxu0 %v4153
  %v4248 = vpop.f32.mrb[0].mxu0
  %v4249 = vadd.f32 0.0, %v4248
  %v4250 = vpop.f32.mrb[0].mxu0
  %v4251 = vpop.f32.mrb[0].mxu0
  %v4252 = vadd.f32 0.0, %v4251
  %v4253 = vpop.f32.mrb[0].mxu0
  %4254 = vmatprep.mubr.bf16.mxu0 0
  %4255 = vmatmul.mubr.bf16.gmra.mrb[0].mxu0 %v4156
  %v4256 = vpop.f32.mrb[0].mxu0
  %v4257 = vadd.f32 0.0, %v4256
  %v4258 = vpop.f32.mrb[0].mxu0
  %v4259 = vpop.f32.mrb[0].mxu0
  %v4260 = vadd.f32 0.0, %v4259
  %v4261 = vpop.f32.mrb[0].mxu0
  %4262 = vmatprep.mubr.bf16.mxu0 0
  %4263 = vmatmul.mubr.bf16.gmra.mrb[0].mxu0 %v4159
  %v4264 = vpop.f32.mrb[0].mxu0
  %v4265 = vadd.f32 0.0, %v4264
  %v4266 = vpop.f32.mrb[0].mxu0
  %v4267 = vpop.f32.mrb[0].mxu0
  %v4268 = vadd.f32 0.0, %v4267
  %v4269 = vpop.f32.mrb[0].mxu0
  %4270 = vmatprep.mubr.bf16.mxu0 0
  %4271 = vmatmul.mubr.bf16.gmra.mrb[0].mxu0 %v4162
  %v4272 = vpop.f32.mrb[0].mxu0
  %v4273 = vadd.f32 0.0, %v4272
  %v4274 = vpop.f32.mrb[0].mxu0
  %v4275 = vpop.f32.mrb[0].mxu0
  %v4276 = vadd.f32 0.0, %v4275
  %v4277 = vpop.f32.mrb[0].mxu0
  %4278 = vmatprep.mubr.bf16.mxu0 0
  %4279 = vmatmul.mubr.bf16.gmra.mrb[0].mxu0 %v4165
  %v4280 = vpop.f32.mrb[0].mxu0
  %v4281 = vadd.f32 0.0, %v4280
  %v4282 = vpop.f32.mrb[0].mxu0
  %v4283 = vpop.f32.mrb[0].mxu0
  %v4284 = vadd.f32 0.0, %v4283
  %v4285 = vpop.f32.mrb[0].mxu0
  %4286 = vmatprep.mubr.bf16.mxu0 0
  %4287 = vmatmul.mubr.bf16.gmra.mrb[0].mxu0 %v4168
  %v4288 = vpop.f32.mrb[0].mxu0
  %v4289 = vadd.f32 0.0, %v4288
  %v4290 = vpop.f32.mrb[0].mxu0
  %v4291 = vpop.f32.mrb[0].mxu0
  %v4292 = vadd.f32 0.0, %v4291
  %v4293 = vpop.f32.mrb[0].mxu0
  %4294 = vmatprep.mubr.bf16.mxu0 0
  %4295 = vmatmul.mubr.bf16.gmra.mrb[0].mxu0 %v4171
  %v4296 = vpop.f32.mrb[0].mxu0
  %v4297 = vadd.f32 0.0, %v4296
  %v4298 = vpop.f32.mrb[0].mxu0
  %v4299 = vpop.f32.mrb[0].mxu0
  %v4300 = vadd.f32 0.0, %v4299
  %v4301 = vpop.f32.mrb[0].mxu0
  %4302 = vmatprep.mubr.bf16.mxu0 0
  %4303 = vmatmul.mubr.bf16.gmra.mrb[0].mxu0 %v4174
  %v4304 = vpop.f32.mrb[0].mxu0
  %v4305 = vadd.f32 0.0, %v4304
  %v4306 = vpop.f32.mrb[0].mxu0
  %v4307 = vpop.f32.mrb[0].mxu0
  %v4308 = vadd.f32 0.0, %v4307
  %v4309 = vpop.f32.mrb[0].mxu0
  %4310 = vmatprep.mubr.bf16.mxu0 0
  %4311 = vmatmul.mubr.bf16.gmra.mrb[0].mxu0 %v4177
  %v4312 = vpop.f32.mrb[0].mxu0
  %v4313 = vadd.f32 0.0, %v4312
  %v4314 = vpop.f32.mrb[0].mxu0
  %v4315 = vpop.f32.mrb[0].mxu0
  %v4316 = vadd.f32 0.0, %v4315
  %v4317 = vpop.f32.mrb[0].mxu0
  %4318 = vmatprep.mubr.bf16.mxu0 0
  %4319 = vmatmul.mubr.bf16.gmra.mrb[0].mxu0 %v4180
  %v4320 = vpop.f32.mrb[0].mxu0
  %v4321 = vadd.f32 0.0, %v4320
  %v4322 = vpop.f32.mrb[0].mxu0
  %v4323 = vpop.f32.mrb[0].mxu0
  %v4324 = vadd.f32 0.0, %v4323
  %v4325 = vpop.f32.mrb[0].mxu0
  %4326 = vdwg.mxu0
  %v4327 = vadd.f32 %v4038, %v4217
  %v4328 = vadd.f32 %v4039, %v4220
  %v4329 = vadd.f32 %v4040, %v4225
  %v4330 = vadd.f32 %v4041, %v4228
  %v4331 = vadd.f32 %v4042, %v4233
  %v4332 = vadd.f32 %v4043, %v4236
  %v4333 = vadd.f32 %v4044, %v4241
  %v4334 = vadd.f32 %v4045, %v4244
  %v4335 = vadd.f32 %v4046, %v4249
  %v4336 = vadd.f32 %v4047, %v4252
  %v4337 = vadd.f32 %v4048, %v4257
  %v4338 = vadd.f32 %v4049, %v4260
  %v4339 = vadd.f32 %v4050, %v4265
  %v4340 = vadd.f32 %v4051, %v4268
  %v4341 = vadd.f32 %v4052, %v4273
  %v4342 = vadd.f32 %v4053, %v4276
  %v4343 = vadd.f32 %v4054, %v4281
  %v4344 = vadd.f32 %v4055, %v4284
  %v4345 = vadd.f32 %v4056, %v4289
  %v4346 = vadd.f32 %v4057, %v4292
  %v4347 = vadd.f32 %v4058, %v4297
  %v4348 = vadd.f32 %v4059, %v4300
  %v4349 = vadd.f32 %v4060, %v4305
  %v4350 = vadd.f32 %v4061, %v4308
  %v4351 = vadd.f32 %v4062, %v4313
  %v4352 = vadd.f32 %v4063, %v4316
  %v4353 = vadd.f32 %v4064, %v4321
  %v4354 = vadd.f32 %v4065, %v4324
  %v4355 = vld [vmem:[%s2965 + $0x12] sm:$0xff]
  %v4356 = vld [vmem:[%s2965 + $0x1a] sm:$0xff]
  %v4357 = vld [vmem:[%s2965 + $0x22] sm:$0xff]
  %v4358 = vld [vmem:[%s2965 + $0x2a] sm:$0xff]
  %v4359 = vld [vmem:[%s2965 + $0x32] sm:$0xff]
  %v4360 = vld [vmem:[%s2965 + $0x3a] sm:$0xff]
  %v4361 = vld [vmem:[%s2965 + $0x42] sm:$0xff]
  %v4362 = vld [vmem:[%s2965 + $0x4a] sm:$0xff]
  %v4363 = vld [vmem:[%s2965 + $0x52] sm:$0xff]
  %v4364 = vld [vmem:[%s2965 + $0x5a] sm:$0xff]
  %v4365 = vld [vmem:[%s2965 + $0x62] sm:$0xff]
  %v4366 = vld [vmem:[%s2965 + $0x6a] sm:$0xff]
  %v4367 = vld [vmem:[%s2965 + $0x72] sm:$0xff]
  %v4368 = vld [vmem:[%s2965 + $0x7a] sm:$0xff]
  %v4369 = vld [vmem:[%s2965 + $0x82] sm:$0xff]
  %v4370 = vld [vmem:[%s2965 + $0x8a] sm:$0xff]
  %v4371 = vld [vmem:[%s2965 + $0x92] sm:$0xff]
  %v4372 = vld [vmem:[%s2965 + $0x9a] sm:$0xff]
  %v4373 = vld [vmem:[%s2965 + $0xa2] sm:$0xff]
  %v4374 = vld [vmem:[%s2965 + $0xaa] sm:$0xff]
  %v4375 = vld [vmem:[%s2965 + $0xb2] sm:$0xff]
  %v4376 = vld [vmem:[%s2965 + $0xba] sm:$0xff]
  %v4377 = vld [vmem:[%s2965 + $0xc2] sm:$0xff]
  %v4378 = vld [vmem:[%s2965 + $0xca] sm:$0xff]
  %v4379 = vld [vmem:[%s2965 + $0xd2] sm:$0xff]
  %v4380 = vld [vmem:[%s2965 + $0xda] sm:$0xff]
  %v4381 = vld [vmem:[%s2965 + $0xe2] sm:$0xff]
  %v4382 = vld [vmem:[%s2965 + $0xea] sm:$0xff]
  %v4383 = vpack.c.bf16 %v4356, %v4355
  %v4384 = vpack.c.bf16 %v4358, %v4357
  %v4385 = vpack.c.bf16 %v4360, %v4359
  %v4386 = vpack.c.bf16 %v4362, %v4361
  %v4387 = vpack.c.bf16 %v4364, %v4363
  %v4388 = vpack.c.bf16 %v4366, %v4365
  %v4389 = vpack.c.bf16 %v4368, %v4367
  %v4390 = vpack.c.bf16 %v4370, %v4369
  %v4391 = vpack.c.bf16 %v4372, %v4371
  %v4392 = vpack.c.bf16 %v4374, %v4373
  %v4393 = vpack.c.bf16 %v4376, %v4375
  %v4394 = vpack.c.bf16 %v4378, %v4377
  %v4395 = vpack.c.bf16 %v4380, %v4379
  %v4396 = vpack.c.bf16 %v4382, %v4381
  %v4397 = vld [vmem:[%s1489] sm:$0xf]
  %v4398 = vld [vmem:[%s1489 + $0x4] sm:$0xf]
  %v4399 = vld [vmem:[%s1489 + $0x8] sm:$0xf]
  %v4400 = vld [vmem:[%s1489 + $0xc] sm:$0xf]
  %v4401 = vld [vmem:[%s1489 + $0x10] sm:$0xf]
  %v4402 = vld [vmem:[%s1489 + $0x14] sm:$0xf]
  %v4403 = vld [vmem:[%s1489 + $0x18] sm:$0xf]
  %v4404 = vld [vmem:[%s1489 + $0x1c] sm:$0xf]
  %v4413 = vunpack.c.l.b16 %v4397
  %v4414 = vunpack.c.l.b16 %v4398
  %v4415 = vunpack.c.l.b16 %v4399
  %v4416 = vunpack.c.l.b16 %v4400
  %v4417 = vunpack.c.l.b16 %v4401
  %v4418 = vunpack.c.l.b16 %v4402
  %v4419 = vunpack.c.l.b16 %v4403
  %v4420 = vunpack.c.l.b16 %v4404
  %v4421 = vpack.c.b16 %v4414, %v4413
  %v4422 = vpack.c.b16 %v4416, %v4415
  %v4423 = vpack.c.b16 %v4418, %v4417
  %v4424 = vpack.c.b16 %v4420, %v4419
  %v4430 = vsel %vm178, %v4383, 0
  %v4433 = vsel %vm178, %v4384, 0
  %v4436 = vsel %vm178, %v4385, 0
  %v4439 = vsel %vm178, %v4386, 0
  %v4442 = vsel %vm178, %v4387, 0
  %v4445 = vsel %vm178, %v4388, 0
  %v4448 = vsel %vm178, %v4389, 0
  %v4451 = vsel %vm178, %v4390, 0
  %v4454 = vsel %vm178, %v4391, 0
  %v4457 = vsel %vm178, %v4392, 0
  %v4460 = vsel %vm178, %v4393, 0
  %v4463 = vsel %vm178, %v4394, 0
  %v4466 = vsel %vm178, %v4395, 0
  %v4469 = vsel %vm178, %v4396, 0
  %4471 = vmatprep.subr.bf16.mxu0 0
  %4472 = vmatpush1.bf16.msra.mxu0 %v4421
  %4473 = vmatprep.subr.bf16.mxu0 0
  %4474 = vmatpush1.bf16.msra.mxu0 %v4422
  %4475 = vmatprep.subr.bf16.mxu0 0
  %4476 = vmatpush1.bf16.msra.mxu0 %v4423
  %4477 = vmatprep.subr.bf16.mxu0 0
  %4478 = vmatpush1.bf16.msra.mxu0 %v4424
  %4479 = vmatprep.subr.bf16.mxu0 0
  %4480 = vmatpush1.bf16.msra.mxu0 0
  %4481 = vmatprep.subr.bf16.mxu0 0
  %4482 = vmatpush1.bf16.msra.mxu0 0
  %4483 = vmatprep.subr.bf16.mxu0 0
  %4484 = vmatpush1.bf16.msra.mxu0 0
  %4485 = vmatprep.subr.bf16.mxu0 0
  %4486 = vmatpush1.bf16.msra.mxu0 0
  %4487 = vmatprep.subr.bf16.mxu0 0
  %4488 = vmatpush1.bf16.msra.mxu0 0
  %4489 = vmatprep.subr.bf16.mxu0 0
  %4490 = vmatpush1.bf16.msra.mxu0 0
  %4491 = vmatprep.subr.bf16.mxu0 0
  %4492 = vmatpush1.bf16.msra.mxu0 0
  %4493 = vmatprep.subr.bf16.mxu0 0
  %4494 = vmatpush1.bf16.msra.mxu0 0
  %4495 = vmatprep.subr.bf16.mxu0 0
  %4496 = vmatpush1.bf16.msra.mxu0 0
  %4497 = vmatprep.subr.bf16.mxu0 0
  %4498 = vmatpush1.bf16.msra.mxu0 0
  %4499 = vmatprep.subr.bf16.mxu0 0
  %4500 = vmatpush1.bf16.msra.mxu0 0
  %4501 = vmatprep.subr.bf16.mxu0 0
  %4502 = vmatpush1.bf16.msra.mxu0 0
  %4503 = vmatprep.mubr.bf16.mxu0 0
  %4504 = vmatmul.mubr.bf16.gmra.mrb[0].mxu0 %v4430
  %v4505 = vpop.f32.mrb[0].mxu0
  %v4506 = vadd.f32 0.0, %v4505
  %v4507 = vpop.f32.mrb[0].mxu0
  %v4508 = vpop.f32.mrb[0].mxu0
  %v4509 = vadd.f32 0.0, %v4508
  %v4510 = vpop.f32.mrb[0].mxu0
  %4511 = vmatprep.mubr.bf16.mxu0 0
  %4512 = vmatmul.mubr.bf16.gmra.mrb[0].mxu0 %v4433
  %v4513 = vpop.f32.mrb[0].mxu0
  %v4514 = vadd.f32 0.0, %v4513
  %v4515 = vpop.f32.mrb[0].mxu0
  %v4516 = vpop.f32.mrb[0].mxu0
  %v4517 = vadd.f32 0.0, %v4516
  %v4518 = vpop.f32.mrb[0].mxu0
  %4519 = vmatprep.mubr.bf16.mxu0 0
  %4520 = vmatmul.mubr.bf16.gmra.mrb[0].mxu0 %v4436
  %v4521 = vpop.f32.mrb[0].mxu0
  %v4522 = vadd.f32 0.0, %v4521
  %v4523 = vpop.f32.mrb[0].mxu0
  %v4524 = vpop.f32.mrb[0].mxu0
  %v4525 = vadd.f32 0.0, %v4524
  %v4526 = vpop.f32.mrb[0].mxu0
  %4527 = vmatprep.mubr.bf16.mxu0 0
  %4528 = vmatmul.mubr.bf16.gmra.mrb[0].mxu0 %v4439
  %v4529 = vpop.f32.mrb[0].mxu0
  %v4530 = vadd.f32 0.0, %v4529
  %v4531 = vpop.f32.mrb[0].mxu0
  %v4532 = vpop.f32.mrb[0].mxu0
  %v4533 = vadd.f32 0.0, %v4532
  %v4534 = vpop.f32.mrb[0].mxu0
  %4535 = vmatprep.mubr.bf16.mxu0 0
  %4536 = vmatmul.mubr.bf16.gmra.mrb[0].mxu0 %v4442
  %v4537 = vpop.f32.mrb[0].mxu0
  %v4538 = vadd.f32 0.0, %v4537
  %v4539 = vpop.f32.mrb[0].mxu0
  %v4540 = vpop.f32.mrb[0].mxu0
  %v4541 = vadd.f32 0.0, %v4540
  %v4542 = vpop.f32.mrb[0].mxu0
  %4543 = vmatprep.mubr.bf16.mxu0 0
  %4544 = vmatmul.mubr.bf16.gmra.mrb[0].mxu0 %v4445
  %v4545 = vpop.f32.mrb[0].mxu0
  %v4546 = vadd.f32 0.0, %v4545
  %v4547 = vpop.f32.mrb[0].mxu0
  %v4548 = vpop.f32.mrb[0].mxu0
  %v4549 = vadd.f32 0.0, %v4548
  %v4550 = vpop.f32.mrb[0].mxu0
  %4551 = vmatprep.mubr.bf16.mxu0 0
  %4552 = vmatmul.mubr.bf16.gmra.mrb[0].mxu0 %v4448
  %v4553 = vpop.f32.mrb[0].mxu0
  %v4554 = vadd.f32 0.0, %v4553
  %v4555 = vpop.f32.mrb[0].mxu0
  %v4556 = vpop.f32.mrb[0].mxu0
  %v4557 = vadd.f32 0.0, %v4556
  %v4558 = vpop.f32.mrb[0].mxu0
  %4559 = vmatprep.mubr.bf16.mxu0 0
  %4560 = vmatmul.mubr.bf16.gmra.mrb[0].mxu0 %v4451
  %v4561 = vpop.f32.mrb[0].mxu0
  %v4562 = vadd.f32 0.0, %v4561
  %v4563 = vpop.f32.mrb[0].mxu0
  %v4564 = vpop.f32.mrb[0].mxu0
  %v4565 = vadd.f32 0.0, %v4564
  %v4566 = vpop.f32.mrb[0].mxu0
  %4567 = vmatprep.mubr.bf16.mxu0 0
  %4568 = vmatmul.mubr.bf16.gmra.mrb[0].mxu0 %v4454
  %v4569 = vpop.f32.mrb[0].mxu0
  %v4570 = vadd.f32 0.0, %v4569
  %v4571 = vpop.f32.mrb[0].mxu0
  %v4572 = vpop.f32.mrb[0].mxu0
  %v4573 = vadd.f32 0.0, %v4572
  %v4574 = vpop.f32.mrb[0].mxu0
  %4575 = vmatprep.mubr.bf16.mxu0 0
  %4576 = vmatmul.mubr.bf16.gmra.mrb[0].mxu0 %v4457
  %v4577 = vpop.f32.mrb[0].mxu0
  %v4578 = vadd.f32 0.0, %v4577
  %v4579 = vpop.f32.mrb[0].mxu0
  %v4580 = vpop.f32.mrb[0].mxu0
  %v4581 = vadd.f32 0.0, %v4580
  %v4582 = vpop.f32.mrb[0].mxu0
  %4583 = vmatprep.mubr.bf16.mxu0 0
  %4584 = vmatmul.mubr.bf16.gmra.mrb[0].mxu0 %v4460
  %v4585 = vpop.f32.mrb[0].mxu0
  %v4586 = vadd.f32 0.0, %v4585
  %v4587 = vpop.f32.mrb[0].mxu0
  %v4588 = vpop.f32.mrb[0].mxu0
  %v4589 = vadd.f32 0.0, %v4588
  %v4590 = vpop.f32.mrb[0].mxu0
  %4591 = vmatprep.mubr.bf16.mxu0 0
  %4592 = vmatmul.mubr.bf16.gmra.mrb[0].mxu0 %v4463
  %v4593 = vpop.f32.mrb[0].mxu0
  %v4594 = vadd.f32 0.0, %v4593
  %v4595 = vpop.f32.mrb[0].mxu0
  %v4596 = vpop.f32.mrb[0].mxu0
  %v4597 = vadd.f32 0.0, %v4596
  %v4598 = vpop.f32.mrb[0].mxu0
  %4599 = vmatprep.mubr.bf16.mxu0 0
  %4600 = vmatmul.mubr.bf16.gmra.mrb[0].mxu0 %v4466
  %v4601 = vpop.f32.mrb[0].mxu0
  %v4602 = vadd.f32 0.0, %v4601
  %v4603 = vpop.f32.mrb[0].mxu0
  %v4604 = vpop.f32.mrb[0].mxu0
  %v4605 = vadd.f32 0.0, %v4604
  %v4606 = vpop.f32.mrb[0].mxu0
  %4607 = vmatprep.mubr.bf16.mxu0 0
  %4608 = vmatmul.mubr.bf16.gmra.mrb[0].mxu0 %v4469
  %v4609 = vpop.f32.mrb[0].mxu0
  %v4610 = vadd.f32 0.0, %v4609
  %v4611 = vpop.f32.mrb[0].mxu0
  %v4612 = vpop.f32.mrb[0].mxu0
  %v4613 = vadd.f32 0.0, %v4612
  %v4614 = vpop.f32.mrb[0].mxu0
  %4615 = vdwg.mxu0
  %v4616 = vadd.f32 %v4327, %v4506
  %v4617 = vadd.f32 %v4328, %v4509
  %v4618 = vadd.f32 %v4329, %v4514
  %v4619 = vadd.f32 %v4330, %v4517
  %v4620 = vadd.f32 %v4331, %v4522
  %v4621 = vadd.f32 %v4332, %v4525
  %v4622 = vadd.f32 %v4333, %v4530
  %v4623 = vadd.f32 %v4334, %v4533
  %v4624 = vadd.f32 %v4335, %v4538
  %v4625 = vadd.f32 %v4336, %v4541
  %v4626 = vadd.f32 %v4337, %v4546
  %v4627 = vadd.f32 %v4338, %v4549
  %v4628 = vadd.f32 %v4339, %v4554
  %v4629 = vadd.f32 %v4340, %v4557
  %v4630 = vadd.f32 %v4341, %v4562
  %v4631 = vadd.f32 %v4342, %v4565
  %v4632 = vadd.f32 %v4343, %v4570
  %v4633 = vadd.f32 %v4344, %v4573
  %v4634 = vadd.f32 %v4345, %v4578
  %v4635 = vadd.f32 %v4346, %v4581
  %v4636 = vadd.f32 %v4347, %v4586
  %v4637 = vadd.f32 %v4348, %v4589
  %v4638 = vadd.f32 %v4349, %v4594
  %v4639 = vadd.f32 %v4350, %v4597
  %v4640 = vadd.f32 %v4351, %v4602
  %v4641 = vadd.f32 %v4352, %v4605
  %v4642 = vadd.f32 %v4353, %v4610
  %v4643 = vadd.f32 %v4354, %v4613
  %v4644 = vld [vmem:[%s2965 + $0x20] sm:$0xff]
  %v4645 = vld [vmem:[%s2965 + $0x28] sm:$0xff]
  %v4646 = vld [vmem:[%s2965 + $0x30] sm:$0xff]
  %v4647 = vld [vmem:[%s2965 + $0x38] sm:$0xff]
  %v4648 = vld [vmem:[%s2965 + $0x40] sm:$0xff]
  %v4649 = vld [vmem:[%s2965 + $0x48] sm:$0xff]
  %v4650 = vld [vmem:[%s2965 + $0x50] sm:$0xff]
  %v4651 = vld [vmem:[%s2965 + $0x58] sm:$0xff]
  %v4652 = vld [vmem:[%s2965 + $0x60] sm:$0xff]
  %v4653 = vld [vmem:[%s2965 + $0x68] sm:$0xff]
  %v4654 = vld [vmem:[%s2965 + $0x70] sm:$0xff]
  %v4655 = vld [vmem:[%s2965 + $0x78] sm:$0xff]
  %v4656 = vld [vmem:[%s2965 + $0x80] sm:$0xff]
  %v4657 = vld [vmem:[%s2965 + $0x88] sm:$0xff]
  %v4658 = vld [vmem:[%s2965 + $0x90] sm:$0xff]
  %v4659 = vld [vmem:[%s2965 + $0x98] sm:$0xff]
  %v4660 = vld [vmem:[%s2965 + $0xa0] sm:$0xff]
  %v4661 = vld [vmem:[%s2965 + $0xa8] sm:$0xff]
  %v4662 = vld [vmem:[%s2965 + $0xb0] sm:$0xff]
  %v4663 = vld [vmem:[%s2965 + $0xb8] sm:$0xff]
  %v4664 = vld [vmem:[%s2965 + $0xc0] sm:$0xff]
  %v4665 = vld [vmem:[%s2965 + $0xc8] sm:$0xff]
  %v4666 = vld [vmem:[%s2965 + $0xd0] sm:$0xff]
  %v4667 = vld [vmem:[%s2965 + $0xd8] sm:$0xff]
  %v4668 = vld [vmem:[%s2965 + $0xe0] sm:$0xff]
  %v4669 = vld [vmem:[%s2965 + $0xe8] sm:$0xff]
  %v4670 = vld [vmem:[%s2965 + $0xf0] sm:$0xff]
  %v4671 = vld [vmem:[%s2965 + $0xf8] sm:$0xff]
  %v4672 = vpack.c.bf16 %v4645, %v4644
  %v4673 = vpack.c.bf16 %v4647, %v4646
  %v4674 = vpack.c.bf16 %v4649, %v4648
  %v4675 = vpack.c.bf16 %v4651, %v4650
  %v4676 = vpack.c.bf16 %v4653, %v4652
  %v4677 = vpack.c.bf16 %v4655, %v4654
  %v4678 = vpack.c.bf16 %v4657, %v4656
  %v4679 = vpack.c.bf16 %v4659, %v4658
  %v4680 = vpack.c.bf16 %v4661, %v4660
  %v4681 = vpack.c.bf16 %v4663, %v4662
  %v4682 = vpack.c.bf16 %v4665, %v4664
  %v4683 = vpack.c.bf16 %v4667, %v4666
  %v4684 = vpack.c.bf16 %v4669, %v4668
  %v4685 = vpack.c.bf16 %v4671, %v4670
  %v4686 = vld [vmem:[%s1779] sm:$0xf]
  %v4687 = vld [vmem:[%s1779 + $0x4] sm:$0xf]
  %v4688 = vld [vmem:[%s1779 + $0x8] sm:$0xf]
  %v4689 = vld [vmem:[%s1779 + $0xc] sm:$0xf]
  %v4690 = vld [vmem:[%s1779 + $0x10] sm:$0xf]
  %v4691 = vld [vmem:[%s1779 + $0x14] sm:$0xf]
  %v4692 = vld [vmem:[%s1779 + $0x18] sm:$0xf]
  %v4693 = vld [vmem:[%s1779 + $0x1c] sm:$0xf]
  %v4702 = vunpack.c.l.b16 %v4686
  %v4703 = vunpack.c.l.b16 %v4687
  %v4704 = vunpack.c.l.b16 %v4688
  %v4705 = vunpack.c.l.b16 %v4689
  %v4706 = vunpack.c.l.b16 %v4690
  %v4707 = vunpack.c.l.b16 %v4691
  %v4708 = vunpack.c.l.b16 %v4692
  %v4709 = vunpack.c.l.b16 %v4693
  %v4710 = vpack.c.b16 %v4703, %v4702
  %v4711 = vpack.c.b16 %v4705, %v4704
  %v4712 = vpack.c.b16 %v4707, %v4706
  %v4713 = vpack.c.b16 %v4709, %v4708
  %v4719 = vsel %vm178, %v4672, 0
  %v4722 = vsel %vm178, %v4673, 0
  %v4725 = vsel %vm178, %v4674, 0
  %v4728 = vsel %vm178, %v4675, 0
  %v4731 = vsel %vm178, %v4676, 0
  %v4734 = vsel %vm178, %v4677, 0
  %v4737 = vsel %vm178, %v4678, 0
  %v4740 = vsel %vm178, %v4679, 0
  %v4743 = vsel %vm178, %v4680, 0
  %v4746 = vsel %vm178, %v4681, 0
  %v4749 = vsel %vm178, %v4682, 0
  %v4752 = vsel %vm178, %v4683, 0
  %v4755 = vsel %vm178, %v4684, 0
  %v4758 = vsel %vm178, %v4685, 0
  %4760 = vmatprep.subr.bf16.mxu0 0
  %4761 = vmatpush1.bf16.msra.mxu0 %v4710
  %4762 = vmatprep.subr.bf16.mxu0 0
  %4763 = vmatpush1.bf16.msra.mxu0 %v4711
  %4764 = vmatprep.subr.bf16.mxu0 0
  %4765 = vmatpush1.bf16.msra.mxu0 %v4712
  %4766 = vmatprep.subr.bf16.mxu0 0
  %4767 = vmatpush1.bf16.msra.mxu0 %v4713
  %4768 = vmatprep.subr.bf16.mxu0 0
  %4769 = vmatpush1.bf16.msra.mxu0 0
  %4770 = vmatprep.subr.bf16.mxu0 0
  %4771 = vmatpush1.bf16.msra.mxu0 0
  %4772 = vmatprep.subr.bf16.mxu0 0
  %4773 = vmatpush1.bf16.msra.mxu0 0
  %4774 = vmatprep.subr.bf16.mxu0 0
  %4775 = vmatpush1.bf16.msra.mxu0 0
  %4776 = vmatprep.subr.bf16.mxu0 0
  %4777 = vmatpush1.bf16.msra.mxu0 0
  %4778 = vmatprep.subr.bf16.mxu0 0
  %4779 = vmatpush1.bf16.msra.mxu0 0
  %4780 = vmatprep.subr.bf16.mxu0 0
  %4781 = vmatpush1.bf16.msra.mxu0 0
  %4782 = vmatprep.subr.bf16.mxu0 0
  %4783 = vmatpush1.bf16.msra.mxu0 0
  %4784 = vmatprep.subr.bf16.mxu0 0
  %4785 = vmatpush1.bf16.msra.mxu0 0
  %4786 = vmatprep.subr.bf16.mxu0 0
  %4787 = vmatpush1.bf16.msra.mxu0 0
  %4788 = vmatprep.subr.bf16.mxu0 0
  %4789 = vmatpush1.bf16.msra.mxu0 0
  %4790 = vmatprep.subr.bf16.mxu0 0
  %4791 = vmatpush1.bf16.msra.mxu0 0
  %4792 = vmatprep.mubr.bf16.mxu0 0
  %4793 = vmatmul.mubr.bf16.gmra.mrb[0].mxu0 %v4719
  %v4794 = vpop.f32.mrb[0].mxu0
  %v4795 = vadd.f32 0.0, %v4794
  %v4796 = vpop.f32.mrb[0].mxu0
  %v4797 = vpop.f32.mrb[0].mxu0
  %v4798 = vadd.f32 0.0, %v4797
  %v4799 = vpop.f32.mrb[0].mxu0
  %4800 = vmatprep.mubr.bf16.mxu0 0
  %4801 = vmatmul.mubr.bf16.gmra.mrb[0].mxu0 %v4722
  %v4802 = vpop.f32.mrb[0].mxu0
  %v4803 = vadd.f32 0.0, %v4802
  %v4804 = vpop.f32.mrb[0].mxu0
  %v4805 = vpop.f32.mrb[0].mxu0
  %v4806 = vadd.f32 0.0, %v4805
  %v4807 = vpop.f32.mrb[0].mxu0
  %4808 = vmatprep.mubr.bf16.mxu0 0
  %4809 = vmatmul.mubr.bf16.gmra.mrb[0].mxu0 %v4725
  %v4810 = vpop.f32.mrb[0].mxu0
  %v4811 = vadd.f32 0.0, %v4810
  %v4812 = vpop.f32.mrb[0].mxu0
  %v4813 = vpop.f32.mrb[0].mxu0
  %v4814 = vadd.f32 0.0, %v4813
  %v4815 = vpop.f32.mrb[0].mxu0
  %4816 = vmatprep.mubr.bf16.mxu0 0
  %4817 = vmatmul.mubr.bf16.gmra.mrb[0].mxu0 %v4728
  %v4818 = vpop.f32.mrb[0].mxu0
  %v4819 = vadd.f32 0.0, %v4818
  %v4820 = vpop.f32.mrb[0].mxu0
  %v4821 = vpop.f32.mrb[0].mxu0
  %v4822 = vadd.f32 0.0, %v4821
  %v4823 = vpop.f32.mrb[0].mxu0
  %4824 = vmatprep.mubr.bf16.mxu0 0
  %4825 = vmatmul.mubr.bf16.gmra.mrb[0].mxu0 %v4731
  %v4826 = vpop.f32.mrb[0].mxu0
  %v4827 = vadd.f32 0.0, %v4826
  %v4828 = vpop.f32.mrb[0].mxu0
  %v4829 = vpop.f32.mrb[0].mxu0
  %v4830 = vadd.f32 0.0, %v4829
  %v4831 = vpop.f32.mrb[0].mxu0
  %4832 = vmatprep.mubr.bf16.mxu0 0
  %4833 = vmatmul.mubr.bf16.gmra.mrb[0].mxu0 %v4734
  %v4834 = vpop.f32.mrb[0].mxu0
  %v4835 = vadd.f32 0.0, %v4834
  %v4836 = vpop.f32.mrb[0].mxu0
  %v4837 = vpop.f32.mrb[0].mxu0
  %v4838 = vadd.f32 0.0, %v4837
  %v4839 = vpop.f32.mrb[0].mxu0
  %4840 = vmatprep.mubr.bf16.mxu0 0
  %4841 = vmatmul.mubr.bf16.gmra.mrb[0].mxu0 %v4737
  %v4842 = vpop.f32.mrb[0].mxu0
  %v4843 = vadd.f32 0.0, %v4842
  %v4844 = vpop.f32.mrb[0].mxu0
  %v4845 = vpop.f32.mrb[0].mxu0
  %v4846 = vadd.f32 0.0, %v4845
  %v4847 = vpop.f32.mrb[0].mxu0
  %4848 = vmatprep.mubr.bf16.mxu0 0
  %4849 = vmatmul.mubr.bf16.gmra.mrb[0].mxu0 %v4740
  %v4850 = vpop.f32.mrb[0].mxu0
  %v4851 = vadd.f32 0.0, %v4850
  %v4852 = vpop.f32.mrb[0].mxu0
  %v4853 = vpop.f32.mrb[0].mxu0
  %v4854 = vadd.f32 0.0, %v4853
  %v4855 = vpop.f32.mrb[0].mxu0
  %4856 = vmatprep.mubr.bf16.mxu0 0
  %4857 = vmatmul.mubr.bf16.gmra.mrb[0].mxu0 %v4743
  %v4858 = vpop.f32.mrb[0].mxu0
  %v4859 = vadd.f32 0.0, %v4858
  %v4860 = vpop.f32.mrb[0].mxu0
  %v4861 = vpop.f32.mrb[0].mxu0
  %v4862 = vadd.f32 0.0, %v4861
  %v4863 = vpop.f32.mrb[0].mxu0
  %4864 = vmatprep.mubr.bf16.mxu0 0
  %4865 = vmatmul.mubr.bf16.gmra.mrb[0].mxu0 %v4746
  %v4866 = vpop.f32.mrb[0].mxu0
  %v4867 = vadd.f32 0.0, %v4866
  %v4868 = vpop.f32.mrb[0].mxu0
  %v4869 = vpop.f32.mrb[0].mxu0
  %v4870 = vadd.f32 0.0, %v4869
  %v4871 = vpop.f32.mrb[0].mxu0
  %4872 = vmatprep.mubr.bf16.mxu0 0
  %4873 = vmatmul.mubr.bf16.gmra.mrb[0].mxu0 %v4749
  %v4874 = vpop.f32.mrb[0].mxu0
  %v4875 = vadd.f32 0.0, %v4874
  %v4876 = vpop.f32.mrb[0].mxu0
  %v4877 = vpop.f32.mrb[0].mxu0
  %v4878 = vadd.f32 0.0, %v4877
  %v4879 = vpop.f32.mrb[0].mxu0
  %4880 = vmatprep.mubr.bf16.mxu0 0
  %4881 = vmatmul.mubr.bf16.gmra.mrb[0].mxu0 %v4752
  %v4882 = vpop.f32.mrb[0].mxu0
  %v4883 = vadd.f32 0.0, %v4882
  %v4884 = vpop.f32.mrb[0].mxu0
  %v4885 = vpop.f32.mrb[0].mxu0
  %v4886 = vadd.f32 0.0, %v4885
  %v4887 = vpop.f32.mrb[0].mxu0
  %4888 = vmatprep.mubr.bf16.mxu0 0
  %4889 = vmatmul.mubr.bf16.gmra.mrb[0].mxu0 %v4755
  %v4890 = vpop.f32.mrb[0].mxu0
  %v4891 = vadd.f32 0.0, %v4890
  %v4892 = vpop.f32.mrb[0].mxu0
  %v4893 = vpop.f32.mrb[0].mxu0
  %v4894 = vadd.f32 0.0, %v4893
  %v4895 = vpop.f32.mrb[0].mxu0
  %4896 = vmatprep.mubr.bf16.mxu0 0
  %4897 = vmatmul.mubr.bf16.gmra.mrb[0].mxu0 %v4758
  %v4898 = vpop.f32.mrb[0].mxu0
  %v4899 = vadd.f32 0.0, %v4898
  %v4900 = vpop.f32.mrb[0].mxu0
  %v4901 = vpop.f32.mrb[0].mxu0
  %v4902 = vadd.f32 0.0, %v4901
  %v4903 = vpop.f32.mrb[0].mxu0
  %4904 = vdwg.mxu0
  %v4905 = vadd.f32 %v4616, %v4795
  %v4906 = vadd.f32 %v4617, %v4798
  %v4907 = vadd.f32 %v4618, %v4803
  %v4908 = vadd.f32 %v4619, %v4806
  %v4909 = vadd.f32 %v4620, %v4811
  %v4910 = vadd.f32 %v4621, %v4814
  %v4911 = vadd.f32 %v4622, %v4819
  %v4912 = vadd.f32 %v4623, %v4822
  %v4913 = vadd.f32 %v4624, %v4827
  %v4914 = vadd.f32 %v4625, %v4830
  %v4915 = vadd.f32 %v4626, %v4835
  %v4916 = vadd.f32 %v4627, %v4838
  %v4917 = vadd.f32 %v4628, %v4843
  %v4918 = vadd.f32 %v4629, %v4846
  %v4919 = vadd.f32 %v4630, %v4851
  %v4920 = vadd.f32 %v4631, %v4854
  %v4921 = vadd.f32 %v4632, %v4859
  %v4922 = vadd.f32 %v4633, %v4862
  %v4923 = vadd.f32 %v4634, %v4867
  %v4924 = vadd.f32 %v4635, %v4870
  %v4925 = vadd.f32 %v4636, %v4875
  %v4926 = vadd.f32 %v4637, %v4878
  %v4927 = vadd.f32 %v4638, %v4883
  %v4928 = vadd.f32 %v4639, %v4886
  %v4929 = vadd.f32 %v4640, %v4891
  %v4930 = vadd.f32 %v4641, %v4894
  %v4931 = vadd.f32 %v4642, %v4899
  %v4932 = vadd.f32 %v4643, %v4902
  %v4933 = vld [vmem:[%s2965 + $0x21] sm:$0xff]
  %v4934 = vld [vmem:[%s2965 + $0x29] sm:$0xff]
  %v4935 = vld [vmem:[%s2965 + $0x31] sm:$0xff]
  %v4936 = vld [vmem:[%s2965 + $0x39] sm:$0xff]
  %v4937 = vld [vmem:[%s2965 + $0x41] sm:$0xff]
  %v4938 = vld [vmem:[%s2965 + $0x49] sm:$0xff]
  %v4939 = vld [vmem:[%s2965 + $0x51] sm:$0xff]
  %v4940 = vld [vmem:[%s2965 + $0x59] sm:$0xff]
  %v4941 = vld [vmem:[%s2965 + $0x61] sm:$0xff]
  %v4942 = vld [vmem:[%s2965 + $0x69] sm:$0xff]
  %v4943 = vld [vmem:[%s2965 + $0x71] sm:$0xff]
  %v4944 = vld [vmem:[%s2965 + $0x79] sm:$0xff]
  %v4945 = vld [vmem:[%s2965 + $0x81] sm:$0xff]
  %v4946 = vld [vmem:[%s2965 + $0x89] sm:$0xff]
  %v4947 = vld [vmem:[%s2965 + $0x91] sm:$0xff]
  %v4948 = vld [vmem:[%s2965 + $0x99] sm:$0xff]
  %v4949 = vld [vmem:[%s2965 + $0xa1] sm:$0xff]
  %v4950 = vld [vmem:[%s2965 + $0xa9] sm:$0xff]
  %v4951 = vld [vmem:[%s2965 + $0xb1] sm:$0xff]
  %v4952 = vld [vmem:[%s2965 + $0xb9] sm:$0xff]
  %v4953 = vld [vmem:[%s2965 + $0xc1] sm:$0xff]
  %v4954 = vld [vmem:[%s2965 + $0xc9] sm:$0xff]
  %v4955 = vld [vmem:[%s2965 + $0xd1] sm:$0xff]
  %v4956 = vld [vmem:[%s2965 + $0xd9] sm:$0xff]
  %v4957 = vld [vmem:[%s2965 + $0xe1] sm:$0xff]
  %v4958 = vld [vmem:[%s2965 + $0xe9] sm:$0xff]
  %v4959 = vld [vmem:[%s2965 + $0xf1] sm:$0xff]
  %v4960 = vld [vmem:[%s2965 + $0xf9] sm:$0xff]
  %v4961 = vpack.c.bf16 %v4934, %v4933
  %v4962 = vpack.c.bf16 %v4936, %v4935
  %v4963 = vpack.c.bf16 %v4938, %v4937
  %v4964 = vpack.c.bf16 %v4940, %v4939
  %v4965 = vpack.c.bf16 %v4942, %v4941
  %v4966 = vpack.c.bf16 %v4944, %v4943
  %v4967 = vpack.c.bf16 %v4946, %v4945
  %v4968 = vpack.c.bf16 %v4948, %v4947
  %v4969 = vpack.c.bf16 %v4950, %v4949
  %v4970 = vpack.c.bf16 %v4952, %v4951
  %v4971 = vpack.c.bf16 %v4954, %v4953
  %v4972 = vpack.c.bf16 %v4956, %v4955
  %v4973 = vpack.c.bf16 %v4958, %v4957
  %v4974 = vpack.c.bf16 %v4960, %v4959
  %v4975 = vld [vmem:[%s2069] sm:$0xf]
  %v4976 = vld [vmem:[%s2069 + $0x4] sm:$0xf]
  %v4977 = vld [vmem:[%s2069 + $0x8] sm:$0xf]
  %v4978 = vld [vmem:[%s2069 + $0xc] sm:$0xf]
  %v4979 = vld [vmem:[%s2069 + $0x10] sm:$0xf]
  %v4980 = vld [vmem:[%s2069 + $0x14] sm:$0xf]
  %v4981 = vld [vmem:[%s2069 + $0x18] sm:$0xf]
  %v4982 = vld [vmem:[%s2069 + $0x1c] sm:$0xf]
  %v4991 = vunpack.c.l.b16 %v4975
  %v4992 = vunpack.c.l.b16 %v4976
  %v4993 = vunpack.c.l.b16 %v4977
  %v4994 = vunpack.c.l.b16 %v4978
  %v4995 = vunpack.c.l.b16 %v4979
  %v4996 = vunpack.c.l.b16 %v4980
  %v4997 = vunpack.c.l.b16 %v4981
  %v4998 = vunpack.c.l.b16 %v4982
  %v4999 = vpack.c.b16 %v4992, %v4991
  %v5000 = vpack.c.b16 %v4994, %v4993
  %v5001 = vpack.c.b16 %v4996, %v4995
  %v5002 = vpack.c.b16 %v4998, %v4997
  %v5008 = vsel %vm178, %v4961, 0
  %v5011 = vsel %vm178, %v4962, 0
  %v5014 = vsel %vm178, %v4963, 0
  %v5017 = vsel %vm178, %v4964, 0
  %v5020 = vsel %vm178, %v4965, 0
  %v5023 = vsel %vm178, %v4966, 0
  %v5026 = vsel %vm178, %v4967, 0
  %v5029 = vsel %vm178, %v4968, 0
  %v5032 = vsel %vm178, %v4969, 0
  %v5035 = vsel %vm178, %v4970, 0
  %v5038 = vsel %vm178, %v4971, 0
  %v5041 = vsel %vm178, %v4972, 0
  %v5044 = vsel %vm178, %v4973, 0
  %v5047 = vsel %vm178, %v4974, 0
  %5049 = vmatprep.subr.bf16.mxu0 0
  %5050 = vmatpush1.bf16.msra.mxu0 %v4999
  %5051 = vmatprep.subr.bf16.mxu0 0
  %5052 = vmatpush1.bf16.msra.mxu0 %v5000
  %5053 = vmatprep.subr.bf16.mxu0 0
  %5054 = vmatpush1.bf16.msra.mxu0 %v5001
  %5055 = vmatprep.subr.bf16.mxu0 0
  %5056 = vmatpush1.bf16.msra.mxu0 %v5002
  %5057 = vmatprep.subr.bf16.mxu0 0
  %5058 = vmatpush1.bf16.msra.mxu0 0
  %5059 = vmatprep.subr.bf16.mxu0 0
  %5060 = vmatpush1.bf16.msra.mxu0 0
  %5061 = vmatprep.subr.bf16.mxu0 0
  %5062 = vmatpush1.bf16.msra.mxu0 0
  %5063 = vmatprep.subr.bf16.mxu0 0
  %5064 = vmatpush1.bf16.msra.mxu0 0
  %5065 = vmatprep.subr.bf16.mxu0 0
  %5066 = vmatpush1.bf16.msra.mxu0 0
  %5067 = vmatprep.subr.bf16.mxu0 0
  %5068 = vmatpush1.bf16.msra.mxu0 0
  %5069 = vmatprep.subr.bf16.mxu0 0
  %5070 = vmatpush1.bf16.msra.mxu0 0
  %5071 = vmatprep.subr.bf16.mxu0 0
  %5072 = vmatpush1.bf16.msra.mxu0 0
  %5073 = vmatprep.subr.bf16.mxu0 0
  %5074 = vmatpush1.bf16.msra.mxu0 0
  %5075 = vmatprep.subr.bf16.mxu0 0
  %5076 = vmatpush1.bf16.msra.mxu0 0
  %5077 = vmatprep.subr.bf16.mxu0 0
  %5078 = vmatpush1.bf16.msra.mxu0 0
  %5079 = vmatprep.subr.bf16.mxu0 0
  %5080 = vmatpush1.bf16.msra.mxu0 0
  %5081 = vmatprep.mubr.bf16.mxu0 0
  %5082 = vmatmul.mubr.bf16.gmra.mrb[0].mxu0 %v5008
  %v5083 = vpop.f32.mrb[0].mxu0
  %v5084 = vadd.f32 0.0, %v5083
  %v5085 = vpop.f32.mrb[0].mxu0
  %v5086 = vpop.f32.mrb[0].mxu0
  %v5087 = vadd.f32 0.0, %v5086
  %v5088 = vpop.f32.mrb[0].mxu0
  %5089 = vmatprep.mubr.bf16.mxu0 0
  %5090 = vmatmul.mubr.bf16.gmra.mrb[0].mxu0 %v5011
  %v5091 = vpop.f32.mrb[0].mxu0
  %v5092 = vadd.f32 0.0, %v5091
  %v5093 = vpop.f32.mrb[0].mxu0
  %v5094 = vpop.f32.mrb[0].mxu0
  %v5095 = vadd.f32 0.0, %v5094
  %v5096 = vpop.f32.mrb[0].mxu0
  %5097 = vmatprep.mubr.bf16.mxu0 0
  %5098 = vmatmul.mubr.bf16.gmra.mrb[0].mxu0 %v5014
  %v5099 = vpop.f32.mrb[0].mxu0
  %v5100 = vadd.f32 0.0, %v5099
  %v5101 = vpop.f32.mrb[0].mxu0
  %v5102 = vpop.f32.mrb[0].mxu0
  %v5103 = vadd.f32 0.0, %v5102
  %v5104 = vpop.f32.mrb[0].mxu0
  %5105 = vmatprep.mubr.bf16.mxu0 0
  %5106 = vmatmul.mubr.bf16.gmra.mrb[0].mxu0 %v5017
  %v5107 = vpop.f32.mrb[0].mxu0
  %v5108 = vadd.f32 0.0, %v5107
  %v5109 = vpop.f32.mrb[0].mxu0
  %v5110 = vpop.f32.mrb[0].mxu0
  %v5111 = vadd.f32 0.0, %v5110
  %v5112 = vpop.f32.mrb[0].mxu0
  %5113 = vmatprep.mubr.bf16.mxu0 0
  %5114 = vmatmul.mubr.bf16.gmra.mrb[0].mxu0 %v5020
  %v5115 = vpop.f32.mrb[0].mxu0
  %v5116 = vadd.f32 0.0, %v5115
  %v5117 = vpop.f32.mrb[0].mxu0
  %v5118 = vpop.f32.mrb[0].mxu0
  %v5119 = vadd.f32 0.0, %v5118
  %v5120 = vpop.f32.mrb[0].mxu0
  %5121 = vmatprep.mubr.bf16.mxu0 0
  %5122 = vmatmul.mubr.bf16.gmra.mrb[0].mxu0 %v5023
  %v5123 = vpop.f32.mrb[0].mxu0
  %v5124 = vadd.f32 0.0, %v5123
  %v5125 = vpop.f32.mrb[0].mxu0
  %v5126 = vpop.f32.mrb[0].mxu0
  %v5127 = vadd.f32 0.0, %v5126
  %v5128 = vpop.f32.mrb[0].mxu0
  %5129 = vmatprep.mubr.bf16.mxu0 0
  %5130 = vmatmul.mubr.bf16.gmra.mrb[0].mxu0 %v5026
  %v5131 = vpop.f32.mrb[0].mxu0
  %v5132 = vadd.f32 0.0, %v5131
  %v5133 = vpop.f32.mrb[0].mxu0
  %v5134 = vpop.f32.mrb[0].mxu0
  %v5135 = vadd.f32 0.0, %v5134
  %v5136 = vpop.f32.mrb[0].mxu0
  %5137 = vmatprep.mubr.bf16.mxu0 0
  %5138 = vmatmul.mubr.bf16.gmra.mrb[0].mxu0 %v5029
  %v5139 = vpop.f32.mrb[0].mxu0
  %v5140 = vadd.f32 0.0, %v5139
  %v5141 = vpop.f32.mrb[0].mxu0
  %v5142 = vpop.f32.mrb[0].mxu0
  %v5143 = vadd.f32 0.0, %v5142
  %v5144 = vpop.f32.mrb[0].mxu0
  %5145 = vmatprep.mubr.bf16.mxu0 0
  %5146 = vmatmul.mubr.bf16.gmra.mrb[0].mxu0 %v5032
  %v5147 = vpop.f32.mrb[0].mxu0
  %v5148 = vadd.f32 0.0, %v5147
  %v5149 = vpop.f32.mrb[0].mxu0
  %v5150 = vpop.f32.mrb[0].mxu0
  %v5151 = vadd.f32 0.0, %v5150
  %v5152 = vpop.f32.mrb[0].mxu0
  %5153 = vmatprep.mubr.bf16.mxu0 0
  %5154 = vmatmul.mubr.bf16.gmra.mrb[0].mxu0 %v5035
  %v5155 = vpop.f32.mrb[0].mxu0
  %v5156 = vadd.f32 0.0, %v5155
  %v5157 = vpop.f32.mrb[0].mxu0
  %v5158 = vpop.f32.mrb[0].mxu0
  %v5159 = vadd.f32 0.0, %v5158
  %v5160 = vpop.f32.mrb[0].mxu0
  %5161 = vmatprep.mubr.bf16.mxu0 0
  %5162 = vmatmul.mubr.bf16.gmra.mrb[0].mxu0 %v5038
  %v5163 = vpop.f32.mrb[0].mxu0
  %v5164 = vadd.f32 0.0, %v5163
  %v5165 = vpop.f32.mrb[0].mxu0
  %v5166 = vpop.f32.mrb[0].mxu0
  %v5167 = vadd.f32 0.0, %v5166
  %v5168 = vpop.f32.mrb[0].mxu0
  %5169 = vmatprep.mubr.bf16.mxu0 0
  %5170 = vmatmul.mubr.bf16.gmra.mrb[0].mxu0 %v5041
  %v5171 = vpop.f32.mrb[0].mxu0
  %v5172 = vadd.f32 0.0, %v5171
  %v5173 = vpop.f32.mrb[0].mxu0
  %v5174 = vpop.f32.mrb[0].mxu0
  %v5175 = vadd.f32 0.0, %v5174
  %v5176 = vpop.f32.mrb[0].mxu0
  %5177 = vmatprep.mubr.bf16.mxu0 0
  %5178 = vmatmul.mubr.bf16.gmra.mrb[0].mxu0 %v5044
  %v5179 = vpop.f32.mrb[0].mxu0
  %v5180 = vadd.f32 0.0, %v5179
  %v5181 = vpop.f32.mrb[0].mxu0
  %v5182 = vpop.f32.mrb[0].mxu0
  %v5183 = vadd.f32 0.0, %v5182
  %v5184 = vpop.f32.mrb[0].mxu0
  %5185 = vmatprep.mubr.bf16.mxu0 0
  %5186 = vmatmul.mubr.bf16.gmra.mrb[0].mxu0 %v5047
  %v5187 = vpop.f32.mrb[0].mxu0
  %v5188 = vadd.f32 0.0, %v5187
  %v5189 = vpop.f32.mrb[0].mxu0
  %v5190 = vpop.f32.mrb[0].mxu0
  %v5191 = vadd.f32 0.0, %v5190
  %v5192 = vpop.f32.mrb[0].mxu0
  %5193 = vdwg.mxu0
  %v5194 = vadd.f32 %v4905, %v5084
  %v5195 = vadd.f32 %v4906, %v5087
  %v5196 = vadd.f32 %v4907, %v5092
  %v5197 = vadd.f32 %v4908, %v5095
  %v5198 = vadd.f32 %v4909, %v5100
  %v5199 = vadd.f32 %v4910, %v5103
  %v5200 = vadd.f32 %v4911, %v5108
  %v5201 = vadd.f32 %v4912, %v5111
  %v5202 = vadd.f32 %v4913, %v5116
  %v5203 = vadd.f32 %v4914, %v5119
  %v5204 = vadd.f32 %v4915, %v5124
  %v5205 = vadd.f32 %v4916, %v5127
  %v5206 = vadd.f32 %v4917, %v5132
  %v5207 = vadd.f32 %v4918, %v5135
  %v5208 = vadd.f32 %v4919, %v5140
  %v5209 = vadd.f32 %v4920, %v5143
  %v5210 = vadd.f32 %v4921, %v5148
  %v5211 = vadd.f32 %v4922, %v5151
  %v5212 = vadd.f32 %v4923, %v5156
  %v5213 = vadd.f32 %v4924, %v5159
  %v5214 = vadd.f32 %v4925, %v5164
  %v5215 = vadd.f32 %v4926, %v5167
  %v5216 = vadd.f32 %v4927, %v5172
  %v5217 = vadd.f32 %v4928, %v5175
  %v5218 = vadd.f32 %v4929, %v5180
  %v5219 = vadd.f32 %v4930, %v5183
  %v5220 = vadd.f32 %v4931, %v5188
  %v5221 = vadd.f32 %v4932, %v5191
  %v5222 = vld [vmem:[%s2965 + $0x22] sm:$0xff]
  %v5223 = vld [vmem:[%s2965 + $0x2a] sm:$0xff]
  %v5224 = vld [vmem:[%s2965 + $0x32] sm:$0xff]
  %v5225 = vld [vmem:[%s2965 + $0x3a] sm:$0xff]
  %v5226 = vld [vmem:[%s2965 + $0x42] sm:$0xff]
  %v5227 = vld [vmem:[%s2965 + $0x4a] sm:$0xff]
  %v5228 = vld [vmem:[%s2965 + $0x52] sm:$0xff]
  %v5229 = vld [vmem:[%s2965 + $0x5a] sm:$0xff]
  %v5230 = vld [vmem:[%s2965 + $0x62] sm:$0xff]
  %v5231 = vld [vmem:[%s2965 + $0x6a] sm:$0xff]
  %v5232 = vld [vmem:[%s2965 + $0x72] sm:$0xff]
  %v5233 = vld [vmem:[%s2965 + $0x7a] sm:$0xff]
  %v5234 = vld [vmem:[%s2965 + $0x82] sm:$0xff]
  %v5235 = vld [vmem:[%s2965 + $0x8a] sm:$0xff]
  %v5236 = vld [vmem:[%s2965 + $0x92] sm:$0xff]
  %v5237 = vld [vmem:[%s2965 + $0x9a] sm:$0xff]
  %v5238 = vld [vmem:[%s2965 + $0xa2] sm:$0xff]
  %v5239 = vld [vmem:[%s2965 + $0xaa] sm:$0xff]
  %v5240 = vld [vmem:[%s2965 + $0xb2] sm:$0xff]
  %v5241 = vld [vmem:[%s2965 + $0xba] sm:$0xff]
  %v5242 = vld [vmem:[%s2965 + $0xc2] sm:$0xff]
  %v5243 = vld [vmem:[%s2965 + $0xca] sm:$0xff]
  %v5244 = vld [vmem:[%s2965 + $0xd2] sm:$0xff]
  %v5245 = vld [vmem:[%s2965 + $0xda] sm:$0xff]
  %v5246 = vld [vmem:[%s2965 + $0xe2] sm:$0xff]
  %v5247 = vld [vmem:[%s2965 + $0xea] sm:$0xff]
  %v5248 = vld [vmem:[%s2965 + $0xf2] sm:$0xff]
  %v5249 = vld [vmem:[%s2965 + $0xfa] sm:$0xff]
  %v5250 = vpack.c.bf16 %v5223, %v5222
  %v5251 = vpack.c.bf16 %v5225, %v5224
  %v5252 = vpack.c.bf16 %v5227, %v5226
  %v5253 = vpack.c.bf16 %v5229, %v5228
  %v5254 = vpack.c.bf16 %v5231, %v5230
  %v5255 = vpack.c.bf16 %v5233, %v5232
  %v5256 = vpack.c.bf16 %v5235, %v5234
  %v5257 = vpack.c.bf16 %v5237, %v5236
  %v5258 = vpack.c.bf16 %v5239, %v5238
  %v5259 = vpack.c.bf16 %v5241, %v5240
  %v5260 = vpack.c.bf16 %v5243, %v5242
  %v5261 = vpack.c.bf16 %v5245, %v5244
  %v5262 = vpack.c.bf16 %v5247, %v5246
  %v5263 = vpack.c.bf16 %v5249, %v5248
  %v5264 = vld [vmem:[%s2359] sm:$0xf]
  %v5265 = vld [vmem:[%s2359 + $0x4] sm:$0xf]
  %v5266 = vld [vmem:[%s2359 + $0x8] sm:$0xf]
  %v5267 = vld [vmem:[%s2359 + $0xc] sm:$0xf]
  %v5268 = vld [vmem:[%s2359 + $0x10] sm:$0xf]
  %v5269 = vld [vmem:[%s2359 + $0x14] sm:$0xf]
  %v5270 = vld [vmem:[%s2359 + $0x18] sm:$0xf]
  %v5271 = vld [vmem:[%s2359 + $0x1c] sm:$0xf]
  %v5280 = vunpack.c.l.b16 %v5264
  %v5281 = vunpack.c.l.b16 %v5265
  %v5282 = vunpack.c.l.b16 %v5266
  %v5283 = vunpack.c.l.b16 %v5267
  %v5284 = vunpack.c.l.b16 %v5268
  %v5285 = vunpack.c.l.b16 %v5269
  %v5286 = vunpack.c.l.b16 %v5270
  %v5287 = vunpack.c.l.b16 %v5271
  %v5288 = vpack.c.b16 %v5281, %v5280
  %v5289 = vpack.c.b16 %v5283, %v5282
  %v5290 = vpack.c.b16 %v5285, %v5284
  %v5291 = vpack.c.b16 %v5287, %v5286
  %v5297 = vsel %vm178, %v5250, 0
  %v5300 = vsel %vm178, %v5251, 0
  %v5303 = vsel %vm178, %v5252, 0
  %v5306 = vsel %vm178, %v5253, 0
  %v5309 = vsel %vm178, %v5254, 0
  %v5312 = vsel %vm178, %v5255, 0
  %v5315 = vsel %vm178, %v5256, 0
  %v5318 = vsel %vm178, %v5257, 0
  %v5321 = vsel %vm178, %v5258, 0
  %v5324 = vsel %vm178, %v5259, 0
  %v5327 = vsel %vm178, %v5260, 0
  %v5330 = vsel %vm178, %v5261, 0
  %v5333 = vsel %vm178, %v5262, 0
  %v5336 = vsel %vm178, %v5263, 0
  %5338 = vmatprep.subr.bf16.mxu0 0
  %5339 = vmatpush1.bf16.msra.mxu0 %v5288
  %5340 = vmatprep.subr.bf16.mxu0 0
  %5341 = vmatpush1.bf16.msra.mxu0 %v5289
  %5342 = vmatprep.subr.bf16.mxu0 0
  %5343 = vmatpush1.bf16.msra.mxu0 %v5290
  %5344 = vmatprep.subr.bf16.mxu0 0
  %5345 = vmatpush1.bf16.msra.mxu0 %v5291
  %5346 = vmatprep.subr.bf16.mxu0 0
  %5347 = vmatpush1.bf16.msra.mxu0 0
  %5348 = vmatprep.subr.bf16.mxu0 0
  %5349 = vmatpush1.bf16.msra.mxu0 0
  %5350 = vmatprep.subr.bf16.mxu0 0
  %5351 = vmatpush1.bf16.msra.mxu0 0
  %5352 = vmatprep.subr.bf16.mxu0 0
  %5353 = vmatpush1.bf16.msra.mxu0 0
  %5354 = vmatprep.subr.bf16.mxu0 0
  %5355 = vmatpush1.bf16.msra.mxu0 0
  %5356 = vmatprep.subr.bf16.mxu0 0
  %5357 = vmatpush1.bf16.msra.mxu0 0
  %5358 = vmatprep.subr.bf16.mxu0 0
  %5359 = vmatpush1.bf16.msra.mxu0 0
  %5360 = vmatprep.subr.bf16.mxu0 0
  %5361 = vmatpush1.bf16.msra.mxu0 0
  %5362 = vmatprep.subr.bf16.mxu0 0
  %5363 = vmatpush1.bf16.msra.mxu0 0
  %5364 = vmatprep.subr.bf16.mxu0 0
  %5365 = vmatpush1.bf16.msra.mxu0 0
  %5366 = vmatprep.subr.bf16.mxu0 0
  %5367 = vmatpush1.bf16.msra.mxu0 0
  %5368 = vmatprep.subr.bf16.mxu0 0
  %5369 = vmatpush1.bf16.msra.mxu0 0
  %5370 = vmatprep.mubr.bf16.mxu0 0
  %5371 = vmatmul.mubr.bf16.gmra.mrb[0].mxu0 %v5297
  %v5372 = vpop.f32.mrb[0].mxu0
  %v5373 = vadd.f32 0.0, %v5372
  %v5374 = vpop.f32.mrb[0].mxu0
  %v5375 = vpop.f32.mrb[0].mxu0
  %v5376 = vadd.f32 0.0, %v5375
  %v5377 = vpop.f32.mrb[0].mxu0
  %5378 = vmatprep.mubr.bf16.mxu0 0
  %5379 = vmatmul.mubr.bf16.gmra.mrb[0].mxu0 %v5300
  %v5380 = vpop.f32.mrb[0].mxu0
  %v5381 = vadd.f32 0.0, %v5380
  %v5382 = vpop.f32.mrb[0].mxu0
  %v5383 = vpop.f32.mrb[0].mxu0
  %v5384 = vadd.f32 0.0, %v5383
  %v5385 = vpop.f32.mrb[0].mxu0
  %5386 = vmatprep.mubr.bf16.mxu0 0
  %5387 = vmatmul.mubr.bf16.gmra.mrb[0].mxu0 %v5303
  %v5388 = vpop.f32.mrb[0].mxu0
  %v5389 = vadd.f32 0.0, %v5388
  %v5390 = vpop.f32.mrb[0].mxu0
  %v5391 = vpop.f32.mrb[0].mxu0
  %v5392 = vadd.f32 0.0, %v5391
  %v5393 = vpop.f32.mrb[0].mxu0
  %5394 = vmatprep.mubr.bf16.mxu0 0
  %5395 = vmatmul.mubr.bf16.gmra.mrb[0].mxu0 %v5306
  %v5396 = vpop.f32.mrb[0].mxu0
  %v5397 = vadd.f32 0.0, %v5396
  %v5398 = vpop.f32.mrb[0].mxu0
  %v5399 = vpop.f32.mrb[0].mxu0
  %v5400 = vadd.f32 0.0, %v5399
  %v5401 = vpop.f32.mrb[0].mxu0
  %5402 = vmatprep.mubr.bf16.mxu0 0
  %5403 = vmatmul.mubr.bf16.gmra.mrb[0].mxu0 %v5309
  %v5404 = vpop.f32.mrb[0].mxu0
  %v5405 = vadd.f32 0.0, %v5404
  %v5406 = vpop.f32.mrb[0].mxu0
  %v5407 = vpop.f32.mrb[0].mxu0
  %v5408 = vadd.f32 0.0, %v5407
  %v5409 = vpop.f32.mrb[0].mxu0
  %5410 = vmatprep.mubr.bf16.mxu0 0
  %5411 = vmatmul.mubr.bf16.gmra.mrb[0].mxu0 %v5312
  %v5412 = vpop.f32.mrb[0].mxu0
  %v5413 = vadd.f32 0.0, %v5412
  %v5414 = vpop.f32.mrb[0].mxu0
  %v5415 = vpop.f32.mrb[0].mxu0
  %v5416 = vadd.f32 0.0, %v5415
  %v5417 = vpop.f32.mrb[0].mxu0
  %5418 = vmatprep.mubr.bf16.mxu0 0
  %5419 = vmatmul.mubr.bf16.gmra.mrb[0].mxu0 %v5315
  %v5420 = vpop.f32.mrb[0].mxu0
  %v5421 = vadd.f32 0.0, %v5420
  %v5422 = vpop.f32.mrb[0].mxu0
  %v5423 = vpop.f32.mrb[0].mxu0
  %v5424 = vadd.f32 0.0, %v5423
  %v5425 = vpop.f32.mrb[0].mxu0
  %5426 = vmatprep.mubr.bf16.mxu0 0
  %5427 = vmatmul.mubr.bf16.gmra.mrb[0].mxu0 %v5318
  %v5428 = vpop.f32.mrb[0].mxu0
  %v5429 = vadd.f32 0.0, %v5428
  %v5430 = vpop.f32.mrb[0].mxu0
  %v5431 = vpop.f32.mrb[0].mxu0
  %v5432 = vadd.f32 0.0, %v5431
  %v5433 = vpop.f32.mrb[0].mxu0
  %5434 = vmatprep.mubr.bf16.mxu0 0
  %5435 = vmatmul.mubr.bf16.gmra.mrb[0].mxu0 %v5321
  %v5436 = vpop.f32.mrb[0].mxu0
  %v5437 = vadd.f32 0.0, %v5436
  %v5438 = vpop.f32.mrb[0].mxu0
  %v5439 = vpop.f32.mrb[0].mxu0
  %v5440 = vadd.f32 0.0, %v5439
  %v5441 = vpop.f32.mrb[0].mxu0
  %5442 = vmatprep.mubr.bf16.mxu0 0
  %5443 = vmatmul.mubr.bf16.gmra.mrb[0].mxu0 %v5324
  %v5444 = vpop.f32.mrb[0].mxu0
  %v5445 = vadd.f32 0.0, %v5444
  %v5446 = vpop.f32.mrb[0].mxu0
  %v5447 = vpop.f32.mrb[0].mxu0
  %v5448 = vadd.f32 0.0, %v5447
  %v5449 = vpop.f32.mrb[0].mxu0
  %5450 = vmatprep.mubr.bf16.mxu0 0
  %5451 = vmatmul.mubr.bf16.gmra.mrb[0].mxu0 %v5327
  %v5452 = vpop.f32.mrb[0].mxu0
  %v5453 = vadd.f32 0.0, %v5452
  %v5454 = vpop.f32.mrb[0].mxu0
  %v5455 = vpop.f32.mrb[0].mxu0
  %v5456 = vadd.f32 0.0, %v5455
  %v5457 = vpop.f32.mrb[0].mxu0
  %5458 = vmatprep.mubr.bf16.mxu0 0
  %5459 = vmatmul.mubr.bf16.gmra.mrb[0].mxu0 %v5330
  %v5460 = vpop.f32.mrb[0].mxu0
  %v5461 = vadd.f32 0.0, %v5460
  %v5462 = vpop.f32.mrb[0].mxu0
  %v5463 = vpop.f32.mrb[0].mxu0
  %v5464 = vadd.f32 0.0, %v5463
  %v5465 = vpop.f32.mrb[0].mxu0
  %5466 = vmatprep.mubr.bf16.mxu0 0
  %5467 = vmatmul.mubr.bf16.gmra.mrb[0].mxu0 %v5333
  %v5468 = vpop.f32.mrb[0].mxu0
  %v5469 = vadd.f32 0.0, %v5468
  %v5470 = vpop.f32.mrb[0].mxu0
  %v5471 = vpop.f32.mrb[0].mxu0
  %v5472 = vadd.f32 0.0, %v5471
  %v5473 = vpop.f32.mrb[0].mxu0
  %5474 = vmatprep.mubr.bf16.mxu0 0
  %5475 = vmatmul.mubr.bf16.gmra.mrb[0].mxu0 %v5336
  %v5476 = vpop.f32.mrb[0].mxu0
  %v5477 = vadd.f32 0.0, %v5476
  %v5478 = vpop.f32.mrb[0].mxu0
  %v5479 = vpop.f32.mrb[0].mxu0
  %v5480 = vadd.f32 0.0, %v5479
  %v5481 = vpop.f32.mrb[0].mxu0
  %5482 = vdwg.mxu0
  %v5483 = vadd.f32 %v5194, %v5373
  %v5484 = vadd.f32 %v5195, %v5376
  %v5485 = vadd.f32 %v5196, %v5381
  %v5486 = vadd.f32 %v5197, %v5384
  %v5487 = vadd.f32 %v5198, %v5389
  %v5488 = vadd.f32 %v5199, %v5392
  %v5489 = vadd.f32 %v5200, %v5397
  %v5490 = vadd.f32 %v5201, %v5400
  %v5491 = vadd.f32 %v5202, %v5405
  %v5492 = vadd.f32 %v5203, %v5408
  %v5493 = vadd.f32 %v5204, %v5413
  %v5494 = vadd.f32 %v5205, %v5416
  %v5495 = vadd.f32 %v5206, %v5421
  %v5496 = vadd.f32 %v5207, %v5424
  %v5497 = vadd.f32 %v5208, %v5429
  %v5498 = vadd.f32 %v5209, %v5432
  %v5499 = vadd.f32 %v5210, %v5437
  %v5500 = vadd.f32 %v5211, %v5440
  %v5501 = vadd.f32 %v5212, %v5445
  %v5502 = vadd.f32 %v5213, %v5448
  %v5503 = vadd.f32 %v5214, %v5453
  %v5504 = vadd.f32 %v5215, %v5456
  %v5505 = vadd.f32 %v5216, %v5461
  %v5506 = vadd.f32 %v5217, %v5464
  %v5507 = vadd.f32 %v5218, %v5469
  %v5508 = vadd.f32 %v5219, %v5472
  %v5509 = vadd.f32 %v5220, %v5477
  %v5510 = vadd.f32 %v5221, %v5480
  %v5511 = vadd.f32 %v5483, %v2611
  %v5512 = vadd.f32 %v5484, %v2611
  %v5513 = vadd.f32 %v5485, %v2611
  %v5514 = vadd.f32 %v5486, %v2611
  %v5515 = vadd.f32 %v5487, %v2611
  %v5516 = vadd.f32 %v5488, %v2611
  %v5517 = vadd.f32 %v5489, %v2611
  %v5518 = vadd.f32 %v5490, %v2611
  %v5519 = vadd.f32 %v5491, %v2611
  %v5520 = vadd.f32 %v5492, %v2611
  %v5521 = vadd.f32 %v5493, %v2611
  %v5522 = vadd.f32 %v5494, %v2611
  %v5523 = vadd.f32 %v5495, %v2611
  %v5524 = vadd.f32 %v5496, %v2611
  %v5525 = vadd.f32 %v5497, %v2611
  %v5526 = vadd.f32 %v5498, %v2611
  %v5527 = vadd.f32 %v5499, %v2611
  %v5528 = vadd.f32 %v5500, %v2611
  %v5529 = vadd.f32 %v5501, %v2611
  %v5530 = vadd.f32 %v5502, %v2611
  %v5531 = vadd.f32 %v5503, %v2611
  %v5532 = vadd.f32 %v5504, %v2611
  %v5533 = vadd.f32 %v5505, %v2611
  %v5534 = vadd.f32 %v5506, %v2611
  %v5535 = vadd.f32 %v5507, %v2611
  %v5536 = vadd.f32 %v5508, %v2611
  %v5537 = vadd.f32 %v5509, %v2611
  %v5538 = vadd.f32 %v5510, %v2611
  %v5539 = vsub.f32 %v5511, %v2644
  %v5540 = vsub.f32 %v5512, %v2644
  %v5541 = vsub.f32 %v5513, %v2644
  %v5542 = vsub.f32 %v5514, %v2644
  %v5543 = vsub.f32 %v5515, %v2644
  %v5544 = vsub.f32 %v5516, %v2644
  %v5545 = vsub.f32 %v5517, %v2644
  %v5546 = vsub.f32 %v5518, %v2644
  %v5547 = vsub.f32 %v5519, %v2644
  %v5548 = vsub.f32 %v5520, %v2644
  %v5549 = vsub.f32 %v5521, %v2644
  %v5550 = vsub.f32 %v5522, %v2644
  %v5551 = vsub.f32 %v5523, %v2644
  %v5552 = vsub.f32 %v5524, %v2644
  %v5553 = vsub.f32 %v5525, %v2644
  %v5554 = vsub.f32 %v5526, %v2644
  %v5555 = vsub.f32 %v5527, %v2644
  %v5556 = vsub.f32 %v5528, %v2644
  %v5557 = vsub.f32 %v5529, %v2644
  %v5558 = vsub.f32 %v5530, %v2644
  %v5559 = vsub.f32 %v5531, %v2644
  %v5560 = vsub.f32 %v5532, %v2644
  %v5561 = vsub.f32 %v5533, %v2644
  %v5562 = vsub.f32 %v5534, %v2644
  %v5563 = vsub.f32 %v5535, %v2644
  %v5564 = vsub.f32 %v5536, %v2644
  %v5565 = vsub.f32 %v5537, %v2644
  %v5566 = vsub.f32 %v5538, %v2644
  %v5567 = vmul.f32 %v5539, %v2676
  %v5568 = vmul.f32 %v5540, %v2681
  %v5569 = vmul.f32 %v5541, %v2686
  %v5570 = vmul.f32 %v5542, %v2691
  %v5571 = vmul.f32 %v5543, %v2696
  %v5572 = vmul.f32 %v5544, %v2701
  %v5573 = vmul.f32 %v5545, %v2706
  %v5574 = vmul.f32 %v5546, %v2711
  %v5575 = vmul.f32 %v5547, %v2716
  %v5576 = vmul.f32 %v5548, %v2721
  %v5577 = vmul.f32 %v5549, %v2726
  %v5578 = vmul.f32 %v5550, %v2731
  %v5579 = vmul.f32 %v5551, %v2736
  %v5580 = vmul.f32 %v5552, %v2741
  %v5581 = vmul.f32 %v5553, %v2746
  %v5582 = vmul.f32 %v5554, %v2751
  %v5583 = vmul.f32 %v5555, %v2756
  %v5584 = vmul.f32 %v5556, %v2761
  %v5585 = vmul.f32 %v5557, %v2766
  %v5586 = vmul.f32 %v5558, %v2771
  %v5587 = vmul.f32 %v5559, %v2776
  %v5588 = vmul.f32 %v5560, %v2781
  %v5589 = vmul.f32 %v5561, %v2786
  %v5590 = vmul.f32 %v5562, %v2791
  %v5591 = vmul.f32 %v5563, %v2796
  %v5592 = vmul.f32 %v5564, %v2801
  %v5593 = vmul.f32 %v5565, %v2806
  %v5594 = vmul.f32 %v5566, %v2811
  %v5595 = vadd.f32 %v5567, %v5568
  %v5596 = vadd.f32 %v5595, %v5569
  %v5597 = vadd.f32 %v5596, %v5570
  %v5598 = vadd.f32 %v5597, %v5571
  %v5599 = vadd.f32 %v5598, %v5572
  %v5600 = vadd.f32 %v5599, %v5573
  %v5601 = vadd.f32 %v5600, %v5574
  %v5602 = vadd.f32 %v5601, %v5575
  %v5603 = vadd.f32 %v5602, %v5576
  %v5604 = vadd.f32 %v5603, %v5577
  %v5605 = vadd.f32 %v5604, %v5578
  %v5606 = vadd.f32 %v5605, %v5579
  %v5607 = vadd.f32 %v5606, %v5580
  %v5608 = vadd.f32 %v5607, %v5581
  %v5609 = vadd.f32 %v5608, %v5582
  %v5610 = vadd.f32 %v5609, %v5583
  %v5611 = vadd.f32 %v5610, %v5584
  %v5612 = vadd.f32 %v5611, %v5585
  %v5613 = vadd.f32 %v5612, %v5586
  %v5614 = vadd.f32 %v5613, %v5587
  %v5615 = vadd.f32 %v5614, %v5588
  %v5616 = vadd.f32 %v5615, %v5589
  %v5617 = vadd.f32 %v5616, %v5590
  %v5618 = vadd.f32 %v5617, %v5591
  %v5619 = vadd.f32 %v5618, %v5592
  %v5620 = vadd.f32 %v5619, %v5593
  %v5621 = vadd.f32 %v5620, %v5594
  %v5622 = vrot.slane %v5621, 4
  %v5623 = vadd.f32 %v5621, %v5622
  %v5624 = vrot.slane %v5623, 2
  %v5625 = vadd.f32 %v5623, %v5624
  %v5626 = vrot.slane %v5625, 1
  %v5627 = vadd.f32 %v5625, %v5626
  %v5628 = vadd.f32 %v2874, %v5627
  %v5629 = vmul.f32 %v5567, %v5567
  %v5630 = vmul.f32 %v5568, %v5568
  %v5631 = vmul.f32 %v5569, %v5569
  %v5632 = vmul.f32 %v5570, %v5570
  %v5633 = vmul.f32 %v5571, %v5571
  %v5634 = vmul.f32 %v5572, %v5572
  %v5635 = vmul.f32 %v5573, %v5573
  %v5636 = vmul.f32 %v5574, %v5574
  %v5637 = vmul.f32 %v5575, %v5575
  %v5638 = vmul.f32 %v5576, %v5576
  %v5639 = vmul.f32 %v5577, %v5577
  %v5640 = vmul.f32 %v5578, %v5578
  %v5641 = vmul.f32 %v5579, %v5579
  %v5642 = vmul.f32 %v5580, %v5580
  %v5643 = vmul.f32 %v5581, %v5581
  %v5644 = vmul.f32 %v5582, %v5582
  %v5645 = vmul.f32 %v5583, %v5583
  %v5646 = vmul.f32 %v5584, %v5584
  %v5647 = vmul.f32 %v5585, %v5585
  %v5648 = vmul.f32 %v5586, %v5586
  %v5649 = vmul.f32 %v5587, %v5587
  %v5650 = vmul.f32 %v5588, %v5588
  %v5651 = vmul.f32 %v5589, %v5589
  %v5652 = vmul.f32 %v5590, %v5590
  %v5653 = vmul.f32 %v5591, %v5591
  %v5654 = vmul.f32 %v5592, %v5592
  %v5655 = vmul.f32 %v5593, %v5593
  %v5656 = vmul.f32 %v5594, %v5594
  %v5657 = vadd.f32 %v5629, %v5630
  %v5658 = vadd.f32 %v5657, %v5631
  %v5659 = vadd.f32 %v5658, %v5632
  %v5660 = vadd.f32 %v5659, %v5633
  %v5661 = vadd.f32 %v5660, %v5634
  %v5662 = vadd.f32 %v5661, %v5635
  %v5663 = vadd.f32 %v5662, %v5636
  %v5664 = vadd.f32 %v5663, %v5637
  %v5665 = vadd.f32 %v5664, %v5638
  %v5666 = vadd.f32 %v5665, %v5639
  %v5667 = vadd.f32 %v5666, %v5640
  %v5668 = vadd.f32 %v5667, %v5641
  %v5669 = vadd.f32 %v5668, %v5642
  %v5670 = vadd.f32 %v5669, %v5643
  %v5671 = vadd.f32 %v5670, %v5644
  %v5672 = vadd.f32 %v5671, %v5645
  %v5673 = vadd.f32 %v5672, %v5646
  %v5674 = vadd.f32 %v5673, %v5647
  %v5675 = vadd.f32 %v5674, %v5648
  %v5676 = vadd.f32 %v5675, %v5649
  %v5677 = vadd.f32 %v5676, %v5650
  %v5678 = vadd.f32 %v5677, %v5651
  %v5679 = vadd.f32 %v5678, %v5652
  %v5680 = vadd.f32 %v5679, %v5653
  %v5681 = vadd.f32 %v5680, %v5654
  %v5682 = vadd.f32 %v5681, %v5655
  %v5683 = vadd.f32 %v5682, %v5656
  %v5684 = vrot.slane %v5683, 4
  %v5685 = vadd.f32 %v5683, %v5684
  %v5686 = vrot.slane %v5685, 2
  %v5687 = vadd.f32 %v5685, %v5686
  %v5688 = vrot.slane %v5687, 1
  %v5689 = vadd.f32 %v5687, %v5688
  %v5690 = vadd.f32 %v2936, %v5689
  %s5691 = scalar_lea.vmem %s6, 224
  %5692 = vst [vmem:[%s5691] sm:$0xff] %v5511
  %5693 = vst [vmem:[%s5691 + $0x8] sm:$0xff] %v5512
  %5694 = vst [vmem:[%s5691 + $0x10] sm:$0xff] %v5513
  %5695 = vst [vmem:[%s5691 + $0x18] sm:$0xff] %v5514
  %5696 = vst [vmem:[%s5691 + $0x20] sm:$0xff] %v5515
  %5697 = vst [vmem:[%s5691 + $0x28] sm:$0xff] %v5516
  %5698 = vst [vmem:[%s5691 + $0x30] sm:$0xff] %v5517
  %5699 = vst [vmem:[%s5691 + $0x38] sm:$0xff] %v5518
  %5700 = vst [vmem:[%s5691 + $0x40] sm:$0xff] %v5519
  %5701 = vst [vmem:[%s5691 + $0x48] sm:$0xff] %v5520
  %5702 = vst [vmem:[%s5691 + $0x50] sm:$0xff] %v5521
  %5703 = vst [vmem:[%s5691 + $0x58] sm:$0xff] %v5522
  %5704 = vst [vmem:[%s5691 + $0x60] sm:$0xff] %v5523
  %5705 = vst [vmem:[%s5691 + $0x68] sm:$0xff] %v5524
  %5706 = vst [vmem:[%s5691 + $0x70] sm:$0xff] %v5525
  %5707 = vst [vmem:[%s5691 + $0x78] sm:$0xff] %v5526
  %5708 = vst [vmem:[%s5691 + $0x80] sm:$0xff] %v5527
  %5709 = vst [vmem:[%s5691 + $0x88] sm:$0xff] %v5528
  %5710 = vst [vmem:[%s5691 + $0x90] sm:$0xff] %v5529
  %5711 = vst [vmem:[%s5691 + $0x98] sm:$0xff] %v5530
  %5712 = vst [vmem:[%s5691 + $0xa0] sm:$0xff] %v5531
  %5713 = vst [vmem:[%s5691 + $0xa8] sm:$0xff] %v5532
  %5714 = vst [vmem:[%s5691 + $0xb0] sm:$0xff] %v5533
  %5715 = vst [vmem:[%s5691 + $0xb8] sm:$0xff] %v5534
  %5716 = vst [vmem:[%s5691 + $0xc0] sm:$0xff] %v5535
  %5717 = vst [vmem:[%s5691 + $0xc8] sm:$0xff] %v5536
  %5718 = vst [vmem:[%s5691 + $0xd0] sm:$0xff] %v5537
  %5719 = vst [vmem:[%s5691 + $0xd8] sm:$0xff] %v5538
  %v5720 = vmul.f32 %v5628, 0.0025510204
  %v5721 = vmul.f32 %v5690, 0.0025510204
  %v5722 = vmul.f32 %v5720, %v5720
  %v5723 = vsub.f32 %v5721, %v5722
  %v5724 = vmax.f32 %v5723, 0.0
  %v5725 = vadd.f32 %v2613, %v5720
  %v5726 = vadd.f32 %v5724, 1e-05
  %v5727 = vrsqrt.pop %v5726
  %v5728 = vld [vmem:[%s3] sm:$0x1]
  %v5729 = vmul.f32 %v5727, %v5728
  %v5730 = vld [vmem:[%s4] sm:$0x1]
  %v5731 = vmul.f32 %v5725, %v5729
  %v5732 = vsub.f32 %v5730, %v5731
  %v5733 = vld [vmem:[%s6] sm:$0xff]
  %v5734 = vld [vmem:[%s6 + $0x8] sm:$0xff]
  %v5735 = vld [vmem:[%s6 + $0x10] sm:$0xff]
  %v5736 = vld [vmem:[%s6 + $0x18] sm:$0xff]
  %v5737 = vld [vmem:[%s6 + $0x20] sm:$0xff]
  %v5738 = vld [vmem:[%s6 + $0x28] sm:$0xff]
  %v5739 = vld [vmem:[%s6 + $0x30] sm:$0xff]
  %v5740 = vld [vmem:[%s6 + $0x38] sm:$0xff]
  %v5741 = vld [vmem:[%s6 + $0x40] sm:$0xff]
  %v5742 = vld [vmem:[%s6 + $0x48] sm:$0xff]
  %v5743 = vld [vmem:[%s6 + $0x50] sm:$0xff]
  %v5744 = vld [vmem:[%s6 + $0x58] sm:$0xff]
  %v5745 = vld [vmem:[%s6 + $0x60] sm:$0xff]
  %v5746 = vld [vmem:[%s6 + $0x68] sm:$0xff]
  %v5747 = vld [vmem:[%s6 + $0x70] sm:$0xff]
  %v5748 = vld [vmem:[%s6 + $0x78] sm:$0xff]
  %v5749 = vld [vmem:[%s6 + $0x80] sm:$0xff]
  %v5750 = vld [vmem:[%s6 + $0x88] sm:$0xff]
  %v5751 = vld [vmem:[%s6 + $0x90] sm:$0xff]
  %v5752 = vld [vmem:[%s6 + $0x98] sm:$0xff]
  %v5753 = vld [vmem:[%s6 + $0xa0] sm:$0xff]
  %v5754 = vld [vmem:[%s6 + $0xa8] sm:$0xff]
  %v5755 = vld [vmem:[%s6 + $0xb0] sm:$0xff]
  %v5756 = vld [vmem:[%s6 + $0xb8] sm:$0xff]
  %v5757 = vld [vmem:[%s6 + $0xc0] sm:$0xff]
  %v5758 = vld [vmem:[%s6 + $0xc8] sm:$0xff]
  %v5759 = vld [vmem:[%s6 + $0xd0] sm:$0xff]
  %v5760 = vld [vmem:[%s6 + $0xd8] sm:$0xff]
  %v5761 = vlaneseq
  %v5762 = vshrl.u32 %v5761, 7
  %v5763 = vsub.s32 0, %v5762
  %v5764 = vrot.slane %v5729, %v5763
  %v5765 = vmul.f32 %v5733, %v5764
  %v5766 = vmul.f32 %v5734, %v5764
  %v5767 = vmul.f32 %v5735, %v5764
  %v5768 = vmul.f32 %v5736, %v5764
  %v5769 = vmul.f32 %v5737, %v5764
  %v5770 = vmul.f32 %v5738, %v5764
  %v5771 = vmul.f32 %v5739, %v5764
  %v5772 = vmul.f32 %v5740, %v5764
  %v5773 = vmul.f32 %v5741, %v5764
  %v5774 = vmul.f32 %v5742, %v5764
  %v5775 = vmul.f32 %v5743, %v5764
  %v5776 = vmul.f32 %v5744, %v5764
  %v5777 = vmul.f32 %v5745, %v5764
  %v5778 = vmul.f32 %v5746, %v5764
  %v5779 = vmul.f32 %v5747, %v5764
  %v5780 = vmul.f32 %v5748, %v5764
  %v5781 = vmul.f32 %v5749, %v5764
  %v5782 = vmul.f32 %v5750, %v5764
  %v5783 = vmul.f32 %v5751, %v5764
  %v5784 = vmul.f32 %v5752, %v5764
  %v5785 = vmul.f32 %v5753, %v5764
  %v5786 = vmul.f32 %v5754, %v5764
  %v5787 = vmul.f32 %v5755, %v5764
  %v5788 = vmul.f32 %v5756, %v5764
  %v5789 = vmul.f32 %v5757, %v5764
  %v5790 = vmul.f32 %v5758, %v5764
  %v5791 = vmul.f32 %v5759, %v5764
  %v5792 = vmul.f32 %v5760, %v5764
  %v5794 = vlaneseq
  %v5795 = vshrl.u32 %v5794, 7
  %v5796 = vsub.s32 0, %v5795
  %v5797 = vrot.slane %v5732, %v5796
  %v5799 = vadd.f32 %v5765, %v5797
  %v5800 = vadd.f32 %v5766, %v5797
  %v5801 = vadd.f32 %v5767, %v5797
  %v5802 = vadd.f32 %v5768, %v5797
  %v5803 = vadd.f32 %v5769, %v5797
  %v5804 = vadd.f32 %v5770, %v5797
  %v5805 = vadd.f32 %v5771, %v5797
  %v5806 = vadd.f32 %v5772, %v5797
  %v5807 = vadd.f32 %v5773, %v5797
  %v5808 = vadd.f32 %v5774, %v5797
  %v5809 = vadd.f32 %v5775, %v5797
  %v5810 = vadd.f32 %v5776, %v5797
  %v5811 = vadd.f32 %v5777, %v5797
  %v5812 = vadd.f32 %v5778, %v5797
  %v5813 = vadd.f32 %v5779, %v5797
  %v5814 = vadd.f32 %v5780, %v5797
  %v5815 = vadd.f32 %v5781, %v5797
  %v5816 = vadd.f32 %v5782, %v5797
  %v5817 = vadd.f32 %v5783, %v5797
  %v5818 = vadd.f32 %v5784, %v5797
  %v5819 = vadd.f32 %v5785, %v5797
  %v5820 = vadd.f32 %v5786, %v5797
  %v5821 = vadd.f32 %v5787, %v5797
  %v5822 = vadd.f32 %v5788, %v5797
  %v5823 = vadd.f32 %v5789, %v5797
  %v5824 = vadd.f32 %v5790, %v5797
  %v5825 = vadd.f32 %v5791, %v5797
  %v5826 = vadd.f32 %v5792, %v5797
  %v5827 = vmax.f32 %v5799, 0.0
  %v5828 = vmax.f32 %v5800, 0.0
  %v5829 = vmax.f32 %v5801, 0.0
  %v5830 = vmax.f32 %v5802, 0.0
  %v5831 = vmax.f32 %v5803, 0.0
  %v5832 = vmax.f32 %v5804, 0.0
  %v5833 = vmax.f32 %v5805, 0.0
  %v5834 = vmax.f32 %v5806, 0.0
  %v5835 = vmax.f32 %v5807, 0.0
  %v5836 = vmax.f32 %v5808, 0.0
  %v5837 = vmax.f32 %v5809, 0.0
  %v5838 = vmax.f32 %v5810, 0.0
  %v5839 = vmax.f32 %v5811, 0.0
  %v5840 = vmax.f32 %v5812, 0.0
  %v5841 = vmax.f32 %v5813, 0.0
  %v5842 = vmax.f32 %v5814, 0.0
  %v5843 = vmax.f32 %v5815, 0.0
  %v5844 = vmax.f32 %v5816, 0.0
  %v5845 = vmax.f32 %v5817, 0.0
  %v5846 = vmax.f32 %v5818, 0.0
  %v5847 = vmax.f32 %v5819, 0.0
  %v5848 = vmax.f32 %v5820, 0.0
  %v5849 = vmax.f32 %v5821, 0.0
  %v5850 = vmax.f32 %v5822, 0.0
  %v5851 = vmax.f32 %v5823, 0.0
  %v5852 = vmax.f32 %v5824, 0.0
  %v5853 = vmax.f32 %v5825, 0.0
  %v5854 = vmax.f32 %v5826, 0.0
  %5855 = vst [vmem:[%s6] sm:$0xff] %v5827
  %5856 = vst [vmem:[%s6 + $0x8] sm:$0xff] %v5828
  %5857 = vst [vmem:[%s6 + $0x10] sm:$0xff] %v5829
  %5858 = vst [vmem:[%s6 + $0x18] sm:$0xff] %v5830
  %5859 = vst [vmem:[%s6 + $0x20] sm:$0xff] %v5831
  %5860 = vst [vmem:[%s6 + $0x28] sm:$0xff] %v5832
  %5861 = vst [vmem:[%s6 + $0x30] sm:$0xff] %v5833
  %5862 = vst [vmem:[%s6 + $0x38] sm:$0xff] %v5834
  %5863 = vst [vmem:[%s6 + $0x40] sm:$0xff] %v5835
  %5864 = vst [vmem:[%s6 + $0x48] sm:$0xff] %v5836
  %5865 = vst [vmem:[%s6 + $0x50] sm:$0xff] %v5837
  %5866 = vst [vmem:[%s6 + $0x58] sm:$0xff] %v5838
  %5867 = vst [vmem:[%s6 + $0x60] sm:$0xff] %v5839
  %5868 = vst [vmem:[%s6 + $0x68] sm:$0xff] %v5840
  %5869 = vst [vmem:[%s6 + $0x70] sm:$0xff] %v5841
  %5870 = vst [vmem:[%s6 + $0x78] sm:$0xff] %v5842
  %5871 = vst [vmem:[%s6 + $0x80] sm:$0xff] %v5843
  %5872 = vst [vmem:[%s6 + $0x88] sm:$0xff] %v5844
  %5873 = vst [vmem:[%s6 + $0x90] sm:$0xff] %v5845
  %5874 = vst [vmem:[%s6 + $0x98] sm:$0xff] %v5846
  %5875 = vst [vmem:[%s6 + $0xa0] sm:$0xff] %v5847
  %5876 = vst [vmem:[%s6 + $0xa8] sm:$0xff] %v5848
  %5877 = vst [vmem:[%s6 + $0xb0] sm:$0xff] %v5849
  %5878 = vst [vmem:[%s6 + $0xb8] sm:$0xff] %v5850
  %5879 = vst [vmem:[%s6 + $0xc0] sm:$0xff] %v5851
  %5880 = vst [vmem:[%s6 + $0xc8] sm:$0xff] %v5852
  %5881 = vst [vmem:[%s6 + $0xd0] sm:$0xff] %v5853
  %5882 = vst [vmem:[%s6 + $0xd8] sm:$0xff] %v5854
  %v5883 = vld [vmem:[%s5691] sm:$0xff]
  %v5884 = vld [vmem:[%s5691 + $0x8] sm:$0xff]
  %v5885 = vld [vmem:[%s5691 + $0x10] sm:$0xff]
  %v5886 = vld [vmem:[%s5691 + $0x18] sm:$0xff]
  %v5887 = vld [vmem:[%s5691 + $0x20] sm:$0xff]
  %v5888 = vld [vmem:[%s5691 + $0x28] sm:$0xff]
  %v5889 = vld [vmem:[%s5691 + $0x30] sm:$0xff]
  %v5890 = vld [vmem:[%s5691 + $0x38] sm:$0xff]
  %v5891 = vld [vmem:[%s5691 + $0x40] sm:$0xff]
  %v5892 = vld [vmem:[%s5691 + $0x48] sm:$0xff]
  %v5893 = vld [vmem:[%s5691 + $0x50] sm:$0xff]
  %v5894 = vld [vmem:[%s5691 + $0x58] sm:$0xff]
  %v5895 = vld [vmem:[%s5691 + $0x60] sm:$0xff]
  %v5896 = vld [vmem:[%s5691 + $0x68] sm:$0xff]
  %v5897 = vld [vmem:[%s5691 + $0x70] sm:$0xff]
  %v5898 = vld [vmem:[%s5691 + $0x78] sm:$0xff]
  %v5899 = vld [vmem:[%s5691 + $0x80] sm:$0xff]
  %v5900 = vld [vmem:[%s5691 + $0x88] sm:$0xff]
  %v5901 = vld [vmem:[%s5691 + $0x90] sm:$0xff]
  %v5902 = vld [vmem:[%s5691 + $0x98] sm:$0xff]
  %v5903 = vld [vmem:[%s5691 + $0xa0] sm:$0xff]
  %v5904 = vld [vmem:[%s5691 + $0xa8] sm:$0xff]
  %v5905 = vld [vmem:[%s5691 + $0xb0] sm:$0xff]
  %v5906 = vld [vmem:[%s5691 + $0xb8] sm:$0xff]
  %v5907 = vld [vmem:[%s5691 + $0xc0] sm:$0xff]
  %v5908 = vld [vmem:[%s5691 + $0xc8] sm:$0xff]
  %v5909 = vld [vmem:[%s5691 + $0xd0] sm:$0xff]
  %v5910 = vld [vmem:[%s5691 + $0xd8] sm:$0xff]
  %v5911 = vmul.f32 %v5883, %v5764
  %v5912 = vmul.f32 %v5884, %v5764
  %v5913 = vmul.f32 %v5885, %v5764
  %v5914 = vmul.f32 %v5886, %v5764
  %v5915 = vmul.f32 %v5887, %v5764
  %v5916 = vmul.f32 %v5888, %v5764
  %v5917 = vmul.f32 %v5889, %v5764
  %v5918 = vmul.f32 %v5890, %v5764
  %v5919 = vmul.f32 %v5891, %v5764
  %v5920 = vmul.f32 %v5892, %v5764
  %v5921 = vmul.f32 %v5893, %v5764
  %v5922 = vmul.f32 %v5894, %v5764
  %v5923 = vmul.f32 %v5895, %v5764
  %v5924 = vmul.f32 %v5896, %v5764
  %v5925 = vmul.f32 %v5897, %v5764
  %v5926 = vmul.f32 %v5898, %v5764
  %v5927 = vmul.f32 %v5899, %v5764
  %v5928 = vmul.f32 %v5900, %v5764
  %v5929 = vmul.f32 %v5901, %v5764
  %v5930 = vmul.f32 %v5902, %v5764
  %v5931 = vmul.f32 %v5903, %v5764
  %v5932 = vmul.f32 %v5904, %v5764
  %v5933 = vmul.f32 %v5905, %v5764
  %v5934 = vmul.f32 %v5906, %v5764
  %v5935 = vmul.f32 %v5907, %v5764
  %v5936 = vmul.f32 %v5908, %v5764
  %v5937 = vmul.f32 %v5909, %v5764
  %v5938 = vmul.f32 %v5910, %v5764
  %v5939 = vadd.f32 %v5911, %v5797
  %v5940 = vadd.f32 %v5912, %v5797
  %v5941 = vadd.f32 %v5913, %v5797
  %v5942 = vadd.f32 %v5914, %v5797
  %v5943 = vadd.f32 %v5915, %v5797
  %v5944 = vadd.f32 %v5916, %v5797
  %v5945 = vadd.f32 %v5917, %v5797
  %v5946 = vadd.f32 %v5918, %v5797
  %v5947 = vadd.f32 %v5919, %v5797
  %v5948 = vadd.f32 %v5920, %v5797
  %v5949 = vadd.f32 %v5921, %v5797
  %v5950 = vadd.f32 %v5922, %v5797
  %v5951 = vadd.f32 %v5923, %v5797
  %v5952 = vadd.f32 %v5924, %v5797
  %v5953 = vadd.f32 %v5925, %v5797
  %v5954 = vadd.f32 %v5926, %v5797
  %v5955 = vadd.f32 %v5927, %v5797
  %v5956 = vadd.f32 %v5928, %v5797
  %v5957 = vadd.f32 %v5929, %v5797
  %v5958 = vadd.f32 %v5930, %v5797
  %v5959 = vadd.f32 %v5931, %v5797
  %v5960 = vadd.f32 %v5932, %v5797
  %v5961 = vadd.f32 %v5933, %v5797
  %v5962 = vadd.f32 %v5934, %v5797
  %v5963 = vadd.f32 %v5935, %v5797
  %v5964 = vadd.f32 %v5936, %v5797
  %v5965 = vadd.f32 %v5937, %v5797
  %v5966 = vadd.f32 %v5938, %v5797
  %v5967 = vmax.f32 %v5939, 0.0
  %v5968 = vmax.f32 %v5940, 0.0
  %v5969 = vmax.f32 %v5941, 0.0
  %v5970 = vmax.f32 %v5942, 0.0
  %v5971 = vmax.f32 %v5943, 0.0
  %v5972 = vmax.f32 %v5944, 0.0
  %v5973 = vmax.f32 %v5945, 0.0
  %v5974 = vmax.f32 %v5946, 0.0
  %v5975 = vmax.f32 %v5947, 0.0
  %v5976 = vmax.f32 %v5948, 0.0
  %v5977 = vmax.f32 %v5949, 0.0
  %v5978 = vmax.f32 %v5950, 0.0
  %v5979 = vmax.f32 %v5951, 0.0
  %v5980 = vmax.f32 %v5952, 0.0
  %v5981 = vmax.f32 %v5953, 0.0
  %v5982 = vmax.f32 %v5954, 0.0
  %v5983 = vmax.f32 %v5955, 0.0
  %v5984 = vmax.f32 %v5956, 0.0
  %v5985 = vmax.f32 %v5957, 0.0
  %v5986 = vmax.f32 %v5958, 0.0
  %v5987 = vmax.f32 %v5959, 0.0
  %v5988 = vmax.f32 %v5960, 0.0
  %v5989 = vmax.f32 %v5961, 0.0
  %v5990 = vmax.f32 %v5962, 0.0
  %v5991 = vmax.f32 %v5963, 0.0
  %v5992 = vmax.f32 %v5964, 0.0
  %v5993 = vmax.f32 %v5965, 0.0
  %v5994 = vmax.f32 %v5966, 0.0
  %5995 = vst [vmem:[%s5691] sm:$0xff] %v5967
  %5996 = vst [vmem:[%s5691 + $0x8] sm:$0xff] %v5968
  %5997 = vst [vmem:[%s5691 + $0x10] sm:$0xff] %v5969
  %5998 = vst [vmem:[%s5691 + $0x18] sm:$0xff] %v5970
  %5999 = vst [vmem:[%s5691 + $0x20] sm:$0xff] %v5971
  %6000 = vst [vmem:[%s5691 + $0x28] sm:$0xff] %v5972
  %6001 = vst [vmem:[%s5691 + $0x30] sm:$0xff] %v5973
  %6002 = vst [vmem:[%s5691 + $0x38] sm:$0xff] %v5974
  %6003 = vst [vmem:[%s5691 + $0x40] sm:$0xff] %v5975
  %6004 = vst [vmem:[%s5691 + $0x48] sm:$0xff] %v5976
  %6005 = vst [vmem:[%s5691 + $0x50] sm:$0xff] %v5977
  %6006 = vst [vmem:[%s5691 + $0x58] sm:$0xff] %v5978
  %6007 = vst [vmem:[%s5691 + $0x60] sm:$0xff] %v5979
  %6008 = vst [vmem:[%s5691 + $0x68] sm:$0xff] %v5980
  %6009 = vst [vmem:[%s5691 + $0x70] sm:$0xff] %v5981
  %6010 = vst [vmem:[%s5691 + $0x78] sm:$0xff] %v5982
  %6011 = vst [vmem:[%s5691 + $0x80] sm:$0xff] %v5983
  %6012 = vst [vmem:[%s5691 + $0x88] sm:$0xff] %v5984
  %6013 = vst [vmem:[%s5691 + $0x90] sm:$0xff] %v5985
  %6014 = vst [vmem:[%s5691 + $0x98] sm:$0xff] %v5986
  %6015 = vst [vmem:[%s5691 + $0xa0] sm:$0xff] %v5987
  %6016 = vst [vmem:[%s5691 + $0xa8] sm:$0xff] %v5988
  %6017 = vst [vmem:[%s5691 + $0xb0] sm:$0xff] %v5989
  %6018 = vst [vmem:[%s5691 + $0xb8] sm:$0xff] %v5990
  %6019 = vst [vmem:[%s5691 + $0xc0] sm:$0xff] %v5991
  %6020 = vst [vmem:[%s5691 + $0xc8] sm:$0xff] %v5992
  %6021 = vst [vmem:[%s5691 + $0xd0] sm:$0xff] %v5993
  %6022 = vst [vmem:[%s5691 + $0xd8] sm:$0xff] %v5994
  // Predicated region
  $region26: #{decoder_block_forward.3} parent=0 // pred_check
    _
  $region27: #{decoder_block_forward.3} parent=0 // pred_check_branch
    %6024 = sbr.rel (0) target = $region29
  $region28: #{decoder_block_forward.3} parent=0 // pred_region
    _
  $region29: #{decoder_block_forward.3} parent=0 // pred_fallthru
    _
  // Predicated region
  $region30: #{decoder_block_forward.3} parent=0 // pred_check
    _
  $region31: #{decoder_block_forward.3} parent=0 // pred_check_branch
    %6026 = sbr.rel (0) target = $region33
  $region32: #{decoder_block_forward.3} parent=0 // pred_region
    _
  $region33: #{decoder_block_forward.3} parent=0 // pred_fallthru
    _

// kernel: decoder_block_forward.4
$region0: #{decoder_block_forward.4}
  #allocation0 [shape = 'u32[]', space=smem, size = 0x4, offset = 0x4, fixed_abs, tag = 'smem constant byte address 0x4 - core index']
  #allocation1 [shape = 'u32[144,128]{1,0:T(1,128)}', space=vmem, size = 0x12000, scoped, tag = 'internal scratch']
  %s0 = inlined_call_operand.vmem [shape: f32[2,198,128], index: 0, kind: input, shape index: {}]
  %s1 = inlined_call_operand.vmem [shape: bf16[9,128,128], index: 1, kind: input, shape index: {}]
  %s2 = inlined_call_operand.vmem [shape: f32[1,128], index: 2, kind: input, shape index: {}]
  %s3 = inlined_call_operand.vmem [shape: f32[1,128], index: 3, kind: input, shape index: {}]
  %s4 = inlined_call_operand.vmem [shape: f32[1,128], index: 4, kind: input, shape index: {}]
  %s5 = inlined_call_operand.vmem [shape: f32[168,1], index: 5, kind: input, shape index: {}]
  %s6 = inlined_call_operand.vmem [shape: f32[2,168,128], index: 6, kind: output, shape index: {}]
  %s7 = sld [smem:[#allocation0]]
  $region34: #{decoder_block_forward.4} parent=0
    _
  %s9 = ssub.s32 1, %s7
  %s10 = scalar_select 0, %s9, %s7
  // Predicated region
  $region2: #{decoder_block_forward.4} parent=0 // pred_check
    _
  $region3: #{decoder_block_forward.4} parent=0 // pred_check_branch
    %12 = sbr.rel (0) target = $region5
  $region4: #{decoder_block_forward.4} parent=0 // pred_region
    _
  $region5: #{decoder_block_forward.4} parent=0 // pred_fallthru
    _
  // Predicated region
  $region6: #{decoder_block_forward.4} parent=0 // pred_check
    _
  $region7: #{decoder_block_forward.4} parent=0 // pred_check_branch
    %14 = sbr.rel (0) target = $region9
  $region8: #{decoder_block_forward.4} parent=0 // pred_region
    _
  $region9: #{decoder_block_forward.4} parent=0 // pred_fallthru
    _
  // Predicated region
  $region10: #{decoder_block_forward.4} parent=0 // pred_check
    _
  $region11: #{decoder_block_forward.4} parent=0 // pred_check_branch
    %16 = sbr.rel (0) target = $region13
  $region12: #{decoder_block_forward.4} parent=0 // pred_region
    _
  $region13: #{decoder_block_forward.4} parent=0 // pred_fallthru
    _
  // Predicated region
  $region14: #{decoder_block_forward.4} parent=0 // pred_check
    _
  $region15: #{decoder_block_forward.4} parent=0 // pred_check_branch
    %18 = sbr.rel (0) target = $region17
  $region16: #{decoder_block_forward.4} parent=0 // pred_region
    _
  $region17: #{decoder_block_forward.4} parent=0 // pred_fallthru
    _
  // Predicated region
  $region18: #{decoder_block_forward.4} parent=0 // pred_check
    _
  $region19: #{decoder_block_forward.4} parent=0 // pred_check_branch
    %20 = sbr.rel (0) target = $region21
  $region20: #{decoder_block_forward.4} parent=0 // pred_region
    _
  $region21: #{decoder_block_forward.4} parent=0 // pred_fallthru
    _
  // Predicated region
  $region22: #{decoder_block_forward.4} parent=0 // pred_check
    _
  $region23: #{decoder_block_forward.4} parent=0 // pred_check_branch
    %22 = sbr.rel (0) target = $region25
  $region24: #{decoder_block_forward.4} parent=0 // pred_region
    _
  $region25: #{decoder_block_forward.4} parent=0 // pred_fallthru
    _
  %v24 = vld [vmem:[%s5] sm:$0xff]
  %v25 = vld [vmem:[%s5 + $0x8] sm:$0xff]
  %v26 = vld [vmem:[%s5 + $0x10] sm:$0xff]
  %v27 = vld [vmem:[%s5 + $0x18] sm:$0xff]
  %v28 = vld [vmem:[%s5 + $0x20] sm:$0xff]
  %v29 = vld [vmem:[%s5 + $0x28] sm:$0xff]
  %v30 = vld [vmem:[%s5 + $0x30] sm:$0xff]
  %v31 = vld [vmem:[%s5 + $0x38] sm:$0xff]
  %v32 = vld [vmem:[%s5 + $0x40] sm:$0xff]
  %v33 = vld [vmem:[%s5 + $0x48] sm:$0xff]
  %v34 = vld [vmem:[%s5 + $0x50] sm:$0xff]
  %v35 = vld [vmem:[%s5 + $0x58] sm:$0xff]
  %v36 = vld [vmem:[%s5 + $0x60] sm:$0xff]
  %v37 = vld [vmem:[%s5 + $0x68] sm:$0xff]
  %v38 = vld [vmem:[%s5 + $0x70] sm:$0xff]
  %v39 = vld [vmem:[%s5 + $0x78] sm:$0xff]
  %v40 = vld [vmem:[%s5 + $0x80] sm:$0xff]
  %v41 = vld [vmem:[%s5 + $0x88] sm:$0xff]
  %v42 = vld [vmem:[%s5 + $0x90] sm:$0xff]
  %v43 = vld [vmem:[%s5 + $0x98] sm:$0xff]
  %v44 = vld [vmem:[%s5 + $0xa0] sm:$0xff]
  %v45 = vld [vmem:[%s2] sm:$0x1]
  %v46 = vld [vmem:[%s0] sm:$0xff]
  %v47 = vld [vmem:[%s0 + $0x8] sm:$0xff]
  %v48 = vld [vmem:[%s0 + $0x10] sm:$0xff]
  %v49 = vld [vmem:[%s0 + $0x18] sm:$0xff]
  %v50 = vld [vmem:[%s0 + $0x20] sm:$0xff]
  %v51 = vld [vmem:[%s0 + $0x28] sm:$0xff]
  %v52 = vld [vmem:[%s0 + $0x30] sm:$0xff]
  %v53 = vld [vmem:[%s0 + $0x38] sm:$0xff]
  %v54 = vld [vmem:[%s0 + $0x40] sm:$0xff]
  %v55 = vld [vmem:[%s0 + $0x48] sm:$0xff]
  %v56 = vld [vmem:[%s0 + $0x50] sm:$0xff]
  %v57 = vld [vmem:[%s0 + $0x58] sm:$0xff]
  %v58 = vld [vmem:[%s0 + $0x60] sm:$0xff]
  %v59 = vld [vmem:[%s0 + $0x68] sm:$0xff]
  %v60 = vld [vmem:[%s0 + $0x70] sm:$0xff]
  %v61 = vld [vmem:[%s0 + $0x78] sm:$0xff]
  %v62 = vld [vmem:[%s0 + $0x80] sm:$0xff]
  %v63 = vld [vmem:[%s0 + $0x88] sm:$0xff]
  %v64 = vld [vmem:[%s0 + $0x90] sm:$0xff]
  %v65 = vld [vmem:[%s0 + $0x98] sm:$0xff]
  %v66 = vld [vmem:[%s0 + $0xa0] sm:$0xff]
  %v67 = vpack.c.bf16 %v47, %v46
  %v68 = vpack.c.bf16 %v49, %v48
  %v69 = vpack.c.bf16 %v51, %v50
  %v70 = vpack.c.bf16 %v53, %v52
  %v71 = vpack.c.bf16 %v55, %v54
  %v72 = vpack.c.bf16 %v57, %v56
  %v73 = vpack.c.bf16 %v59, %v58
  %v74 = vpack.c.bf16 %v61, %v60
  %v75 = vpack.c.bf16 %v63, %v62
  %v76 = vpack.c.bf16 %v65, %v64
  %v77 = vpack.c.bf16 %v66, %v66
  %v78 = vld [vmem:[%s1] sm:$0xf]
  %v79 = vld [vmem:[%s1 + $0x4] sm:$0xf]
  %v80 = vld [vmem:[%s1 + $0x8] sm:$0xf]
  %v81 = vld [vmem:[%s1 + $0xc] sm:$0xf]
  %v82 = vld [vmem:[%s1 + $0x10] sm:$0xf]
  %v83 = vld [vmem:[%s1 + $0x14] sm:$0xf]
  %v84 = vld [vmem:[%s1 + $0x18] sm:$0xf]
  %v85 = vld [vmem:[%s1 + $0x1c] sm:$0xf]
  %v86 = vld [vmem:[%s1 + $0x20] sm:$0xf]
  %v87 = vld [vmem:[%s1 + $0x24] sm:$0xf]
  %v88 = vld [vmem:[%s1 + $0x28] sm:$0xf]
  %v89 = vld [vmem:[%s1 + $0x2c] sm:$0xf]
  %v90 = vld [vmem:[%s1 + $0x30] sm:$0xf]
  %v91 = vld [vmem:[%s1 + $0x34] sm:$0xf]
  %v92 = vld [vmem:[%s1 + $0x38] sm:$0xf]
  %v93 = vld [vmem:[%s1 + $0x3c] sm:$0xf]
  %v94 = vld [vmem:[%s0 + $0x1] sm:$0xff]
  %v95 = vld [vmem:[%s0 + $0x9] sm:$0xff]
  %v96 = vld [vmem:[%s0 + $0x11] sm:$0xff]
  %v97 = vld [vmem:[%s0 + $0x19] sm:$0xff]
  %v98 = vld [vmem:[%s0 + $0x21] sm:$0xff]
  %v99 = vld [vmem:[%s0 + $0x29] sm:$0xff]
  %v100 = vld [vmem:[%s0 + $0x31] sm:$0xff]
  %v101 = vld [vmem:[%s0 + $0x39] sm:$0xff]
  %v102 = vld [vmem:[%s0 + $0x41] sm:$0xff]
  %v103 = vld [vmem:[%s0 + $0x49] sm:$0xff]
  %v104 = vld [vmem:[%s0 + $0x51] sm:$0xff]
  %v105 = vld [vmem:[%s0 + $0x59] sm:$0xff]
  %v106 = vld [vmem:[%s0 + $0x61] sm:$0xff]
  %v107 = vld [vmem:[%s0 + $0x69] sm:$0xff]
  %v108 = vld [vmem:[%s0 + $0x71] sm:$0xff]
  %v109 = vld [vmem:[%s0 + $0x79] sm:$0xff]
  %v110 = vld [vmem:[%s0 + $0x81] sm:$0xff]
  %v111 = vld [vmem:[%s0 + $0x89] sm:$0xff]
  %v112 = vld [vmem:[%s0 + $0x91] sm:$0xff]
  %v113 = vld [vmem:[%s0 + $0x99] sm:$0xff]
  %v114 = vld [vmem:[%s0 + $0xa1] sm:$0xff]
  %v115 = vpack.c.bf16 %v95, %v94
  %v116 = vpack.c.bf16 %v97, %v96
  %v117 = vpack.c.bf16 %v99, %v98
  %v118 = vpack.c.bf16 %v101, %v100
  %v119 = vpack.c.bf16 %v103, %v102
  %v120 = vpack.c.bf16 %v105, %v104
  %v121 = vpack.c.bf16 %v107, %v106
  %v122 = vpack.c.bf16 %v109, %v108
  %v123 = vpack.c.bf16 %v111, %v110
  %v124 = vpack.c.bf16 %v113, %v112
  %v125 = vpack.c.bf16 %v114, %v114
  %s126 = scalar_lea.vmem %s1, 64
  %v127 = vld [vmem:[%s126] sm:$0xf]
  %v128 = vld [vmem:[%s126 + $0x4] sm:$0xf]
  %v129 = vld [vmem:[%s126 + $0x8] sm:$0xf]
  %v130 = vld [vmem:[%s126 + $0xc] sm:$0xf]
  %v131 = vld [vmem:[%s126 + $0x10] sm:$0xf]
  %v132 = vld [vmem:[%s126 + $0x14] sm:$0xf]
  %v133 = vld [vmem:[%s126 + $0x18] sm:$0xf]
  %v134 = vld [vmem:[%s126 + $0x1c] sm:$0xf]
  %v135 = vld [vmem:[%s126 + $0x20] sm:$0xf]
  %v136 = vld [vmem:[%s126 + $0x24] sm:$0xf]
  %v137 = vld [vmem:[%s126 + $0x28] sm:$0xf]
  %v138 = vld [vmem:[%s126 + $0x2c] sm:$0xf]
  %v139 = vld [vmem:[%s126 + $0x30] sm:$0xf]
  %v140 = vld [vmem:[%s126 + $0x34] sm:$0xf]
  %v141 = vld [vmem:[%s126 + $0x38] sm:$0xf]
  %v142 = vld [vmem:[%s126 + $0x3c] sm:$0xf]
  %v159 = vunpack.c.l.b16 %v127
  %v160 = vunpack.c.l.b16 %v128
  %v161 = vunpack.c.l.b16 %v129
  %v162 = vunpack.c.l.b16 %v130
  %v163 = vunpack.c.l.b16 %v131
  %v164 = vunpack.c.l.b16 %v132
  %v165 = vunpack.c.l.b16 %v133
  %v166 = vunpack.c.l.b16 %v134
  %v167 = vunpack.c.l.b16 %v135
  %v168 = vunpack.c.l.b16 %v136
  %v169 = vunpack.c.l.b16 %v137
  %v170 = vunpack.c.l.b16 %v138
  %v171 = vunpack.c.l.b16 %v139
  %v172 = vunpack.c.l.b16 %v140
  %v173 = vunpack.c.l.b16 %v141
  %v174 = vunpack.c.l.b16 %v142
  %v175 = vpack.c.b16 %v160, %v159
  %v176 = vpack.c.b16 %v162, %v161
  %v177 = vpack.c.b16 %v164, %v163
  %v178 = vpack.c.b16 %v166, %v165
  %v179 = vpack.c.b16 %v168, %v167
  %v180 = vpack.c.b16 %v170, %v169
  %v181 = vpack.c.b16 %v172, %v171
  %v182 = vpack.c.b16 %v174, %v173
  %191 = vmatprep.subr.bf16.mxu0 0
  %192 = vmatpush1.bf16.msra.mxu0 %v175
  %193 = vmatprep.subr.bf16.mxu0 0
  %194 = vmatpush1.bf16.msra.mxu0 %v176
  %195 = vmatprep.subr.bf16.mxu0 0
  %196 = vmatpush1.bf16.msra.mxu0 %v177
  %197 = vmatprep.subr.bf16.mxu0 0
  %198 = vmatpush1.bf16.msra.mxu0 %v178
  %199 = vmatprep.subr.bf16.mxu0 0
  %200 = vmatpush1.bf16.msra.mxu0 %v179
  %201 = vmatprep.subr.bf16.mxu0 0
  %202 = vmatpush1.bf16.msra.mxu0 %v180
  %203 = vmatprep.subr.bf16.mxu0 0
  %204 = vmatpush1.bf16.msra.mxu0 %v181
  %205 = vmatprep.subr.bf16.mxu0 0
  %206 = vmatpush1.bf16.msra.mxu0 %v182
  %207 = vmatprep.subr.bf16.mxu0 0
  %208 = vmatpush1.bf16.msra.mxu0 0
  %209 = vmatprep.subr.bf16.mxu0 0
  %210 = vmatpush1.bf16.msra.mxu0 0
  %211 = vmatprep.subr.bf16.mxu0 0
  %212 = vmatpush1.bf16.msra.mxu0 0
  %213 = vmatprep.subr.bf16.mxu0 0
  %214 = vmatpush1.bf16.msra.mxu0 0
  %215 = vmatprep.subr.bf16.mxu0 0
  %216 = vmatpush1.bf16.msra.mxu0 0
  %217 = vmatprep.subr.bf16.mxu0 0
  %218 = vmatpush1.bf16.msra.mxu0 0
  %219 = vmatprep.subr.bf16.mxu0 0
  %220 = vmatpush1.bf16.msra.mxu0 0
  %221 = vmatprep.subr.bf16.mxu0 0
  %222 = vmatpush1.bf16.msra.mxu0 0
  %223 = vmatprep.mubr.bf16.mxu0 0
  %224 = vmatmul.mubr.bf16.gmra.mrb[0].mxu0 %v115
  %v225 = vpop.f32.mrb[0].mxu0
  %v226 = vadd.f32 0.0, %v225
  %v227 = vpop.f32.mrb[0].mxu0
  %v228 = vpop.f32.mrb[0].mxu0
  %v229 = vadd.f32 0.0, %v228
  %v230 = vpop.f32.mrb[0].mxu0
  %231 = vmatprep.mubr.bf16.mxu0 0
  %232 = vmatmul.mubr.bf16.gmra.mrb[0].mxu0 %v116
  %v233 = vpop.f32.mrb[0].mxu0
  %v234 = vadd.f32 0.0, %v233
  %v235 = vpop.f32.mrb[0].mxu0
  %v236 = vpop.f32.mrb[0].mxu0
  %v237 = vadd.f32 0.0, %v236
  %v238 = vpop.f32.mrb[0].mxu0
  %239 = vmatprep.mubr.bf16.mxu0 0
  %240 = vmatmul.mubr.bf16.gmra.mrb[0].mxu0 %v117
  %v241 = vpop.f32.mrb[0].mxu0
  %v242 = vadd.f32 0.0, %v241
  %v243 = vpop.f32.mrb[0].mxu0
  %v244 = vpop.f32.mrb[0].mxu0
  %v245 = vadd.f32 0.0, %v244
  %v246 = vpop.f32.mrb[0].mxu0
  %247 = vmatprep.mubr.bf16.mxu0 0
  %248 = vmatmul.mubr.bf16.gmra.mrb[0].mxu0 %v118
  %v249 = vpop.f32.mrb[0].mxu0
  %v250 = vadd.f32 0.0, %v249
  %v251 = vpop.f32.mrb[0].mxu0
  %v252 = vpop.f32.mrb[0].mxu0
  %v253 = vadd.f32 0.0, %v252
  %v254 = vpop.f32.mrb[0].mxu0
  %255 = vmatprep.mubr.bf16.mxu0 0
  %256 = vmatmul.mubr.bf16.gmra.mrb[0].mxu0 %v119
  %v257 = vpop.f32.mrb[0].mxu0
  %v258 = vadd.f32 0.0, %v257
  %v259 = vpop.f32.mrb[0].mxu0
  %v260 = vpop.f32.mrb[0].mxu0
  %v261 = vadd.f32 0.0, %v260
  %v262 = vpop.f32.mrb[0].mxu0
  %263 = vmatprep.mubr.bf16.mxu0 0
  %264 = vmatmul.mubr.bf16.gmra.mrb[0].mxu0 %v120
  %v265 = vpop.f32.mrb[0].mxu0
  %v266 = vadd.f32 0.0, %v265
  %v267 = vpop.f32.mrb[0].mxu0
  %v268 = vpop.f32.mrb[0].mxu0
  %v269 = vadd.f32 0.0, %v268
  %v270 = vpop.f32.mrb[0].mxu0
  %271 = vmatprep.mubr.bf16.mxu0 0
  %272 = vmatmul.mubr.bf16.gmra.mrb[0].mxu0 %v121
  %v273 = vpop.f32.mrb[0].mxu0
  %v274 = vadd.f32 0.0, %v273
  %v275 = vpop.f32.mrb[0].mxu0
  %v276 = vpop.f32.mrb[0].mxu0
  %v277 = vadd.f32 0.0, %v276
  %v278 = vpop.f32.mrb[0].mxu0
  %279 = vmatprep.mubr.bf16.mxu0 0
  %280 = vmatmul.mubr.bf16.gmra.mrb[0].mxu0 %v122
  %v281 = vpop.f32.mrb[0].mxu0
  %v282 = vadd.f32 0.0, %v281
  %v283 = vpop.f32.mrb[0].mxu0
  %v284 = vpop.f32.mrb[0].mxu0
  %v285 = vadd.f32 0.0, %v284
  %v286 = vpop.f32.mrb[0].mxu0
  %287 = vmatprep.mubr.bf16.mxu0 0
  %288 = vmatmul.mubr.bf16.gmra.mrb[0].mxu0 %v123
  %v289 = vpop.f32.mrb[0].mxu0
  %v290 = vadd.f32 0.0, %v289
  %v291 = vpop.f32.mrb[0].mxu0
  %v292 = vpop.f32.mrb[0].mxu0
  %v293 = vadd.f32 0.0, %v292
  %v294 = vpop.f32.mrb[0].mxu0
  %295 = vmatprep.mubr.bf16.mxu0 0
  %296 = vmatmul.mubr.bf16.gmra.mrb[0].mxu0 %v124
  %v297 = vpop.f32.mrb[0].mxu0
  %v298 = vadd.f32 0.0, %v297
  %v299 = vpop.f32.mrb[0].mxu0
  %v300 = vpop.f32.mrb[0].mxu0
  %v301 = vadd.f32 0.0, %v300
  %v302 = vpop.f32.mrb[0].mxu0
  %303 = vmatprep.mubr.bf16.mxu0 0
  %304 = vmatmul.mubr.bf16.gmra.mrb[0].mxu0 %v125
  %v305 = vpop.f32.mrb[0].mxu0
  %v306 = vadd.f32 0.0, %v305
  %v307 = vpop.f32.mrb[0].mxu0
  %v308 = vpop.f32.mrb[0].mxu0
  %v309 = vpop.f32.mrb[0].mxu0
  %310 = vdwg.mxu0
  %v327 = vunpack.c.l.b16 %v78
  %v328 = vunpack.c.l.b16 %v79
  %v329 = vunpack.c.l.b16 %v80
  %v330 = vunpack.c.l.b16 %v81
  %v331 = vunpack.c.l.b16 %v82
  %v332 = vunpack.c.l.b16 %v83
  %v333 = vunpack.c.l.b16 %v84
  %v334 = vunpack.c.l.b16 %v85
  %v335 = vunpack.c.l.b16 %v86
  %v336 = vunpack.c.l.b16 %v87
  %v337 = vunpack.c.l.b16 %v88
  %v338 = vunpack.c.l.b16 %v89
  %v339 = vunpack.c.l.b16 %v90
  %v340 = vunpack.c.l.b16 %v91
  %v341 = vunpack.c.l.b16 %v92
  %v342 = vunpack.c.l.b16 %v93
  %v343 = vpack.c.b16 %v328, %v327
  %v344 = vpack.c.b16 %v330, %v329
  %v345 = vpack.c.b16 %v332, %v331
  %v346 = vpack.c.b16 %v334, %v333
  %v347 = vpack.c.b16 %v336, %v335
  %v348 = vpack.c.b16 %v338, %v337
  %v349 = vpack.c.b16 %v340, %v339
  %v350 = vpack.c.b16 %v342, %v341
  %359 = vmatprep.subr.bf16.mxu0 0
  %360 = vmatpush1.bf16.msra.mxu0 %v343
  %361 = vmatprep.subr.bf16.mxu0 0
  %362 = vmatpush1.bf16.msra.mxu0 %v344
  %363 = vmatprep.subr.bf16.mxu0 0
  %364 = vmatpush1.bf16.msra.mxu0 %v345
  %365 = vmatprep.subr.bf16.mxu0 0
  %366 = vmatpush1.bf16.msra.mxu0 %v346
  %367 = vmatprep.subr.bf16.mxu0 0
  %368 = vmatpush1.bf16.msra.mxu0 %v347
  %369 = vmatprep.subr.bf16.mxu0 0
  %370 = vmatpush1.bf16.msra.mxu0 %v348
  %371 = vmatprep.subr.bf16.mxu0 0
  %372 = vmatpush1.bf16.msra.mxu0 %v349
  %373 = vmatprep.subr.bf16.mxu0 0
  %374 = vmatpush1.bf16.msra.mxu0 %v350
  %375 = vmatprep.subr.bf16.mxu0 0
  %376 = vmatpush1.bf16.msra.mxu0 0
  %377 = vmatprep.subr.bf16.mxu0 0
  %378 = vmatpush1.bf16.msra.mxu0 0
  %379 = vmatprep.subr.bf16.mxu0 0
  %380 = vmatpush1.bf16.msra.mxu0 0
  %381 = vmatprep.subr.bf16.mxu0 0
  %382 = vmatpush1.bf16.msra.mxu0 0
  %383 = vmatprep.subr.bf16.mxu0 0
  %384 = vmatpush1.bf16.msra.mxu0 0
  %385 = vmatprep.subr.bf16.mxu0 0
  %386 = vmatpush1.bf16.msra.mxu0 0
  %387 = vmatprep.subr.bf16.mxu0 0
  %388 = vmatpush1.bf16.msra.mxu0 0
  %389 = vmatprep.subr.bf16.mxu0 0
  %390 = vmatpush1.bf16.msra.mxu0 0
  %391 = vmatprep.mubr.bf16.mxu0 0
  %392 = vmatmul.mubr.bf16.gmra.mrb[0].mxu0 %v67
  %v393 = vpop.f32.mrb[0].mxu0
  %v394 = vadd.f32 %v226, %v393
  %v395 = vpop.f32.mrb[0].mxu0
  %v396 = vpop.f32.mrb[0].mxu0
  %v397 = vadd.f32 %v229, %v396
  %v398 = vpop.f32.mrb[0].mxu0
  %399 = vmatprep.mubr.bf16.mxu0 0
  %400 = vmatmul.mubr.bf16.gmra.mrb[0].mxu0 %v68
  %v401 = vpop.f32.mrb[0].mxu0
  %v402 = vadd.f32 %v234, %v401
  %v403 = vpop.f32.mrb[0].mxu0
  %v404 = vpop.f32.mrb[0].mxu0
  %v405 = vadd.f32 %v237, %v404
  %v406 = vpop.f32.mrb[0].mxu0
  %407 = vmatprep.mubr.bf16.mxu0 0
  %408 = vmatmul.mubr.bf16.gmra.mrb[0].mxu0 %v69
  %v409 = vpop.f32.mrb[0].mxu0
  %v410 = vadd.f32 %v242, %v409
  %v411 = vpop.f32.mrb[0].mxu0
  %v412 = vpop.f32.mrb[0].mxu0
  %v413 = vadd.f32 %v245, %v412
  %v414 = vpop.f32.mrb[0].mxu0
  %415 = vmatprep.mubr.bf16.mxu0 0
  %416 = vmatmul.mubr.bf16.gmra.mrb[0].mxu0 %v70
  %v417 = vpop.f32.mrb[0].mxu0
  %v418 = vadd.f32 %v250, %v417
  %v419 = vpop.f32.mrb[0].mxu0
  %v420 = vpop.f32.mrb[0].mxu0
  %v421 = vadd.f32 %v253, %v420
  %v422 = vpop.f32.mrb[0].mxu0
  %423 = vmatprep.mubr.bf16.mxu0 0
  %424 = vmatmul.mubr.bf16.gmra.mrb[0].mxu0 %v71
  %v425 = vpop.f32.mrb[0].mxu0
  %v426 = vadd.f32 %v258, %v425
  %v427 = vpop.f32.mrb[0].mxu0
  %v428 = vpop.f32.mrb[0].mxu0
  %v429 = vadd.f32 %v261, %v428
  %v430 = vpop.f32.mrb[0].mxu0
  %431 = vmatprep.mubr.bf16.mxu0 0
  %432 = vmatmul.mubr.bf16.gmra.mrb[0].mxu0 %v72
  %v433 = vpop.f32.mrb[0].mxu0
  %v434 = vadd.f32 %v266, %v433
  %v435 = vpop.f32.mrb[0].mxu0
  %v436 = vpop.f32.mrb[0].mxu0
  %v437 = vadd.f32 %v269, %v436
  %v438 = vpop.f32.mrb[0].mxu0
  %439 = vmatprep.mubr.bf16.mxu0 0
  %440 = vmatmul.mubr.bf16.gmra.mrb[0].mxu0 %v73
  %v441 = vpop.f32.mrb[0].mxu0
  %v442 = vadd.f32 %v274, %v441
  %v443 = vpop.f32.mrb[0].mxu0
  %v444 = vpop.f32.mrb[0].mxu0
  %v445 = vadd.f32 %v277, %v444
  %v446 = vpop.f32.mrb[0].mxu0
  %447 = vmatprep.mubr.bf16.mxu0 0
  %448 = vmatmul.mubr.bf16.gmra.mrb[0].mxu0 %v74
  %v449 = vpop.f32.mrb[0].mxu0
  %v450 = vadd.f32 %v282, %v449
  %v451 = vpop.f32.mrb[0].mxu0
  %v452 = vpop.f32.mrb[0].mxu0
  %v453 = vadd.f32 %v285, %v452
  %v454 = vpop.f32.mrb[0].mxu0
  %455 = vmatprep.mubr.bf16.mxu0 0
  %456 = vmatmul.mubr.bf16.gmra.mrb[0].mxu0 %v75
  %v457 = vpop.f32.mrb[0].mxu0
  %v458 = vadd.f32 %v290, %v457
  %v459 = vpop.f32.mrb[0].mxu0
  %v460 = vpop.f32.mrb[0].mxu0
  %v461 = vadd.f32 %v293, %v460
  %v462 = vpop.f32.mrb[0].mxu0
  %463 = vmatprep.mubr.bf16.mxu0 0
  %464 = vmatmul.mubr.bf16.gmra.mrb[0].mxu0 %v76
  %v465 = vpop.f32.mrb[0].mxu0
  %v466 = vadd.f32 %v298, %v465
  %v467 = vpop.f32.mrb[0].mxu0
  %v468 = vpop.f32.mrb[0].mxu0
  %v469 = vadd.f32 %v301, %v468
  %v470 = vpop.f32.mrb[0].mxu0
  %471 = vmatprep.mubr.bf16.mxu0 0
  %472 = vmatmul.mubr.bf16.gmra.mrb[0].mxu0 %v77
  %v473 = vpop.f32.mrb[0].mxu0
  %v474 = vadd.f32 %v306, %v473
  %v475 = vpop.f32.mrb[0].mxu0
  %v476 = vpop.f32.mrb[0].mxu0
  %v477 = vpop.f32.mrb[0].mxu0
  %478 = vdwg.mxu0
  %v479 = vld [vmem:[%s0 + $0x2] sm:$0xff]
  %v480 = vld [vmem:[%s0 + $0xa] sm:$0xff]
  %v481 = vld [vmem:[%s0 + $0x12] sm:$0xff]
  %v482 = vld [vmem:[%s0 + $0x1a] sm:$0xff]
  %v483 = vld [vmem:[%s0 + $0x22] sm:$0xff]
  %v484 = vld [vmem:[%s0 + $0x2a] sm:$0xff]
  %v485 = vld [vmem:[%s0 + $0x32] sm:$0xff]
  %v486 = vld [vmem:[%s0 + $0x3a] sm:$0xff]
  %v487 = vld [vmem:[%s0 + $0x42] sm:$0xff]
  %v488 = vld [vmem:[%s0 + $0x4a] sm:$0xff]
  %v489 = vld [vmem:[%s0 + $0x52] sm:$0xff]
  %v490 = vld [vmem:[%s0 + $0x5a] sm:$0xff]
  %v491 = vld [vmem:[%s0 + $0x62] sm:$0xff]
  %v492 = vld [vmem:[%s0 + $0x6a] sm:$0xff]
  %v493 = vld [vmem:[%s0 + $0x72] sm:$0xff]
  %v494 = vld [vmem:[%s0 + $0x7a] sm:$0xff]
  %v495 = vld [vmem:[%s0 + $0x82] sm:$0xff]
  %v496 = vld [vmem:[%s0 + $0x8a] sm:$0xff]
  %v497 = vld [vmem:[%s0 + $0x92] sm:$0xff]
  %v498 = vld [vmem:[%s0 + $0x9a] sm:$0xff]
  %v499 = vld [vmem:[%s0 + $0xa2] sm:$0xff]
  %v500 = vpack.c.bf16 %v480, %v479
  %v501 = vpack.c.bf16 %v482, %v481
  %v502 = vpack.c.bf16 %v484, %v483
  %v503 = vpack.c.bf16 %v486, %v485
  %v504 = vpack.c.bf16 %v488, %v487
  %v505 = vpack.c.bf16 %v490, %v489
  %v506 = vpack.c.bf16 %v492, %v491
  %v507 = vpack.c.bf16 %v494, %v493
  %v508 = vpack.c.bf16 %v496, %v495
  %v509 = vpack.c.bf16 %v498, %v497
  %v510 = vpack.c.bf16 %v499, %v499
  %s511 = scalar_lea.vmem %s1, 128
  %v512 = vld [vmem:[%s511] sm:$0xf]
  %v513 = vld [vmem:[%s511 + $0x4] sm:$0xf]
  %v514 = vld [vmem:[%s511 + $0x8] sm:$0xf]
  %v515 = vld [vmem:[%s511 + $0xc] sm:$0xf]
  %v516 = vld [vmem:[%s511 + $0x10] sm:$0xf]
  %v517 = vld [vmem:[%s511 + $0x14] sm:$0xf]
  %v518 = vld [vmem:[%s511 + $0x18] sm:$0xf]
  %v519 = vld [vmem:[%s511 + $0x1c] sm:$0xf]
  %v520 = vld [vmem:[%s511 + $0x20] sm:$0xf]
  %v521 = vld [vmem:[%s511 + $0x24] sm:$0xf]
  %v522 = vld [vmem:[%s511 + $0x28] sm:$0xf]
  %v523 = vld [vmem:[%s511 + $0x2c] sm:$0xf]
  %v524 = vld [vmem:[%s511 + $0x30] sm:$0xf]
  %v525 = vld [vmem:[%s511 + $0x34] sm:$0xf]
  %v526 = vld [vmem:[%s511 + $0x38] sm:$0xf]
  %v527 = vld [vmem:[%s511 + $0x3c] sm:$0xf]
  %v544 = vunpack.c.l.b16 %v512
  %v545 = vunpack.c.l.b16 %v513
  %v546 = vunpack.c.l.b16 %v514
  %v547 = vunpack.c.l.b16 %v515
  %v548 = vunpack.c.l.b16 %v516
  %v549 = vunpack.c.l.b16 %v517
  %v550 = vunpack.c.l.b16 %v518
  %v551 = vunpack.c.l.b16 %v519
  %v552 = vunpack.c.l.b16 %v520
  %v553 = vunpack.c.l.b16 %v521
  %v554 = vunpack.c.l.b16 %v522
  %v555 = vunpack.c.l.b16 %v523
  %v556 = vunpack.c.l.b16 %v524
  %v557 = vunpack.c.l.b16 %v525
  %v558 = vunpack.c.l.b16 %v526
  %v559 = vunpack.c.l.b16 %v527
  %v560 = vpack.c.b16 %v545, %v544
  %v561 = vpack.c.b16 %v547, %v546
  %v562 = vpack.c.b16 %v549, %v548
  %v563 = vpack.c.b16 %v551, %v550
  %v564 = vpack.c.b16 %v553, %v552
  %v565 = vpack.c.b16 %v555, %v554
  %v566 = vpack.c.b16 %v557, %v556
  %v567 = vpack.c.b16 %v559, %v558
  %576 = vmatprep.subr.bf16.mxu0 0
  %577 = vmatpush1.bf16.msra.mxu0 %v560
  %578 = vmatprep.subr.bf16.mxu0 0
  %579 = vmatpush1.bf16.msra.mxu0 %v561
  %580 = vmatprep.subr.bf16.mxu0 0
  %581 = vmatpush1.bf16.msra.mxu0 %v562
  %582 = vmatprep.subr.bf16.mxu0 0
  %583 = vmatpush1.bf16.msra.mxu0 %v563
  %584 = vmatprep.subr.bf16.mxu0 0
  %585 = vmatpush1.bf16.msra.mxu0 %v564
  %586 = vmatprep.subr.bf16.mxu0 0
  %587 = vmatpush1.bf16.msra.mxu0 %v565
  %588 = vmatprep.subr.bf16.mxu0 0
  %589 = vmatpush1.bf16.msra.mxu0 %v566
  %590 = vmatprep.subr.bf16.mxu0 0
  %591 = vmatpush1.bf16.msra.mxu0 %v567
  %592 = vmatprep.subr.bf16.mxu0 0
  %593 = vmatpush1.bf16.msra.mxu0 0
  %594 = vmatprep.subr.bf16.mxu0 0
  %595 = vmatpush1.bf16.msra.mxu0 0
  %596 = vmatprep.subr.bf16.mxu0 0
  %597 = vmatpush1.bf16.msra.mxu0 0
  %598 = vmatprep.subr.bf16.mxu0 0
  %599 = vmatpush1.bf16.msra.mxu0 0
  %600 = vmatprep.subr.bf16.mxu0 0
  %601 = vmatpush1.bf16.msra.mxu0 0
  %602 = vmatprep.subr.bf16.mxu0 0
  %603 = vmatpush1.bf16.msra.mxu0 0
  %604 = vmatprep.subr.bf16.mxu0 0
  %605 = vmatpush1.bf16.msra.mxu0 0
  %606 = vmatprep.subr.bf16.mxu0 0
  %607 = vmatpush1.bf16.msra.mxu0 0
  %608 = vmatprep.mubr.bf16.mxu0 0
  %609 = vmatmul.mubr.bf16.gmra.mrb[0].mxu0 %v500
  %v610 = vpop.f32.mrb[0].mxu0
  %v611 = vadd.f32 0.0, %v610
  %v612 = vpop.f32.mrb[0].mxu0
  %v613 = vpop.f32.mrb[0].mxu0
  %v614 = vadd.f32 0.0, %v613
  %v615 = vpop.f32.mrb[0].mxu0
  %616 = vmatprep.mubr.bf16.mxu0 0
  %617 = vmatmul.mubr.bf16.gmra.mrb[0].mxu0 %v501
  %v618 = vpop.f32.mrb[0].mxu0
  %v619 = vadd.f32 0.0, %v618
  %v620 = vpop.f32.mrb[0].mxu0
  %v621 = vpop.f32.mrb[0].mxu0
  %v622 = vadd.f32 0.0, %v621
  %v623 = vpop.f32.mrb[0].mxu0
  %624 = vmatprep.mubr.bf16.mxu0 0
  %625 = vmatmul.mubr.bf16.gmra.mrb[0].mxu0 %v502
  %v626 = vpop.f32.mrb[0].mxu0
  %v627 = vadd.f32 0.0, %v626
  %v628 = vpop.f32.mrb[0].mxu0
  %v629 = vpop.f32.mrb[0].mxu0
  %v630 = vadd.f32 0.0, %v629
  %v631 = vpop.f32.mrb[0].mxu0
  %632 = vmatprep.mubr.bf16.mxu0 0
  %633 = vmatmul.mubr.bf16.gmra.mrb[0].mxu0 %v503
  %v634 = vpop.f32.mrb[0].mxu0
  %v635 = vadd.f32 0.0, %v634
  %v636 = vpop.f32.mrb[0].mxu0
  %v637 = vpop.f32.mrb[0].mxu0
  %v638 = vadd.f32 0.0, %v637
  %v639 = vpop.f32.mrb[0].mxu0
  %640 = vmatprep.mubr.bf16.mxu0 0
  %641 = vmatmul.mubr.bf16.gmra.mrb[0].mxu0 %v504
  %v642 = vpop.f32.mrb[0].mxu0
  %v643 = vadd.f32 0.0, %v642
  %v644 = vpop.f32.mrb[0].mxu0
  %v645 = vpop.f32.mrb[0].mxu0
  %v646 = vadd.f32 0.0, %v645
  %v647 = vpop.f32.mrb[0].mxu0
  %648 = vmatprep.mubr.bf16.mxu0 0
  %649 = vmatmul.mubr.bf16.gmra.mrb[0].mxu0 %v505
  %v650 = vpop.f32.mrb[0].mxu0
  %v651 = vadd.f32 0.0, %v650
  %v652 = vpop.f32.mrb[0].mxu0
  %v653 = vpop.f32.mrb[0].mxu0
  %v654 = vadd.f32 0.0, %v653
  %v655 = vpop.f32.mrb[0].mxu0
  %656 = vmatprep.mubr.bf16.mxu0 0
  %657 = vmatmul.mubr.bf16.gmra.mrb[0].mxu0 %v506
  %v658 = vpop.f32.mrb[0].mxu0
  %v659 = vadd.f32 0.0, %v658
  %v660 = vpop.f32.mrb[0].mxu0
  %v661 = vpop.f32.mrb[0].mxu0
  %v662 = vadd.f32 0.0, %v661
  %v663 = vpop.f32.mrb[0].mxu0
  %664 = vmatprep.mubr.bf16.mxu0 0
  %665 = vmatmul.mubr.bf16.gmra.mrb[0].mxu0 %v507
  %v666 = vpop.f32.mrb[0].mxu0
  %v667 = vadd.f32 0.0, %v666
  %v668 = vpop.f32.mrb[0].mxu0
  %v669 = vpop.f32.mrb[0].mxu0
  %v670 = vadd.f32 0.0, %v669
  %v671 = vpop.f32.mrb[0].mxu0
  %672 = vmatprep.mubr.bf16.mxu0 0
  %673 = vmatmul.mubr.bf16.gmra.mrb[0].mxu0 %v508
  %v674 = vpop.f32.mrb[0].mxu0
  %v675 = vadd.f32 0.0, %v674
  %v676 = vpop.f32.mrb[0].mxu0
  %v677 = vpop.f32.mrb[0].mxu0
  %v678 = vadd.f32 0.0, %v677
  %v679 = vpop.f32.mrb[0].mxu0
  %680 = vmatprep.mubr.bf16.mxu0 0
  %681 = vmatmul.mubr.bf16.gmra.mrb[0].mxu0 %v509
  %v682 = vpop.f32.mrb[0].mxu0
  %v683 = vadd.f32 0.0, %v682
  %v684 = vpop.f32.mrb[0].mxu0
  %v685 = vpop.f32.mrb[0].mxu0
  %v686 = vadd.f32 0.0, %v685
  %v687 = vpop.f32.mrb[0].mxu0
  %688 = vmatprep.mubr.bf16.mxu0 0
  %689 = vmatmul.mubr.bf16.gmra.mrb[0].mxu0 %v510
  %v690 = vpop.f32.mrb[0].mxu0
  %v691 = vadd.f32 0.0, %v690
  %v692 = vpop.f32.mrb[0].mxu0
  %v693 = vpop.f32.mrb[0].mxu0
  %v694 = vpop.f32.mrb[0].mxu0
  %695 = vdwg.mxu0
  %v696 = vadd.f32 %v394, %v611
  %v697 = vadd.f32 %v397, %v614
  %v698 = vadd.f32 %v402, %v619
  %v699 = vadd.f32 %v405, %v622
  %v700 = vadd.f32 %v410, %v627
  %v701 = vadd.f32 %v413, %v630
  %v702 = vadd.f32 %v418, %v635
  %v703 = vadd.f32 %v421, %v638
  %v704 = vadd.f32 %v426, %v643
  %v705 = vadd.f32 %v429, %v646
  %v706 = vadd.f32 %v434, %v651
  %v707 = vadd.f32 %v437, %v654
  %v708 = vadd.f32 %v442, %v659
  %v709 = vadd.f32 %v445, %v662
  %v710 = vadd.f32 %v450, %v667
  %v711 = vadd.f32 %v453, %v670
  %v712 = vadd.f32 %v458, %v675
  %v713 = vadd.f32 %v461, %v678
  %v714 = vadd.f32 %v466, %v683
  %v715 = vadd.f32 %v469, %v686
  %v716 = vadd.f32 %v474, %v691
  %v717 = vld [vmem:[%s0 + $0xe] sm:$0xff]
  %v718 = vld [vmem:[%s0 + $0x16] sm:$0xff]
  %v719 = vld [vmem:[%s0 + $0x1e] sm:$0xff]
  %v720 = vld [vmem:[%s0 + $0x26] sm:$0xff]
  %v721 = vld [vmem:[%s0 + $0x2e] sm:$0xff]
  %v722 = vld [vmem:[%s0 + $0x36] sm:$0xff]
  %v723 = vld [vmem:[%s0 + $0x3e] sm:$0xff]
  %v724 = vld [vmem:[%s0 + $0x46] sm:$0xff]
  %v725 = vld [vmem:[%s0 + $0x4e] sm:$0xff]
  %v726 = vld [vmem:[%s0 + $0x56] sm:$0xff]
  %v727 = vld [vmem:[%s0 + $0x5e] sm:$0xff]
  %v728 = vld [vmem:[%s0 + $0x66] sm:$0xff]
  %v729 = vld [vmem:[%s0 + $0x6e] sm:$0xff]
  %v730 = vld [vmem:[%s0 + $0x76] sm:$0xff]
  %v731 = vld [vmem:[%s0 + $0x7e] sm:$0xff]
  %v732 = vld [vmem:[%s0 + $0x86] sm:$0xff]
  %v733 = vld [vmem:[%s0 + $0x8e] sm:$0xff]
  %v734 = vld [vmem:[%s0 + $0x96] sm:$0xff]
  %v735 = vld [vmem:[%s0 + $0x9e] sm:$0xff]
  %v736 = vld [vmem:[%s0 + $0xa6] sm:$0xff]
  %v737 = vld [vmem:[%s0 + $0xae] sm:$0xff]
  %v738 = vpack.c.bf16 %v718, %v717
  %v739 = vpack.c.bf16 %v720, %v719
  %v740 = vpack.c.bf16 %v722, %v721
  %v741 = vpack.c.bf16 %v724, %v723
  %v742 = vpack.c.bf16 %v726, %v725
  %v743 = vpack.c.bf16 %v728, %v727
  %v744 = vpack.c.bf16 %v730, %v729
  %v745 = vpack.c.bf16 %v732, %v731
  %v746 = vpack.c.bf16 %v734, %v733
  %v747 = vpack.c.bf16 %v736, %v735
  %v748 = vpack.c.bf16 %v737, %v737
  %s749 = scalar_lea.vmem %s1, 192
  %v750 = vld [vmem:[%s749] sm:$0xf]
  %v751 = vld [vmem:[%s749 + $0x4] sm:$0xf]
  %v752 = vld [vmem:[%s749 + $0x8] sm:$0xf]
  %v753 = vld [vmem:[%s749 + $0xc] sm:$0xf]
  %v754 = vld [vmem:[%s749 + $0x10] sm:$0xf]
  %v755 = vld [vmem:[%s749 + $0x14] sm:$0xf]
  %v756 = vld [vmem:[%s749 + $0x18] sm:$0xf]
  %v757 = vld [vmem:[%s749 + $0x1c] sm:$0xf]
  %v758 = vld [vmem:[%s749 + $0x20] sm:$0xf]
  %v759 = vld [vmem:[%s749 + $0x24] sm:$0xf]
  %v760 = vld [vmem:[%s749 + $0x28] sm:$0xf]
  %v761 = vld [vmem:[%s749 + $0x2c] sm:$0xf]
  %v762 = vld [vmem:[%s749 + $0x30] sm:$0xf]
  %v763 = vld [vmem:[%s749 + $0x34] sm:$0xf]
  %v764 = vld [vmem:[%s749 + $0x38] sm:$0xf]
  %v765 = vld [vmem:[%s749 + $0x3c] sm:$0xf]
  %v782 = vunpack.c.l.b16 %v750
  %v783 = vunpack.c.l.b16 %v751
  %v784 = vunpack.c.l.b16 %v752
  %v785 = vunpack.c.l.b16 %v753
  %v786 = vunpack.c.l.b16 %v754
  %v787 = vunpack.c.l.b16 %v755
  %v788 = vunpack.c.l.b16 %v756
  %v789 = vunpack.c.l.b16 %v757
  %v790 = vunpack.c.l.b16 %v758
  %v791 = vunpack.c.l.b16 %v759
  %v792 = vunpack.c.l.b16 %v760
  %v793 = vunpack.c.l.b16 %v761
  %v794 = vunpack.c.l.b16 %v762
  %v795 = vunpack.c.l.b16 %v763
  %v796 = vunpack.c.l.b16 %v764
  %v797 = vunpack.c.l.b16 %v765
  %v798 = vpack.c.b16 %v783, %v782
  %v799 = vpack.c.b16 %v785, %v784
  %v800 = vpack.c.b16 %v787, %v786
  %v801 = vpack.c.b16 %v789, %v788
  %v802 = vpack.c.b16 %v791, %v790
  %v803 = vpack.c.b16 %v793, %v792
  %v804 = vpack.c.b16 %v795, %v794
  %v805 = vpack.c.b16 %v797, %v796
  %814 = vmatprep.subr.bf16.mxu0 0
  %815 = vmatpush1.bf16.msra.mxu0 %v798
  %816 = vmatprep.subr.bf16.mxu0 0
  %817 = vmatpush1.bf16.msra.mxu0 %v799
  %818 = vmatprep.subr.bf16.mxu0 0
  %819 = vmatpush1.bf16.msra.mxu0 %v800
  %820 = vmatprep.subr.bf16.mxu0 0
  %821 = vmatpush1.bf16.msra.mxu0 %v801
  %822 = vmatprep.subr.bf16.mxu0 0
  %823 = vmatpush1.bf16.msra.mxu0 %v802
  %824 = vmatprep.subr.bf16.mxu0 0
  %825 = vmatpush1.bf16.msra.mxu0 %v803
  %826 = vmatprep.subr.bf16.mxu0 0
  %827 = vmatpush1.bf16.msra.mxu0 %v804
  %828 = vmatprep.subr.bf16.mxu0 0
  %829 = vmatpush1.bf16.msra.mxu0 %v805
  %830 = vmatprep.subr.bf16.mxu0 0
  %831 = vmatpush1.bf16.msra.mxu0 0
  %832 = vmatprep.subr.bf16.mxu0 0
  %833 = vmatpush1.bf16.msra.mxu0 0
  %834 = vmatprep.subr.bf16.mxu0 0
  %835 = vmatpush1.bf16.msra.mxu0 0
  %836 = vmatprep.subr.bf16.mxu0 0
  %837 = vmatpush1.bf16.msra.mxu0 0
  %838 = vmatprep.subr.bf16.mxu0 0
  %839 = vmatpush1.bf16.msra.mxu0 0
  %840 = vmatprep.subr.bf16.mxu0 0
  %841 = vmatpush1.bf16.msra.mxu0 0
  %842 = vmatprep.subr.bf16.mxu0 0
  %843 = vmatpush1.bf16.msra.mxu0 0
  %844 = vmatprep.subr.bf16.mxu0 0
  %845 = vmatpush1.bf16.msra.mxu0 0
  %846 = vmatprep.mubr.bf16.mxu0 0
  %847 = vmatmul.mubr.bf16.gmra.mrb[0].mxu0 %v738
  %v848 = vpop.f32.mrb[0].mxu0
  %v849 = vadd.f32 0.0, %v848
  %v850 = vpop.f32.mrb[0].mxu0
  %v851 = vpop.f32.mrb[0].mxu0
  %v852 = vadd.f32 0.0, %v851
  %v853 = vpop.f32.mrb[0].mxu0
  %854 = vmatprep.mubr.bf16.mxu0 0
  %855 = vmatmul.mubr.bf16.gmra.mrb[0].mxu0 %v739
  %v856 = vpop.f32.mrb[0].mxu0
  %v857 = vadd.f32 0.0, %v856
  %v858 = vpop.f32.mrb[0].mxu0
  %v859 = vpop.f32.mrb[0].mxu0
  %v860 = vadd.f32 0.0, %v859
  %v861 = vpop.f32.mrb[0].mxu0
  %862 = vmatprep.mubr.bf16.mxu0 0
  %863 = vmatmul.mubr.bf16.gmra.mrb[0].mxu0 %v740
  %v864 = vpop.f32.mrb[0].mxu0
  %v865 = vadd.f32 0.0, %v864
  %v866 = vpop.f32.mrb[0].mxu0
  %v867 = vpop.f32.mrb[0].mxu0
  %v868 = vadd.f32 0.0, %v867
  %v869 = vpop.f32.mrb[0].mxu0
  %870 = vmatprep.mubr.bf16.mxu0 0
  %871 = vmatmul.mubr.bf16.gmra.mrb[0].mxu0 %v741
  %v872 = vpop.f32.mrb[0].mxu0
  %v873 = vadd.f32 0.0, %v872
  %v874 = vpop.f32.mrb[0].mxu0
  %v875 = vpop.f32.mrb[0].mxu0
  %v876 = vadd.f32 0.0, %v875
  %v877 = vpop.f32.mrb[0].mxu0
  %878 = vmatprep.mubr.bf16.mxu0 0
  %879 = vmatmul.mubr.bf16.gmra.mrb[0].mxu0 %v742
  %v880 = vpop.f32.mrb[0].mxu0
  %v881 = vadd.f32 0.0, %v880
  %v882 = vpop.f32.mrb[0].mxu0
  %v883 = vpop.f32.mrb[0].mxu0
  %v884 = vadd.f32 0.0, %v883
  %v885 = vpop.f32.mrb[0].mxu0
  %886 = vmatprep.mubr.bf16.mxu0 0
  %887 = vmatmul.mubr.bf16.gmra.mrb[0].mxu0 %v743
  %v888 = vpop.f32.mrb[0].mxu0
  %v889 = vadd.f32 0.0, %v888
  %v890 = vpop.f32.mrb[0].mxu0
  %v891 = vpop.f32.mrb[0].mxu0
  %v892 = vadd.f32 0.0, %v891
  %v893 = vpop.f32.mrb[0].mxu0
  %894 = vmatprep.mubr.bf16.mxu0 0
  %895 = vmatmul.mubr.bf16.gmra.mrb[0].mxu0 %v744
  %v896 = vpop.f32.mrb[0].mxu0
  %v897 = vadd.f32 0.0, %v896
  %v898 = vpop.f32.mrb[0].mxu0
  %v899 = vpop.f32.mrb[0].mxu0
  %v900 = vadd.f32 0.0, %v899
  %v901 = vpop.f32.mrb[0].mxu0
  %902 = vmatprep.mubr.bf16.mxu0 0
  %903 = vmatmul.mubr.bf16.gmra.mrb[0].mxu0 %v745
  %v904 = vpop.f32.mrb[0].mxu0
  %v905 = vadd.f32 0.0, %v904
  %v906 = vpop.f32.mrb[0].mxu0
  %v907 = vpop.f32.mrb[0].mxu0
  %v908 = vadd.f32 0.0, %v907
  %v909 = vpop.f32.mrb[0].mxu0
  %910 = vmatprep.mubr.bf16.mxu0 0
  %911 = vmatmul.mubr.bf16.gmra.mrb[0].mxu0 %v746
  %v912 = vpop.f32.mrb[0].mxu0
  %v913 = vadd.f32 0.0, %v912
  %v914 = vpop.f32.mrb[0].mxu0
  %v915 = vpop.f32.mrb[0].mxu0
  %v916 = vadd.f32 0.0, %v915
  %v917 = vpop.f32.mrb[0].mxu0
  %918 = vmatprep.mubr.bf16.mxu0 0
  %919 = vmatmul.mubr.bf16.gmra.mrb[0].mxu0 %v747
  %v920 = vpop.f32.mrb[0].mxu0
  %v921 = vadd.f32 0.0, %v920
  %v922 = vpop.f32.mrb[0].mxu0
  %v923 = vpop.f32.mrb[0].mxu0
  %v924 = vadd.f32 0.0, %v923
  %v925 = vpop.f32.mrb[0].mxu0
  %926 = vmatprep.mubr.bf16.mxu0 0
  %927 = vmatmul.mubr.bf16.gmra.mrb[0].mxu0 %v748
  %v928 = vpop.f32.mrb[0].mxu0
  %v929 = vadd.f32 0.0, %v928
  %v930 = vpop.f32.mrb[0].mxu0
  %v931 = vpop.f32.mrb[0].mxu0
  %v932 = vpop.f32.mrb[0].mxu0
  %933 = vdwg.mxu0
  %v934 = vadd.f32 %v696, %v849
  %v935 = vadd.f32 %v697, %v852
  %v936 = vadd.f32 %v698, %v857
  %v937 = vadd.f32 %v699, %v860
  %v938 = vadd.f32 %v700, %v865
  %v939 = vadd.f32 %v701, %v868
  %v940 = vadd.f32 %v702, %v873
  %v941 = vadd.f32 %v703, %v876
  %v942 = vadd.f32 %v704, %v881
  %v943 = vadd.f32 %v705, %v884
  %v944 = vadd.f32 %v706, %v889
  %v945 = vadd.f32 %v707, %v892
  %v946 = vadd.f32 %v708, %v897
  %v947 = vadd.f32 %v709, %v900
  %v948 = vadd.f32 %v710, %v905
  %v949 = vadd.f32 %v711, %v908
  %v950 = vadd.f32 %v712, %v913
  %v951 = vadd.f32 %v713, %v916
  %v952 = vadd.f32 %v714, %v921
  %v953 = vadd.f32 %v715, %v924
  %v954 = vadd.f32 %v716, %v929
  %v955 = vld [vmem:[%s0 + $0xf] sm:$0xff]
  %v956 = vld [vmem:[%s0 + $0x17] sm:$0xff]
  %v957 = vld [vmem:[%s0 + $0x1f] sm:$0xff]
  %v958 = vld [vmem:[%s0 + $0x27] sm:$0xff]
  %v959 = vld [vmem:[%s0 + $0x2f] sm:$0xff]
  %v960 = vld [vmem:[%s0 + $0x37] sm:$0xff]
  %v961 = vld [vmem:[%s0 + $0x3f] sm:$0xff]
  %v962 = vld [vmem:[%s0 + $0x47] sm:$0xff]
  %v963 = vld [vmem:[%s0 + $0x4f] sm:$0xff]
  %v964 = vld [vmem:[%s0 + $0x57] sm:$0xff]
  %v965 = vld [vmem:[%s0 + $0x5f] sm:$0xff]
  %v966 = vld [vmem:[%s0 + $0x67] sm:$0xff]
  %v967 = vld [vmem:[%s0 + $0x6f] sm:$0xff]
  %v968 = vld [vmem:[%s0 + $0x77] sm:$0xff]
  %v969 = vld [vmem:[%s0 + $0x7f] sm:$0xff]
  %v970 = vld [vmem:[%s0 + $0x87] sm:$0xff]
  %v971 = vld [vmem:[%s0 + $0x8f] sm:$0xff]
  %v972 = vld [vmem:[%s0 + $0x97] sm:$0xff]
  %v973 = vld [vmem:[%s0 + $0x9f] sm:$0xff]
  %v974 = vld [vmem:[%s0 + $0xa7] sm:$0xff]
  %v975 = vld [vmem:[%s0 + $0xaf] sm:$0xff]
  %v976 = vpack.c.bf16 %v956, %v955
  %v977 = vpack.c.bf16 %v958, %v957
  %v978 = vpack.c.bf16 %v960, %v959
  %v979 = vpack.c.bf16 %v962, %v961
  %v980 = vpack.c.bf16 %v964, %v963
  %v981 = vpack.c.bf16 %v966, %v965
  %v982 = vpack.c.bf16 %v968, %v967
  %v983 = vpack.c.bf16 %v970, %v969
  %v984 = vpack.c.bf16 %v972, %v971
  %v985 = vpack.c.bf16 %v974, %v973
  %v986 = vpack.c.bf16 %v975, %v975
  %s987 = scalar_lea.vmem %s1, 256
  %v988 = vld [vmem:[%s987] sm:$0xf]
  %v989 = vld [vmem:[%s987 + $0x4] sm:$0xf]
  %v990 = vld [vmem:[%s987 + $0x8] sm:$0xf]
  %v991 = vld [vmem:[%s987 + $0xc] sm:$0xf]
  %v992 = vld [vmem:[%s987 + $0x10] sm:$0xf]
  %v993 = vld [vmem:[%s987 + $0x14] sm:$0xf]
  %v994 = vld [vmem:[%s987 + $0x18] sm:$0xf]
  %v995 = vld [vmem:[%s987 + $0x1c] sm:$0xf]
  %v996 = vld [vmem:[%s987 + $0x20] sm:$0xf]
  %v997 = vld [vmem:[%s987 + $0x24] sm:$0xf]
  %v998 = vld [vmem:[%s987 + $0x28] sm:$0xf]
  %v999 = vld [vmem:[%s987 + $0x2c] sm:$0xf]
  %v1000 = vld [vmem:[%s987 + $0x30] sm:$0xf]
  %v1001 = vld [vmem:[%s987 + $0x34] sm:$0xf]
  %v1002 = vld [vmem:[%s987 + $0x38] sm:$0xf]
  %v1003 = vld [vmem:[%s987 + $0x3c] sm:$0xf]
  %v1020 = vunpack.c.l.b16 %v988
  %v1021 = vunpack.c.l.b16 %v989
  %v1022 = vunpack.c.l.b16 %v990
  %v1023 = vunpack.c.l.b16 %v991
  %v1024 = vunpack.c.l.b16 %v992
  %v1025 = vunpack.c.l.b16 %v993
  %v1026 = vunpack.c.l.b16 %v994
  %v1027 = vunpack.c.l.b16 %v995
  %v1028 = vunpack.c.l.b16 %v996
  %v1029 = vunpack.c.l.b16 %v997
  %v1030 = vunpack.c.l.b16 %v998
  %v1031 = vunpack.c.l.b16 %v999
  %v1032 = vunpack.c.l.b16 %v1000
  %v1033 = vunpack.c.l.b16 %v1001
  %v1034 = vunpack.c.l.b16 %v1002
  %v1035 = vunpack.c.l.b16 %v1003
  %v1036 = vpack.c.b16 %v1021, %v1020
  %v1037 = vpack.c.b16 %v1023, %v1022
  %v1038 = vpack.c.b16 %v1025, %v1024
  %v1039 = vpack.c.b16 %v1027, %v1026
  %v1040 = vpack.c.b16 %v1029, %v1028
  %v1041 = vpack.c.b16 %v1031, %v1030
  %v1042 = vpack.c.b16 %v1033, %v1032
  %v1043 = vpack.c.b16 %v1035, %v1034
  %1052 = vmatprep.subr.bf16.mxu0 0
  %1053 = vmatpush1.bf16.msra.mxu0 %v1036
  %1054 = vmatprep.subr.bf16.mxu0 0
  %1055 = vmatpush1.bf16.msra.mxu0 %v1037
  %1056 = vmatprep.subr.bf16.mxu0 0
  %1057 = vmatpush1.bf16.msra.mxu0 %v1038
  %1058 = vmatprep.subr.bf16.mxu0 0
  %1059 = vmatpush1.bf16.msra.mxu0 %v1039
  %1060 = vmatprep.subr.bf16.mxu0 0
  %1061 = vmatpush1.bf16.msra.mxu0 %v1040
  %1062 = vmatprep.subr.bf16.mxu0 0
  %1063 = vmatpush1.bf16.msra.mxu0 %v1041
  %1064 = vmatprep.subr.bf16.mxu0 0
  %1065 = vmatpush1.bf16.msra.mxu0 %v1042
  %1066 = vmatprep.subr.bf16.mxu0 0
  %1067 = vmatpush1.bf16.msra.mxu0 %v1043
  %1068 = vmatprep.subr.bf16.mxu0 0
  %1069 = vmatpush1.bf16.msra.mxu0 0
  %1070 = vmatprep.subr.bf16.mxu0 0
  %1071 = vmatpush1.bf16.msra.mxu0 0
  %1072 = vmatprep.subr.bf16.mxu0 0
  %1073 = vmatpush1.bf16.msra.mxu0 0
  %1074 = vmatprep.subr.bf16.mxu0 0
  %1075 = vmatpush1.bf16.msra.mxu0 0
  %1076 = vmatprep.subr.bf16.mxu0 0
  %1077 = vmatpush1.bf16.msra.mxu0 0
  %1078 = vmatprep.subr.bf16.mxu0 0
  %1079 = vmatpush1.bf16.msra.mxu0 0
  %1080 = vmatprep.subr.bf16.mxu0 0
  %1081 = vmatpush1.bf16.msra.mxu0 0
  %1082 = vmatprep.subr.bf16.mxu0 0
  %1083 = vmatpush1.bf16.msra.mxu0 0
  %1084 = vmatprep.mubr.bf16.mxu0 0
  %1085 = vmatmul.mubr.bf16.gmra.mrb[0].mxu0 %v976
  %v1086 = vpop.f32.mrb[0].mxu0
  %v1087 = vadd.f32 0.0, %v1086
  %v1088 = vpop.f32.mrb[0].mxu0
  %v1089 = vpop.f32.mrb[0].mxu0
  %v1090 = vadd.f32 0.0, %v1089
  %v1091 = vpop.f32.mrb[0].mxu0
  %1092 = vmatprep.mubr.bf16.mxu0 0
  %1093 = vmatmul.mubr.bf16.gmra.mrb[0].mxu0 %v977
  %v1094 = vpop.f32.mrb[0].mxu0
  %v1095 = vadd.f32 0.0, %v1094
  %v1096 = vpop.f32.mrb[0].mxu0
  %v1097 = vpop.f32.mrb[0].mxu0
  %v1098 = vadd.f32 0.0, %v1097
  %v1099 = vpop.f32.mrb[0].mxu0
  %1100 = vmatprep.mubr.bf16.mxu0 0
  %1101 = vmatmul.mubr.bf16.gmra.mrb[0].mxu0 %v978
  %v1102 = vpop.f32.mrb[0].mxu0
  %v1103 = vadd.f32 0.0, %v1102
  %v1104 = vpop.f32.mrb[0].mxu0
  %v1105 = vpop.f32.mrb[0].mxu0
  %v1106 = vadd.f32 0.0, %v1105
  %v1107 = vpop.f32.mrb[0].mxu0
  %1108 = vmatprep.mubr.bf16.mxu0 0
  %1109 = vmatmul.mubr.bf16.gmra.mrb[0].mxu0 %v979
  %v1110 = vpop.f32.mrb[0].mxu0
  %v1111 = vadd.f32 0.0, %v1110
  %v1112 = vpop.f32.mrb[0].mxu0
  %v1113 = vpop.f32.mrb[0].mxu0
  %v1114 = vadd.f32 0.0, %v1113
  %v1115 = vpop.f32.mrb[0].mxu0
  %1116 = vmatprep.mubr.bf16.mxu0 0
  %1117 = vmatmul.mubr.bf16.gmra.mrb[0].mxu0 %v980
  %v1118 = vpop.f32.mrb[0].mxu0
  %v1119 = vadd.f32 0.0, %v1118
  %v1120 = vpop.f32.mrb[0].mxu0
  %v1121 = vpop.f32.mrb[0].mxu0
  %v1122 = vadd.f32 0.0, %v1121
  %v1123 = vpop.f32.mrb[0].mxu0
  %1124 = vmatprep.mubr.bf16.mxu0 0
  %1125 = vmatmul.mubr.bf16.gmra.mrb[0].mxu0 %v981
  %v1126 = vpop.f32.mrb[0].mxu0
  %v1127 = vadd.f32 0.0, %v1126
  %v1128 = vpop.f32.mrb[0].mxu0
  %v1129 = vpop.f32.mrb[0].mxu0
  %v1130 = vadd.f32 0.0, %v1129
  %v1131 = vpop.f32.mrb[0].mxu0
  %1132 = vmatprep.mubr.bf16.mxu0 0
  %1133 = vmatmul.mubr.bf16.gmra.mrb[0].mxu0 %v982
  %v1134 = vpop.f32.mrb[0].mxu0
  %v1135 = vadd.f32 0.0, %v1134
  %v1136 = vpop.f32.mrb[0].mxu0
  %v1137 = vpop.f32.mrb[0].mxu0
  %v1138 = vadd.f32 0.0, %v1137
  %v1139 = vpop.f32.mrb[0].mxu0
  %1140 = vmatprep.mubr.bf16.mxu0 0
  %1141 = vmatmul.mubr.bf16.gmra.mrb[0].mxu0 %v983
  %v1142 = vpop.f32.mrb[0].mxu0
  %v1143 = vadd.f32 0.0, %v1142
  %v1144 = vpop.f32.mrb[0].mxu0
  %v1145 = vpop.f32.mrb[0].mxu0
  %v1146 = vadd.f32 0.0, %v1145
  %v1147 = vpop.f32.mrb[0].mxu0
  %1148 = vmatprep.mubr.bf16.mxu0 0
  %1149 = vmatmul.mubr.bf16.gmra.mrb[0].mxu0 %v984
  %v1150 = vpop.f32.mrb[0].mxu0
  %v1151 = vadd.f32 0.0, %v1150
  %v1152 = vpop.f32.mrb[0].mxu0
  %v1153 = vpop.f32.mrb[0].mxu0
  %v1154 = vadd.f32 0.0, %v1153
  %v1155 = vpop.f32.mrb[0].mxu0
  %1156 = vmatprep.mubr.bf16.mxu0 0
  %1157 = vmatmul.mubr.bf16.gmra.mrb[0].mxu0 %v985
  %v1158 = vpop.f32.mrb[0].mxu0
  %v1159 = vadd.f32 0.0, %v1158
  %v1160 = vpop.f32.mrb[0].mxu0
  %v1161 = vpop.f32.mrb[0].mxu0
  %v1162 = vadd.f32 0.0, %v1161
  %v1163 = vpop.f32.mrb[0].mxu0
  %1164 = vmatprep.mubr.bf16.mxu0 0
  %1165 = vmatmul.mubr.bf16.gmra.mrb[0].mxu0 %v986
  %v1166 = vpop.f32.mrb[0].mxu0
  %v1167 = vadd.f32 0.0, %v1166
  %v1168 = vpop.f32.mrb[0].mxu0
  %v1169 = vpop.f32.mrb[0].mxu0
  %v1170 = vpop.f32.mrb[0].mxu0
  %1171 = vdwg.mxu0
  %v1172 = vadd.f32 %v934, %v1087
  %v1173 = vadd.f32 %v935, %v1090
  %v1174 = vadd.f32 %v936, %v1095
  %v1175 = vadd.f32 %v937, %v1098
  %v1176 = vadd.f32 %v938, %v1103
  %v1177 = vadd.f32 %v939, %v1106
  %v1178 = vadd.f32 %v940, %v1111
  %v1179 = vadd.f32 %v941, %v1114
  %v1180 = vadd.f32 %v942, %v1119
  %v1181 = vadd.f32 %v943, %v1122
  %v1182 = vadd.f32 %v944, %v1127
  %v1183 = vadd.f32 %v945, %v1130
  %v1184 = vadd.f32 %v946, %v1135
  %v1185 = vadd.f32 %v947, %v1138
  %v1186 = vadd.f32 %v948, %v1143
  %v1187 = vadd.f32 %v949, %v1146
  %v1188 = vadd.f32 %v950, %v1151
  %v1189 = vadd.f32 %v951, %v1154
  %v1190 = vadd.f32 %v952, %v1159
  %v1191 = vadd.f32 %v953, %v1162
  %v1192 = vadd.f32 %v954, %v1167
  %v1193 = vld [vmem:[%s0 + $0x10] sm:$0xff]
  %v1194 = vld [vmem:[%s0 + $0x18] sm:$0xff]
  %v1195 = vld [vmem:[%s0 + $0x20] sm:$0xff]
  %v1196 = vld [vmem:[%s0 + $0x28] sm:$0xff]
  %v1197 = vld [vmem:[%s0 + $0x30] sm:$0xff]
  %v1198 = vld [vmem:[%s0 + $0x38] sm:$0xff]
  %v1199 = vld [vmem:[%s0 + $0x40] sm:$0xff]
  %v1200 = vld [vmem:[%s0 + $0x48] sm:$0xff]
  %v1201 = vld [vmem:[%s0 + $0x50] sm:$0xff]
  %v1202 = vld [vmem:[%s0 + $0x58] sm:$0xff]
  %v1203 = vld [vmem:[%s0 + $0x60] sm:$0xff]
  %v1204 = vld [vmem:[%s0 + $0x68] sm:$0xff]
  %v1205 = vld [vmem:[%s0 + $0x70] sm:$0xff]
  %v1206 = vld [vmem:[%s0 + $0x78] sm:$0xff]
  %v1207 = vld [vmem:[%s0 + $0x80] sm:$0xff]
  %v1208 = vld [vmem:[%s0 + $0x88] sm:$0xff]
  %v1209 = vld [vmem:[%s0 + $0x90] sm:$0xff]
  %v1210 = vld [vmem:[%s0 + $0x98] sm:$0xff]
  %v1211 = vld [vmem:[%s0 + $0xa0] sm:$0xff]
  %v1212 = vld [vmem:[%s0 + $0xa8] sm:$0xff]
  %v1213 = vld [vmem:[%s0 + $0xb0] sm:$0xff]
  %v1214 = vpack.c.bf16 %v1194, %v1193
  %v1215 = vpack.c.bf16 %v1196, %v1195
  %v1216 = vpack.c.bf16 %v1198, %v1197
  %v1217 = vpack.c.bf16 %v1200, %v1199
  %v1218 = vpack.c.bf16 %v1202, %v1201
  %v1219 = vpack.c.bf16 %v1204, %v1203
  %v1220 = vpack.c.bf16 %v1206, %v1205
  %v1221 = vpack.c.bf16 %v1208, %v1207
  %v1222 = vpack.c.bf16 %v1210, %v1209
  %v1223 = vpack.c.bf16 %v1212, %v1211
  %v1224 = vpack.c.bf16 %v1213, %v1213
  %s1225 = scalar_lea.vmem %s1, 320
  %v1226 = vld [vmem:[%s1225] sm:$0xf]
  %v1227 = vld [vmem:[%s1225 + $0x4] sm:$0xf]
  %v1228 = vld [vmem:[%s1225 + $0x8] sm:$0xf]
  %v1229 = vld [vmem:[%s1225 + $0xc] sm:$0xf]
  %v1230 = vld [vmem:[%s1225 + $0x10] sm:$0xf]
  %v1231 = vld [vmem:[%s1225 + $0x14] sm:$0xf]
  %v1232 = vld [vmem:[%s1225 + $0x18] sm:$0xf]
  %v1233 = vld [vmem:[%s1225 + $0x1c] sm:$0xf]
  %v1234 = vld [vmem:[%s1225 + $0x20] sm:$0xf]
  %v1235 = vld [vmem:[%s1225 + $0x24] sm:$0xf]
  %v1236 = vld [vmem:[%s1225 + $0x28] sm:$0xf]
  %v1237 = vld [vmem:[%s1225 + $0x2c] sm:$0xf]
  %v1238 = vld [vmem:[%s1225 + $0x30] sm:$0xf]
  %v1239 = vld [vmem:[%s1225 + $0x34] sm:$0xf]
  %v1240 = vld [vmem:[%s1225 + $0x38] sm:$0xf]
  %v1241 = vld [vmem:[%s1225 + $0x3c] sm:$0xf]
  %v1258 = vunpack.c.l.b16 %v1226
  %v1259 = vunpack.c.l.b16 %v1227
  %v1260 = vunpack.c.l.b16 %v1228
  %v1261 = vunpack.c.l.b16 %v1229
  %v1262 = vunpack.c.l.b16 %v1230
  %v1263 = vunpack.c.l.b16 %v1231
  %v1264 = vunpack.c.l.b16 %v1232
  %v1265 = vunpack.c.l.b16 %v1233
  %v1266 = vunpack.c.l.b16 %v1234
  %v1267 = vunpack.c.l.b16 %v1235
  %v1268 = vunpack.c.l.b16 %v1236
  %v1269 = vunpack.c.l.b16 %v1237
  %v1270 = vunpack.c.l.b16 %v1238
  %v1271 = vunpack.c.l.b16 %v1239
  %v1272 = vunpack.c.l.b16 %v1240
  %v1273 = vunpack.c.l.b16 %v1241
  %v1274 = vpack.c.b16 %v1259, %v1258
  %v1275 = vpack.c.b16 %v1261, %v1260
  %v1276 = vpack.c.b16 %v1263, %v1262
  %v1277 = vpack.c.b16 %v1265, %v1264
  %v1278 = vpack.c.b16 %v1267, %v1266
  %v1279 = vpack.c.b16 %v1269, %v1268
  %v1280 = vpack.c.b16 %v1271, %v1270
  %v1281 = vpack.c.b16 %v1273, %v1272
  %1290 = vmatprep.subr.bf16.mxu0 0
  %1291 = vmatpush1.bf16.msra.mxu0 %v1274
  %1292 = vmatprep.subr.bf16.mxu0 0
  %1293 = vmatpush1.bf16.msra.mxu0 %v1275
  %1294 = vmatprep.subr.bf16.mxu0 0
  %1295 = vmatpush1.bf16.msra.mxu0 %v1276
  %1296 = vmatprep.subr.bf16.mxu0 0
  %1297 = vmatpush1.bf16.msra.mxu0 %v1277
  %1298 = vmatprep.subr.bf16.mxu0 0
  %1299 = vmatpush1.bf16.msra.mxu0 %v1278
  %1300 = vmatprep.subr.bf16.mxu0 0
  %1301 = vmatpush1.bf16.msra.mxu0 %v1279
  %1302 = vmatprep.subr.bf16.mxu0 0
  %1303 = vmatpush1.bf16.msra.mxu0 %v1280
  %1304 = vmatprep.subr.bf16.mxu0 0
  %1305 = vmatpush1.bf16.msra.mxu0 %v1281
  %1306 = vmatprep.subr.bf16.mxu0 0
  %1307 = vmatpush1.bf16.msra.mxu0 0
  %1308 = vmatprep.subr.bf16.mxu0 0
  %1309 = vmatpush1.bf16.msra.mxu0 0
  %1310 = vmatprep.subr.bf16.mxu0 0
  %1311 = vmatpush1.bf16.msra.mxu0 0
  %1312 = vmatprep.subr.bf16.mxu0 0
  %1313 = vmatpush1.bf16.msra.mxu0 0
  %1314 = vmatprep.subr.bf16.mxu0 0
  %1315 = vmatpush1.bf16.msra.mxu0 0
  %1316 = vmatprep.subr.bf16.mxu0 0
  %1317 = vmatpush1.bf16.msra.mxu0 0
  %1318 = vmatprep.subr.bf16.mxu0 0
  %1319 = vmatpush1.bf16.msra.mxu0 0
  %1320 = vmatprep.subr.bf16.mxu0 0
  %1321 = vmatpush1.bf16.msra.mxu0 0
  %1322 = vmatprep.mubr.bf16.mxu0 0
  %1323 = vmatmul.mubr.bf16.gmra.mrb[0].mxu0 %v1214
  %v1324 = vpop.f32.mrb[0].mxu0
  %v1325 = vadd.f32 0.0, %v1324
  %v1326 = vpop.f32.mrb[0].mxu0
  %v1327 = vpop.f32.mrb[0].mxu0
  %v1328 = vadd.f32 0.0, %v1327
  %v1329 = vpop.f32.mrb[0].mxu0
  %1330 = vmatprep.mubr.bf16.mxu0 0
  %1331 = vmatmul.mubr.bf16.gmra.mrb[0].mxu0 %v1215
  %v1332 = vpop.f32.mrb[0].mxu0
  %v1333 = vadd.f32 0.0, %v1332
  %v1334 = vpop.f32.mrb[0].mxu0
  %v1335 = vpop.f32.mrb[0].mxu0
  %v1336 = vadd.f32 0.0, %v1335
  %v1337 = vpop.f32.mrb[0].mxu0
  %1338 = vmatprep.mubr.bf16.mxu0 0
  %1339 = vmatmul.mubr.bf16.gmra.mrb[0].mxu0 %v1216
  %v1340 = vpop.f32.mrb[0].mxu0
  %v1341 = vadd.f32 0.0, %v1340
  %v1342 = vpop.f32.mrb[0].mxu0
  %v1343 = vpop.f32.mrb[0].mxu0
  %v1344 = vadd.f32 0.0, %v1343
  %v1345 = vpop.f32.mrb[0].mxu0
  %1346 = vmatprep.mubr.bf16.mxu0 0
  %1347 = vmatmul.mubr.bf16.gmra.mrb[0].mxu0 %v1217
  %v1348 = vpop.f32.mrb[0].mxu0
  %v1349 = vadd.f32 0.0, %v1348
  %v1350 = vpop.f32.mrb[0].mxu0
  %v1351 = vpop.f32.mrb[0].mxu0
  %v1352 = vadd.f32 0.0, %v1351
  %v1353 = vpop.f32.mrb[0].mxu0
  %1354 = vmatprep.mubr.bf16.mxu0 0
  %1355 = vmatmul.mubr.bf16.gmra.mrb[0].mxu0 %v1218
  %v1356 = vpop.f32.mrb[0].mxu0
  %v1357 = vadd.f32 0.0, %v1356
  %v1358 = vpop.f32.mrb[0].mxu0
  %v1359 = vpop.f32.mrb[0].mxu0
  %v1360 = vadd.f32 0.0, %v1359
  %v1361 = vpop.f32.mrb[0].mxu0
  %1362 = vmatprep.mubr.bf16.mxu0 0
  %1363 = vmatmul.mubr.bf16.gmra.mrb[0].mxu0 %v1219
  %v1364 = vpop.f32.mrb[0].mxu0
  %v1365 = vadd.f32 0.0, %v1364
  %v1366 = vpop.f32.mrb[0].mxu0
  %v1367 = vpop.f32.mrb[0].mxu0
  %v1368 = vadd.f32 0.0, %v1367
  %v1369 = vpop.f32.mrb[0].mxu0
  %1370 = vmatprep.mubr.bf16.mxu0 0
  %1371 = vmatmul.mubr.bf16.gmra.mrb[0].mxu0 %v1220
  %v1372 = vpop.f32.mrb[0].mxu0
  %v1373 = vadd.f32 0.0, %v1372
  %v1374 = vpop.f32.mrb[0].mxu0
  %v1375 = vpop.f32.mrb[0].mxu0
  %v1376 = vadd.f32 0.0, %v1375
  %v1377 = vpop.f32.mrb[0].mxu0
  %1378 = vmatprep.mubr.bf16.mxu0 0
  %1379 = vmatmul.mubr.bf16.gmra.mrb[0].mxu0 %v1221
  %v1380 = vpop.f32.mrb[0].mxu0
  %v1381 = vadd.f32 0.0, %v1380
  %v1382 = vpop.f32.mrb[0].mxu0
  %v1383 = vpop.f32.mrb[0].mxu0
  %v1384 = vadd.f32 0.0, %v1383
  %v1385 = vpop.f32.mrb[0].mxu0
  %1386 = vmatprep.mubr.bf16.mxu0 0
  %1387 = vmatmul.mubr.bf16.gmra.mrb[0].mxu0 %v1222
  %v1388 = vpop.f32.mrb[0].mxu0
  %v1389 = vadd.f32 0.0, %v1388
  %v1390 = vpop.f32.mrb[0].mxu0
  %v1391 = vpop.f32.mrb[0].mxu0
  %v1392 = vadd.f32 0.0, %v1391
  %v1393 = vpop.f32.mrb[0].mxu0
  %1394 = vmatprep.mubr.bf16.mxu0 0
  %1395 = vmatmul.mubr.bf16.gmra.mrb[0].mxu0 %v1223
  %v1396 = vpop.f32.mrb[0].mxu0
  %v1397 = vadd.f32 0.0, %v1396
  %v1398 = vpop.f32.mrb[0].mxu0
  %v1399 = vpop.f32.mrb[0].mxu0
  %v1400 = vadd.f32 0.0, %v1399
  %v1401 = vpop.f32.mrb[0].mxu0
  %1402 = vmatprep.mubr.bf16.mxu0 0
  %1403 = vmatmul.mubr.bf16.gmra.mrb[0].mxu0 %v1224
  %v1404 = vpop.f32.mrb[0].mxu0
  %v1405 = vadd.f32 0.0, %v1404
  %v1406 = vpop.f32.mrb[0].mxu0
  %v1407 = vpop.f32.mrb[0].mxu0
  %v1408 = vpop.f32.mrb[0].mxu0
  %1409 = vdwg.mxu0
  %v1410 = vadd.f32 %v1172, %v1325
  %v1411 = vadd.f32 %v1173, %v1328
  %v1412 = vadd.f32 %v1174, %v1333
  %v1413 = vadd.f32 %v1175, %v1336
  %v1414 = vadd.f32 %v1176, %v1341
  %v1415 = vadd.f32 %v1177, %v1344
  %v1416 = vadd.f32 %v1178, %v1349
  %v1417 = vadd.f32 %v1179, %v1352
  %v1418 = vadd.f32 %v1180, %v1357
  %v1419 = vadd.f32 %v1181, %v1360
  %v1420 = vadd.f32 %v1182, %v1365
  %v1421 = vadd.f32 %v1183, %v1368
  %v1422 = vadd.f32 %v1184, %v1373
  %v1423 = vadd.f32 %v1185, %v1376
  %v1424 = vadd.f32 %v1186, %v1381
  %v1425 = vadd.f32 %v1187, %v1384
  %v1426 = vadd.f32 %v1188, %v1389
  %v1427 = vadd.f32 %v1189, %v1392
  %v1428 = vadd.f32 %v1190, %v1397
  %v1429 = vadd.f32 %v1191, %v1400
  %v1430 = vadd.f32 %v1192, %v1405
  %v1431 = vld [vmem:[%s0 + $0x1c] sm:$0xff]
  %v1432 = vld [vmem:[%s0 + $0x24] sm:$0xff]
  %v1433 = vld [vmem:[%s0 + $0x2c] sm:$0xff]
  %v1434 = vld [vmem:[%s0 + $0x34] sm:$0xff]
  %v1435 = vld [vmem:[%s0 + $0x3c] sm:$0xff]
  %v1436 = vld [vmem:[%s0 + $0x44] sm:$0xff]
  %v1437 = vld [vmem:[%s0 + $0x4c] sm:$0xff]
  %v1438 = vld [vmem:[%s0 + $0x54] sm:$0xff]
  %v1439 = vld [vmem:[%s0 + $0x5c] sm:$0xff]
  %v1440 = vld [vmem:[%s0 + $0x64] sm:$0xff]
  %v1441 = vld [vmem:[%s0 + $0x6c] sm:$0xff]
  %v1442 = vld [vmem:[%s0 + $0x74] sm:$0xff]
  %v1443 = vld [vmem:[%s0 + $0x7c] sm:$0xff]
  %v1444 = vld [vmem:[%s0 + $0x84] sm:$0xff]
  %v1445 = vld [vmem:[%s0 + $0x8c] sm:$0xff]
  %v1446 = vld [vmem:[%s0 + $0x94] sm:$0xff]
  %v1447 = vld [vmem:[%s0 + $0x9c] sm:$0xff]
  %v1448 = vld [vmem:[%s0 + $0xa4] sm:$0xff]
  %v1449 = vld [vmem:[%s0 + $0xac] sm:$0xff]
  %v1450 = vld [vmem:[%s0 + $0xb4] sm:$0xff]
  %v1451 = vld [vmem:[%s0 + $0xbc] sm:$0xff]
  %v1452 = vpack.c.bf16 %v1432, %v1431
  %v1453 = vpack.c.bf16 %v1434, %v1433
  %v1454 = vpack.c.bf16 %v1436, %v1435
  %v1455 = vpack.c.bf16 %v1438, %v1437
  %v1456 = vpack.c.bf16 %v1440, %v1439
  %v1457 = vpack.c.bf16 %v1442, %v1441
  %v1458 = vpack.c.bf16 %v1444, %v1443
  %v1459 = vpack.c.bf16 %v1446, %v1445
  %v1460 = vpack.c.bf16 %v1448, %v1447
  %v1461 = vpack.c.bf16 %v1450, %v1449
  %v1462 = vpack.c.bf16 %v1451, %v1451
  %s1463 = scalar_lea.vmem %s1, 384
  %v1464 = vld [vmem:[%s1463] sm:$0xf]
  %v1465 = vld [vmem:[%s1463 + $0x4] sm:$0xf]
  %v1466 = vld [vmem:[%s1463 + $0x8] sm:$0xf]
  %v1467 = vld [vmem:[%s1463 + $0xc] sm:$0xf]
  %v1468 = vld [vmem:[%s1463 + $0x10] sm:$0xf]
  %v1469 = vld [vmem:[%s1463 + $0x14] sm:$0xf]
  %v1470 = vld [vmem:[%s1463 + $0x18] sm:$0xf]
  %v1471 = vld [vmem:[%s1463 + $0x1c] sm:$0xf]
  %v1472 = vld [vmem:[%s1463 + $0x20] sm:$0xf]
  %v1473 = vld [vmem:[%s1463 + $0x24] sm:$0xf]
  %v1474 = vld [vmem:[%s1463 + $0x28] sm:$0xf]
  %v1475 = vld [vmem:[%s1463 + $0x2c] sm:$0xf]
  %v1476 = vld [vmem:[%s1463 + $0x30] sm:$0xf]
  %v1477 = vld [vmem:[%s1463 + $0x34] sm:$0xf]
  %v1478 = vld [vmem:[%s1463 + $0x38] sm:$0xf]
  %v1479 = vld [vmem:[%s1463 + $0x3c] sm:$0xf]
  %v1496 = vunpack.c.l.b16 %v1464
  %v1497 = vunpack.c.l.b16 %v1465
  %v1498 = vunpack.c.l.b16 %v1466
  %v1499 = vunpack.c.l.b16 %v1467
  %v1500 = vunpack.c.l.b16 %v1468
  %v1501 = vunpack.c.l.b16 %v1469
  %v1502 = vunpack.c.l.b16 %v1470
  %v1503 = vunpack.c.l.b16 %v1471
  %v1504 = vunpack.c.l.b16 %v1472
  %v1505 = vunpack.c.l.b16 %v1473
  %v1506 = vunpack.c.l.b16 %v1474
  %v1507 = vunpack.c.l.b16 %v1475
  %v1508 = vunpack.c.l.b16 %v1476
  %v1509 = vunpack.c.l.b16 %v1477
  %v1510 = vunpack.c.l.b16 %v1478
  %v1511 = vunpack.c.l.b16 %v1479
  %v1512 = vpack.c.b16 %v1497, %v1496
  %v1513 = vpack.c.b16 %v1499, %v1498
  %v1514 = vpack.c.b16 %v1501, %v1500
  %v1515 = vpack.c.b16 %v1503, %v1502
  %v1516 = vpack.c.b16 %v1505, %v1504
  %v1517 = vpack.c.b16 %v1507, %v1506
  %v1518 = vpack.c.b16 %v1509, %v1508
  %v1519 = vpack.c.b16 %v1511, %v1510
  %1528 = vmatprep.subr.bf16.mxu0 0
  %1529 = vmatpush1.bf16.msra.mxu0 %v1512
  %1530 = vmatprep.subr.bf16.mxu0 0
  %1531 = vmatpush1.bf16.msra.mxu0 %v1513
  %1532 = vmatprep.subr.bf16.mxu0 0
  %1533 = vmatpush1.bf16.msra.mxu0 %v1514
  %1534 = vmatprep.subr.bf16.mxu0 0
  %1535 = vmatpush1.bf16.msra.mxu0 %v1515
  %1536 = vmatprep.subr.bf16.mxu0 0
  %1537 = vmatpush1.bf16.msra.mxu0 %v1516
  %1538 = vmatprep.subr.bf16.mxu0 0
  %1539 = vmatpush1.bf16.msra.mxu0 %v1517
  %1540 = vmatprep.subr.bf16.mxu0 0
  %1541 = vmatpush1.bf16.msra.mxu0 %v1518
  %1542 = vmatprep.subr.bf16.mxu0 0
  %1543 = vmatpush1.bf16.msra.mxu0 %v1519
  %1544 = vmatprep.subr.bf16.mxu0 0
  %1545 = vmatpush1.bf16.msra.mxu0 0
  %1546 = vmatprep.subr.bf16.mxu0 0
  %1547 = vmatpush1.bf16.msra.mxu0 0
  %1548 = vmatprep.subr.bf16.mxu0 0
  %1549 = vmatpush1.bf16.msra.mxu0 0
  %1550 = vmatprep.subr.bf16.mxu0 0
  %1551 = vmatpush1.bf16.msra.mxu0 0
  %1552 = vmatprep.subr.bf16.mxu0 0
  %1553 = vmatpush1.bf16.msra.mxu0 0
  %1554 = vmatprep.subr.bf16.mxu0 0
  %1555 = vmatpush1.bf16.msra.mxu0 0
  %1556 = vmatprep.subr.bf16.mxu0 0
  %1557 = vmatpush1.bf16.msra.mxu0 0
  %1558 = vmatprep.subr.bf16.mxu0 0
  %1559 = vmatpush1.bf16.msra.mxu0 0
  %1560 = vmatprep.mubr.bf16.mxu0 0
  %1561 = vmatmul.mubr.bf16.gmra.mrb[0].mxu0 %v1452
  %v1562 = vpop.f32.mrb[0].mxu0
  %v1563 = vadd.f32 0.0, %v1562
  %v1564 = vpop.f32.mrb[0].mxu0
  %v1565 = vpop.f32.mrb[0].mxu0
  %v1566 = vadd.f32 0.0, %v1565
  %v1567 = vpop.f32.mrb[0].mxu0
  %1568 = vmatprep.mubr.bf16.mxu0 0
  %1569 = vmatmul.mubr.bf16.gmra.mrb[0].mxu0 %v1453
  %v1570 = vpop.f32.mrb[0].mxu0
  %v1571 = vadd.f32 0.0, %v1570
  %v1572 = vpop.f32.mrb[0].mxu0
  %v1573 = vpop.f32.mrb[0].mxu0
  %v1574 = vadd.f32 0.0, %v1573
  %v1575 = vpop.f32.mrb[0].mxu0
  %1576 = vmatprep.mubr.bf16.mxu0 0
  %1577 = vmatmul.mubr.bf16.gmra.mrb[0].mxu0 %v1454
  %v1578 = vpop.f32.mrb[0].mxu0
  %v1579 = vadd.f32 0.0, %v1578
  %v1580 = vpop.f32.mrb[0].mxu0
  %v1581 = vpop.f32.mrb[0].mxu0
  %v1582 = vadd.f32 0.0, %v1581
  %v1583 = vpop.f32.mrb[0].mxu0
  %1584 = vmatprep.mubr.bf16.mxu0 0
  %1585 = vmatmul.mubr.bf16.gmra.mrb[0].mxu0 %v1455
  %v1586 = vpop.f32.mrb[0].mxu0
  %v1587 = vadd.f32 0.0, %v1586
  %v1588 = vpop.f32.mrb[0].mxu0
  %v1589 = vpop.f32.mrb[0].mxu0
  %v1590 = vadd.f32 0.0, %v1589
  %v1591 = vpop.f32.mrb[0].mxu0
  %1592 = vmatprep.mubr.bf16.mxu0 0
  %1593 = vmatmul.mubr.bf16.gmra.mrb[0].mxu0 %v1456
  %v1594 = vpop.f32.mrb[0].mxu0
  %v1595 = vadd.f32 0.0, %v1594
  %v1596 = vpop.f32.mrb[0].mxu0
  %v1597 = vpop.f32.mrb[0].mxu0
  %v1598 = vadd.f32 0.0, %v1597
  %v1599 = vpop.f32.mrb[0].mxu0
  %1600 = vmatprep.mubr.bf16.mxu0 0
  %1601 = vmatmul.mubr.bf16.gmra.mrb[0].mxu0 %v1457
  %v1602 = vpop.f32.mrb[0].mxu0
  %v1603 = vadd.f32 0.0, %v1602
  %v1604 = vpop.f32.mrb[0].mxu0
  %v1605 = vpop.f32.mrb[0].mxu0
  %v1606 = vadd.f32 0.0, %v1605
  %v1607 = vpop.f32.mrb[0].mxu0
  %1608 = vmatprep.mubr.bf16.mxu0 0
  %1609 = vmatmul.mubr.bf16.gmra.mrb[0].mxu0 %v1458
  %v1610 = vpop.f32.mrb[0].mxu0
  %v1611 = vadd.f32 0.0, %v1610
  %v1612 = vpop.f32.mrb[0].mxu0
  %v1613 = vpop.f32.mrb[0].mxu0
  %v1614 = vadd.f32 0.0, %v1613
  %v1615 = vpop.f32.mrb[0].mxu0
  %1616 = vmatprep.mubr.bf16.mxu0 0
  %1617 = vmatmul.mubr.bf16.gmra.mrb[0].mxu0 %v1459
  %v1618 = vpop.f32.mrb[0].mxu0
  %v1619 = vadd.f32 0.0, %v1618
  %v1620 = vpop.f32.mrb[0].mxu0
  %v1621 = vpop.f32.mrb[0].mxu0
  %v1622 = vadd.f32 0.0, %v1621
  %v1623 = vpop.f32.mrb[0].mxu0
  %1624 = vmatprep.mubr.bf16.mxu0 0
  %1625 = vmatmul.mubr.bf16.gmra.mrb[0].mxu0 %v1460
  %v1626 = vpop.f32.mrb[0].mxu0
  %v1627 = vadd.f32 0.0, %v1626
  %v1628 = vpop.f32.mrb[0].mxu0
  %v1629 = vpop.f32.mrb[0].mxu0
  %v1630 = vadd.f32 0.0, %v1629
  %v1631 = vpop.f32.mrb[0].mxu0
  %1632 = vmatprep.mubr.bf16.mxu0 0
  %1633 = vmatmul.mubr.bf16.gmra.mrb[0].mxu0 %v1461
  %v1634 = vpop.f32.mrb[0].mxu0
  %v1635 = vadd.f32 0.0, %v1634
  %v1636 = vpop.f32.mrb[0].mxu0
  %v1637 = vpop.f32.mrb[0].mxu0
  %v1638 = vadd.f32 0.0, %v1637
  %v1639 = vpop.f32.mrb[0].mxu0
  %1640 = vmatprep.mubr.bf16.mxu0 0
  %1641 = vmatmul.mubr.bf16.gmra.mrb[0].mxu0 %v1462
  %v1642 = vpop.f32.mrb[0].mxu0
  %v1643 = vadd.f32 0.0, %v1642
  %v1644 = vpop.f32.mrb[0].mxu0
  %v1645 = vpop.f32.mrb[0].mxu0
  %v1646 = vpop.f32.mrb[0].mxu0
  %1647 = vdwg.mxu0
  %v1648 = vadd.f32 %v1410, %v1563
  %v1649 = vadd.f32 %v1411, %v1566
  %v1650 = vadd.f32 %v1412, %v1571
  %v1651 = vadd.f32 %v1413, %v1574
  %v1652 = vadd.f32 %v1414, %v1579
  %v1653 = vadd.f32 %v1415, %v1582
  %v1654 = vadd.f32 %v1416, %v1587
  %v1655 = vadd.f32 %v1417, %v1590
  %v1656 = vadd.f32 %v1418, %v1595
  %v1657 = vadd.f32 %v1419, %v1598
  %v1658 = vadd.f32 %v1420, %v1603
  %v1659 = vadd.f32 %v1421, %v1606
  %v1660 = vadd.f32 %v1422, %v1611
  %v1661 = vadd.f32 %v1423, %v1614
  %v1662 = vadd.f32 %v1424, %v1619
  %v1663 = vadd.f32 %v1425, %v1622
  %v1664 = vadd.f32 %v1426, %v1627
  %v1665 = vadd.f32 %v1427, %v1630
  %v1666 = vadd.f32 %v1428, %v1635
  %v1667 = vadd.f32 %v1429, %v1638
  %v1668 = vadd.f32 %v1430, %v1643
  %v1669 = vld [vmem:[%s0 + $0x1d] sm:$0xff]
  %v1670 = vld [vmem:[%s0 + $0x25] sm:$0xff]
  %v1671 = vld [vmem:[%s0 + $0x2d] sm:$0xff]
  %v1672 = vld [vmem:[%s0 + $0x35] sm:$0xff]
  %v1673 = vld [vmem:[%s0 + $0x3d] sm:$0xff]
  %v1674 = vld [vmem:[%s0 + $0x45] sm:$0xff]
  %v1675 = vld [vmem:[%s0 + $0x4d] sm:$0xff]
  %v1676 = vld [vmem:[%s0 + $0x55] sm:$0xff]
  %v1677 = vld [vmem:[%s0 + $0x5d] sm:$0xff]
  %v1678 = vld [vmem:[%s0 + $0x65] sm:$0xff]
  %v1679 = vld [vmem:[%s0 + $0x6d] sm:$0xff]
  %v1680 = vld [vmem:[%s0 + $0x75] sm:$0xff]
  %v1681 = vld [vmem:[%s0 + $0x7d] sm:$0xff]
  %v1682 = vld [vmem:[%s0 + $0x85] sm:$0xff]
  %v1683 = vld [vmem:[%s0 + $0x8d] sm:$0xff]
  %v1684 = vld [vmem:[%s0 + $0x95] sm:$0xff]
  %v1685 = vld [vmem:[%s0 + $0x9d] sm:$0xff]
  %v1686 = vld [vmem:[%s0 + $0xa5] sm:$0xff]
  %v1687 = vld [vmem:[%s0 + $0xad] sm:$0xff]
  %v1688 = vld [vmem:[%s0 + $0xb5] sm:$0xff]
  %v1689 = vld [vmem:[%s0 + $0xbd] sm:$0xff]
  %v1690 = vpack.c.bf16 %v1670, %v1669
  %v1691 = vpack.c.bf16 %v1672, %v1671
  %v1692 = vpack.c.bf16 %v1674, %v1673
  %v1693 = vpack.c.bf16 %v1676, %v1675
  %v1694 = vpack.c.bf16 %v1678, %v1677
  %v1695 = vpack.c.bf16 %v1680, %v1679
  %v1696 = vpack.c.bf16 %v1682, %v1681
  %v1697 = vpack.c.bf16 %v1684, %v1683
  %v1698 = vpack.c.bf16 %v1686, %v1685
  %v1699 = vpack.c.bf16 %v1688, %v1687
  %v1700 = vpack.c.bf16 %v1689, %v1689
  %s1701 = scalar_lea.vmem %s1, 448
  %v1702 = vld [vmem:[%s1701] sm:$0xf]
  %v1703 = vld [vmem:[%s1701 + $0x4] sm:$0xf]
  %v1704 = vld [vmem:[%s1701 + $0x8] sm:$0xf]
  %v1705 = vld [vmem:[%s1701 + $0xc] sm:$0xf]
  %v1706 = vld [vmem:[%s1701 + $0x10] sm:$0xf]
  %v1707 = vld [vmem:[%s1701 + $0x14] sm:$0xf]
  %v1708 = vld [vmem:[%s1701 + $0x18] sm:$0xf]
  %v1709 = vld [vmem:[%s1701 + $0x1c] sm:$0xf]
  %v1710 = vld [vmem:[%s1701 + $0x20] sm:$0xf]
  %v1711 = vld [vmem:[%s1701 + $0x24] sm:$0xf]
  %v1712 = vld [vmem:[%s1701 + $0x28] sm:$0xf]
  %v1713 = vld [vmem:[%s1701 + $0x2c] sm:$0xf]
  %v1714 = vld [vmem:[%s1701 + $0x30] sm:$0xf]
  %v1715 = vld [vmem:[%s1701 + $0x34] sm:$0xf]
  %v1716 = vld [vmem:[%s1701 + $0x38] sm:$0xf]
  %v1717 = vld [vmem:[%s1701 + $0x3c] sm:$0xf]
  %v1734 = vunpack.c.l.b16 %v1702
  %v1735 = vunpack.c.l.b16 %v1703
  %v1736 = vunpack.c.l.b16 %v1704
  %v1737 = vunpack.c.l.b16 %v1705
  %v1738 = vunpack.c.l.b16 %v1706
  %v1739 = vunpack.c.l.b16 %v1707
  %v1740 = vunpack.c.l.b16 %v1708
  %v1741 = vunpack.c.l.b16 %v1709
  %v1742 = vunpack.c.l.b16 %v1710
  %v1743 = vunpack.c.l.b16 %v1711
  %v1744 = vunpack.c.l.b16 %v1712
  %v1745 = vunpack.c.l.b16 %v1713
  %v1746 = vunpack.c.l.b16 %v1714
  %v1747 = vunpack.c.l.b16 %v1715
  %v1748 = vunpack.c.l.b16 %v1716
  %v1749 = vunpack.c.l.b16 %v1717
  %v1750 = vpack.c.b16 %v1735, %v1734
  %v1751 = vpack.c.b16 %v1737, %v1736
  %v1752 = vpack.c.b16 %v1739, %v1738
  %v1753 = vpack.c.b16 %v1741, %v1740
  %v1754 = vpack.c.b16 %v1743, %v1742
  %v1755 = vpack.c.b16 %v1745, %v1744
  %v1756 = vpack.c.b16 %v1747, %v1746
  %v1757 = vpack.c.b16 %v1749, %v1748
  %1766 = vmatprep.subr.bf16.mxu0 0
  %1767 = vmatpush1.bf16.msra.mxu0 %v1750
  %1768 = vmatprep.subr.bf16.mxu0 0
  %1769 = vmatpush1.bf16.msra.mxu0 %v1751
  %1770 = vmatprep.subr.bf16.mxu0 0
  %1771 = vmatpush1.bf16.msra.mxu0 %v1752
  %1772 = vmatprep.subr.bf16.mxu0 0
  %1773 = vmatpush1.bf16.msra.mxu0 %v1753
  %1774 = vmatprep.subr.bf16.mxu0 0
  %1775 = vmatpush1.bf16.msra.mxu0 %v1754
  %1776 = vmatprep.subr.bf16.mxu0 0
  %1777 = vmatpush1.bf16.msra.mxu0 %v1755
  %1778 = vmatprep.subr.bf16.mxu0 0
  %1779 = vmatpush1.bf16.msra.mxu0 %v1756
  %1780 = vmatprep.subr.bf16.mxu0 0
  %1781 = vmatpush1.bf16.msra.mxu0 %v1757
  %1782 = vmatprep.subr.bf16.mxu0 0
  %1783 = vmatpush1.bf16.msra.mxu0 0
  %1784 = vmatprep.subr.bf16.mxu0 0
  %1785 = vmatpush1.bf16.msra.mxu0 0
  %1786 = vmatprep.subr.bf16.mxu0 0
  %1787 = vmatpush1.bf16.msra.mxu0 0
  %1788 = vmatprep.subr.bf16.mxu0 0
  %1789 = vmatpush1.bf16.msra.mxu0 0
  %1790 = vmatprep.subr.bf16.mxu0 0
  %1791 = vmatpush1.bf16.msra.mxu0 0
  %1792 = vmatprep.subr.bf16.mxu0 0
  %1793 = vmatpush1.bf16.msra.mxu0 0
  %1794 = vmatprep.subr.bf16.mxu0 0
  %1795 = vmatpush1.bf16.msra.mxu0 0
  %1796 = vmatprep.subr.bf16.mxu0 0
  %1797 = vmatpush1.bf16.msra.mxu0 0
  %1798 = vmatprep.mubr.bf16.mxu0 0
  %1799 = vmatmul.mubr.bf16.gmra.mrb[0].mxu0 %v1690
  %v1800 = vpop.f32.mrb[0].mxu0
  %v1801 = vadd.f32 0.0, %v1800
  %v1802 = vpop.f32.mrb[0].mxu0
  %v1803 = vpop.f32.mrb[0].mxu0
  %v1804 = vadd.f32 0.0, %v1803
  %v1805 = vpop.f32.mrb[0].mxu0
  %1806 = vmatprep.mubr.bf16.mxu0 0
  %1807 = vmatmul.mubr.bf16.gmra.mrb[0].mxu0 %v1691
  %v1808 = vpop.f32.mrb[0].mxu0
  %v1809 = vadd.f32 0.0, %v1808
  %v1810 = vpop.f32.mrb[0].mxu0
  %v1811 = vpop.f32.mrb[0].mxu0
  %v1812 = vadd.f32 0.0, %v1811
  %v1813 = vpop.f32.mrb[0].mxu0
  %1814 = vmatprep.mubr.bf16.mxu0 0
  %1815 = vmatmul.mubr.bf16.gmra.mrb[0].mxu0 %v1692
  %v1816 = vpop.f32.mrb[0].mxu0
  %v1817 = vadd.f32 0.0, %v1816
  %v1818 = vpop.f32.mrb[0].mxu0
  %v1819 = vpop.f32.mrb[0].mxu0
  %v1820 = vadd.f32 0.0, %v1819
  %v1821 = vpop.f32.mrb[0].mxu0
  %1822 = vmatprep.mubr.bf16.mxu0 0
  %1823 = vmatmul.mubr.bf16.gmra.mrb[0].mxu0 %v1693
  %v1824 = vpop.f32.mrb[0].mxu0
  %v1825 = vadd.f32 0.0, %v1824
  %v1826 = vpop.f32.mrb[0].mxu0
  %v1827 = vpop.f32.mrb[0].mxu0
  %v1828 = vadd.f32 0.0, %v1827
  %v1829 = vpop.f32.mrb[0].mxu0
  %1830 = vmatprep.mubr.bf16.mxu0 0
  %1831 = vmatmul.mubr.bf16.gmra.mrb[0].mxu0 %v1694
  %v1832 = vpop.f32.mrb[0].mxu0
  %v1833 = vadd.f32 0.0, %v1832
  %v1834 = vpop.f32.mrb[0].mxu0
  %v1835 = vpop.f32.mrb[0].mxu0
  %v1836 = vadd.f32 0.0, %v1835
  %v1837 = vpop.f32.mrb[0].mxu0
  %1838 = vmatprep.mubr.bf16.mxu0 0
  %1839 = vmatmul.mubr.bf16.gmra.mrb[0].mxu0 %v1695
  %v1840 = vpop.f32.mrb[0].mxu0
  %v1841 = vadd.f32 0.0, %v1840
  %v1842 = vpop.f32.mrb[0].mxu0
  %v1843 = vpop.f32.mrb[0].mxu0
  %v1844 = vadd.f32 0.0, %v1843
  %v1845 = vpop.f32.mrb[0].mxu0
  %1846 = vmatprep.mubr.bf16.mxu0 0
  %1847 = vmatmul.mubr.bf16.gmra.mrb[0].mxu0 %v1696
  %v1848 = vpop.f32.mrb[0].mxu0
  %v1849 = vadd.f32 0.0, %v1848
  %v1850 = vpop.f32.mrb[0].mxu0
  %v1851 = vpop.f32.mrb[0].mxu0
  %v1852 = vadd.f32 0.0, %v1851
  %v1853 = vpop.f32.mrb[0].mxu0
  %1854 = vmatprep.mubr.bf16.mxu0 0
  %1855 = vmatmul.mubr.bf16.gmra.mrb[0].mxu0 %v1697
  %v1856 = vpop.f32.mrb[0].mxu0
  %v1857 = vadd.f32 0.0, %v1856
  %v1858 = vpop.f32.mrb[0].mxu0
  %v1859 = vpop.f32.mrb[0].mxu0
  %v1860 = vadd.f32 0.0, %v1859
  %v1861 = vpop.f32.mrb[0].mxu0
  %1862 = vmatprep.mubr.bf16.mxu0 0
  %1863 = vmatmul.mubr.bf16.gmra.mrb[0].mxu0 %v1698
  %v1864 = vpop.f32.mrb[0].mxu0
  %v1865 = vadd.f32 0.0, %v1864
  %v1866 = vpop.f32.mrb[0].mxu0
  %v1867 = vpop.f32.mrb[0].mxu0
  %v1868 = vadd.f32 0.0, %v1867
  %v1869 = vpop.f32.mrb[0].mxu0
  %1870 = vmatprep.mubr.bf16.mxu0 0
  %1871 = vmatmul.mubr.bf16.gmra.mrb[0].mxu0 %v1699
  %v1872 = vpop.f32.mrb[0].mxu0
  %v1873 = vadd.f32 0.0, %v1872
  %v1874 = vpop.f32.mrb[0].mxu0
  %v1875 = vpop.f32.mrb[0].mxu0
  %v1876 = vadd.f32 0.0, %v1875
  %v1877 = vpop.f32.mrb[0].mxu0
  %1878 = vmatprep.mubr.bf16.mxu0 0
  %1879 = vmatmul.mubr.bf16.gmra.mrb[0].mxu0 %v1700
  %v1880 = vpop.f32.mrb[0].mxu0
  %v1881 = vadd.f32 0.0, %v1880
  %v1882 = vpop.f32.mrb[0].mxu0
  %v1883 = vpop.f32.mrb[0].mxu0
  %v1884 = vpop.f32.mrb[0].mxu0
  %1885 = vdwg.mxu0
  %v1886 = vadd.f32 %v1648, %v1801
  %v1887 = vadd.f32 %v1649, %v1804
  %v1888 = vadd.f32 %v1650, %v1809
  %v1889 = vadd.f32 %v1651, %v1812
  %v1890 = vadd.f32 %v1652, %v1817
  %v1891 = vadd.f32 %v1653, %v1820
  %v1892 = vadd.f32 %v1654, %v1825
  %v1893 = vadd.f32 %v1655, %v1828
  %v1894 = vadd.f32 %v1656, %v1833
  %v1895 = vadd.f32 %v1657, %v1836
  %v1896 = vadd.f32 %v1658, %v1841
  %v1897 = vadd.f32 %v1659, %v1844
  %v1898 = vadd.f32 %v1660, %v1849
  %v1899 = vadd.f32 %v1661, %v1852
  %v1900 = vadd.f32 %v1662, %v1857
  %v1901 = vadd.f32 %v1663, %v1860
  %v1902 = vadd.f32 %v1664, %v1865
  %v1903 = vadd.f32 %v1665, %v1868
  %v1904 = vadd.f32 %v1666, %v1873
  %v1905 = vadd.f32 %v1667, %v1876
  %v1906 = vadd.f32 %v1668, %v1881
  %v1907 = vld [vmem:[%s0 + $0x1e] sm:$0xff]
  %v1908 = vld [vmem:[%s0 + $0x26] sm:$0xff]
  %v1909 = vld [vmem:[%s0 + $0x2e] sm:$0xff]
  %v1910 = vld [vmem:[%s0 + $0x36] sm:$0xff]
  %v1911 = vld [vmem:[%s0 + $0x3e] sm:$0xff]
  %v1912 = vld [vmem:[%s0 + $0x46] sm:$0xff]
  %v1913 = vld [vmem:[%s0 + $0x4e] sm:$0xff]
  %v1914 = vld [vmem:[%s0 + $0x56] sm:$0xff]
  %v1915 = vld [vmem:[%s0 + $0x5e] sm:$0xff]
  %v1916 = vld [vmem:[%s0 + $0x66] sm:$0xff]
  %v1917 = vld [vmem:[%s0 + $0x6e] sm:$0xff]
  %v1918 = vld [vmem:[%s0 + $0x76] sm:$0xff]
  %v1919 = vld [vmem:[%s0 + $0x7e] sm:$0xff]
  %v1920 = vld [vmem:[%s0 + $0x86] sm:$0xff]
  %v1921 = vld [vmem:[%s0 + $0x8e] sm:$0xff]
  %v1922 = vld [vmem:[%s0 + $0x96] sm:$0xff]
  %v1923 = vld [vmem:[%s0 + $0x9e] sm:$0xff]
  %v1924 = vld [vmem:[%s0 + $0xa6] sm:$0xff]
  %v1925 = vld [vmem:[%s0 + $0xae] sm:$0xff]
  %v1926 = vld [vmem:[%s0 + $0xb6] sm:$0xff]
  %v1927 = vld [vmem:[%s0 + $0xbe] sm:$0xff]
  %v1928 = vpack.c.bf16 %v1908, %v1907
  %v1929 = vpack.c.bf16 %v1910, %v1909
  %v1930 = vpack.c.bf16 %v1912, %v1911
  %v1931 = vpack.c.bf16 %v1914, %v1913
  %v1932 = vpack.c.bf16 %v1916, %v1915
  %v1933 = vpack.c.bf16 %v1918, %v1917
  %v1934 = vpack.c.bf16 %v1920, %v1919
  %v1935 = vpack.c.bf16 %v1922, %v1921
  %v1936 = vpack.c.bf16 %v1924, %v1923
  %v1937 = vpack.c.bf16 %v1926, %v1925
  %v1938 = vpack.c.bf16 %v1927, %v1927
  %s1939 = scalar_lea.vmem %s1, 512
  %v1940 = vld [vmem:[%s1939] sm:$0xf]
  %v1941 = vld [vmem:[%s1939 + $0x4] sm:$0xf]
  %v1942 = vld [vmem:[%s1939 + $0x8] sm:$0xf]
  %v1943 = vld [vmem:[%s1939 + $0xc] sm:$0xf]
  %v1944 = vld [vmem:[%s1939 + $0x10] sm:$0xf]
  %v1945 = vld [vmem:[%s1939 + $0x14] sm:$0xf]
  %v1946 = vld [vmem:[%s1939 + $0x18] sm:$0xf]
  %v1947 = vld [vmem:[%s1939 + $0x1c] sm:$0xf]
  %v1948 = vld [vmem:[%s1939 + $0x20] sm:$0xf]
  %v1949 = vld [vmem:[%s1939 + $0x24] sm:$0xf]
  %v1950 = vld [vmem:[%s1939 + $0x28] sm:$0xf]
  %v1951 = vld [vmem:[%s1939 + $0x2c] sm:$0xf]
  %v1952 = vld [vmem:[%s1939 + $0x30] sm:$0xf]
  %v1953 = vld [vmem:[%s1939 + $0x34] sm:$0xf]
  %v1954 = vld [vmem:[%s1939 + $0x38] sm:$0xf]
  %v1955 = vld [vmem:[%s1939 + $0x3c] sm:$0xf]
  %v1972 = vunpack.c.l.b16 %v1940
  %v1973 = vunpack.c.l.b16 %v1941
  %v1974 = vunpack.c.l.b16 %v1942
  %v1975 = vunpack.c.l.b16 %v1943
  %v1976 = vunpack.c.l.b16 %v1944
  %v1977 = vunpack.c.l.b16 %v1945
  %v1978 = vunpack.c.l.b16 %v1946
  %v1979 = vunpack.c.l.b16 %v1947
  %v1980 = vunpack.c.l.b16 %v1948
  %v1981 = vunpack.c.l.b16 %v1949
  %v1982 = vunpack.c.l.b16 %v1950
  %v1983 = vunpack.c.l.b16 %v1951
  %v1984 = vunpack.c.l.b16 %v1952
  %v1985 = vunpack.c.l.b16 %v1953
  %v1986 = vunpack.c.l.b16 %v1954
  %v1987 = vunpack.c.l.b16 %v1955
  %v1988 = vpack.c.b16 %v1973, %v1972
  %v1989 = vpack.c.b16 %v1975, %v1974
  %v1990 = vpack.c.b16 %v1977, %v1976
  %v1991 = vpack.c.b16 %v1979, %v1978
  %v1992 = vpack.c.b16 %v1981, %v1980
  %v1993 = vpack.c.b16 %v1983, %v1982
  %v1994 = vpack.c.b16 %v1985, %v1984
  %v1995 = vpack.c.b16 %v1987, %v1986
  %2004 = vmatprep.subr.bf16.mxu0 0
  %2005 = vmatpush1.bf16.msra.mxu0 %v1988
  %2006 = vmatprep.subr.bf16.mxu0 0
  %2007 = vmatpush1.bf16.msra.mxu0 %v1989
  %2008 = vmatprep.subr.bf16.mxu0 0
  %2009 = vmatpush1.bf16.msra.mxu0 %v1990
  %2010 = vmatprep.subr.bf16.mxu0 0
  %2011 = vmatpush1.bf16.msra.mxu0 %v1991
  %2012 = vmatprep.subr.bf16.mxu0 0
  %2013 = vmatpush1.bf16.msra.mxu0 %v1992
  %2014 = vmatprep.subr.bf16.mxu0 0
  %2015 = vmatpush1.bf16.msra.mxu0 %v1993
  %2016 = vmatprep.subr.bf16.mxu0 0
  %2017 = vmatpush1.bf16.msra.mxu0 %v1994
  %2018 = vmatprep.subr.bf16.mxu0 0
  %2019 = vmatpush1.bf16.msra.mxu0 %v1995
  %2020 = vmatprep.subr.bf16.mxu0 0
  %2021 = vmatpush1.bf16.msra.mxu0 0
  %2022 = vmatprep.subr.bf16.mxu0 0
  %2023 = vmatpush1.bf16.msra.mxu0 0
  %2024 = vmatprep.subr.bf16.mxu0 0
  %2025 = vmatpush1.bf16.msra.mxu0 0
  %2026 = vmatprep.subr.bf16.mxu0 0
  %2027 = vmatpush1.bf16.msra.mxu0 0
  %2028 = vmatprep.subr.bf16.mxu0 0
  %2029 = vmatpush1.bf16.msra.mxu0 0
  %2030 = vmatprep.subr.bf16.mxu0 0
  %2031 = vmatpush1.bf16.msra.mxu0 0
  %2032 = vmatprep.subr.bf16.mxu0 0
  %2033 = vmatpush1.bf16.msra.mxu0 0
  %2034 = vmatprep.subr.bf16.mxu0 0
  %2035 = vmatpush1.bf16.msra.mxu0 0
  %2036 = vmatprep.mubr.bf16.mxu0 0
  %2037 = vmatmul.mubr.bf16.gmra.mrb[0].mxu0 %v1928
  %v2038 = vpop.f32.mrb[0].mxu0
  %v2039 = vadd.f32 0.0, %v2038
  %v2040 = vpop.f32.mrb[0].mxu0
  %v2041 = vpop.f32.mrb[0].mxu0
  %v2042 = vadd.f32 0.0, %v2041
  %v2043 = vpop.f32.mrb[0].mxu0
  %2044 = vmatprep.mubr.bf16.mxu0 0
  %2045 = vmatmul.mubr.bf16.gmra.mrb[0].mxu0 %v1929
  %v2046 = vpop.f32.mrb[0].mxu0
  %v2047 = vadd.f32 0.0, %v2046
  %v2048 = vpop.f32.mrb[0].mxu0
  %v2049 = vpop.f32.mrb[0].mxu0
  %v2050 = vadd.f32 0.0, %v2049
  %v2051 = vpop.f32.mrb[0].mxu0
  %2052 = vmatprep.mubr.bf16.mxu0 0
  %2053 = vmatmul.mubr.bf16.gmra.mrb[0].mxu0 %v1930
  %v2054 = vpop.f32.mrb[0].mxu0
  %v2055 = vadd.f32 0.0, %v2054
  %v2056 = vpop.f32.mrb[0].mxu0
  %v2057 = vpop.f32.mrb[0].mxu0
  %v2058 = vadd.f32 0.0, %v2057
  %v2059 = vpop.f32.mrb[0].mxu0
  %2060 = vmatprep.mubr.bf16.mxu0 0
  %2061 = vmatmul.mubr.bf16.gmra.mrb[0].mxu0 %v1931
  %v2062 = vpop.f32.mrb[0].mxu0
  %v2063 = vadd.f32 0.0, %v2062
  %v2064 = vpop.f32.mrb[0].mxu0
  %v2065 = vpop.f32.mrb[0].mxu0
  %v2066 = vadd.f32 0.0, %v2065
  %v2067 = vpop.f32.mrb[0].mxu0
  %2068 = vmatprep.mubr.bf16.mxu0 0
  %2069 = vmatmul.mubr.bf16.gmra.mrb[0].mxu0 %v1932
  %v2070 = vpop.f32.mrb[0].mxu0
  %v2071 = vadd.f32 0.0, %v2070
  %v2072 = vpop.f32.mrb[0].mxu0
  %v2073 = vpop.f32.mrb[0].mxu0
  %v2074 = vadd.f32 0.0, %v2073
  %v2075 = vpop.f32.mrb[0].mxu0
  %2076 = vmatprep.mubr.bf16.mxu0 0
  %2077 = vmatmul.mubr.bf16.gmra.mrb[0].mxu0 %v1933
  %v2078 = vpop.f32.mrb[0].mxu0
  %v2079 = vadd.f32 0.0, %v2078
  %v2080 = vpop.f32.mrb[0].mxu0
  %v2081 = vpop.f32.mrb[0].mxu0
  %v2082 = vadd.f32 0.0, %v2081
  %v2083 = vpop.f32.mrb[0].mxu0
  %2084 = vmatprep.mubr.bf16.mxu0 0
  %2085 = vmatmul.mubr.bf16.gmra.mrb[0].mxu0 %v1934
  %v2086 = vpop.f32.mrb[0].mxu0
  %v2087 = vadd.f32 0.0, %v2086
  %v2088 = vpop.f32.mrb[0].mxu0
  %v2089 = vpop.f32.mrb[0].mxu0
  %v2090 = vadd.f32 0.0, %v2089
  %v2091 = vpop.f32.mrb[0].mxu0
  %2092 = vmatprep.mubr.bf16.mxu0 0
  %2093 = vmatmul.mubr.bf16.gmra.mrb[0].mxu0 %v1935
  %v2094 = vpop.f32.mrb[0].mxu0
  %v2095 = vadd.f32 0.0, %v2094
  %v2096 = vpop.f32.mrb[0].mxu0
  %v2097 = vpop.f32.mrb[0].mxu0
  %v2098 = vadd.f32 0.0, %v2097
  %v2099 = vpop.f32.mrb[0].mxu0
  %2100 = vmatprep.mubr.bf16.mxu0 0
  %2101 = vmatmul.mubr.bf16.gmra.mrb[0].mxu0 %v1936
  %v2102 = vpop.f32.mrb[0].mxu0
  %v2103 = vadd.f32 0.0, %v2102
  %v2104 = vpop.f32.mrb[0].mxu0
  %v2105 = vpop.f32.mrb[0].mxu0
  %v2106 = vadd.f32 0.0, %v2105
  %v2107 = vpop.f32.mrb[0].mxu0
  %2108 = vmatprep.mubr.bf16.mxu0 0
  %2109 = vmatmul.mubr.bf16.gmra.mrb[0].mxu0 %v1937
  %v2110 = vpop.f32.mrb[0].mxu0
  %v2111 = vadd.f32 0.0, %v2110
  %v2112 = vpop.f32.mrb[0].mxu0
  %v2113 = vpop.f32.mrb[0].mxu0
  %v2114 = vadd.f32 0.0, %v2113
  %v2115 = vpop.f32.mrb[0].mxu0
  %2116 = vmatprep.mubr.bf16.mxu0 0
  %2117 = vmatmul.mubr.bf16.gmra.mrb[0].mxu0 %v1938
  %v2118 = vpop.f32.mrb[0].mxu0
  %v2119 = vadd.f32 0.0, %v2118
  %v2120 = vpop.f32.mrb[0].mxu0
  %v2121 = vpop.f32.mrb[0].mxu0
  %v2122 = vpop.f32.mrb[0].mxu0
  %2123 = vdwg.mxu0
  %v2124 = vadd.f32 %v1886, %v2039
  %v2125 = vadd.f32 %v1887, %v2042
  %v2126 = vadd.f32 %v1888, %v2047
  %v2127 = vadd.f32 %v1889, %v2050
  %v2128 = vadd.f32 %v1890, %v2055
  %v2129 = vadd.f32 %v1891, %v2058
  %v2130 = vadd.f32 %v1892, %v2063
  %v2131 = vadd.f32 %v1893, %v2066
  %v2132 = vadd.f32 %v1894, %v2071
  %v2133 = vadd.f32 %v1895, %v2074
  %v2134 = vadd.f32 %v1896, %v2079
  %v2135 = vadd.f32 %v1897, %v2082
  %v2136 = vadd.f32 %v1898, %v2087
  %v2137 = vadd.f32 %v1899, %v2090
  %v2138 = vadd.f32 %v1900, %v2095
  %v2139 = vadd.f32 %v1901, %v2098
  %v2140 = vadd.f32 %v1902, %v2103
  %v2141 = vadd.f32 %v1903, %v2106
  %v2142 = vadd.f32 %v1904, %v2111
  %v2143 = vadd.f32 %v1905, %v2114
  %v2144 = vadd.f32 %v1906, %v2119
  %v2146 = vlaneseq
  %v2147 = vshrl.u32 %v2146, 7
  %v2148 = vsub.s32 0, %v2147
  %v2149 = vrot.slane %v45, %v2148
  %v2151 = vadd.f32 %v2124, %v2149
  %v2152 = vadd.f32 %v2125, %v2149
  %v2153 = vadd.f32 %v2126, %v2149
  %v2154 = vadd.f32 %v2127, %v2149
  %v2155 = vadd.f32 %v2128, %v2149
  %v2156 = vadd.f32 %v2129, %v2149
  %v2157 = vadd.f32 %v2130, %v2149
  %v2158 = vadd.f32 %v2131, %v2149
  %v2159 = vadd.f32 %v2132, %v2149
  %v2160 = vadd.f32 %v2133, %v2149
  %v2161 = vadd.f32 %v2134, %v2149
  %v2162 = vadd.f32 %v2135, %v2149
  %v2163 = vadd.f32 %v2136, %v2149
  %v2164 = vadd.f32 %v2137, %v2149
  %v2165 = vadd.f32 %v2138, %v2149
  %v2166 = vadd.f32 %v2139, %v2149
  %v2167 = vadd.f32 %v2140, %v2149
  %v2168 = vadd.f32 %v2141, %v2149
  %v2169 = vadd.f32 %v2142, %v2149
  %v2170 = vadd.f32 %v2143, %v2149
  %v2171 = vadd.f32 %v2144, %v2149
  %v2172 = vlaneseq
  %v2173 = vshrl.u32 %v2172, 7
  %v2174 = vsub.s32 0, %v2173
  %v2175 = vrot.slane %v2151, %v2174
  %v2176 = vsub.f32 %v2151, %v2175
  %v2177 = vsub.f32 %v2152, %v2175
  %v2178 = vsub.f32 %v2153, %v2175
  %v2179 = vsub.f32 %v2154, %v2175
  %v2180 = vsub.f32 %v2155, %v2175
  %v2181 = vsub.f32 %v2156, %v2175
  %v2182 = vsub.f32 %v2157, %v2175
  %v2183 = vsub.f32 %v2158, %v2175
  %v2184 = vsub.f32 %v2159, %v2175
  %v2185 = vsub.f32 %v2160, %v2175
  %v2186 = vsub.f32 %v2161, %v2175
  %v2187 = vsub.f32 %v2162, %v2175
  %v2188 = vsub.f32 %v2163, %v2175
  %v2189 = vsub.f32 %v2164, %v2175
  %v2190 = vsub.f32 %v2165, %v2175
  %v2191 = vsub.f32 %v2166, %v2175
  %v2192 = vsub.f32 %v2167, %v2175
  %v2193 = vsub.f32 %v2168, %v2175
  %v2194 = vsub.f32 %v2169, %v2175
  %v2195 = vsub.f32 %v2170, %v2175
  %v2196 = vsub.f32 %v2171, %v2175
  %2198 = vset.pattern.permute.xlu0 0
  %2199 = vperm.xlu0 %2198, %v24
  %v2200 = vpop.permute.xlu0 %2199
  %2203 = vset.pattern.permute.xlu0 0
  %2204 = vperm.xlu0 %2203, %v25
  %v2205 = vpop.permute.xlu0 %2204
  %2208 = vset.pattern.permute.xlu0 0
  %2209 = vperm.xlu0 %2208, %v26
  %v2210 = vpop.permute.xlu0 %2209
  %2213 = vset.pattern.permute.xlu0 0
  %2214 = vperm.xlu0 %2213, %v27
  %v2215 = vpop.permute.xlu0 %2214
  %2218 = vset.pattern.permute.xlu0 0
  %2219 = vperm.xlu0 %2218, %v28
  %v2220 = vpop.permute.xlu0 %2219
  %2223 = vset.pattern.permute.xlu0 0
  %2224 = vperm.xlu0 %2223, %v29
  %v2225 = vpop.permute.xlu0 %2224
  %2228 = vset.pattern.permute.xlu0 0
  %2229 = vperm.xlu0 %2228, %v30
  %v2230 = vpop.permute.xlu0 %2229
  %2233 = vset.pattern.permute.xlu0 0
  %2234 = vperm.xlu0 %2233, %v31
  %v2235 = vpop.permute.xlu0 %2234
  %2238 = vset.pattern.permute.xlu0 0
  %2239 = vperm.xlu0 %2238, %v32
  %v2240 = vpop.permute.xlu0 %2239
  %2243 = vset.pattern.permute.xlu0 0
  %2244 = vperm.xlu0 %2243, %v33
  %v2245 = vpop.permute.xlu0 %2244
  %2248 = vset.pattern.permute.xlu0 0
  %2249 = vperm.xlu0 %2248, %v34
  %v2250 = vpop.permute.xlu0 %2249
  %2253 = vset.pattern.permute.xlu0 0
  %2254 = vperm.xlu0 %2253, %v35
  %v2255 = vpop.permute.xlu0 %2254
  %2258 = vset.pattern.permute.xlu0 0
  %2259 = vperm.xlu0 %2258, %v36
  %v2260 = vpop.permute.xlu0 %2259
  %2263 = vset.pattern.permute.xlu0 0
  %2264 = vperm.xlu0 %2263, %v37
  %v2265 = vpop.permute.xlu0 %2264
  %2268 = vset.pattern.permute.xlu0 0
  %2269 = vperm.xlu0 %2268, %v38
  %v2270 = vpop.permute.xlu0 %2269
  %2273 = vset.pattern.permute.xlu0 0
  %2274 = vperm.xlu0 %2273, %v39
  %v2275 = vpop.permute.xlu0 %2274
  %2278 = vset.pattern.permute.xlu0 0
  %2279 = vperm.xlu0 %2278, %v40
  %v2280 = vpop.permute.xlu0 %2279
  %2283 = vset.pattern.permute.xlu0 0
  %2284 = vperm.xlu0 %2283, %v41
  %v2285 = vpop.permute.xlu0 %2284
  %2288 = vset.pattern.permute.xlu0 0
  %2289 = vperm.xlu0 %2288, %v42
  %v2290 = vpop.permute.xlu0 %2289
  %2293 = vset.pattern.permute.xlu0 0
  %2294 = vperm.xlu0 %2293, %v43
  %v2295 = vpop.permute.xlu0 %2294
  %2298 = vset.pattern.permute.xlu0 0
  %2299 = vperm.xlu0 %2298, %v44
  %v2300 = vpop.permute.xlu0 %2299
  %v2302 = vmul.f32 %v2176, %v2200
  %v2303 = vmul.f32 %v2177, %v2205
  %v2304 = vmul.f32 %v2178, %v2210
  %v2305 = vmul.f32 %v2179, %v2215
  %v2306 = vmul.f32 %v2180, %v2220
  %v2307 = vmul.f32 %v2181, %v2225
  %v2308 = vmul.f32 %v2182, %v2230
  %v2309 = vmul.f32 %v2183, %v2235
  %v2310 = vmul.f32 %v2184, %v2240
  %v2311 = vmul.f32 %v2185, %v2245
  %v2312 = vmul.f32 %v2186, %v2250
  %v2313 = vmul.f32 %v2187, %v2255
  %v2314 = vmul.f32 %v2188, %v2260
  %v2315 = vmul.f32 %v2189, %v2265
  %v2316 = vmul.f32 %v2190, %v2270
  %v2317 = vmul.f32 %v2191, %v2275
  %v2318 = vmul.f32 %v2192, %v2280
  %v2319 = vmul.f32 %v2193, %v2285
  %v2320 = vmul.f32 %v2194, %v2290
  %v2321 = vmul.f32 %v2195, %v2295
  %v2322 = vmul.f32 %v2196, %v2300
  %v2323 = vadd.f32 %v2302, %v2303
  %v2324 = vadd.f32 %v2323, %v2304
  %v2325 = vadd.f32 %v2324, %v2305
  %v2326 = vadd.f32 %v2325, %v2306
  %v2327 = vadd.f32 %v2326, %v2307
  %v2328 = vadd.f32 %v2327, %v2308
  %v2329 = vadd.f32 %v2328, %v2309
  %v2330 = vadd.f32 %v2329, %v2310
  %v2331 = vadd.f32 %v2330, %v2311
  %v2332 = vadd.f32 %v2331, %v2312
  %v2333 = vadd.f32 %v2332, %v2313
  %v2334 = vadd.f32 %v2333, %v2314
  %v2335 = vadd.f32 %v2334, %v2315
  %v2336 = vadd.f32 %v2335, %v2316
  %v2337 = vadd.f32 %v2336, %v2317
  %v2338 = vadd.f32 %v2337, %v2318
  %v2339 = vadd.f32 %v2338, %v2319
  %v2340 = vadd.f32 %v2339, %v2320
  %v2341 = vadd.f32 %v2340, %v2321
  %v2342 = vadd.f32 %v2341, %v2322
  %v2343 = vrot.slane %v2342, 4
  %v2344 = vadd.f32 %v2342, %v2343
  %v2345 = vrot.slane %v2344, 2
  %v2346 = vadd.f32 %v2344, %v2345
  %v2347 = vrot.slane %v2346, 1
  %v2348 = vadd.f32 %v2346, %v2347
  %v2349 = vadd.f32 %v2348, 0.0
  %v2350 = vmul.f32 %v2302, %v2302
  %v2351 = vmul.f32 %v2303, %v2303
  %v2352 = vmul.f32 %v2304, %v2304
  %v2353 = vmul.f32 %v2305, %v2305
  %v2354 = vmul.f32 %v2306, %v2306
  %v2355 = vmul.f32 %v2307, %v2307
  %v2356 = vmul.f32 %v2308, %v2308
  %v2357 = vmul.f32 %v2309, %v2309
  %v2358 = vmul.f32 %v2310, %v2310
  %v2359 = vmul.f32 %v2311, %v2311
  %v2360 = vmul.f32 %v2312, %v2312
  %v2361 = vmul.f32 %v2313, %v2313
  %v2362 = vmul.f32 %v2314, %v2314
  %v2363 = vmul.f32 %v2315, %v2315
  %v2364 = vmul.f32 %v2316, %v2316
  %v2365 = vmul.f32 %v2317, %v2317
  %v2366 = vmul.f32 %v2318, %v2318
  %v2367 = vmul.f32 %v2319, %v2319
  %v2368 = vmul.f32 %v2320, %v2320
  %v2369 = vmul.f32 %v2321, %v2321
  %v2370 = vmul.f32 %v2322, %v2322
  %v2371 = vadd.f32 %v2350, %v2351
  %v2372 = vadd.f32 %v2371, %v2352
  %v2373 = vadd.f32 %v2372, %v2353
  %v2374 = vadd.f32 %v2373, %v2354
  %v2375 = vadd.f32 %v2374, %v2355
  %v2376 = vadd.f32 %v2375, %v2356
  %v2377 = vadd.f32 %v2376, %v2357
  %v2378 = vadd.f32 %v2377, %v2358
  %v2379 = vadd.f32 %v2378, %v2359
  %v2380 = vadd.f32 %v2379, %v2360
  %v2381 = vadd.f32 %v2380, %v2361
  %v2382 = vadd.f32 %v2381, %v2362
  %v2383 = vadd.f32 %v2382, %v2363
  %v2384 = vadd.f32 %v2383, %v2364
  %v2385 = vadd.f32 %v2384, %v2365
  %v2386 = vadd.f32 %v2385, %v2366
  %v2387 = vadd.f32 %v2386, %v2367
  %v2388 = vadd.f32 %v2387, %v2368
  %v2389 = vadd.f32 %v2388, %v2369
  %v2390 = vadd.f32 %v2389, %v2370
  %v2391 = vrot.slane %v2390, 4
  %v2392 = vadd.f32 %v2390, %v2391
  %v2393 = vrot.slane %v2392, 2
  %v2394 = vadd.f32 %v2392, %v2393
  %v2395 = vrot.slane %v2394, 1
  %v2396 = vadd.f32 %v2394, %v2395
  %v2397 = vadd.f32 %v2396, 0.0
  %2398 = vst [vmem:[%s6] sm:$0xff] %v2151
  %2399 = vst [vmem:[%s6 + $0x8] sm:$0xff] %v2152
  %2400 = vst [vmem:[%s6 + $0x10] sm:$0xff] %v2153
  %2401 = vst [vmem:[%s6 + $0x18] sm:$0xff] %v2154
  %2402 = vst [vmem:[%s6 + $0x20] sm:$0xff] %v2155
  %2403 = vst [vmem:[%s6 + $0x28] sm:$0xff] %v2156
  %2404 = vst [vmem:[%s6 + $0x30] sm:$0xff] %v2157
  %2405 = vst [vmem:[%s6 + $0x38] sm:$0xff] %v2158
  %2406 = vst [vmem:[%s6 + $0x40] sm:$0xff] %v2159
  %2407 = vst [vmem:[%s6 + $0x48] sm:$0xff] %v2160
  %2408 = vst [vmem:[%s6 + $0x50] sm:$0xff] %v2161
  %2409 = vst [vmem:[%s6 + $0x58] sm:$0xff] %v2162
  %2410 = vst [vmem:[%s6 + $0x60] sm:$0xff] %v2163
  %2411 = vst [vmem:[%s6 + $0x68] sm:$0xff] %v2164
  %2412 = vst [vmem:[%s6 + $0x70] sm:$0xff] %v2165
  %2413 = vst [vmem:[%s6 + $0x78] sm:$0xff] %v2166
  %2414 = vst [vmem:[%s6 + $0x80] sm:$0xff] %v2167
  %2415 = vst [vmem:[%s6 + $0x88] sm:$0xff] %v2168
  %2416 = vst [vmem:[%s6 + $0x90] sm:$0xff] %v2169
  %2417 = vst [vmem:[%s6 + $0x98] sm:$0xff] %v2170
  %2418 = vst [vmem:[%s6 + $0xa0] sm:$0xff] %v2171
  %s2419 = scalar_lea.vmem %s0, 200
  %v2420 = vld [vmem:[%s2419] sm:$0xff]
  %v2421 = vld [vmem:[%s2419 + $0x8] sm:$0xff]
  %v2422 = vld [vmem:[%s2419 + $0x10] sm:$0xff]
  %v2423 = vld [vmem:[%s2419 + $0x18] sm:$0xff]
  %v2424 = vld [vmem:[%s2419 + $0x20] sm:$0xff]
  %v2425 = vld [vmem:[%s2419 + $0x28] sm:$0xff]
  %v2426 = vld [vmem:[%s2419 + $0x30] sm:$0xff]
  %v2427 = vld [vmem:[%s2419 + $0x38] sm:$0xff]
  %v2428 = vld [vmem:[%s2419 + $0x40] sm:$0xff]
  %v2429 = vld [vmem:[%s2419 + $0x48] sm:$0xff]
  %v2430 = vld [vmem:[%s2419 + $0x50] sm:$0xff]
  %v2431 = vld [vmem:[%s2419 + $0x58] sm:$0xff]
  %v2432 = vld [vmem:[%s2419 + $0x60] sm:$0xff]
  %v2433 = vld [vmem:[%s2419 + $0x68] sm:$0xff]
  %v2434 = vld [vmem:[%s2419 + $0x70] sm:$0xff]
  %v2435 = vld [vmem:[%s2419 + $0x78] sm:$0xff]
  %v2436 = vld [vmem:[%s2419 + $0x80] sm:$0xff]
  %v2437 = vld [vmem:[%s2419 + $0x88] sm:$0xff]
  %v2438 = vld [vmem:[%s2419 + $0x90] sm:$0xff]
  %v2439 = vld [vmem:[%s2419 + $0x98] sm:$0xff]
  %v2440 = vld [vmem:[%s2419 + $0xa0] sm:$0xff]
  %v2441 = vpack.c.bf16 %v2421, %v2420
  %v2442 = vpack.c.bf16 %v2423, %v2422
  %v2443 = vpack.c.bf16 %v2425, %v2424
  %v2444 = vpack.c.bf16 %v2427, %v2426
  %v2445 = vpack.c.bf16 %v2429, %v2428
  %v2446 = vpack.c.bf16 %v2431, %v2430
  %v2447 = vpack.c.bf16 %v2433, %v2432
  %v2448 = vpack.c.bf16 %v2435, %v2434
  %v2449 = vpack.c.bf16 %v2437, %v2436
  %v2450 = vpack.c.bf16 %v2439, %v2438
  %v2451 = vpack.c.bf16 %v2440, %v2440
  %v2452 = vld [vmem:[%s1] sm:$0xf]
  %v2453 = vld [vmem:[%s1 + $0x4] sm:$0xf]
  %v2454 = vld [vmem:[%s1 + $0x8] sm:$0xf]
  %v2455 = vld [vmem:[%s1 + $0xc] sm:$0xf]
  %v2456 = vld [vmem:[%s1 + $0x10] sm:$0xf]
  %v2457 = vld [vmem:[%s1 + $0x14] sm:$0xf]
  %v2458 = vld [vmem:[%s1 + $0x18] sm:$0xf]
  %v2459 = vld [vmem:[%s1 + $0x1c] sm:$0xf]
  %v2460 = vld [vmem:[%s1 + $0x20] sm:$0xf]
  %v2461 = vld [vmem:[%s1 + $0x24] sm:$0xf]
  %v2462 = vld [vmem:[%s1 + $0x28] sm:$0xf]
  %v2463 = vld [vmem:[%s1 + $0x2c] sm:$0xf]
  %v2464 = vld [vmem:[%s1 + $0x30] sm:$0xf]
  %v2465 = vld [vmem:[%s1 + $0x34] sm:$0xf]
  %v2466 = vld [vmem:[%s1 + $0x38] sm:$0xf]
  %v2467 = vld [vmem:[%s1 + $0x3c] sm:$0xf]
  %v2468 = vld [vmem:[%s2419 + $0x1] sm:$0xff]
  %v2469 = vld [vmem:[%s2419 + $0x9] sm:$0xff]
  %v2470 = vld [vmem:[%s2419 + $0x11] sm:$0xff]
  %v2471 = vld [vmem:[%s2419 + $0x19] sm:$0xff]
  %v2472 = vld [vmem:[%s2419 + $0x21] sm:$0xff]
  %v2473 = vld [vmem:[%s2419 + $0x29] sm:$0xff]
  %v2474 = vld [vmem:[%s2419 + $0x31] sm:$0xff]
  %v2475 = vld [vmem:[%s2419 + $0x39] sm:$0xff]
  %v2476 = vld [vmem:[%s2419 + $0x41] sm:$0xff]
  %v2477 = vld [vmem:[%s2419 + $0x49] sm:$0xff]
  %v2478 = vld [vmem:[%s2419 + $0x51] sm:$0xff]
  %v2479 = vld [vmem:[%s2419 + $0x59] sm:$0xff]
  %v2480 = vld [vmem:[%s2419 + $0x61] sm:$0xff]
  %v2481 = vld [vmem:[%s2419 + $0x69] sm:$0xff]
  %v2482 = vld [vmem:[%s2419 + $0x71] sm:$0xff]
  %v2483 = vld [vmem:[%s2419 + $0x79] sm:$0xff]
  %v2484 = vld [vmem:[%s2419 + $0x81] sm:$0xff]
  %v2485 = vld [vmem:[%s2419 + $0x89] sm:$0xff]
  %v2486 = vld [vmem:[%s2419 + $0x91] sm:$0xff]
  %v2487 = vld [vmem:[%s2419 + $0x99] sm:$0xff]
  %v2488 = vld [vmem:[%s2419 + $0xa1] sm:$0xff]
  %v2489 = vpack.c.bf16 %v2469, %v2468
  %v2490 = vpack.c.bf16 %v2471, %v2470
  %v2491 = vpack.c.bf16 %v2473, %v2472
  %v2492 = vpack.c.bf16 %v2475, %v2474
  %v2493 = vpack.c.bf16 %v2477, %v2476
  %v2494 = vpack.c.bf16 %v2479, %v2478
  %v2495 = vpack.c.bf16 %v2481, %v2480
  %v2496 = vpack.c.bf16 %v2483, %v2482
  %v2497 = vpack.c.bf16 %v2485, %v2484
  %v2498 = vpack.c.bf16 %v2487, %v2486
  %v2499 = vpack.c.bf16 %v2488, %v2488
  %v2500 = vld [vmem:[%s126] sm:$0xf]
  %v2501 = vld [vmem:[%s126 + $0x4] sm:$0xf]
  %v2502 = vld [vmem:[%s126 + $0x8] sm:$0xf]
  %v2503 = vld [vmem:[%s126 + $0xc] sm:$0xf]
  %v2504 = vld [vmem:[%s126 + $0x10] sm:$0xf]
  %v2505 = vld [vmem:[%s126 + $0x14] sm:$0xf]
  %v2506 = vld [vmem:[%s126 + $0x18] sm:$0xf]
  %v2507 = vld [vmem:[%s126 + $0x1c] sm:$0xf]
  %v2508 = vld [vmem:[%s126 + $0x20] sm:$0xf]
  %v2509 = vld [vmem:[%s126 + $0x24] sm:$0xf]
  %v2510 = vld [vmem:[%s126 + $0x28] sm:$0xf]
  %v2511 = vld [vmem:[%s126 + $0x2c] sm:$0xf]
  %v2512 = vld [vmem:[%s126 + $0x30] sm:$0xf]
  %v2513 = vld [vmem:[%s126 + $0x34] sm:$0xf]
  %v2514 = vld [vmem:[%s126 + $0x38] sm:$0xf]
  %v2515 = vld [vmem:[%s126 + $0x3c] sm:$0xf]
  %v2532 = vunpack.c.l.b16 %v2500
  %v2533 = vunpack.c.l.b16 %v2501
  %v2534 = vunpack.c.l.b16 %v2502
  %v2535 = vunpack.c.l.b16 %v2503
  %v2536 = vunpack.c.l.b16 %v2504
  %v2537 = vunpack.c.l.b16 %v2505
  %v2538 = vunpack.c.l.b16 %v2506
  %v2539 = vunpack.c.l.b16 %v2507
  %v2540 = vunpack.c.l.b16 %v2508
  %v2541 = vunpack.c.l.b16 %v2509
  %v2542 = vunpack.c.l.b16 %v2510
  %v2543 = vunpack.c.l.b16 %v2511
  %v2544 = vunpack.c.l.b16 %v2512
  %v2545 = vunpack.c.l.b16 %v2513
  %v2546 = vunpack.c.l.b16 %v2514
  %v2547 = vunpack.c.l.b16 %v2515
  %v2548 = vpack.c.b16 %v2533, %v2532
  %v2549 = vpack.c.b16 %v2535, %v2534
  %v2550 = vpack.c.b16 %v2537, %v2536
  %v2551 = vpack.c.b16 %v2539, %v2538
  %v2552 = vpack.c.b16 %v2541, %v2540
  %v2553 = vpack.c.b16 %v2543, %v2542
  %v2554 = vpack.c.b16 %v2545, %v2544
  %v2555 = vpack.c.b16 %v2547, %v2546
  %2564 = vmatprep.subr.bf16.mxu0 0
  %2565 = vmatpush1.bf16.msra.mxu0 %v2548
  %2566 = vmatprep.subr.bf16.mxu0 0
  %2567 = vmatpush1.bf16.msra.mxu0 %v2549
  %2568 = vmatprep.subr.bf16.mxu0 0
  %2569 = vmatpush1.bf16.msra.mxu0 %v2550
  %2570 = vmatprep.subr.bf16.mxu0 0
  %2571 = vmatpush1.bf16.msra.mxu0 %v2551
  %2572 = vmatprep.subr.bf16.mxu0 0
  %2573 = vmatpush1.bf16.msra.mxu0 %v2552
  %2574 = vmatprep.subr.bf16.mxu0 0
  %2575 = vmatpush1.bf16.msra.mxu0 %v2553
  %2576 = vmatprep.subr.bf16.mxu0 0
  %2577 = vmatpush1.bf16.msra.mxu0 %v2554
  %2578 = vmatprep.subr.bf16.mxu0 0
  %2579 = vmatpush1.bf16.msra.mxu0 %v2555
  %2580 = vmatprep.subr.bf16.mxu0 0
  %2581 = vmatpush1.bf16.msra.mxu0 0
  %2582 = vmatprep.subr.bf16.mxu0 0
  %2583 = vmatpush1.bf16.msra.mxu0 0
  %2584 = vmatprep.subr.bf16.mxu0 0
  %2585 = vmatpush1.bf16.msra.mxu0 0
  %2586 = vmatprep.subr.bf16.mxu0 0
  %2587 = vmatpush1.bf16.msra.mxu0 0
  %2588 = vmatprep.subr.bf16.mxu0 0
  %2589 = vmatpush1.bf16.msra.mxu0 0
  %2590 = vmatprep.subr.bf16.mxu0 0
  %2591 = vmatpush1.bf16.msra.mxu0 0
  %2592 = vmatprep.subr.bf16.mxu0 0
  %2593 = vmatpush1.bf16.msra.mxu0 0
  %2594 = vmatprep.subr.bf16.mxu0 0
  %2595 = vmatpush1.bf16.msra.mxu0 0
  %2596 = vmatprep.mubr.bf16.mxu0 0
  %2597 = vmatmul.mubr.bf16.gmra.mrb[0].mxu0 %v2489
  %v2598 = vpop.f32.mrb[0].mxu0
  %v2599 = vadd.f32 0.0, %v2598
  %v2600 = vpop.f32.mrb[0].mxu0
  %v2601 = vpop.f32.mrb[0].mxu0
  %v2602 = vadd.f32 0.0, %v2601
  %v2603 = vpop.f32.mrb[0].mxu0
  %2604 = vmatprep.mubr.bf16.mxu0 0
  %2605 = vmatmul.mubr.bf16.gmra.mrb[0].mxu0 %v2490
  %v2606 = vpop.f32.mrb[0].mxu0
  %v2607 = vadd.f32 0.0, %v2606
  %v2608 = vpop.f32.mrb[0].mxu0
  %v2609 = vpop.f32.mrb[0].mxu0
  %v2610 = vadd.f32 0.0, %v2609
  %v2611 = vpop.f32.mrb[0].mxu0
  %2612 = vmatprep.mubr.bf16.mxu0 0
  %2613 = vmatmul.mubr.bf16.gmra.mrb[0].mxu0 %v2491
  %v2614 = vpop.f32.mrb[0].mxu0
  %v2615 = vadd.f32 0.0, %v2614
  %v2616 = vpop.f32.mrb[0].mxu0
  %v2617 = vpop.f32.mrb[0].mxu0
  %v2618 = vadd.f32 0.0, %v2617
  %v2619 = vpop.f32.mrb[0].mxu0
  %2620 = vmatprep.mubr.bf16.mxu0 0
  %2621 = vmatmul.mubr.bf16.gmra.mrb[0].mxu0 %v2492
  %v2622 = vpop.f32.mrb[0].mxu0
  %v2623 = vadd.f32 0.0, %v2622
  %v2624 = vpop.f32.mrb[0].mxu0
  %v2625 = vpop.f32.mrb[0].mxu0
  %v2626 = vadd.f32 0.0, %v2625
  %v2627 = vpop.f32.mrb[0].mxu0
  %2628 = vmatprep.mubr.bf16.mxu0 0
  %2629 = vmatmul.mubr.bf16.gmra.mrb[0].mxu0 %v2493
  %v2630 = vpop.f32.mrb[0].mxu0
  %v2631 = vadd.f32 0.0, %v2630
  %v2632 = vpop.f32.mrb[0].mxu0
  %v2633 = vpop.f32.mrb[0].mxu0
  %v2634 = vadd.f32 0.0, %v2633
  %v2635 = vpop.f32.mrb[0].mxu0
  %2636 = vmatprep.mubr.bf16.mxu0 0
  %2637 = vmatmul.mubr.bf16.gmra.mrb[0].mxu0 %v2494
  %v2638 = vpop.f32.mrb[0].mxu0
  %v2639 = vadd.f32 0.0, %v2638
  %v2640 = vpop.f32.mrb[0].mxu0
  %v2641 = vpop.f32.mrb[0].mxu0
  %v2642 = vadd.f32 0.0, %v2641
  %v2643 = vpop.f32.mrb[0].mxu0
  %2644 = vmatprep.mubr.bf16.mxu0 0
  %2645 = vmatmul.mubr.bf16.gmra.mrb[0].mxu0 %v2495
  %v2646 = vpop.f32.mrb[0].mxu0
  %v2647 = vadd.f32 0.0, %v2646
  %v2648 = vpop.f32.mrb[0].mxu0
  %v2649 = vpop.f32.mrb[0].mxu0
  %v2650 = vadd.f32 0.0, %v2649
  %v2651 = vpop.f32.mrb[0].mxu0
  %2652 = vmatprep.mubr.bf16.mxu0 0
  %2653 = vmatmul.mubr.bf16.gmra.mrb[0].mxu0 %v2496
  %v2654 = vpop.f32.mrb[0].mxu0
  %v2655 = vadd.f32 0.0, %v2654
  %v2656 = vpop.f32.mrb[0].mxu0
  %v2657 = vpop.f32.mrb[0].mxu0
  %v2658 = vadd.f32 0.0, %v2657
  %v2659 = vpop.f32.mrb[0].mxu0
  %2660 = vmatprep.mubr.bf16.mxu0 0
  %2661 = vmatmul.mubr.bf16.gmra.mrb[0].mxu0 %v2497
  %v2662 = vpop.f32.mrb[0].mxu0
  %v2663 = vadd.f32 0.0, %v2662
  %v2664 = vpop.f32.mrb[0].mxu0
  %v2665 = vpop.f32.mrb[0].mxu0
  %v2666 = vadd.f32 0.0, %v2665
  %v2667 = vpop.f32.mrb[0].mxu0
  %2668 = vmatprep.mubr.bf16.mxu0 0
  %2669 = vmatmul.mubr.bf16.gmra.mrb[0].mxu0 %v2498
  %v2670 = vpop.f32.mrb[0].mxu0
  %v2671 = vadd.f32 0.0, %v2670
  %v2672 = vpop.f32.mrb[0].mxu0
  %v2673 = vpop.f32.mrb[0].mxu0
  %v2674 = vadd.f32 0.0, %v2673
  %v2675 = vpop.f32.mrb[0].mxu0
  %2676 = vmatprep.mubr.bf16.mxu0 0
  %2677 = vmatmul.mubr.bf16.gmra.mrb[0].mxu0 %v2499
  %v2678 = vpop.f32.mrb[0].mxu0
  %v2679 = vadd.f32 0.0, %v2678
  %v2680 = vpop.f32.mrb[0].mxu0
  %v2681 = vpop.f32.mrb[0].mxu0
  %v2682 = vpop.f32.mrb[0].mxu0
  %2683 = vdwg.mxu0
  %v2700 = vunpack.c.l.b16 %v2452
  %v2701 = vunpack.c.l.b16 %v2453
  %v2702 = vunpack.c.l.b16 %v2454
  %v2703 = vunpack.c.l.b16 %v2455
  %v2704 = vunpack.c.l.b16 %v2456
  %v2705 = vunpack.c.l.b16 %v2457
  %v2706 = vunpack.c.l.b16 %v2458
  %v2707 = vunpack.c.l.b16 %v2459
  %v2708 = vunpack.c.l.b16 %v2460
  %v2709 = vunpack.c.l.b16 %v2461
  %v2710 = vunpack.c.l.b16 %v2462
  %v2711 = vunpack.c.l.b16 %v2463
  %v2712 = vunpack.c.l.b16 %v2464
  %v2713 = vunpack.c.l.b16 %v2465
  %v2714 = vunpack.c.l.b16 %v2466
  %v2715 = vunpack.c.l.b16 %v2467
  %v2716 = vpack.c.b16 %v2701, %v2700
  %v2717 = vpack.c.b16 %v2703, %v2702
  %v2718 = vpack.c.b16 %v2705, %v2704
  %v2719 = vpack.c.b16 %v2707, %v2706
  %v2720 = vpack.c.b16 %v2709, %v2708
  %v2721 = vpack.c.b16 %v2711, %v2710
  %v2722 = vpack.c.b16 %v2713, %v2712
  %v2723 = vpack.c.b16 %v2715, %v2714
  %2732 = vmatprep.subr.bf16.mxu0 0
  %2733 = vmatpush1.bf16.msra.mxu0 %v2716
  %2734 = vmatprep.subr.bf16.mxu0 0
  %2735 = vmatpush1.bf16.msra.mxu0 %v2717
  %2736 = vmatprep.subr.bf16.mxu0 0
  %2737 = vmatpush1.bf16.msra.mxu0 %v2718
  %2738 = vmatprep.subr.bf16.mxu0 0
  %2739 = vmatpush1.bf16.msra.mxu0 %v2719
  %2740 = vmatprep.subr.bf16.mxu0 0
  %2741 = vmatpush1.bf16.msra.mxu0 %v2720
  %2742 = vmatprep.subr.bf16.mxu0 0
  %2743 = vmatpush1.bf16.msra.mxu0 %v2721
  %2744 = vmatprep.subr.bf16.mxu0 0
  %2745 = vmatpush1.bf16.msra.mxu0 %v2722
  %2746 = vmatprep.subr.bf16.mxu0 0
  %2747 = vmatpush1.bf16.msra.mxu0 %v2723
  %2748 = vmatprep.subr.bf16.mxu0 0
  %2749 = vmatpush1.bf16.msra.mxu0 0
  %2750 = vmatprep.subr.bf16.mxu0 0
  %2751 = vmatpush1.bf16.msra.mxu0 0
  %2752 = vmatprep.subr.bf16.mxu0 0
  %2753 = vmatpush1.bf16.msra.mxu0 0
  %2754 = vmatprep.subr.bf16.mxu0 0
  %2755 = vmatpush1.bf16.msra.mxu0 0
  %2756 = vmatprep.subr.bf16.mxu0 0
  %2757 = vmatpush1.bf16.msra.mxu0 0
  %2758 = vmatprep.subr.bf16.mxu0 0
  %2759 = vmatpush1.bf16.msra.mxu0 0
  %2760 = vmatprep.subr.bf16.mxu0 0
  %2761 = vmatpush1.bf16.msra.mxu0 0
  %2762 = vmatprep.subr.bf16.mxu0 0
  %2763 = vmatpush1.bf16.msra.mxu0 0
  %2764 = vmatprep.mubr.bf16.mxu0 0
  %2765 = vmatmul.mubr.bf16.gmra.mrb[0].mxu0 %v2441
  %v2766 = vpop.f32.mrb[0].mxu0
  %v2767 = vadd.f32 %v2599, %v2766
  %v2768 = vpop.f32.mrb[0].mxu0
  %v2769 = vpop.f32.mrb[0].mxu0
  %v2770 = vadd.f32 %v2602, %v2769
  %v2771 = vpop.f32.mrb[0].mxu0
  %2772 = vmatprep.mubr.bf16.mxu0 0
  %2773 = vmatmul.mubr.bf16.gmra.mrb[0].mxu0 %v2442
  %v2774 = vpop.f32.mrb[0].mxu0
  %v2775 = vadd.f32 %v2607, %v2774
  %v2776 = vpop.f32.mrb[0].mxu0
  %v2777 = vpop.f32.mrb[0].mxu0
  %v2778 = vadd.f32 %v2610, %v2777
  %v2779 = vpop.f32.mrb[0].mxu0
  %2780 = vmatprep.mubr.bf16.mxu0 0
  %2781 = vmatmul.mubr.bf16.gmra.mrb[0].mxu0 %v2443
  %v2782 = vpop.f32.mrb[0].mxu0
  %v2783 = vadd.f32 %v2615, %v2782
  %v2784 = vpop.f32.mrb[0].mxu0
  %v2785 = vpop.f32.mrb[0].mxu0
  %v2786 = vadd.f32 %v2618, %v2785
  %v2787 = vpop.f32.mrb[0].mxu0
  %2788 = vmatprep.mubr.bf16.mxu0 0
  %2789 = vmatmul.mubr.bf16.gmra.mrb[0].mxu0 %v2444
  %v2790 = vpop.f32.mrb[0].mxu0
  %v2791 = vadd.f32 %v2623, %v2790
  %v2792 = vpop.f32.mrb[0].mxu0
  %v2793 = vpop.f32.mrb[0].mxu0
  %v2794 = vadd.f32 %v2626, %v2793
  %v2795 = vpop.f32.mrb[0].mxu0
  %2796 = vmatprep.mubr.bf16.mxu0 0
  %2797 = vmatmul.mubr.bf16.gmra.mrb[0].mxu0 %v2445
  %v2798 = vpop.f32.mrb[0].mxu0
  %v2799 = vadd.f32 %v2631, %v2798
  %v2800 = vpop.f32.mrb[0].mxu0
  %v2801 = vpop.f32.mrb[0].mxu0
  %v2802 = vadd.f32 %v2634, %v2801
  %v2803 = vpop.f32.mrb[0].mxu0
  %2804 = vmatprep.mubr.bf16.mxu0 0
  %2805 = vmatmul.mubr.bf16.gmra.mrb[0].mxu0 %v2446
  %v2806 = vpop.f32.mrb[0].mxu0
  %v2807 = vadd.f32 %v2639, %v2806
  %v2808 = vpop.f32.mrb[0].mxu0
  %v2809 = vpop.f32.mrb[0].mxu0
  %v2810 = vadd.f32 %v2642, %v2809
  %v2811 = vpop.f32.mrb[0].mxu0
  %2812 = vmatprep.mubr.bf16.mxu0 0
  %2813 = vmatmul.mubr.bf16.gmra.mrb[0].mxu0 %v2447
  %v2814 = vpop.f32.mrb[0].mxu0
  %v2815 = vadd.f32 %v2647, %v2814
  %v2816 = vpop.f32.mrb[0].mxu0
  %v2817 = vpop.f32.mrb[0].mxu0
  %v2818 = vadd.f32 %v2650, %v2817
  %v2819 = vpop.f32.mrb[0].mxu0
  %2820 = vmatprep.mubr.bf16.mxu0 0
  %2821 = vmatmul.mubr.bf16.gmra.mrb[0].mxu0 %v2448
  %v2822 = vpop.f32.mrb[0].mxu0
  %v2823 = vadd.f32 %v2655, %v2822
  %v2824 = vpop.f32.mrb[0].mxu0
  %v2825 = vpop.f32.mrb[0].mxu0
  %v2826 = vadd.f32 %v2658, %v2825
  %v2827 = vpop.f32.mrb[0].mxu0
  %2828 = vmatprep.mubr.bf16.mxu0 0
  %2829 = vmatmul.mubr.bf16.gmra.mrb[0].mxu0 %v2449
  %v2830 = vpop.f32.mrb[0].mxu0
  %v2831 = vadd.f32 %v2663, %v2830
  %v2832 = vpop.f32.mrb[0].mxu0
  %v2833 = vpop.f32.mrb[0].mxu0
  %v2834 = vadd.f32 %v2666, %v2833
  %v2835 = vpop.f32.mrb[0].mxu0
  %2836 = vmatprep.mubr.bf16.mxu0 0
  %2837 = vmatmul.mubr.bf16.gmra.mrb[0].mxu0 %v2450
  %v2838 = vpop.f32.mrb[0].mxu0
  %v2839 = vadd.f32 %v2671, %v2838
  %v2840 = vpop.f32.mrb[0].mxu0
  %v2841 = vpop.f32.mrb[0].mxu0
  %v2842 = vadd.f32 %v2674, %v2841
  %v2843 = vpop.f32.mrb[0].mxu0
  %2844 = vmatprep.mubr.bf16.mxu0 0
  %2845 = vmatmul.mubr.bf16.gmra.mrb[0].mxu0 %v2451
  %v2846 = vpop.f32.mrb[0].mxu0
  %v2847 = vadd.f32 %v2679, %v2846
  %v2848 = vpop.f32.mrb[0].mxu0
  %v2849 = vpop.f32.mrb[0].mxu0
  %v2850 = vpop.f32.mrb[0].mxu0
  %2851 = vdwg.mxu0
  %v2852 = vld [vmem:[%s2419 + $0x2] sm:$0xff]
  %v2853 = vld [vmem:[%s2419 + $0xa] sm:$0xff]
  %v2854 = vld [vmem:[%s2419 + $0x12] sm:$0xff]
  %v2855 = vld [vmem:[%s2419 + $0x1a] sm:$0xff]
  %v2856 = vld [vmem:[%s2419 + $0x22] sm:$0xff]
  %v2857 = vld [vmem:[%s2419 + $0x2a] sm:$0xff]
  %v2858 = vld [vmem:[%s2419 + $0x32] sm:$0xff]
  %v2859 = vld [vmem:[%s2419 + $0x3a] sm:$0xff]
  %v2860 = vld [vmem:[%s2419 + $0x42] sm:$0xff]
  %v2861 = vld [vmem:[%s2419 + $0x4a] sm:$0xff]
  %v2862 = vld [vmem:[%s2419 + $0x52] sm:$0xff]
  %v2863 = vld [vmem:[%s2419 + $0x5a] sm:$0xff]
  %v2864 = vld [vmem:[%s2419 + $0x62] sm:$0xff]
  %v2865 = vld [vmem:[%s2419 + $0x6a] sm:$0xff]
  %v2866 = vld [vmem:[%s2419 + $0x72] sm:$0xff]
  %v2867 = vld [vmem:[%s2419 + $0x7a] sm:$0xff]
  %v2868 = vld [vmem:[%s2419 + $0x82] sm:$0xff]
  %v2869 = vld [vmem:[%s2419 + $0x8a] sm:$0xff]
  %v2870 = vld [vmem:[%s2419 + $0x92] sm:$0xff]
  %v2871 = vld [vmem:[%s2419 + $0x9a] sm:$0xff]
  %v2872 = vld [vmem:[%s2419 + $0xa2] sm:$0xff]
  %v2873 = vpack.c.bf16 %v2853, %v2852
  %v2874 = vpack.c.bf16 %v2855, %v2854
  %v2875 = vpack.c.bf16 %v2857, %v2856
  %v2876 = vpack.c.bf16 %v2859, %v2858
  %v2877 = vpack.c.bf16 %v2861, %v2860
  %v2878 = vpack.c.bf16 %v2863, %v2862
  %v2879 = vpack.c.bf16 %v2865, %v2864
  %v2880 = vpack.c.bf16 %v2867, %v2866
  %v2881 = vpack.c.bf16 %v2869, %v2868
  %v2882 = vpack.c.bf16 %v2871, %v2870
  %v2883 = vpack.c.bf16 %v2872, %v2872
  %v2884 = vld [vmem:[%s511] sm:$0xf]
  %v2885 = vld [vmem:[%s511 + $0x4] sm:$0xf]
  %v2886 = vld [vmem:[%s511 + $0x8] sm:$0xf]
  %v2887 = vld [vmem:[%s511 + $0xc] sm:$0xf]
  %v2888 = vld [vmem:[%s511 + $0x10] sm:$0xf]
  %v2889 = vld [vmem:[%s511 + $0x14] sm:$0xf]
  %v2890 = vld [vmem:[%s511 + $0x18] sm:$0xf]
  %v2891 = vld [vmem:[%s511 + $0x1c] sm:$0xf]
  %v2892 = vld [vmem:[%s511 + $0x20] sm:$0xf]
  %v2893 = vld [vmem:[%s511 + $0x24] sm:$0xf]
  %v2894 = vld [vmem:[%s511 + $0x28] sm:$0xf]
  %v2895 = vld [vmem:[%s511 + $0x2c] sm:$0xf]
  %v2896 = vld [vmem:[%s511 + $0x30] sm:$0xf]
  %v2897 = vld [vmem:[%s511 + $0x34] sm:$0xf]
  %v2898 = vld [vmem:[%s511 + $0x38] sm:$0xf]
  %v2899 = vld [vmem:[%s511 + $0x3c] sm:$0xf]
  %v2916 = vunpack.c.l.b16 %v2884
  %v2917 = vunpack.c.l.b16 %v2885
  %v2918 = vunpack.c.l.b16 %v2886
  %v2919 = vunpack.c.l.b16 %v2887
  %v2920 = vunpack.c.l.b16 %v2888
  %v2921 = vunpack.c.l.b16 %v2889
  %v2922 = vunpack.c.l.b16 %v2890
  %v2923 = vunpack.c.l.b16 %v2891
  %v2924 = vunpack.c.l.b16 %v2892
  %v2925 = vunpack.c.l.b16 %v2893
  %v2926 = vunpack.c.l.b16 %v2894
  %v2927 = vunpack.c.l.b16 %v2895
  %v2928 = vunpack.c.l.b16 %v2896
  %v2929 = vunpack.c.l.b16 %v2897
  %v2930 = vunpack.c.l.b16 %v2898
  %v2931 = vunpack.c.l.b16 %v2899
  %v2932 = vpack.c.b16 %v2917, %v2916
  %v2933 = vpack.c.b16 %v2919, %v2918
  %v2934 = vpack.c.b16 %v2921, %v2920
  %v2935 = vpack.c.b16 %v2923, %v2922
  %v2936 = vpack.c.b16 %v2925, %v2924
  %v2937 = vpack.c.b16 %v2927, %v2926
  %v2938 = vpack.c.b16 %v2929, %v2928
  %v2939 = vpack.c.b16 %v2931, %v2930
  %2948 = vmatprep.subr.bf16.mxu0 0
  %2949 = vmatpush1.bf16.msra.mxu0 %v2932
  %2950 = vmatprep.subr.bf16.mxu0 0
  %2951 = vmatpush1.bf16.msra.mxu0 %v2933
  %2952 = vmatprep.subr.bf16.mxu0 0
  %2953 = vmatpush1.bf16.msra.mxu0 %v2934
  %2954 = vmatprep.subr.bf16.mxu0 0
  %2955 = vmatpush1.bf16.msra.mxu0 %v2935
  %2956 = vmatprep.subr.bf16.mxu0 0
  %2957 = vmatpush1.bf16.msra.mxu0 %v2936
  %2958 = vmatprep.subr.bf16.mxu0 0
  %2959 = vmatpush1.bf16.msra.mxu0 %v2937
  %2960 = vmatprep.subr.bf16.mxu0 0
  %2961 = vmatpush1.bf16.msra.mxu0 %v2938
  %2962 = vmatprep.subr.bf16.mxu0 0
  %2963 = vmatpush1.bf16.msra.mxu0 %v2939
  %2964 = vmatprep.subr.bf16.mxu0 0
  %2965 = vmatpush1.bf16.msra.mxu0 0
  %2966 = vmatprep.subr.bf16.mxu0 0
  %2967 = vmatpush1.bf16.msra.mxu0 0
  %2968 = vmatprep.subr.bf16.mxu0 0
  %2969 = vmatpush1.bf16.msra.mxu0 0
  %2970 = vmatprep.subr.bf16.mxu0 0
  %2971 = vmatpush1.bf16.msra.mxu0 0
  %2972 = vmatprep.subr.bf16.mxu0 0
  %2973 = vmatpush1.bf16.msra.mxu0 0
  %2974 = vmatprep.subr.bf16.mxu0 0
  %2975 = vmatpush1.bf16.msra.mxu0 0
  %2976 = vmatprep.subr.bf16.mxu0 0
  %2977 = vmatpush1.bf16.msra.mxu0 0
  %2978 = vmatprep.subr.bf16.mxu0 0
  %2979 = vmatpush1.bf16.msra.mxu0 0
  %2980 = vmatprep.mubr.bf16.mxu0 0
  %2981 = vmatmul.mubr.bf16.gmra.mrb[0].mxu0 %v2873
  %v2982 = vpop.f32.mrb[0].mxu0
  %v2983 = vadd.f32 0.0, %v2982
  %v2984 = vpop.f32.mrb[0].mxu0
  %v2985 = vpop.f32.mrb[0].mxu0
  %v2986 = vadd.f32 0.0, %v2985
  %v2987 = vpop.f32.mrb[0].mxu0
  %2988 = vmatprep.mubr.bf16.mxu0 0
  %2989 = vmatmul.mubr.bf16.gmra.mrb[0].mxu0 %v2874
  %v2990 = vpop.f32.mrb[0].mxu0
  %v2991 = vadd.f32 0.0, %v2990
  %v2992 = vpop.f32.mrb[0].mxu0
  %v2993 = vpop.f32.mrb[0].mxu0
  %v2994 = vadd.f32 0.0, %v2993
  %v2995 = vpop.f32.mrb[0].mxu0
  %2996 = vmatprep.mubr.bf16.mxu0 0
  %2997 = vmatmul.mubr.bf16.gmra.mrb[0].mxu0 %v2875
  %v2998 = vpop.f32.mrb[0].mxu0
  %v2999 = vadd.f32 0.0, %v2998
  %v3000 = vpop.f32.mrb[0].mxu0
  %v3001 = vpop.f32.mrb[0].mxu0
  %v3002 = vadd.f32 0.0, %v3001
  %v3003 = vpop.f32.mrb[0].mxu0
  %3004 = vmatprep.mubr.bf16.mxu0 0
  %3005 = vmatmul.mubr.bf16.gmra.mrb[0].mxu0 %v2876
  %v3006 = vpop.f32.mrb[0].mxu0
  %v3007 = vadd.f32 0.0, %v3006
  %v3008 = vpop.f32.mrb[0].mxu0
  %v3009 = vpop.f32.mrb[0].mxu0
  %v3010 = vadd.f32 0.0, %v3009
  %v3011 = vpop.f32.mrb[0].mxu0
  %3012 = vmatprep.mubr.bf16.mxu0 0
  %3013 = vmatmul.mubr.bf16.gmra.mrb[0].mxu0 %v2877
  %v3014 = vpop.f32.mrb[0].mxu0
  %v3015 = vadd.f32 0.0, %v3014
  %v3016 = vpop.f32.mrb[0].mxu0
  %v3017 = vpop.f32.mrb[0].mxu0
  %v3018 = vadd.f32 0.0, %v3017
  %v3019 = vpop.f32.mrb[0].mxu0
  %3020 = vmatprep.mubr.bf16.mxu0 0
  %3021 = vmatmul.mubr.bf16.gmra.mrb[0].mxu0 %v2878
  %v3022 = vpop.f32.mrb[0].mxu0
  %v3023 = vadd.f32 0.0, %v3022
  %v3024 = vpop.f32.mrb[0].mxu0
  %v3025 = vpop.f32.mrb[0].mxu0
  %v3026 = vadd.f32 0.0, %v3025
  %v3027 = vpop.f32.mrb[0].mxu0
  %3028 = vmatprep.mubr.bf16.mxu0 0
  %3029 = vmatmul.mubr.bf16.gmra.mrb[0].mxu0 %v2879
  %v3030 = vpop.f32.mrb[0].mxu0
  %v3031 = vadd.f32 0.0, %v3030
  %v3032 = vpop.f32.mrb[0].mxu0
  %v3033 = vpop.f32.mrb[0].mxu0
  %v3034 = vadd.f32 0.0, %v3033
  %v3035 = vpop.f32.mrb[0].mxu0
  %3036 = vmatprep.mubr.bf16.mxu0 0
  %3037 = vmatmul.mubr.bf16.gmra.mrb[0].mxu0 %v2880
  %v3038 = vpop.f32.mrb[0].mxu0
  %v3039 = vadd.f32 0.0, %v3038
  %v3040 = vpop.f32.mrb[0].mxu0
  %v3041 = vpop.f32.mrb[0].mxu0
  %v3042 = vadd.f32 0.0, %v3041
  %v3043 = vpop.f32.mrb[0].mxu0
  %3044 = vmatprep.mubr.bf16.mxu0 0
  %3045 = vmatmul.mubr.bf16.gmra.mrb[0].mxu0 %v2881
  %v3046 = vpop.f32.mrb[0].mxu0
  %v3047 = vadd.f32 0.0, %v3046
  %v3048 = vpop.f32.mrb[0].mxu0
  %v3049 = vpop.f32.mrb[0].mxu0
  %v3050 = vadd.f32 0.0, %v3049
  %v3051 = vpop.f32.mrb[0].mxu0
  %3052 = vmatprep.mubr.bf16.mxu0 0
  %3053 = vmatmul.mubr.bf16.gmra.mrb[0].mxu0 %v2882
  %v3054 = vpop.f32.mrb[0].mxu0
  %v3055 = vadd.f32 0.0, %v3054
  %v3056 = vpop.f32.mrb[0].mxu0
  %v3057 = vpop.f32.mrb[0].mxu0
  %v3058 = vadd.f32 0.0, %v3057
  %v3059 = vpop.f32.mrb[0].mxu0
  %3060 = vmatprep.mubr.bf16.mxu0 0
  %3061 = vmatmul.mubr.bf16.gmra.mrb[0].mxu0 %v2883
  %v3062 = vpop.f32.mrb[0].mxu0
  %v3063 = vadd.f32 0.0, %v3062
  %v3064 = vpop.f32.mrb[0].mxu0
  %v3065 = vpop.f32.mrb[0].mxu0
  %v3066 = vpop.f32.mrb[0].mxu0
  %3067 = vdwg.mxu0
  %v3068 = vadd.f32 %v2767, %v2983
  %v3069 = vadd.f32 %v2770, %v2986
  %v3070 = vadd.f32 %v2775, %v2991
  %v3071 = vadd.f32 %v2778, %v2994
  %v3072 = vadd.f32 %v2783, %v2999
  %v3073 = vadd.f32 %v2786, %v3002
  %v3074 = vadd.f32 %v2791, %v3007
  %v3075 = vadd.f32 %v2794, %v3010
  %v3076 = vadd.f32 %v2799, %v3015
  %v3077 = vadd.f32 %v2802, %v3018
  %v3078 = vadd.f32 %v2807, %v3023
  %v3079 = vadd.f32 %v2810, %v3026
  %v3080 = vadd.f32 %v2815, %v3031
  %v3081 = vadd.f32 %v2818, %v3034
  %v3082 = vadd.f32 %v2823, %v3039
  %v3083 = vadd.f32 %v2826, %v3042
  %v3084 = vadd.f32 %v2831, %v3047
  %v3085 = vadd.f32 %v2834, %v3050
  %v3086 = vadd.f32 %v2839, %v3055
  %v3087 = vadd.f32 %v2842, %v3058
  %v3088 = vadd.f32 %v2847, %v3063
  %v3089 = vld [vmem:[%s2419 + $0xe] sm:$0xff]
  %v3090 = vld [vmem:[%s2419 + $0x16] sm:$0xff]
  %v3091 = vld [vmem:[%s2419 + $0x1e] sm:$0xff]
  %v3092 = vld [vmem:[%s2419 + $0x26] sm:$0xff]
  %v3093 = vld [vmem:[%s2419 + $0x2e] sm:$0xff]
  %v3094 = vld [vmem:[%s2419 + $0x36] sm:$0xff]
  %v3095 = vld [vmem:[%s2419 + $0x3e] sm:$0xff]
  %v3096 = vld [vmem:[%s2419 + $0x46] sm:$0xff]
  %v3097 = vld [vmem:[%s2419 + $0x4e] sm:$0xff]
  %v3098 = vld [vmem:[%s2419 + $0x56] sm:$0xff]
  %v3099 = vld [vmem:[%s2419 + $0x5e] sm:$0xff]
  %v3100 = vld [vmem:[%s2419 + $0x66] sm:$0xff]
  %v3101 = vld [vmem:[%s2419 + $0x6e] sm:$0xff]
  %v3102 = vld [vmem:[%s2419 + $0x76] sm:$0xff]
  %v3103 = vld [vmem:[%s2419 + $0x7e] sm:$0xff]
  %v3104 = vld [vmem:[%s2419 + $0x86] sm:$0xff]
  %v3105 = vld [vmem:[%s2419 + $0x8e] sm:$0xff]
  %v3106 = vld [vmem:[%s2419 + $0x96] sm:$0xff]
  %v3107 = vld [vmem:[%s2419 + $0x9e] sm:$0xff]
  %v3108 = vld [vmem:[%s2419 + $0xa6] sm:$0xff]
  %v3109 = vld [vmem:[%s2419 + $0xae] sm:$0xff]
  %v3110 = vpack.c.bf16 %v3090, %v3089
  %v3111 = vpack.c.bf16 %v3092, %v3091
  %v3112 = vpack.c.bf16 %v3094, %v3093
  %v3113 = vpack.c.bf16 %v3096, %v3095
  %v3114 = vpack.c.bf16 %v3098, %v3097
  %v3115 = vpack.c.bf16 %v3100, %v3099
  %v3116 = vpack.c.bf16 %v3102, %v3101
  %v3117 = vpack.c.bf16 %v3104, %v3103
  %v3118 = vpack.c.bf16 %v3106, %v3105
  %v3119 = vpack.c.bf16 %v3108, %v3107
  %v3120 = vpack.c.bf16 %v3109, %v3109
  %v3121 = vld [vmem:[%s749] sm:$0xf]
  %v3122 = vld [vmem:[%s749 + $0x4] sm:$0xf]
  %v3123 = vld [vmem:[%s749 + $0x8] sm:$0xf]
  %v3124 = vld [vmem:[%s749 + $0xc] sm:$0xf]
  %v3125 = vld [vmem:[%s749 + $0x10] sm:$0xf]
  %v3126 = vld [vmem:[%s749 + $0x14] sm:$0xf]
  %v3127 = vld [vmem:[%s749 + $0x18] sm:$0xf]
  %v3128 = vld [vmem:[%s749 + $0x1c] sm:$0xf]
  %v3129 = vld [vmem:[%s749 + $0x20] sm:$0xf]
  %v3130 = vld [vmem:[%s749 + $0x24] sm:$0xf]
  %v3131 = vld [vmem:[%s749 + $0x28] sm:$0xf]
  %v3132 = vld [vmem:[%s749 + $0x2c] sm:$0xf]
  %v3133 = vld [vmem:[%s749 + $0x30] sm:$0xf]
  %v3134 = vld [vmem:[%s749 + $0x34] sm:$0xf]
  %v3135 = vld [vmem:[%s749 + $0x38] sm:$0xf]
  %v3136 = vld [vmem:[%s749 + $0x3c] sm:$0xf]
  %v3153 = vunpack.c.l.b16 %v3121
  %v3154 = vunpack.c.l.b16 %v3122
  %v3155 = vunpack.c.l.b16 %v3123
  %v3156 = vunpack.c.l.b16 %v3124
  %v3157 = vunpack.c.l.b16 %v3125
  %v3158 = vunpack.c.l.b16 %v3126
  %v3159 = vunpack.c.l.b16 %v3127
  %v3160 = vunpack.c.l.b16 %v3128
  %v3161 = vunpack.c.l.b16 %v3129
  %v3162 = vunpack.c.l.b16 %v3130
  %v3163 = vunpack.c.l.b16 %v3131
  %v3164 = vunpack.c.l.b16 %v3132
  %v3165 = vunpack.c.l.b16 %v3133
  %v3166 = vunpack.c.l.b16 %v3134
  %v3167 = vunpack.c.l.b16 %v3135
  %v3168 = vunpack.c.l.b16 %v3136
  %v3169 = vpack.c.b16 %v3154, %v3153
  %v3170 = vpack.c.b16 %v3156, %v3155
  %v3171 = vpack.c.b16 %v3158, %v3157
  %v3172 = vpack.c.b16 %v3160, %v3159
  %v3173 = vpack.c.b16 %v3162, %v3161
  %v3174 = vpack.c.b16 %v3164, %v3163
  %v3175 = vpack.c.b16 %v3166, %v3165
  %v3176 = vpack.c.b16 %v3168, %v3167
  %3185 = vmatprep.subr.bf16.mxu0 0
  %3186 = vmatpush1.bf16.msra.mxu0 %v3169
  %3187 = vmatprep.subr.bf16.mxu0 0
  %3188 = vmatpush1.bf16.msra.mxu0 %v3170
  %3189 = vmatprep.subr.bf16.mxu0 0
  %3190 = vmatpush1.bf16.msra.mxu0 %v3171
  %3191 = vmatprep.subr.bf16.mxu0 0
  %3192 = vmatpush1.bf16.msra.mxu0 %v3172
  %3193 = vmatprep.subr.bf16.mxu0 0
  %3194 = vmatpush1.bf16.msra.mxu0 %v3173
  %3195 = vmatprep.subr.bf16.mxu0 0
  %3196 = vmatpush1.bf16.msra.mxu0 %v3174
  %3197 = vmatprep.subr.bf16.mxu0 0
  %3198 = vmatpush1.bf16.msra.mxu0 %v3175
  %3199 = vmatprep.subr.bf16.mxu0 0
  %3200 = vmatpush1.bf16.msra.mxu0 %v3176
  %3201 = vmatprep.subr.bf16.mxu0 0
  %3202 = vmatpush1.bf16.msra.mxu0 0
  %3203 = vmatprep.subr.bf16.mxu0 0
  %3204 = vmatpush1.bf16.msra.mxu0 0
  %3205 = vmatprep.subr.bf16.mxu0 0
  %3206 = vmatpush1.bf16.msra.mxu0 0
  %3207 = vmatprep.subr.bf16.mxu0 0
  %3208 = vmatpush1.bf16.msra.mxu0 0
  %3209 = vmatprep.subr.bf16.mxu0 0
  %3210 = vmatpush1.bf16.msra.mxu0 0
  %3211 = vmatprep.subr.bf16.mxu0 0
  %3212 = vmatpush1.bf16.msra.mxu0 0
  %3213 = vmatprep.subr.bf16.mxu0 0
  %3214 = vmatpush1.bf16.msra.mxu0 0
  %3215 = vmatprep.subr.bf16.mxu0 0
  %3216 = vmatpush1.bf16.msra.mxu0 0
  %3217 = vmatprep.mubr.bf16.mxu0 0
  %3218 = vmatmul.mubr.bf16.gmra.mrb[0].mxu0 %v3110
  %v3219 = vpop.f32.mrb[0].mxu0
  %v3220 = vadd.f32 0.0, %v3219
  %v3221 = vpop.f32.mrb[0].mxu0
  %v3222 = vpop.f32.mrb[0].mxu0
  %v3223 = vadd.f32 0.0, %v3222
  %v3224 = vpop.f32.mrb[0].mxu0
  %3225 = vmatprep.mubr.bf16.mxu0 0
  %3226 = vmatmul.mubr.bf16.gmra.mrb[0].mxu0 %v3111
  %v3227 = vpop.f32.mrb[0].mxu0
  %v3228 = vadd.f32 0.0, %v3227
  %v3229 = vpop.f32.mrb[0].mxu0
  %v3230 = vpop.f32.mrb[0].mxu0
  %v3231 = vadd.f32 0.0, %v3230
  %v3232 = vpop.f32.mrb[0].mxu0
  %3233 = vmatprep.mubr.bf16.mxu0 0
  %3234 = vmatmul.mubr.bf16.gmra.mrb[0].mxu0 %v3112
  %v3235 = vpop.f32.mrb[0].mxu0
  %v3236 = vadd.f32 0.0, %v3235
  %v3237 = vpop.f32.mrb[0].mxu0
  %v3238 = vpop.f32.mrb[0].mxu0
  %v3239 = vadd.f32 0.0, %v3238
  %v3240 = vpop.f32.mrb[0].mxu0
  %3241 = vmatprep.mubr.bf16.mxu0 0
  %3242 = vmatmul.mubr.bf16.gmra.mrb[0].mxu0 %v3113
  %v3243 = vpop.f32.mrb[0].mxu0
  %v3244 = vadd.f32 0.0, %v3243
  %v3245 = vpop.f32.mrb[0].mxu0
  %v3246 = vpop.f32.mrb[0].mxu0
  %v3247 = vadd.f32 0.0, %v3246
  %v3248 = vpop.f32.mrb[0].mxu0
  %3249 = vmatprep.mubr.bf16.mxu0 0
  %3250 = vmatmul.mubr.bf16.gmra.mrb[0].mxu0 %v3114
  %v3251 = vpop.f32.mrb[0].mxu0
  %v3252 = vadd.f32 0.0, %v3251
  %v3253 = vpop.f32.mrb[0].mxu0
  %v3254 = vpop.f32.mrb[0].mxu0
  %v3255 = vadd.f32 0.0, %v3254
  %v3256 = vpop.f32.mrb[0].mxu0
  %3257 = vmatprep.mubr.bf16.mxu0 0
  %3258 = vmatmul.mubr.bf16.gmra.mrb[0].mxu0 %v3115
  %v3259 = vpop.f32.mrb[0].mxu0
  %v3260 = vadd.f32 0.0, %v3259
  %v3261 = vpop.f32.mrb[0].mxu0
  %v3262 = vpop.f32.mrb[0].mxu0
  %v3263 = vadd.f32 0.0, %v3262
  %v3264 = vpop.f32.mrb[0].mxu0
  %3265 = vmatprep.mubr.bf16.mxu0 0
  %3266 = vmatmul.mubr.bf16.gmra.mrb[0].mxu0 %v3116
  %v3267 = vpop.f32.mrb[0].mxu0
  %v3268 = vadd.f32 0.0, %v3267
  %v3269 = vpop.f32.mrb[0].mxu0
  %v3270 = vpop.f32.mrb[0].mxu0
  %v3271 = vadd.f32 0.0, %v3270
  %v3272 = vpop.f32.mrb[0].mxu0
  %3273 = vmatprep.mubr.bf16.mxu0 0
  %3274 = vmatmul.mubr.bf16.gmra.mrb[0].mxu0 %v3117
  %v3275 = vpop.f32.mrb[0].mxu0
  %v3276 = vadd.f32 0.0, %v3275
  %v3277 = vpop.f32.mrb[0].mxu0
  %v3278 = vpop.f32.mrb[0].mxu0
  %v3279 = vadd.f32 0.0, %v3278
  %v3280 = vpop.f32.mrb[0].mxu0
  %3281 = vmatprep.mubr.bf16.mxu0 0
  %3282 = vmatmul.mubr.bf16.gmra.mrb[0].mxu0 %v3118
  %v3283 = vpop.f32.mrb[0].mxu0
  %v3284 = vadd.f32 0.0, %v3283
  %v3285 = vpop.f32.mrb[0].mxu0
  %v3286 = vpop.f32.mrb[0].mxu0
  %v3287 = vadd.f32 0.0, %v3286
  %v3288 = vpop.f32.mrb[0].mxu0
  %3289 = vmatprep.mubr.bf16.mxu0 0
  %3290 = vmatmul.mubr.bf16.gmra.mrb[0].mxu0 %v3119
  %v3291 = vpop.f32.mrb[0].mxu0
  %v3292 = vadd.f32 0.0, %v3291
  %v3293 = vpop.f32.mrb[0].mxu0
  %v3294 = vpop.f32.mrb[0].mxu0
  %v3295 = vadd.f32 0.0, %v3294
  %v3296 = vpop.f32.mrb[0].mxu0
  %3297 = vmatprep.mubr.bf16.mxu0 0
  %3298 = vmatmul.mubr.bf16.gmra.mrb[0].mxu0 %v3120
  %v3299 = vpop.f32.mrb[0].mxu0
  %v3300 = vadd.f32 0.0, %v3299
  %v3301 = vpop.f32.mrb[0].mxu0
  %v3302 = vpop.f32.mrb[0].mxu0
  %v3303 = vpop.f32.mrb[0].mxu0
  %3304 = vdwg.mxu0
  %v3305 = vadd.f32 %v3068, %v3220
  %v3306 = vadd.f32 %v3069, %v3223
  %v3307 = vadd.f32 %v3070, %v3228
  %v3308 = vadd.f32 %v3071, %v3231
  %v3309 = vadd.f32 %v3072, %v3236
  %v3310 = vadd.f32 %v3073, %v3239
  %v3311 = vadd.f32 %v3074, %v3244
  %v3312 = vadd.f32 %v3075, %v3247
  %v3313 = vadd.f32 %v3076, %v3252
  %v3314 = vadd.f32 %v3077, %v3255
  %v3315 = vadd.f32 %v3078, %v3260
  %v3316 = vadd.f32 %v3079, %v3263
  %v3317 = vadd.f32 %v3080, %v3268
  %v3318 = vadd.f32 %v3081, %v3271
  %v3319 = vadd.f32 %v3082, %v3276
  %v3320 = vadd.f32 %v3083, %v3279
  %v3321 = vadd.f32 %v3084, %v3284
  %v3322 = vadd.f32 %v3085, %v3287
  %v3323 = vadd.f32 %v3086, %v3292
  %v3324 = vadd.f32 %v3087, %v3295
  %v3325 = vadd.f32 %v3088, %v3300
  %v3326 = vld [vmem:[%s2419 + $0xf] sm:$0xff]
  %v3327 = vld [vmem:[%s2419 + $0x17] sm:$0xff]
  %v3328 = vld [vmem:[%s2419 + $0x1f] sm:$0xff]
  %v3329 = vld [vmem:[%s2419 + $0x27] sm:$0xff]
  %v3330 = vld [vmem:[%s2419 + $0x2f] sm:$0xff]
  %v3331 = vld [vmem:[%s2419 + $0x37] sm:$0xff]
  %v3332 = vld [vmem:[%s2419 + $0x3f] sm:$0xff]
  %v3333 = vld [vmem:[%s2419 + $0x47] sm:$0xff]
  %v3334 = vld [vmem:[%s2419 + $0x4f] sm:$0xff]
  %v3335 = vld [vmem:[%s2419 + $0x57] sm:$0xff]
  %v3336 = vld [vmem:[%s2419 + $0x5f] sm:$0xff]
  %v3337 = vld [vmem:[%s2419 + $0x67] sm:$0xff]
  %v3338 = vld [vmem:[%s2419 + $0x6f] sm:$0xff]
  %v3339 = vld [vmem:[%s2419 + $0x77] sm:$0xff]
  %v3340 = vld [vmem:[%s2419 + $0x7f] sm:$0xff]
  %v3341 = vld [vmem:[%s2419 + $0x87] sm:$0xff]
  %v3342 = vld [vmem:[%s2419 + $0x8f] sm:$0xff]
  %v3343 = vld [vmem:[%s2419 + $0x97] sm:$0xff]
  %v3344 = vld [vmem:[%s2419 + $0x9f] sm:$0xff]
  %v3345 = vld [vmem:[%s2419 + $0xa7] sm:$0xff]
  %v3346 = vld [vmem:[%s2419 + $0xaf] sm:$0xff]
  %v3347 = vpack.c.bf16 %v3327, %v3326
  %v3348 = vpack.c.bf16 %v3329, %v3328
  %v3349 = vpack.c.bf16 %v3331, %v3330
  %v3350 = vpack.c.bf16 %v3333, %v3332
  %v3351 = vpack.c.bf16 %v3335, %v3334
  %v3352 = vpack.c.bf16 %v3337, %v3336
  %v3353 = vpack.c.bf16 %v3339, %v3338
  %v3354 = vpack.c.bf16 %v3341, %v3340
  %v3355 = vpack.c.bf16 %v3343, %v3342
  %v3356 = vpack.c.bf16 %v3345, %v3344
  %v3357 = vpack.c.bf16 %v3346, %v3346
  %v3358 = vld [vmem:[%s987] sm:$0xf]
  %v3359 = vld [vmem:[%s987 + $0x4] sm:$0xf]
  %v3360 = vld [vmem:[%s987 + $0x8] sm:$0xf]
  %v3361 = vld [vmem:[%s987 + $0xc] sm:$0xf]
  %v3362 = vld [vmem:[%s987 + $0x10] sm:$0xf]
  %v3363 = vld [vmem:[%s987 + $0x14] sm:$0xf]
  %v3364 = vld [vmem:[%s987 + $0x18] sm:$0xf]
  %v3365 = vld [vmem:[%s987 + $0x1c] sm:$0xf]
  %v3366 = vld [vmem:[%s987 + $0x20] sm:$0xf]
  %v3367 = vld [vmem:[%s987 + $0x24] sm:$0xf]
  %v3368 = vld [vmem:[%s987 + $0x28] sm:$0xf]
  %v3369 = vld [vmem:[%s987 + $0x2c] sm:$0xf]
  %v3370 = vld [vmem:[%s987 + $0x30] sm:$0xf]
  %v3371 = vld [vmem:[%s987 + $0x34] sm:$0xf]
  %v3372 = vld [vmem:[%s987 + $0x38] sm:$0xf]
  %v3373 = vld [vmem:[%s987 + $0x3c] sm:$0xf]
  %v3390 = vunpack.c.l.b16 %v3358
  %v3391 = vunpack.c.l.b16 %v3359
  %v3392 = vunpack.c.l.b16 %v3360
  %v3393 = vunpack.c.l.b16 %v3361
  %v3394 = vunpack.c.l.b16 %v3362
  %v3395 = vunpack.c.l.b16 %v3363
  %v3396 = vunpack.c.l.b16 %v3364
  %v3397 = vunpack.c.l.b16 %v3365
  %v3398 = vunpack.c.l.b16 %v3366
  %v3399 = vunpack.c.l.b16 %v3367
  %v3400 = vunpack.c.l.b16 %v3368
  %v3401 = vunpack.c.l.b16 %v3369
  %v3402 = vunpack.c.l.b16 %v3370
  %v3403 = vunpack.c.l.b16 %v3371
  %v3404 = vunpack.c.l.b16 %v3372
  %v3405 = vunpack.c.l.b16 %v3373
  %v3406 = vpack.c.b16 %v3391, %v3390
  %v3407 = vpack.c.b16 %v3393, %v3392
  %v3408 = vpack.c.b16 %v3395, %v3394
  %v3409 = vpack.c.b16 %v3397, %v3396
  %v3410 = vpack.c.b16 %v3399, %v3398
  %v3411 = vpack.c.b16 %v3401, %v3400
  %v3412 = vpack.c.b16 %v3403, %v3402
  %v3413 = vpack.c.b16 %v3405, %v3404
  %3422 = vmatprep.subr.bf16.mxu0 0
  %3423 = vmatpush1.bf16.msra.mxu0 %v3406
  %3424 = vmatprep.subr.bf16.mxu0 0
  %3425 = vmatpush1.bf16.msra.mxu0 %v3407
  %3426 = vmatprep.subr.bf16.mxu0 0
  %3427 = vmatpush1.bf16.msra.mxu0 %v3408
  %3428 = vmatprep.subr.bf16.mxu0 0
  %3429 = vmatpush1.bf16.msra.mxu0 %v3409
  %3430 = vmatprep.subr.bf16.mxu0 0
  %3431 = vmatpush1.bf16.msra.mxu0 %v3410
  %3432 = vmatprep.subr.bf16.mxu0 0
  %3433 = vmatpush1.bf16.msra.mxu0 %v3411
  %3434 = vmatprep.subr.bf16.mxu0 0
  %3435 = vmatpush1.bf16.msra.mxu0 %v3412
  %3436 = vmatprep.subr.bf16.mxu0 0
  %3437 = vmatpush1.bf16.msra.mxu0 %v3413
  %3438 = vmatprep.subr.bf16.mxu0 0
  %3439 = vmatpush1.bf16.msra.mxu0 0
  %3440 = vmatprep.subr.bf16.mxu0 0
  %3441 = vmatpush1.bf16.msra.mxu0 0
  %3442 = vmatprep.subr.bf16.mxu0 0
  %3443 = vmatpush1.bf16.msra.mxu0 0
  %3444 = vmatprep.subr.bf16.mxu0 0
  %3445 = vmatpush1.bf16.msra.mxu0 0
  %3446 = vmatprep.subr.bf16.mxu0 0
  %3447 = vmatpush1.bf16.msra.mxu0 0
  %3448 = vmatprep.subr.bf16.mxu0 0
  %3449 = vmatpush1.bf16.msra.mxu0 0
  %3450 = vmatprep.subr.bf16.mxu0 0
  %3451 = vmatpush1.bf16.msra.mxu0 0
  %3452 = vmatprep.subr.bf16.mxu0 0
  %3453 = vmatpush1.bf16.msra.mxu0 0
  %3454 = vmatprep.mubr.bf16.mxu0 0
  %3455 = vmatmul.mubr.bf16.gmra.mrb[0].mxu0 %v3347
  %v3456 = vpop.f32.mrb[0].mxu0
  %v3457 = vadd.f32 0.0, %v3456
  %v3458 = vpop.f32.mrb[0].mxu0
  %v3459 = vpop.f32.mrb[0].mxu0
  %v3460 = vadd.f32 0.0, %v3459
  %v3461 = vpop.f32.mrb[0].mxu0
  %3462 = vmatprep.mubr.bf16.mxu0 0
  %3463 = vmatmul.mubr.bf16.gmra.mrb[0].mxu0 %v3348
  %v3464 = vpop.f32.mrb[0].mxu0
  %v3465 = vadd.f32 0.0, %v3464
  %v3466 = vpop.f32.mrb[0].mxu0
  %v3467 = vpop.f32.mrb[0].mxu0
  %v3468 = vadd.f32 0.0, %v3467
  %v3469 = vpop.f32.mrb[0].mxu0
  %3470 = vmatprep.mubr.bf16.mxu0 0
  %3471 = vmatmul.mubr.bf16.gmra.mrb[0].mxu0 %v3349
  %v3472 = vpop.f32.mrb[0].mxu0
  %v3473 = vadd.f32 0.0, %v3472
  %v3474 = vpop.f32.mrb[0].mxu0
  %v3475 = vpop.f32.mrb[0].mxu0
  %v3476 = vadd.f32 0.0, %v3475
  %v3477 = vpop.f32.mrb[0].mxu0
  %3478 = vmatprep.mubr.bf16.mxu0 0
  %3479 = vmatmul.mubr.bf16.gmra.mrb[0].mxu0 %v3350
  %v3480 = vpop.f32.mrb[0].mxu0
  %v3481 = vadd.f32 0.0, %v3480
  %v3482 = vpop.f32.mrb[0].mxu0
  %v3483 = vpop.f32.mrb[0].mxu0
  %v3484 = vadd.f32 0.0, %v3483
  %v3485 = vpop.f32.mrb[0].mxu0
  %3486 = vmatprep.mubr.bf16.mxu0 0
  %3487 = vmatmul.mubr.bf16.gmra.mrb[0].mxu0 %v3351
  %v3488 = vpop.f32.mrb[0].mxu0
  %v3489 = vadd.f32 0.0, %v3488
  %v3490 = vpop.f32.mrb[0].mxu0
  %v3491 = vpop.f32.mrb[0].mxu0
  %v3492 = vadd.f32 0.0, %v3491
  %v3493 = vpop.f32.mrb[0].mxu0
  %3494 = vmatprep.mubr.bf16.mxu0 0
  %3495 = vmatmul.mubr.bf16.gmra.mrb[0].mxu0 %v3352
  %v3496 = vpop.f32.mrb[0].mxu0
  %v3497 = vadd.f32 0.0, %v3496
  %v3498 = vpop.f32.mrb[0].mxu0
  %v3499 = vpop.f32.mrb[0].mxu0
  %v3500 = vadd.f32 0.0, %v3499
  %v3501 = vpop.f32.mrb[0].mxu0
  %3502 = vmatprep.mubr.bf16.mxu0 0
  %3503 = vmatmul.mubr.bf16.gmra.mrb[0].mxu0 %v3353
  %v3504 = vpop.f32.mrb[0].mxu0
  %v3505 = vadd.f32 0.0, %v3504
  %v3506 = vpop.f32.mrb[0].mxu0
  %v3507 = vpop.f32.mrb[0].mxu0
  %v3508 = vadd.f32 0.0, %v3507
  %v3509 = vpop.f32.mrb[0].mxu0
  %3510 = vmatprep.mubr.bf16.mxu0 0
  %3511 = vmatmul.mubr.bf16.gmra.mrb[0].mxu0 %v3354
  %v3512 = vpop.f32.mrb[0].mxu0
  %v3513 = vadd.f32 0.0, %v3512
  %v3514 = vpop.f32.mrb[0].mxu0
  %v3515 = vpop.f32.mrb[0].mxu0
  %v3516 = vadd.f32 0.0, %v3515
  %v3517 = vpop.f32.mrb[0].mxu0
  %3518 = vmatprep.mubr.bf16.mxu0 0
  %3519 = vmatmul.mubr.bf16.gmra.mrb[0].mxu0 %v3355
  %v3520 = vpop.f32.mrb[0].mxu0
  %v3521 = vadd.f32 0.0, %v3520
  %v3522 = vpop.f32.mrb[0].mxu0
  %v3523 = vpop.f32.mrb[0].mxu0
  %v3524 = vadd.f32 0.0, %v3523
  %v3525 = vpop.f32.mrb[0].mxu0
  %3526 = vmatprep.mubr.bf16.mxu0 0
  %3527 = vmatmul.mubr.bf16.gmra.mrb[0].mxu0 %v3356
  %v3528 = vpop.f32.mrb[0].mxu0
  %v3529 = vadd.f32 0.0, %v3528
  %v3530 = vpop.f32.mrb[0].mxu0
  %v3531 = vpop.f32.mrb[0].mxu0
  %v3532 = vadd.f32 0.0, %v3531
  %v3533 = vpop.f32.mrb[0].mxu0
  %3534 = vmatprep.mubr.bf16.mxu0 0
  %3535 = vmatmul.mubr.bf16.gmra.mrb[0].mxu0 %v3357
  %v3536 = vpop.f32.mrb[0].mxu0
  %v3537 = vadd.f32 0.0, %v3536
  %v3538 = vpop.f32.mrb[0].mxu0
  %v3539 = vpop.f32.mrb[0].mxu0
  %v3540 = vpop.f32.mrb[0].mxu0
  %3541 = vdwg.mxu0
  %v3542 = vadd.f32 %v3305, %v3457
  %v3543 = vadd.f32 %v3306, %v3460
  %v3544 = vadd.f32 %v3307, %v3465
  %v3545 = vadd.f32 %v3308, %v3468
  %v3546 = vadd.f32 %v3309, %v3473
  %v3547 = vadd.f32 %v3310, %v3476
  %v3548 = vadd.f32 %v3311, %v3481
  %v3549 = vadd.f32 %v3312, %v3484
  %v3550 = vadd.f32 %v3313, %v3489
  %v3551 = vadd.f32 %v3314, %v3492
  %v3552 = vadd.f32 %v3315, %v3497
  %v3553 = vadd.f32 %v3316, %v3500
  %v3554 = vadd.f32 %v3317, %v3505
  %v3555 = vadd.f32 %v3318, %v3508
  %v3556 = vadd.f32 %v3319, %v3513
  %v3557 = vadd.f32 %v3320, %v3516
  %v3558 = vadd.f32 %v3321, %v3521
  %v3559 = vadd.f32 %v3322, %v3524
  %v3560 = vadd.f32 %v3323, %v3529
  %v3561 = vadd.f32 %v3324, %v3532
  %v3562 = vadd.f32 %v3325, %v3537
  %v3563 = vld [vmem:[%s2419 + $0x10] sm:$0xff]
  %v3564 = vld [vmem:[%s2419 + $0x18] sm:$0xff]
  %v3565 = vld [vmem:[%s2419 + $0x20] sm:$0xff]
  %v3566 = vld [vmem:[%s2419 + $0x28] sm:$0xff]
  %v3567 = vld [vmem:[%s2419 + $0x30] sm:$0xff]
  %v3568 = vld [vmem:[%s2419 + $0x38] sm:$0xff]
  %v3569 = vld [vmem:[%s2419 + $0x40] sm:$0xff]
  %v3570 = vld [vmem:[%s2419 + $0x48] sm:$0xff]
  %v3571 = vld [vmem:[%s2419 + $0x50] sm:$0xff]
  %v3572 = vld [vmem:[%s2419 + $0x58] sm:$0xff]
  %v3573 = vld [vmem:[%s2419 + $0x60] sm:$0xff]
  %v3574 = vld [vmem:[%s2419 + $0x68] sm:$0xff]
  %v3575 = vld [vmem:[%s2419 + $0x70] sm:$0xff]
  %v3576 = vld [vmem:[%s2419 + $0x78] sm:$0xff]
  %v3577 = vld [vmem:[%s2419 + $0x80] sm:$0xff]
  %v3578 = vld [vmem:[%s2419 + $0x88] sm:$0xff]
  %v3579 = vld [vmem:[%s2419 + $0x90] sm:$0xff]
  %v3580 = vld [vmem:[%s2419 + $0x98] sm:$0xff]
  %v3581 = vld [vmem:[%s2419 + $0xa0] sm:$0xff]
  %v3582 = vld [vmem:[%s2419 + $0xa8] sm:$0xff]
  %v3583 = vld [vmem:[%s2419 + $0xb0] sm:$0xff]
  %v3584 = vpack.c.bf16 %v3564, %v3563
  %v3585 = vpack.c.bf16 %v3566, %v3565
  %v3586 = vpack.c.bf16 %v3568, %v3567
  %v3587 = vpack.c.bf16 %v3570, %v3569
  %v3588 = vpack.c.bf16 %v3572, %v3571
  %v3589 = vpack.c.bf16 %v3574, %v3573
  %v3590 = vpack.c.bf16 %v3576, %v3575
  %v3591 = vpack.c.bf16 %v3578, %v3577
  %v3592 = vpack.c.bf16 %v3580, %v3579
  %v3593 = vpack.c.bf16 %v3582, %v3581
  %v3594 = vpack.c.bf16 %v3583, %v3583
  %v3595 = vld [vmem:[%s1225] sm:$0xf]
  %v3596 = vld [vmem:[%s1225 + $0x4] sm:$0xf]
  %v3597 = vld [vmem:[%s1225 + $0x8] sm:$0xf]
  %v3598 = vld [vmem:[%s1225 + $0xc] sm:$0xf]
  %v3599 = vld [vmem:[%s1225 + $0x10] sm:$0xf]
  %v3600 = vld [vmem:[%s1225 + $0x14] sm:$0xf]
  %v3601 = vld [vmem:[%s1225 + $0x18] sm:$0xf]
  %v3602 = vld [vmem:[%s1225 + $0x1c] sm:$0xf]
  %v3603 = vld [vmem:[%s1225 + $0x20] sm:$0xf]
  %v3604 = vld [vmem:[%s1225 + $0x24] sm:$0xf]
  %v3605 = vld [vmem:[%s1225 + $0x28] sm:$0xf]
  %v3606 = vld [vmem:[%s1225 + $0x2c] sm:$0xf]
  %v3607 = vld [vmem:[%s1225 + $0x30] sm:$0xf]
  %v3608 = vld [vmem:[%s1225 + $0x34] sm:$0xf]
  %v3609 = vld [vmem:[%s1225 + $0x38] sm:$0xf]
  %v3610 = vld [vmem:[%s1225 + $0x3c] sm:$0xf]
  %v3627 = vunpack.c.l.b16 %v3595
  %v3628 = vunpack.c.l.b16 %v3596
  %v3629 = vunpack.c.l.b16 %v3597
  %v3630 = vunpack.c.l.b16 %v3598
  %v3631 = vunpack.c.l.b16 %v3599
  %v3632 = vunpack.c.l.b16 %v3600
  %v3633 = vunpack.c.l.b16 %v3601
  %v3634 = vunpack.c.l.b16 %v3602
  %v3635 = vunpack.c.l.b16 %v3603
  %v3636 = vunpack.c.l.b16 %v3604
  %v3637 = vunpack.c.l.b16 %v3605
  %v3638 = vunpack.c.l.b16 %v3606
  %v3639 = vunpack.c.l.b16 %v3607
  %v3640 = vunpack.c.l.b16 %v3608
  %v3641 = vunpack.c.l.b16 %v3609
  %v3642 = vunpack.c.l.b16 %v3610
  %v3643 = vpack.c.b16 %v3628, %v3627
  %v3644 = vpack.c.b16 %v3630, %v3629
  %v3645 = vpack.c.b16 %v3632, %v3631
  %v3646 = vpack.c.b16 %v3634, %v3633
  %v3647 = vpack.c.b16 %v3636, %v3635
  %v3648 = vpack.c.b16 %v3638, %v3637
  %v3649 = vpack.c.b16 %v3640, %v3639
  %v3650 = vpack.c.b16 %v3642, %v3641
  %3659 = vmatprep.subr.bf16.mxu0 0
  %3660 = vmatpush1.bf16.msra.mxu0 %v3643
  %3661 = vmatprep.subr.bf16.mxu0 0
  %3662 = vmatpush1.bf16.msra.mxu0 %v3644
  %3663 = vmatprep.subr.bf16.mxu0 0
  %3664 = vmatpush1.bf16.msra.mxu0 %v3645
  %3665 = vmatprep.subr.bf16.mxu0 0
  %3666 = vmatpush1.bf16.msra.mxu0 %v3646
  %3667 = vmatprep.subr.bf16.mxu0 0
  %3668 = vmatpush1.bf16.msra.mxu0 %v3647
  %3669 = vmatprep.subr.bf16.mxu0 0
  %3670 = vmatpush1.bf16.msra.mxu0 %v3648
  %3671 = vmatprep.subr.bf16.mxu0 0
  %3672 = vmatpush1.bf16.msra.mxu0 %v3649
  %3673 = vmatprep.subr.bf16.mxu0 0
  %3674 = vmatpush1.bf16.msra.mxu0 %v3650
  %3675 = vmatprep.subr.bf16.mxu0 0
  %3676 = vmatpush1.bf16.msra.mxu0 0
  %3677 = vmatprep.subr.bf16.mxu0 0
  %3678 = vmatpush1.bf16.msra.mxu0 0
  %3679 = vmatprep.subr.bf16.mxu0 0
  %3680 = vmatpush1.bf16.msra.mxu0 0
  %3681 = vmatprep.subr.bf16.mxu0 0
  %3682 = vmatpush1.bf16.msra.mxu0 0
  %3683 = vmatprep.subr.bf16.mxu0 0
  %3684 = vmatpush1.bf16.msra.mxu0 0
  %3685 = vmatprep.subr.bf16.mxu0 0
  %3686 = vmatpush1.bf16.msra.mxu0 0
  %3687 = vmatprep.subr.bf16.mxu0 0
  %3688 = vmatpush1.bf16.msra.mxu0 0
  %3689 = vmatprep.subr.bf16.mxu0 0
  %3690 = vmatpush1.bf16.msra.mxu0 0
  %3691 = vmatprep.mubr.bf16.mxu0 0
  %3692 = vmatmul.mubr.bf16.gmra.mrb[0].mxu0 %v3584
  %v3693 = vpop.f32.mrb[0].mxu0
  %v3694 = vadd.f32 0.0, %v3693
  %v3695 = vpop.f32.mrb[0].mxu0
  %v3696 = vpop.f32.mrb[0].mxu0
  %v3697 = vadd.f32 0.0, %v3696
  %v3698 = vpop.f32.mrb[0].mxu0
  %3699 = vmatprep.mubr.bf16.mxu0 0
  %3700 = vmatmul.mubr.bf16.gmra.mrb[0].mxu0 %v3585
  %v3701 = vpop.f32.mrb[0].mxu0
  %v3702 = vadd.f32 0.0, %v3701
  %v3703 = vpop.f32.mrb[0].mxu0
  %v3704 = vpop.f32.mrb[0].mxu0
  %v3705 = vadd.f32 0.0, %v3704
  %v3706 = vpop.f32.mrb[0].mxu0
  %3707 = vmatprep.mubr.bf16.mxu0 0
  %3708 = vmatmul.mubr.bf16.gmra.mrb[0].mxu0 %v3586
  %v3709 = vpop.f32.mrb[0].mxu0
  %v3710 = vadd.f32 0.0, %v3709
  %v3711 = vpop.f32.mrb[0].mxu0
  %v3712 = vpop.f32.mrb[0].mxu0
  %v3713 = vadd.f32 0.0, %v3712
  %v3714 = vpop.f32.mrb[0].mxu0
  %3715 = vmatprep.mubr.bf16.mxu0 0
  %3716 = vmatmul.mubr.bf16.gmra.mrb[0].mxu0 %v3587
  %v3717 = vpop.f32.mrb[0].mxu0
  %v3718 = vadd.f32 0.0, %v3717
  %v3719 = vpop.f32.mrb[0].mxu0
  %v3720 = vpop.f32.mrb[0].mxu0
  %v3721 = vadd.f32 0.0, %v3720
  %v3722 = vpop.f32.mrb[0].mxu0
  %3723 = vmatprep.mubr.bf16.mxu0 0
  %3724 = vmatmul.mubr.bf16.gmra.mrb[0].mxu0 %v3588
  %v3725 = vpop.f32.mrb[0].mxu0
  %v3726 = vadd.f32 0.0, %v3725
  %v3727 = vpop.f32.mrb[0].mxu0
  %v3728 = vpop.f32.mrb[0].mxu0
  %v3729 = vadd.f32 0.0, %v3728
  %v3730 = vpop.f32.mrb[0].mxu0
  %3731 = vmatprep.mubr.bf16.mxu0 0
  %3732 = vmatmul.mubr.bf16.gmra.mrb[0].mxu0 %v3589
  %v3733 = vpop.f32.mrb[0].mxu0
  %v3734 = vadd.f32 0.0, %v3733
  %v3735 = vpop.f32.mrb[0].mxu0
  %v3736 = vpop.f32.mrb[0].mxu0
  %v3737 = vadd.f32 0.0, %v3736
  %v3738 = vpop.f32.mrb[0].mxu0
  %3739 = vmatprep.mubr.bf16.mxu0 0
  %3740 = vmatmul.mubr.bf16.gmra.mrb[0].mxu0 %v3590
  %v3741 = vpop.f32.mrb[0].mxu0
  %v3742 = vadd.f32 0.0, %v3741
  %v3743 = vpop.f32.mrb[0].mxu0
  %v3744 = vpop.f32.mrb[0].mxu0
  %v3745 = vadd.f32 0.0, %v3744
  %v3746 = vpop.f32.mrb[0].mxu0
  %3747 = vmatprep.mubr.bf16.mxu0 0
  %3748 = vmatmul.mubr.bf16.gmra.mrb[0].mxu0 %v3591
  %v3749 = vpop.f32.mrb[0].mxu0
  %v3750 = vadd.f32 0.0, %v3749
  %v3751 = vpop.f32.mrb[0].mxu0
  %v3752 = vpop.f32.mrb[0].mxu0
  %v3753 = vadd.f32 0.0, %v3752
  %v3754 = vpop.f32.mrb[0].mxu0
  %3755 = vmatprep.mubr.bf16.mxu0 0
  %3756 = vmatmul.mubr.bf16.gmra.mrb[0].mxu0 %v3592
  %v3757 = vpop.f32.mrb[0].mxu0
  %v3758 = vadd.f32 0.0, %v3757
  %v3759 = vpop.f32.mrb[0].mxu0
  %v3760 = vpop.f32.mrb[0].mxu0
  %v3761 = vadd.f32 0.0, %v3760
  %v3762 = vpop.f32.mrb[0].mxu0
  %3763 = vmatprep.mubr.bf16.mxu0 0
  %3764 = vmatmul.mubr.bf16.gmra.mrb[0].mxu0 %v3593
  %v3765 = vpop.f32.mrb[0].mxu0
  %v3766 = vadd.f32 0.0, %v3765
  %v3767 = vpop.f32.mrb[0].mxu0
  %v3768 = vpop.f32.mrb[0].mxu0
  %v3769 = vadd.f32 0.0, %v3768
  %v3770 = vpop.f32.mrb[0].mxu0
  %3771 = vmatprep.mubr.bf16.mxu0 0
  %3772 = vmatmul.mubr.bf16.gmra.mrb[0].mxu0 %v3594
  %v3773 = vpop.f32.mrb[0].mxu0
  %v3774 = vadd.f32 0.0, %v3773
  %v3775 = vpop.f32.mrb[0].mxu0
  %v3776 = vpop.f32.mrb[0].mxu0
  %v3777 = vpop.f32.mrb[0].mxu0
  %3778 = vdwg.mxu0
  %v3779 = vadd.f32 %v3542, %v3694
  %v3780 = vadd.f32 %v3543, %v3697
  %v3781 = vadd.f32 %v3544, %v3702
  %v3782 = vadd.f32 %v3545, %v3705
  %v3783 = vadd.f32 %v3546, %v3710
  %v3784 = vadd.f32 %v3547, %v3713
  %v3785 = vadd.f32 %v3548, %v3718
  %v3786 = vadd.f32 %v3549, %v3721
  %v3787 = vadd.f32 %v3550, %v3726
  %v3788 = vadd.f32 %v3551, %v3729
  %v3789 = vadd.f32 %v3552, %v3734
  %v3790 = vadd.f32 %v3553, %v3737
  %v3791 = vadd.f32 %v3554, %v3742
  %v3792 = vadd.f32 %v3555, %v3745
  %v3793 = vadd.f32 %v3556, %v3750
  %v3794 = vadd.f32 %v3557, %v3753
  %v3795 = vadd.f32 %v3558, %v3758
  %v3796 = vadd.f32 %v3559, %v3761
  %v3797 = vadd.f32 %v3560, %v3766
  %v3798 = vadd.f32 %v3561, %v3769
  %v3799 = vadd.f32 %v3562, %v3774
  %v3800 = vld [vmem:[%s2419 + $0x1c] sm:$0xff]
  %v3801 = vld [vmem:[%s2419 + $0x24] sm:$0xff]
  %v3802 = vld [vmem:[%s2419 + $0x2c] sm:$0xff]
  %v3803 = vld [vmem:[%s2419 + $0x34] sm:$0xff]
  %v3804 = vld [vmem:[%s2419 + $0x3c] sm:$0xff]
  %v3805 = vld [vmem:[%s2419 + $0x44] sm:$0xff]
  %v3806 = vld [vmem:[%s2419 + $0x4c] sm:$0xff]
  %v3807 = vld [vmem:[%s2419 + $0x54] sm:$0xff]
  %v3808 = vld [vmem:[%s2419 + $0x5c] sm:$0xff]
  %v3809 = vld [vmem:[%s2419 + $0x64] sm:$0xff]
  %v3810 = vld [vmem:[%s2419 + $0x6c] sm:$0xff]
  %v3811 = vld [vmem:[%s2419 + $0x74] sm:$0xff]
  %v3812 = vld [vmem:[%s2419 + $0x7c] sm:$0xff]
  %v3813 = vld [vmem:[%s2419 + $0x84] sm:$0xff]
  %v3814 = vld [vmem:[%s2419 + $0x8c] sm:$0xff]
  %v3815 = vld [vmem:[%s2419 + $0x94] sm:$0xff]
  %v3816 = vld [vmem:[%s2419 + $0x9c] sm:$0xff]
  %v3817 = vld [vmem:[%s2419 + $0xa4] sm:$0xff]
  %v3818 = vld [vmem:[%s2419 + $0xac] sm:$0xff]
  %v3819 = vld [vmem:[%s2419 + $0xb4] sm:$0xff]
  %v3820 = vld [vmem:[%s2419 + $0xbc] sm:$0xff]
  %v3821 = vpack.c.bf16 %v3801, %v3800
  %v3822 = vpack.c.bf16 %v3803, %v3802
  %v3823 = vpack.c.bf16 %v3805, %v3804
  %v3824 = vpack.c.bf16 %v3807, %v3806
  %v3825 = vpack.c.bf16 %v3809, %v3808
  %v3826 = vpack.c.bf16 %v3811, %v3810
  %v3827 = vpack.c.bf16 %v3813, %v3812
  %v3828 = vpack.c.bf16 %v3815, %v3814
  %v3829 = vpack.c.bf16 %v3817, %v3816
  %v3830 = vpack.c.bf16 %v3819, %v3818
  %v3831 = vpack.c.bf16 %v3820, %v3820
  %v3832 = vld [vmem:[%s1463] sm:$0xf]
  %v3833 = vld [vmem:[%s1463 + $0x4] sm:$0xf]
  %v3834 = vld [vmem:[%s1463 + $0x8] sm:$0xf]
  %v3835 = vld [vmem:[%s1463 + $0xc] sm:$0xf]
  %v3836 = vld [vmem:[%s1463 + $0x10] sm:$0xf]
  %v3837 = vld [vmem:[%s1463 + $0x14] sm:$0xf]
  %v3838 = vld [vmem:[%s1463 + $0x18] sm:$0xf]
  %v3839 = vld [vmem:[%s1463 + $0x1c] sm:$0xf]
  %v3840 = vld [vmem:[%s1463 + $0x20] sm:$0xf]
  %v3841 = vld [vmem:[%s1463 + $0x24] sm:$0xf]
  %v3842 = vld [vmem:[%s1463 + $0x28] sm:$0xf]
  %v3843 = vld [vmem:[%s1463 + $0x2c] sm:$0xf]
  %v3844 = vld [vmem:[%s1463 + $0x30] sm:$0xf]
  %v3845 = vld [vmem:[%s1463 + $0x34] sm:$0xf]
  %v3846 = vld [vmem:[%s1463 + $0x38] sm:$0xf]
  %v3847 = vld [vmem:[%s1463 + $0x3c] sm:$0xf]
  %v3864 = vunpack.c.l.b16 %v3832
  %v3865 = vunpack.c.l.b16 %v3833
  %v3866 = vunpack.c.l.b16 %v3834
  %v3867 = vunpack.c.l.b16 %v3835
  %v3868 = vunpack.c.l.b16 %v3836
  %v3869 = vunpack.c.l.b16 %v3837
  %v3870 = vunpack.c.l.b16 %v3838
  %v3871 = vunpack.c.l.b16 %v3839
  %v3872 = vunpack.c.l.b16 %v3840
  %v3873 = vunpack.c.l.b16 %v3841
  %v3874 = vunpack.c.l.b16 %v3842
  %v3875 = vunpack.c.l.b16 %v3843
  %v3876 = vunpack.c.l.b16 %v3844
  %v3877 = vunpack.c.l.b16 %v3845
  %v3878 = vunpack.c.l.b16 %v3846
  %v3879 = vunpack.c.l.b16 %v3847
  %v3880 = vpack.c.b16 %v3865, %v3864
  %v3881 = vpack.c.b16 %v3867, %v3866
  %v3882 = vpack.c.b16 %v3869, %v3868
  %v3883 = vpack.c.b16 %v3871, %v3870
  %v3884 = vpack.c.b16 %v3873, %v3872
  %v3885 = vpack.c.b16 %v3875, %v3874
  %v3886 = vpack.c.b16 %v3877, %v3876
  %v3887 = vpack.c.b16 %v3879, %v3878
  %3896 = vmatprep.subr.bf16.mxu0 0
  %3897 = vmatpush1.bf16.msra.mxu0 %v3880
  %3898 = vmatprep.subr.bf16.mxu0 0
  %3899 = vmatpush1.bf16.msra.mxu0 %v3881
  %3900 = vmatprep.subr.bf16.mxu0 0
  %3901 = vmatpush1.bf16.msra.mxu0 %v3882
  %3902 = vmatprep.subr.bf16.mxu0 0
  %3903 = vmatpush1.bf16.msra.mxu0 %v3883
  %3904 = vmatprep.subr.bf16.mxu0 0
  %3905 = vmatpush1.bf16.msra.mxu0 %v3884
  %3906 = vmatprep.subr.bf16.mxu0 0
  %3907 = vmatpush1.bf16.msra.mxu0 %v3885
  %3908 = vmatprep.subr.bf16.mxu0 0
  %3909 = vmatpush1.bf16.msra.mxu0 %v3886
  %3910 = vmatprep.subr.bf16.mxu0 0
  %3911 = vmatpush1.bf16.msra.mxu0 %v3887
  %3912 = vmatprep.subr.bf16.mxu0 0
  %3913 = vmatpush1.bf16.msra.mxu0 0
  %3914 = vmatprep.subr.bf16.mxu0 0
  %3915 = vmatpush1.bf16.msra.mxu0 0
  %3916 = vmatprep.subr.bf16.mxu0 0
  %3917 = vmatpush1.bf16.msra.mxu0 0
  %3918 = vmatprep.subr.bf16.mxu0 0
  %3919 = vmatpush1.bf16.msra.mxu0 0
  %3920 = vmatprep.subr.bf16.mxu0 0
  %3921 = vmatpush1.bf16.msra.mxu0 0
  %3922 = vmatprep.subr.bf16.mxu0 0
  %3923 = vmatpush1.bf16.msra.mxu0 0
  %3924 = vmatprep.subr.bf16.mxu0 0
  %3925 = vmatpush1.bf16.msra.mxu0 0
  %3926 = vmatprep.subr.bf16.mxu0 0
  %3927 = vmatpush1.bf16.msra.mxu0 0
  %3928 = vmatprep.mubr.bf16.mxu0 0
  %3929 = vmatmul.mubr.bf16.gmra.mrb[0].mxu0 %v3821
  %v3930 = vpop.f32.mrb[0].mxu0
  %v3931 = vadd.f32 0.0, %v3930
  %v3932 = vpop.f32.mrb[0].mxu0
  %v3933 = vpop.f32.mrb[0].mxu0
  %v3934 = vadd.f32 0.0, %v3933
  %v3935 = vpop.f32.mrb[0].mxu0
  %3936 = vmatprep.mubr.bf16.mxu0 0
  %3937 = vmatmul.mubr.bf16.gmra.mrb[0].mxu0 %v3822
  %v3938 = vpop.f32.mrb[0].mxu0
  %v3939 = vadd.f32 0.0, %v3938
  %v3940 = vpop.f32.mrb[0].mxu0
  %v3941 = vpop.f32.mrb[0].mxu0
  %v3942 = vadd.f32 0.0, %v3941
  %v3943 = vpop.f32.mrb[0].mxu0
  %3944 = vmatprep.mubr.bf16.mxu0 0
  %3945 = vmatmul.mubr.bf16.gmra.mrb[0].mxu0 %v3823
  %v3946 = vpop.f32.mrb[0].mxu0
  %v3947 = vadd.f32 0.0, %v3946
  %v3948 = vpop.f32.mrb[0].mxu0
  %v3949 = vpop.f32.mrb[0].mxu0
  %v3950 = vadd.f32 0.0, %v3949
  %v3951 = vpop.f32.mrb[0].mxu0
  %3952 = vmatprep.mubr.bf16.mxu0 0
  %3953 = vmatmul.mubr.bf16.gmra.mrb[0].mxu0 %v3824
  %v3954 = vpop.f32.mrb[0].mxu0
  %v3955 = vadd.f32 0.0, %v3954
  %v3956 = vpop.f32.mrb[0].mxu0
  %v3957 = vpop.f32.mrb[0].mxu0
  %v3958 = vadd.f32 0.0, %v3957
  %v3959 = vpop.f32.mrb[0].mxu0
  %3960 = vmatprep.mubr.bf16.mxu0 0
  %3961 = vmatmul.mubr.bf16.gmra.mrb[0].mxu0 %v3825
  %v3962 = vpop.f32.mrb[0].mxu0
  %v3963 = vadd.f32 0.0, %v3962
  %v3964 = vpop.f32.mrb[0].mxu0
  %v3965 = vpop.f32.mrb[0].mxu0
  %v3966 = vadd.f32 0.0, %v3965
  %v3967 = vpop.f32.mrb[0].mxu0
  %3968 = vmatprep.mubr.bf16.mxu0 0
  %3969 = vmatmul.mubr.bf16.gmra.mrb[0].mxu0 %v3826
  %v3970 = vpop.f32.mrb[0].mxu0
  %v3971 = vadd.f32 0.0, %v3970
  %v3972 = vpop.f32.mrb[0].mxu0
  %v3973 = vpop.f32.mrb[0].mxu0
  %v3974 = vadd.f32 0.0, %v3973
  %v3975 = vpop.f32.mrb[0].mxu0
  %3976 = vmatprep.mubr.bf16.mxu0 0
  %3977 = vmatmul.mubr.bf16.gmra.mrb[0].mxu0 %v3827
  %v3978 = vpop.f32.mrb[0].mxu0
  %v3979 = vadd.f32 0.0, %v3978
  %v3980 = vpop.f32.mrb[0].mxu0
  %v3981 = vpop.f32.mrb[0].mxu0
  %v3982 = vadd.f32 0.0, %v3981
  %v3983 = vpop.f32.mrb[0].mxu0
  %3984 = vmatprep.mubr.bf16.mxu0 0
  %3985 = vmatmul.mubr.bf16.gmra.mrb[0].mxu0 %v3828
  %v3986 = vpop.f32.mrb[0].mxu0
  %v3987 = vadd.f32 0.0, %v3986
  %v3988 = vpop.f32.mrb[0].mxu0
  %v3989 = vpop.f32.mrb[0].mxu0
  %v3990 = vadd.f32 0.0, %v3989
  %v3991 = vpop.f32.mrb[0].mxu0
  %3992 = vmatprep.mubr.bf16.mxu0 0
  %3993 = vmatmul.mubr.bf16.gmra.mrb[0].mxu0 %v3829
  %v3994 = vpop.f32.mrb[0].mxu0
  %v3995 = vadd.f32 0.0, %v3994
  %v3996 = vpop.f32.mrb[0].mxu0
  %v3997 = vpop.f32.mrb[0].mxu0
  %v3998 = vadd.f32 0.0, %v3997
  %v3999 = vpop.f32.mrb[0].mxu0
  %4000 = vmatprep.mubr.bf16.mxu0 0
  %4001 = vmatmul.mubr.bf16.gmra.mrb[0].mxu0 %v3830
  %v4002 = vpop.f32.mrb[0].mxu0
  %v4003 = vadd.f32 0.0, %v4002
  %v4004 = vpop.f32.mrb[0].mxu0
  %v4005 = vpop.f32.mrb[0].mxu0
  %v4006 = vadd.f32 0.0, %v4005
  %v4007 = vpop.f32.mrb[0].mxu0
  %4008 = vmatprep.mubr.bf16.mxu0 0
  %4009 = vmatmul.mubr.bf16.gmra.mrb[0].mxu0 %v3831
  %v4010 = vpop.f32.mrb[0].mxu0
  %v4011 = vadd.f32 0.0, %v4010
  %v4012 = vpop.f32.mrb[0].mxu0
  %v4013 = vpop.f32.mrb[0].mxu0
  %v4014 = vpop.f32.mrb[0].mxu0
  %4015 = vdwg.mxu0
  %v4016 = vadd.f32 %v3779, %v3931
  %v4017 = vadd.f32 %v3780, %v3934
  %v4018 = vadd.f32 %v3781, %v3939
  %v4019 = vadd.f32 %v3782, %v3942
  %v4020 = vadd.f32 %v3783, %v3947
  %v4021 = vadd.f32 %v3784, %v3950
  %v4022 = vadd.f32 %v3785, %v3955
  %v4023 = vadd.f32 %v3786, %v3958
  %v4024 = vadd.f32 %v3787, %v3963
  %v4025 = vadd.f32 %v3788, %v3966
  %v4026 = vadd.f32 %v3789, %v3971
  %v4027 = vadd.f32 %v3790, %v3974
  %v4028 = vadd.f32 %v3791, %v3979
  %v4029 = vadd.f32 %v3792, %v3982
  %v4030 = vadd.f32 %v3793, %v3987
  %v4031 = vadd.f32 %v3794, %v3990
  %v4032 = vadd.f32 %v3795, %v3995
  %v4033 = vadd.f32 %v3796, %v3998
  %v4034 = vadd.f32 %v3797, %v4003
  %v4035 = vadd.f32 %v3798, %v4006
  %v4036 = vadd.f32 %v3799, %v4011
  %v4037 = vld [vmem:[%s2419 + $0x1d] sm:$0xff]
  %v4038 = vld [vmem:[%s2419 + $0x25] sm:$0xff]
  %v4039 = vld [vmem:[%s2419 + $0x2d] sm:$0xff]
  %v4040 = vld [vmem:[%s2419 + $0x35] sm:$0xff]
  %v4041 = vld [vmem:[%s2419 + $0x3d] sm:$0xff]
  %v4042 = vld [vmem:[%s2419 + $0x45] sm:$0xff]
  %v4043 = vld [vmem:[%s2419 + $0x4d] sm:$0xff]
  %v4044 = vld [vmem:[%s2419 + $0x55] sm:$0xff]
  %v4045 = vld [vmem:[%s2419 + $0x5d] sm:$0xff]
  %v4046 = vld [vmem:[%s2419 + $0x65] sm:$0xff]
  %v4047 = vld [vmem:[%s2419 + $0x6d] sm:$0xff]
  %v4048 = vld [vmem:[%s2419 + $0x75] sm:$0xff]
  %v4049 = vld [vmem:[%s2419 + $0x7d] sm:$0xff]
  %v4050 = vld [vmem:[%s2419 + $0x85] sm:$0xff]
  %v4051 = vld [vmem:[%s2419 + $0x8d] sm:$0xff]
  %v4052 = vld [vmem:[%s2419 + $0x95] sm:$0xff]
  %v4053 = vld [vmem:[%s2419 + $0x9d] sm:$0xff]
  %v4054 = vld [vmem:[%s2419 + $0xa5] sm:$0xff]
  %v4055 = vld [vmem:[%s2419 + $0xad] sm:$0xff]
  %v4056 = vld [vmem:[%s2419 + $0xb5] sm:$0xff]
  %v4057 = vld [vmem:[%s2419 + $0xbd] sm:$0xff]
  %v4058 = vpack.c.bf16 %v4038, %v4037
  %v4059 = vpack.c.bf16 %v4040, %v4039
  %v4060 = vpack.c.bf16 %v4042, %v4041
  %v4061 = vpack.c.bf16 %v4044, %v4043
  %v4062 = vpack.c.bf16 %v4046, %v4045
  %v4063 = vpack.c.bf16 %v4048, %v4047
  %v4064 = vpack.c.bf16 %v4050, %v4049
  %v4065 = vpack.c.bf16 %v4052, %v4051
  %v4066 = vpack.c.bf16 %v4054, %v4053
  %v4067 = vpack.c.bf16 %v4056, %v4055
  %v4068 = vpack.c.bf16 %v4057, %v4057
  %v4069 = vld [vmem:[%s1701] sm:$0xf]
  %v4070 = vld [vmem:[%s1701 + $0x4] sm:$0xf]
  %v4071 = vld [vmem:[%s1701 + $0x8] sm:$0xf]
  %v4072 = vld [vmem:[%s1701 + $0xc] sm:$0xf]
  %v4073 = vld [vmem:[%s1701 + $0x10] sm:$0xf]
  %v4074 = vld [vmem:[%s1701 + $0x14] sm:$0xf]
  %v4075 = vld [vmem:[%s1701 + $0x18] sm:$0xf]
  %v4076 = vld [vmem:[%s1701 + $0x1c] sm:$0xf]
  %v4077 = vld [vmem:[%s1701 + $0x20] sm:$0xf]
  %v4078 = vld [vmem:[%s1701 + $0x24] sm:$0xf]
  %v4079 = vld [vmem:[%s1701 + $0x28] sm:$0xf]
  %v4080 = vld [vmem:[%s1701 + $0x2c] sm:$0xf]
  %v4081 = vld [vmem:[%s1701 + $0x30] sm:$0xf]
  %v4082 = vld [vmem:[%s1701 + $0x34] sm:$0xf]
  %v4083 = vld [vmem:[%s1701 + $0x38] sm:$0xf]
  %v4084 = vld [vmem:[%s1701 + $0x3c] sm:$0xf]
  %v4101 = vunpack.c.l.b16 %v4069
  %v4102 = vunpack.c.l.b16 %v4070
  %v4103 = vunpack.c.l.b16 %v4071
  %v4104 = vunpack.c.l.b16 %v4072
  %v4105 = vunpack.c.l.b16 %v4073
  %v4106 = vunpack.c.l.b16 %v4074
  %v4107 = vunpack.c.l.b16 %v4075
  %v4108 = vunpack.c.l.b16 %v4076
  %v4109 = vunpack.c.l.b16 %v4077
  %v4110 = vunpack.c.l.b16 %v4078
  %v4111 = vunpack.c.l.b16 %v4079
  %v4112 = vunpack.c.l.b16 %v4080
  %v4113 = vunpack.c.l.b16 %v4081
  %v4114 = vunpack.c.l.b16 %v4082
  %v4115 = vunpack.c.l.b16 %v4083
  %v4116 = vunpack.c.l.b16 %v4084
  %v4117 = vpack.c.b16 %v4102, %v4101
  %v4118 = vpack.c.b16 %v4104, %v4103
  %v4119 = vpack.c.b16 %v4106, %v4105
  %v4120 = vpack.c.b16 %v4108, %v4107
  %v4121 = vpack.c.b16 %v4110, %v4109
  %v4122 = vpack.c.b16 %v4112, %v4111
  %v4123 = vpack.c.b16 %v4114, %v4113
  %v4124 = vpack.c.b16 %v4116, %v4115
  %4133 = vmatprep.subr.bf16.mxu0 0
  %4134 = vmatpush1.bf16.msra.mxu0 %v4117
  %4135 = vmatprep.subr.bf16.mxu0 0
  %4136 = vmatpush1.bf16.msra.mxu0 %v4118
  %4137 = vmatprep.subr.bf16.mxu0 0
  %4138 = vmatpush1.bf16.msra.mxu0 %v4119
  %4139 = vmatprep.subr.bf16.mxu0 0
  %4140 = vmatpush1.bf16.msra.mxu0 %v4120
  %4141 = vmatprep.subr.bf16.mxu0 0
  %4142 = vmatpush1.bf16.msra.mxu0 %v4121
  %4143 = vmatprep.subr.bf16.mxu0 0
  %4144 = vmatpush1.bf16.msra.mxu0 %v4122
  %4145 = vmatprep.subr.bf16.mxu0 0
  %4146 = vmatpush1.bf16.msra.mxu0 %v4123
  %4147 = vmatprep.subr.bf16.mxu0 0
  %4148 = vmatpush1.bf16.msra.mxu0 %v4124
  %4149 = vmatprep.subr.bf16.mxu0 0
  %4150 = vmatpush1.bf16.msra.mxu0 0
  %4151 = vmatprep.subr.bf16.mxu0 0
  %4152 = vmatpush1.bf16.msra.mxu0 0
  %4153 = vmatprep.subr.bf16.mxu0 0
  %4154 = vmatpush1.bf16.msra.mxu0 0
  %4155 = vmatprep.subr.bf16.mxu0 0
  %4156 = vmatpush1.bf16.msra.mxu0 0
  %4157 = vmatprep.subr.bf16.mxu0 0
  %4158 = vmatpush1.bf16.msra.mxu0 0
  %4159 = vmatprep.subr.bf16.mxu0 0
  %4160 = vmatpush1.bf16.msra.mxu0 0
  %4161 = vmatprep.subr.bf16.mxu0 0
  %4162 = vmatpush1.bf16.msra.mxu0 0
  %4163 = vmatprep.subr.bf16.mxu0 0
  %4164 = vmatpush1.bf16.msra.mxu0 0
  %4165 = vmatprep.mubr.bf16.mxu0 0
  %4166 = vmatmul.mubr.bf16.gmra.mrb[0].mxu0 %v4058
  %v4167 = vpop.f32.mrb[0].mxu0
  %v4168 = vadd.f32 0.0, %v4167
  %v4169 = vpop.f32.mrb[0].mxu0
  %v4170 = vpop.f32.mrb[0].mxu0
  %v4171 = vadd.f32 0.0, %v4170
  %v4172 = vpop.f32.mrb[0].mxu0
  %4173 = vmatprep.mubr.bf16.mxu0 0
  %4174 = vmatmul.mubr.bf16.gmra.mrb[0].mxu0 %v4059
  %v4175 = vpop.f32.mrb[0].mxu0
  %v4176 = vadd.f32 0.0, %v4175
  %v4177 = vpop.f32.mrb[0].mxu0
  %v4178 = vpop.f32.mrb[0].mxu0
  %v4179 = vadd.f32 0.0, %v4178
  %v4180 = vpop.f32.mrb[0].mxu0
  %4181 = vmatprep.mubr.bf16.mxu0 0
  %4182 = vmatmul.mubr.bf16.gmra.mrb[0].mxu0 %v4060
  %v4183 = vpop.f32.mrb[0].mxu0
  %v4184 = vadd.f32 0.0, %v4183
  %v4185 = vpop.f32.mrb[0].mxu0
  %v4186 = vpop.f32.mrb[0].mxu0
  %v4187 = vadd.f32 0.0, %v4186
  %v4188 = vpop.f32.mrb[0].mxu0
  %4189 = vmatprep.mubr.bf16.mxu0 0
  %4190 = vmatmul.mubr.bf16.gmra.mrb[0].mxu0 %v4061
  %v4191 = vpop.f32.mrb[0].mxu0
  %v4192 = vadd.f32 0.0, %v4191
  %v4193 = vpop.f32.mrb[0].mxu0
  %v4194 = vpop.f32.mrb[0].mxu0
  %v4195 = vadd.f32 0.0, %v4194
  %v4196 = vpop.f32.mrb[0].mxu0
  %4197 = vmatprep.mubr.bf16.mxu0 0
  %4198 = vmatmul.mubr.bf16.gmra.mrb[0].mxu0 %v4062
  %v4199 = vpop.f32.mrb[0].mxu0
  %v4200 = vadd.f32 0.0, %v4199
  %v4201 = vpop.f32.mrb[0].mxu0
  %v4202 = vpop.f32.mrb[0].mxu0
  %v4203 = vadd.f32 0.0, %v4202
  %v4204 = vpop.f32.mrb[0].mxu0
  %4205 = vmatprep.mubr.bf16.mxu0 0
  %4206 = vmatmul.mubr.bf16.gmra.mrb[0].mxu0 %v4063
  %v4207 = vpop.f32.mrb[0].mxu0
  %v4208 = vadd.f32 0.0, %v4207
  %v4209 = vpop.f32.mrb[0].mxu0
  %v4210 = vpop.f32.mrb[0].mxu0
  %v4211 = vadd.f32 0.0, %v4210
  %v4212 = vpop.f32.mrb[0].mxu0
  %4213 = vmatprep.mubr.bf16.mxu0 0
  %4214 = vmatmul.mubr.bf16.gmra.mrb[0].mxu0 %v4064
  %v4215 = vpop.f32.mrb[0].mxu0
  %v4216 = vadd.f32 0.0, %v4215
  %v4217 = vpop.f32.mrb[0].mxu0
  %v4218 = vpop.f32.mrb[0].mxu0
  %v4219 = vadd.f32 0.0, %v4218
  %v4220 = vpop.f32.mrb[0].mxu0
  %4221 = vmatprep.mubr.bf16.mxu0 0
  %4222 = vmatmul.mubr.bf16.gmra.mrb[0].mxu0 %v4065
  %v4223 = vpop.f32.mrb[0].mxu0
  %v4224 = vadd.f32 0.0, %v4223
  %v4225 = vpop.f32.mrb[0].mxu0
  %v4226 = vpop.f32.mrb[0].mxu0
  %v4227 = vadd.f32 0.0, %v4226
  %v4228 = vpop.f32.mrb[0].mxu0
  %4229 = vmatprep.mubr.bf16.mxu0 0
  %4230 = vmatmul.mubr.bf16.gmra.mrb[0].mxu0 %v4066
  %v4231 = vpop.f32.mrb[0].mxu0
  %v4232 = vadd.f32 0.0, %v4231
  %v4233 = vpop.f32.mrb[0].mxu0
  %v4234 = vpop.f32.mrb[0].mxu0
  %v4235 = vadd.f32 0.0, %v4234
  %v4236 = vpop.f32.mrb[0].mxu0
  %4237 = vmatprep.mubr.bf16.mxu0 0
  %4238 = vmatmul.mubr.bf16.gmra.mrb[0].mxu0 %v4067
  %v4239 = vpop.f32.mrb[0].mxu0
  %v4240 = vadd.f32 0.0, %v4239
  %v4241 = vpop.f32.mrb[0].mxu0
  %v4242 = vpop.f32.mrb[0].mxu0
  %v4243 = vadd.f32 0.0, %v4242
  %v4244 = vpop.f32.mrb[0].mxu0
  %4245 = vmatprep.mubr.bf16.mxu0 0
  %4246 = vmatmul.mubr.bf16.gmra.mrb[0].mxu0 %v4068
  %v4247 = vpop.f32.mrb[0].mxu0
  %v4248 = vadd.f32 0.0, %v4247
  %v4249 = vpop.f32.mrb[0].mxu0
  %v4250 = vpop.f32.mrb[0].mxu0
  %v4251 = vpop.f32.mrb[0].mxu0
  %4252 = vdwg.mxu0
  %v4253 = vadd.f32 %v4016, %v4168
  %v4254 = vadd.f32 %v4017, %v4171
  %v4255 = vadd.f32 %v4018, %v4176
  %v4256 = vadd.f32 %v4019, %v4179
  %v4257 = vadd.f32 %v4020, %v4184
  %v4258 = vadd.f32 %v4021, %v4187
  %v4259 = vadd.f32 %v4022, %v4192
  %v4260 = vadd.f32 %v4023, %v4195
  %v4261 = vadd.f32 %v4024, %v4200
  %v4262 = vadd.f32 %v4025, %v4203
  %v4263 = vadd.f32 %v4026, %v4208
  %v4264 = vadd.f32 %v4027, %v4211
  %v4265 = vadd.f32 %v4028, %v4216
  %v4266 = vadd.f32 %v4029, %v4219
  %v4267 = vadd.f32 %v4030, %v4224
  %v4268 = vadd.f32 %v4031, %v4227
  %v4269 = vadd.f32 %v4032, %v4232
  %v4270 = vadd.f32 %v4033, %v4235
  %v4271 = vadd.f32 %v4034, %v4240
  %v4272 = vadd.f32 %v4035, %v4243
  %v4273 = vadd.f32 %v4036, %v4248
  %v4274 = vld [vmem:[%s2419 + $0x1e] sm:$0xff]
  %v4275 = vld [vmem:[%s2419 + $0x26] sm:$0xff]
  %v4276 = vld [vmem:[%s2419 + $0x2e] sm:$0xff]
  %v4277 = vld [vmem:[%s2419 + $0x36] sm:$0xff]
  %v4278 = vld [vmem:[%s2419 + $0x3e] sm:$0xff]
  %v4279 = vld [vmem:[%s2419 + $0x46] sm:$0xff]
  %v4280 = vld [vmem:[%s2419 + $0x4e] sm:$0xff]
  %v4281 = vld [vmem:[%s2419 + $0x56] sm:$0xff]
  %v4282 = vld [vmem:[%s2419 + $0x5e] sm:$0xff]
  %v4283 = vld [vmem:[%s2419 + $0x66] sm:$0xff]
  %v4284 = vld [vmem:[%s2419 + $0x6e] sm:$0xff]
  %v4285 = vld [vmem:[%s2419 + $0x76] sm:$0xff]
  %v4286 = vld [vmem:[%s2419 + $0x7e] sm:$0xff]
  %v4287 = vld [vmem:[%s2419 + $0x86] sm:$0xff]
  %v4288 = vld [vmem:[%s2419 + $0x8e] sm:$0xff]
  %v4289 = vld [vmem:[%s2419 + $0x96] sm:$0xff]
  %v4290 = vld [vmem:[%s2419 + $0x9e] sm:$0xff]
  %v4291 = vld [vmem:[%s2419 + $0xa6] sm:$0xff]
  %v4292 = vld [vmem:[%s2419 + $0xae] sm:$0xff]
  %v4293 = vld [vmem:[%s2419 + $0xb6] sm:$0xff]
  %v4294 = vld [vmem:[%s2419 + $0xbe] sm:$0xff]
  %v4295 = vpack.c.bf16 %v4275, %v4274
  %v4296 = vpack.c.bf16 %v4277, %v4276
  %v4297 = vpack.c.bf16 %v4279, %v4278
  %v4298 = vpack.c.bf16 %v4281, %v4280
  %v4299 = vpack.c.bf16 %v4283, %v4282
  %v4300 = vpack.c.bf16 %v4285, %v4284
  %v4301 = vpack.c.bf16 %v4287, %v4286
  %v4302 = vpack.c.bf16 %v4289, %v4288
  %v4303 = vpack.c.bf16 %v4291, %v4290
  %v4304 = vpack.c.bf16 %v4293, %v4292
  %v4305 = vpack.c.bf16 %v4294, %v4294
  %v4306 = vld [vmem:[%s1939] sm:$0xf]
  %v4307 = vld [vmem:[%s1939 + $0x4] sm:$0xf]
  %v4308 = vld [vmem:[%s1939 + $0x8] sm:$0xf]
  %v4309 = vld [vmem:[%s1939 + $0xc] sm:$0xf]
  %v4310 = vld [vmem:[%s1939 + $0x10] sm:$0xf]
  %v4311 = vld [vmem:[%s1939 + $0x14] sm:$0xf]
  %v4312 = vld [vmem:[%s1939 + $0x18] sm:$0xf]
  %v4313 = vld [vmem:[%s1939 + $0x1c] sm:$0xf]
  %v4314 = vld [vmem:[%s1939 + $0x20] sm:$0xf]
  %v4315 = vld [vmem:[%s1939 + $0x24] sm:$0xf]
  %v4316 = vld [vmem:[%s1939 + $0x28] sm:$0xf]
  %v4317 = vld [vmem:[%s1939 + $0x2c] sm:$0xf]
  %v4318 = vld [vmem:[%s1939 + $0x30] sm:$0xf]
  %v4319 = vld [vmem:[%s1939 + $0x34] sm:$0xf]
  %v4320 = vld [vmem:[%s1939 + $0x38] sm:$0xf]
  %v4321 = vld [vmem:[%s1939 + $0x3c] sm:$0xf]
  %v4338 = vunpack.c.l.b16 %v4306
  %v4339 = vunpack.c.l.b16 %v4307
  %v4340 = vunpack.c.l.b16 %v4308
  %v4341 = vunpack.c.l.b16 %v4309
  %v4342 = vunpack.c.l.b16 %v4310
  %v4343 = vunpack.c.l.b16 %v4311
  %v4344 = vunpack.c.l.b16 %v4312
  %v4345 = vunpack.c.l.b16 %v4313
  %v4346 = vunpack.c.l.b16 %v4314
  %v4347 = vunpack.c.l.b16 %v4315
  %v4348 = vunpack.c.l.b16 %v4316
  %v4349 = vunpack.c.l.b16 %v4317
  %v4350 = vunpack.c.l.b16 %v4318
  %v4351 = vunpack.c.l.b16 %v4319
  %v4352 = vunpack.c.l.b16 %v4320
  %v4353 = vunpack.c.l.b16 %v4321
  %v4354 = vpack.c.b16 %v4339, %v4338
  %v4355 = vpack.c.b16 %v4341, %v4340
  %v4356 = vpack.c.b16 %v4343, %v4342
  %v4357 = vpack.c.b16 %v4345, %v4344
  %v4358 = vpack.c.b16 %v4347, %v4346
  %v4359 = vpack.c.b16 %v4349, %v4348
  %v4360 = vpack.c.b16 %v4351, %v4350
  %v4361 = vpack.c.b16 %v4353, %v4352
  %4370 = vmatprep.subr.bf16.mxu0 0
  %4371 = vmatpush1.bf16.msra.mxu0 %v4354
  %4372 = vmatprep.subr.bf16.mxu0 0
  %4373 = vmatpush1.bf16.msra.mxu0 %v4355
  %4374 = vmatprep.subr.bf16.mxu0 0
  %4375 = vmatpush1.bf16.msra.mxu0 %v4356
  %4376 = vmatprep.subr.bf16.mxu0 0
  %4377 = vmatpush1.bf16.msra.mxu0 %v4357
  %4378 = vmatprep.subr.bf16.mxu0 0
  %4379 = vmatpush1.bf16.msra.mxu0 %v4358
  %4380 = vmatprep.subr.bf16.mxu0 0
  %4381 = vmatpush1.bf16.msra.mxu0 %v4359
  %4382 = vmatprep.subr.bf16.mxu0 0
  %4383 = vmatpush1.bf16.msra.mxu0 %v4360
  %4384 = vmatprep.subr.bf16.mxu0 0
  %4385 = vmatpush1.bf16.msra.mxu0 %v4361
  %4386 = vmatprep.subr.bf16.mxu0 0
  %4387 = vmatpush1.bf16.msra.mxu0 0
  %4388 = vmatprep.subr.bf16.mxu0 0
  %4389 = vmatpush1.bf16.msra.mxu0 0
  %4390 = vmatprep.subr.bf16.mxu0 0
  %4391 = vmatpush1.bf16.msra.mxu0 0
  %4392 = vmatprep.subr.bf16.mxu0 0
  %4393 = vmatpush1.bf16.msra.mxu0 0
  %4394 = vmatprep.subr.bf16.mxu0 0
  %4395 = vmatpush1.bf16.msra.mxu0 0
  %4396 = vmatprep.subr.bf16.mxu0 0
  %4397 = vmatpush1.bf16.msra.mxu0 0
  %4398 = vmatprep.subr.bf16.mxu0 0
  %4399 = vmatpush1.bf16.msra.mxu0 0
  %4400 = vmatprep.subr.bf16.mxu0 0
  %4401 = vmatpush1.bf16.msra.mxu0 0
  %4402 = vmatprep.mubr.bf16.mxu0 0
  %4403 = vmatmul.mubr.bf16.gmra.mrb[0].mxu0 %v4295
  %v4404 = vpop.f32.mrb[0].mxu0
  %v4405 = vadd.f32 0.0, %v4404
  %v4406 = vpop.f32.mrb[0].mxu0
  %v4407 = vpop.f32.mrb[0].mxu0
  %v4408 = vadd.f32 0.0, %v4407
  %v4409 = vpop.f32.mrb[0].mxu0
  %4410 = vmatprep.mubr.bf16.mxu0 0
  %4411 = vmatmul.mubr.bf16.gmra.mrb[0].mxu0 %v4296
  %v4412 = vpop.f32.mrb[0].mxu0
  %v4413 = vadd.f32 0.0, %v4412
  %v4414 = vpop.f32.mrb[0].mxu0
  %v4415 = vpop.f32.mrb[0].mxu0
  %v4416 = vadd.f32 0.0, %v4415
  %v4417 = vpop.f32.mrb[0].mxu0
  %4418 = vmatprep.mubr.bf16.mxu0 0
  %4419 = vmatmul.mubr.bf16.gmra.mrb[0].mxu0 %v4297
  %v4420 = vpop.f32.mrb[0].mxu0
  %v4421 = vadd.f32 0.0, %v4420
  %v4422 = vpop.f32.mrb[0].mxu0
  %v4423 = vpop.f32.mrb[0].mxu0
  %v4424 = vadd.f32 0.0, %v4423
  %v4425 = vpop.f32.mrb[0].mxu0
  %4426 = vmatprep.mubr.bf16.mxu0 0
  %4427 = vmatmul.mubr.bf16.gmra.mrb[0].mxu0 %v4298
  %v4428 = vpop.f32.mrb[0].mxu0
  %v4429 = vadd.f32 0.0, %v4428
  %v4430 = vpop.f32.mrb[0].mxu0
  %v4431 = vpop.f32.mrb[0].mxu0
  %v4432 = vadd.f32 0.0, %v4431
  %v4433 = vpop.f32.mrb[0].mxu0
  %4434 = vmatprep.mubr.bf16.mxu0 0
  %4435 = vmatmul.mubr.bf16.gmra.mrb[0].mxu0 %v4299
  %v4436 = vpop.f32.mrb[0].mxu0
  %v4437 = vadd.f32 0.0, %v4436
  %v4438 = vpop.f32.mrb[0].mxu0
  %v4439 = vpop.f32.mrb[0].mxu0
  %v4440 = vadd.f32 0.0, %v4439
  %v4441 = vpop.f32.mrb[0].mxu0
  %4442 = vmatprep.mubr.bf16.mxu0 0
  %4443 = vmatmul.mubr.bf16.gmra.mrb[0].mxu0 %v4300
  %v4444 = vpop.f32.mrb[0].mxu0
  %v4445 = vadd.f32 0.0, %v4444
  %v4446 = vpop.f32.mrb[0].mxu0
  %v4447 = vpop.f32.mrb[0].mxu0
  %v4448 = vadd.f32 0.0, %v4447
  %v4449 = vpop.f32.mrb[0].mxu0
  %4450 = vmatprep.mubr.bf16.mxu0 0
  %4451 = vmatmul.mubr.bf16.gmra.mrb[0].mxu0 %v4301
  %v4452 = vpop.f32.mrb[0].mxu0
  %v4453 = vadd.f32 0.0, %v4452
  %v4454 = vpop.f32.mrb[0].mxu0
  %v4455 = vpop.f32.mrb[0].mxu0
  %v4456 = vadd.f32 0.0, %v4455
  %v4457 = vpop.f32.mrb[0].mxu0
  %4458 = vmatprep.mubr.bf16.mxu0 0
  %4459 = vmatmul.mubr.bf16.gmra.mrb[0].mxu0 %v4302
  %v4460 = vpop.f32.mrb[0].mxu0
  %v4461 = vadd.f32 0.0, %v4460
  %v4462 = vpop.f32.mrb[0].mxu0
  %v4463 = vpop.f32.mrb[0].mxu0
  %v4464 = vadd.f32 0.0, %v4463
  %v4465 = vpop.f32.mrb[0].mxu0
  %4466 = vmatprep.mubr.bf16.mxu0 0
  %4467 = vmatmul.mubr.bf16.gmra.mrb[0].mxu0 %v4303
  %v4468 = vpop.f32.mrb[0].mxu0
  %v4469 = vadd.f32 0.0, %v4468
  %v4470 = vpop.f32.mrb[0].mxu0
  %v4471 = vpop.f32.mrb[0].mxu0
  %v4472 = vadd.f32 0.0, %v4471
  %v4473 = vpop.f32.mrb[0].mxu0
  %4474 = vmatprep.mubr.bf16.mxu0 0
  %4475 = vmatmul.mubr.bf16.gmra.mrb[0].mxu0 %v4304
  %v4476 = vpop.f32.mrb[0].mxu0
  %v4477 = vadd.f32 0.0, %v4476
  %v4478 = vpop.f32.mrb[0].mxu0
  %v4479 = vpop.f32.mrb[0].mxu0
  %v4480 = vadd.f32 0.0, %v4479
  %v4481 = vpop.f32.mrb[0].mxu0
  %4482 = vmatprep.mubr.bf16.mxu0 0
  %4483 = vmatmul.mubr.bf16.gmra.mrb[0].mxu0 %v4305
  %v4484 = vpop.f32.mrb[0].mxu0
  %v4485 = vadd.f32 0.0, %v4484
  %v4486 = vpop.f32.mrb[0].mxu0
  %v4487 = vpop.f32.mrb[0].mxu0
  %v4488 = vpop.f32.mrb[0].mxu0
  %4489 = vdwg.mxu0
  %v4490 = vadd.f32 %v4253, %v4405
  %v4491 = vadd.f32 %v4254, %v4408
  %v4492 = vadd.f32 %v4255, %v4413
  %v4493 = vadd.f32 %v4256, %v4416
  %v4494 = vadd.f32 %v4257, %v4421
  %v4495 = vadd.f32 %v4258, %v4424
  %v4496 = vadd.f32 %v4259, %v4429
  %v4497 = vadd.f32 %v4260, %v4432
  %v4498 = vadd.f32 %v4261, %v4437
  %v4499 = vadd.f32 %v4262, %v4440
  %v4500 = vadd.f32 %v4263, %v4445
  %v4501 = vadd.f32 %v4264, %v4448
  %v4502 = vadd.f32 %v4265, %v4453
  %v4503 = vadd.f32 %v4266, %v4456
  %v4504 = vadd.f32 %v4267, %v4461
  %v4505 = vadd.f32 %v4268, %v4464
  %v4506 = vadd.f32 %v4269, %v4469
  %v4507 = vadd.f32 %v4270, %v4472
  %v4508 = vadd.f32 %v4271, %v4477
  %v4509 = vadd.f32 %v4272, %v4480
  %v4510 = vadd.f32 %v4273, %v4485
  %v4511 = vadd.f32 %v4490, %v2149
  %v4512 = vadd.f32 %v4491, %v2149
  %v4513 = vadd.f32 %v4492, %v2149
  %v4514 = vadd.f32 %v4493, %v2149
  %v4515 = vadd.f32 %v4494, %v2149
  %v4516 = vadd.f32 %v4495, %v2149
  %v4517 = vadd.f32 %v4496, %v2149
  %v4518 = vadd.f32 %v4497, %v2149
  %v4519 = vadd.f32 %v4498, %v2149
  %v4520 = vadd.f32 %v4499, %v2149
  %v4521 = vadd.f32 %v4500, %v2149
  %v4522 = vadd.f32 %v4501, %v2149
  %v4523 = vadd.f32 %v4502, %v2149
  %v4524 = vadd.f32 %v4503, %v2149
  %v4525 = vadd.f32 %v4504, %v2149
  %v4526 = vadd.f32 %v4505, %v2149
  %v4527 = vadd.f32 %v4506, %v2149
  %v4528 = vadd.f32 %v4507, %v2149
  %v4529 = vadd.f32 %v4508, %v2149
  %v4530 = vadd.f32 %v4509, %v2149
  %v4531 = vadd.f32 %v4510, %v2149
  %v4532 = vsub.f32 %v4511, %v2175
  %v4533 = vsub.f32 %v4512, %v2175
  %v4534 = vsub.f32 %v4513, %v2175
  %v4535 = vsub.f32 %v4514, %v2175
  %v4536 = vsub.f32 %v4515, %v2175
  %v4537 = vsub.f32 %v4516, %v2175
  %v4538 = vsub.f32 %v4517, %v2175
  %v4539 = vsub.f32 %v4518, %v2175
  %v4540 = vsub.f32 %v4519, %v2175
  %v4541 = vsub.f32 %v4520, %v2175
  %v4542 = vsub.f32 %v4521, %v2175
  %v4543 = vsub.f32 %v4522, %v2175
  %v4544 = vsub.f32 %v4523, %v2175
  %v4545 = vsub.f32 %v4524, %v2175
  %v4546 = vsub.f32 %v4525, %v2175
  %v4547 = vsub.f32 %v4526, %v2175
  %v4548 = vsub.f32 %v4527, %v2175
  %v4549 = vsub.f32 %v4528, %v2175
  %v4550 = vsub.f32 %v4529, %v2175
  %v4551 = vsub.f32 %v4530, %v2175
  %v4552 = vsub.f32 %v4531, %v2175
  %v4553 = vmul.f32 %v4532, %v2200
  %v4554 = vmul.f32 %v4533, %v2205
  %v4555 = vmul.f32 %v4534, %v2210
  %v4556 = vmul.f32 %v4535, %v2215
  %v4557 = vmul.f32 %v4536, %v2220
  %v4558 = vmul.f32 %v4537, %v2225
  %v4559 = vmul.f32 %v4538, %v2230
  %v4560 = vmul.f32 %v4539, %v2235
  %v4561 = vmul.f32 %v4540, %v2240
  %v4562 = vmul.f32 %v4541, %v2245
  %v4563 = vmul.f32 %v4542, %v2250
  %v4564 = vmul.f32 %v4543, %v2255
  %v4565 = vmul.f32 %v4544, %v2260
  %v4566 = vmul.f32 %v4545, %v2265
  %v4567 = vmul.f32 %v4546, %v2270
  %v4568 = vmul.f32 %v4547, %v2275
  %v4569 = vmul.f32 %v4548, %v2280
  %v4570 = vmul.f32 %v4549, %v2285
  %v4571 = vmul.f32 %v4550, %v2290
  %v4572 = vmul.f32 %v4551, %v2295
  %v4573 = vmul.f32 %v4552, %v2300
  %v4574 = vadd.f32 %v4553, %v4554
  %v4575 = vadd.f32 %v4574, %v4555
  %v4576 = vadd.f32 %v4575, %v4556
  %v4577 = vadd.f32 %v4576, %v4557
  %v4578 = vadd.f32 %v4577, %v4558
  %v4579 = vadd.f32 %v4578, %v4559
  %v4580 = vadd.f32 %v4579, %v4560
  %v4581 = vadd.f32 %v4580, %v4561
  %v4582 = vadd.f32 %v4581, %v4562
  %v4583 = vadd.f32 %v4582, %v4563
  %v4584 = vadd.f32 %v4583, %v4564
  %v4585 = vadd.f32 %v4584, %v4565
  %v4586 = vadd.f32 %v4585, %v4566
  %v4587 = vadd.f32 %v4586, %v4567
  %v4588 = vadd.f32 %v4587, %v4568
  %v4589 = vadd.f32 %v4588, %v4569
  %v4590 = vadd.f32 %v4589, %v4570
  %v4591 = vadd.f32 %v4590, %v4571
  %v4592 = vadd.f32 %v4591, %v4572
  %v4593 = vadd.f32 %v4592, %v4573
  %v4594 = vrot.slane %v4593, 4
  %v4595 = vadd.f32 %v4593, %v4594
  %v4596 = vrot.slane %v4595, 2
  %v4597 = vadd.f32 %v4595, %v4596
  %v4598 = vrot.slane %v4597, 1
  %v4599 = vadd.f32 %v4597, %v4598
  %v4600 = vadd.f32 %v2349, %v4599
  %v4601 = vmul.f32 %v4553, %v4553
  %v4602 = vmul.f32 %v4554, %v4554
  %v4603 = vmul.f32 %v4555, %v4555
  %v4604 = vmul.f32 %v4556, %v4556
  %v4605 = vmul.f32 %v4557, %v4557
  %v4606 = vmul.f32 %v4558, %v4558
  %v4607 = vmul.f32 %v4559, %v4559
  %v4608 = vmul.f32 %v4560, %v4560
  %v4609 = vmul.f32 %v4561, %v4561
  %v4610 = vmul.f32 %v4562, %v4562
  %v4611 = vmul.f32 %v4563, %v4563
  %v4612 = vmul.f32 %v4564, %v4564
  %v4613 = vmul.f32 %v4565, %v4565
  %v4614 = vmul.f32 %v4566, %v4566
  %v4615 = vmul.f32 %v4567, %v4567
  %v4616 = vmul.f32 %v4568, %v4568
  %v4617 = vmul.f32 %v4569, %v4569
  %v4618 = vmul.f32 %v4570, %v4570
  %v4619 = vmul.f32 %v4571, %v4571
  %v4620 = vmul.f32 %v4572, %v4572
  %v4621 = vmul.f32 %v4573, %v4573
  %v4622 = vadd.f32 %v4601, %v4602
  %v4623 = vadd.f32 %v4622, %v4603
  %v4624 = vadd.f32 %v4623, %v4604
  %v4625 = vadd.f32 %v4624, %v4605
  %v4626 = vadd.f32 %v4625, %v4606
  %v4627 = vadd.f32 %v4626, %v4607
  %v4628 = vadd.f32 %v4627, %v4608
  %v4629 = vadd.f32 %v4628, %v4609
  %v4630 = vadd.f32 %v4629, %v4610
  %v4631 = vadd.f32 %v4630, %v4611
  %v4632 = vadd.f32 %v4631, %v4612
  %v4633 = vadd.f32 %v4632, %v4613
  %v4634 = vadd.f32 %v4633, %v4614
  %v4635 = vadd.f32 %v4634, %v4615
  %v4636 = vadd.f32 %v4635, %v4616
  %v4637 = vadd.f32 %v4636, %v4617
  %v4638 = vadd.f32 %v4637, %v4618
  %v4639 = vadd.f32 %v4638, %v4619
  %v4640 = vadd.f32 %v4639, %v4620
  %v4641 = vadd.f32 %v4640, %v4621
  %v4642 = vrot.slane %v4641, 4
  %v4643 = vadd.f32 %v4641, %v4642
  %v4644 = vrot.slane %v4643, 2
  %v4645 = vadd.f32 %v4643, %v4644
  %v4646 = vrot.slane %v4645, 1
  %v4647 = vadd.f32 %v4645, %v4646
  %v4648 = vadd.f32 %v2397, %v4647
  %s4649 = scalar_lea.vmem %s6, 168
  %4650 = vst [vmem:[%s4649] sm:$0xff] %v4511
  %4651 = vst [vmem:[%s4649 + $0x8] sm:$0xff] %v4512
  %4652 = vst [vmem:[%s4649 + $0x10] sm:$0xff] %v4513
  %4653 = vst [vmem:[%s4649 + $0x18] sm:$0xff] %v4514
  %4654 = vst [vmem:[%s4649 + $0x20] sm:$0xff] %v4515
  %4655 = vst [vmem:[%s4649 + $0x28] sm:$0xff] %v4516
  %4656 = vst [vmem:[%s4649 + $0x30] sm:$0xff] %v4517
  %4657 = vst [vmem:[%s4649 + $0x38] sm:$0xff] %v4518
  %4658 = vst [vmem:[%s4649 + $0x40] sm:$0xff] %v4519
  %4659 = vst [vmem:[%s4649 + $0x48] sm:$0xff] %v4520
  %4660 = vst [vmem:[%s4649 + $0x50] sm:$0xff] %v4521
  %4661 = vst [vmem:[%s4649 + $0x58] sm:$0xff] %v4522
  %4662 = vst [vmem:[%s4649 + $0x60] sm:$0xff] %v4523
  %4663 = vst [vmem:[%s4649 + $0x68] sm:$0xff] %v4524
  %4664 = vst [vmem:[%s4649 + $0x70] sm:$0xff] %v4525
  %4665 = vst [vmem:[%s4649 + $0x78] sm:$0xff] %v4526
  %4666 = vst [vmem:[%s4649 + $0x80] sm:$0xff] %v4527
  %4667 = vst [vmem:[%s4649 + $0x88] sm:$0xff] %v4528
  %4668 = vst [vmem:[%s4649 + $0x90] sm:$0xff] %v4529
  %4669 = vst [vmem:[%s4649 + $0x98] sm:$0xff] %v4530
  %4670 = vst [vmem:[%s4649 + $0xa0] sm:$0xff] %v4531
  %v4671 = vmul.f32 %v4600, 0.0034722222
  %v4672 = vmul.f32 %v4648, 0.0034722222
  %v4673 = vmul.f32 %v4671, %v4671
  %v4674 = vsub.f32 %v4672, %v4673
  %v4675 = vmax.f32 %v4674, 0.0
  %v4676 = vadd.f32 %v2151, %v4671
  %v4677 = vadd.f32 %v4675, 1e-05
  %v4678 = vrsqrt.pop %v4677
  %v4679 = vld [vmem:[%s3] sm:$0x1]
  %v4680 = vmul.f32 %v4678, %v4679
  %v4681 = vld [vmem:[%s4] sm:$0x1]
  %v4682 = vmul.f32 %v4676, %v4680
  %v4683 = vsub.f32 %v4681, %v4682
  %v4684 = vld [vmem:[%s6] sm:$0xff]
  %v4685 = vld [vmem:[%s6 + $0x8] sm:$0xff]
  %v4686 = vld [vmem:[%s6 + $0x10] sm:$0xff]
  %v4687 = vld [vmem:[%s6 + $0x18] sm:$0xff]
  %v4688 = vld [vmem:[%s6 + $0x20] sm:$0xff]
  %v4689 = vld [vmem:[%s6 + $0x28] sm:$0xff]
  %v4690 = vld [vmem:[%s6 + $0x30] sm:$0xff]
  %v4691 = vld [vmem:[%s6 + $0x38] sm:$0xff]
  %v4692 = vld [vmem:[%s6 + $0x40] sm:$0xff]
  %v4693 = vld [vmem:[%s6 + $0x48] sm:$0xff]
  %v4694 = vld [vmem:[%s6 + $0x50] sm:$0xff]
  %v4695 = vld [vmem:[%s6 + $0x58] sm:$0xff]
  %v4696 = vld [vmem:[%s6 + $0x60] sm:$0xff]
  %v4697 = vld [vmem:[%s6 + $0x68] sm:$0xff]
  %v4698 = vld [vmem:[%s6 + $0x70] sm:$0xff]
  %v4699 = vld [vmem:[%s6 + $0x78] sm:$0xff]
  %v4700 = vld [vmem:[%s6 + $0x80] sm:$0xff]
  %v4701 = vld [vmem:[%s6 + $0x88] sm:$0xff]
  %v4702 = vld [vmem:[%s6 + $0x90] sm:$0xff]
  %v4703 = vld [vmem:[%s6 + $0x98] sm:$0xff]
  %v4704 = vld [vmem:[%s6 + $0xa0] sm:$0xff]
  %v4705 = vlaneseq
  %v4706 = vshrl.u32 %v4705, 7
  %v4707 = vsub.s32 0, %v4706
  %v4708 = vrot.slane %v4680, %v4707
  %v4709 = vmul.f32 %v4684, %v4708
  %v4710 = vmul.f32 %v4685, %v4708
  %v4711 = vmul.f32 %v4686, %v4708
  %v4712 = vmul.f32 %v4687, %v4708
  %v4713 = vmul.f32 %v4688, %v4708
  %v4714 = vmul.f32 %v4689, %v4708
  %v4715 = vmul.f32 %v4690, %v4708
  %v4716 = vmul.f32 %v4691, %v4708
  %v4717 = vmul.f32 %v4692, %v4708
  %v4718 = vmul.f32 %v4693, %v4708
  %v4719 = vmul.f32 %v4694, %v4708
  %v4720 = vmul.f32 %v4695, %v4708
  %v4721 = vmul.f32 %v4696, %v4708
  %v4722 = vmul.f32 %v4697, %v4708
  %v4723 = vmul.f32 %v4698, %v4708
  %v4724 = vmul.f32 %v4699, %v4708
  %v4725 = vmul.f32 %v4700, %v4708
  %v4726 = vmul.f32 %v4701, %v4708
  %v4727 = vmul.f32 %v4702, %v4708
  %v4728 = vmul.f32 %v4703, %v4708
  %v4729 = vmul.f32 %v4704, %v4708
  %v4731 = vlaneseq
  %v4732 = vshrl.u32 %v4731, 7
  %v4733 = vsub.s32 0, %v4732
  %v4734 = vrot.slane %v4683, %v4733
  %v4736 = vadd.f32 %v4709, %v4734
  %v4737 = vadd.f32 %v4710, %v4734
  %v4738 = vadd.f32 %v4711, %v4734
  %v4739 = vadd.f32 %v4712, %v4734
  %v4740 = vadd.f32 %v4713, %v4734
  %v4741 = vadd.f32 %v4714, %v4734
  %v4742 = vadd.f32 %v4715, %v4734
  %v4743 = vadd.f32 %v4716, %v4734
  %v4744 = vadd.f32 %v4717, %v4734
  %v4745 = vadd.f32 %v4718, %v4734
  %v4746 = vadd.f32 %v4719, %v4734
  %v4747 = vadd.f32 %v4720, %v4734
  %v4748 = vadd.f32 %v4721, %v4734
  %v4749 = vadd.f32 %v4722, %v4734
  %v4750 = vadd.f32 %v4723, %v4734
  %v4751 = vadd.f32 %v4724, %v4734
  %v4752 = vadd.f32 %v4725, %v4734
  %v4753 = vadd.f32 %v4726, %v4734
  %v4754 = vadd.f32 %v4727, %v4734
  %v4755 = vadd.f32 %v4728, %v4734
  %v4756 = vadd.f32 %v4729, %v4734
  %v4757 = vmax.f32 %v4736, 0.0
  %v4758 = vmax.f32 %v4737, 0.0
  %v4759 = vmax.f32 %v4738, 0.0
  %v4760 = vmax.f32 %v4739, 0.0
  %v4761 = vmax.f32 %v4740, 0.0
  %v4762 = vmax.f32 %v4741, 0.0
  %v4763 = vmax.f32 %v4742, 0.0
  %v4764 = vmax.f32 %v4743, 0.0
  %v4765 = vmax.f32 %v4744, 0.0
  %v4766 = vmax.f32 %v4745, 0.0
  %v4767 = vmax.f32 %v4746, 0.0
  %v4768 = vmax.f32 %v4747, 0.0
  %v4769 = vmax.f32 %v4748, 0.0
  %v4770 = vmax.f32 %v4749, 0.0
  %v4771 = vmax.f32 %v4750, 0.0
  %v4772 = vmax.f32 %v4751, 0.0
  %v4773 = vmax.f32 %v4752, 0.0
  %v4774 = vmax.f32 %v4753, 0.0
  %v4775 = vmax.f32 %v4754, 0.0
  %v4776 = vmax.f32 %v4755, 0.0
  %v4777 = vmax.f32 %v4756, 0.0
  %4778 = vst [vmem:[%s6] sm:$0xff] %v4757
  %4779 = vst [vmem:[%s6 + $0x8] sm:$0xff] %v4758
  %4780 = vst [vmem:[%s6 + $0x10] sm:$0xff] %v4759
  %4781 = vst [vmem:[%s6 + $0x18] sm:$0xff] %v4760
  %4782 = vst [vmem:[%s6 + $0x20] sm:$0xff] %v4761
  %4783 = vst [vmem:[%s6 + $0x28] sm:$0xff] %v4762
  %4784 = vst [vmem:[%s6 + $0x30] sm:$0xff] %v4763
  %4785 = vst [vmem:[%s6 + $0x38] sm:$0xff] %v4764
  %4786 = vst [vmem:[%s6 + $0x40] sm:$0xff] %v4765
  %4787 = vst [vmem:[%s6 + $0x48] sm:$0xff] %v4766
  %4788 = vst [vmem:[%s6 + $0x50] sm:$0xff] %v4767
  %4789 = vst [vmem:[%s6 + $0x58] sm:$0xff] %v4768
  %4790 = vst [vmem:[%s6 + $0x60] sm:$0xff] %v4769
  %4791 = vst [vmem:[%s6 + $0x68] sm:$0xff] %v4770
  %4792 = vst [vmem:[%s6 + $0x70] sm:$0xff] %v4771
  %4793 = vst [vmem:[%s6 + $0x78] sm:$0xff] %v4772
  %4794 = vst [vmem:[%s6 + $0x80] sm:$0xff] %v4773
  %4795 = vst [vmem:[%s6 + $0x88] sm:$0xff] %v4774
  %4796 = vst [vmem:[%s6 + $0x90] sm:$0xff] %v4775
  %4797 = vst [vmem:[%s6 + $0x98] sm:$0xff] %v4776
  %4798 = vst [vmem:[%s6 + $0xa0] sm:$0xff] %v4777
  %v4799 = vld [vmem:[%s4649] sm:$0xff]
  %v4800 = vld [vmem:[%s4649 + $0x8] sm:$0xff]
  %v4801 = vld [vmem:[%s4649 + $0x10] sm:$0xff]
  %v4802 = vld [vmem:[%s4649 + $0x18] sm:$0xff]
  %v4803 = vld [vmem:[%s4649 + $0x20] sm:$0xff]
  %v4804 = vld [vmem:[%s4649 + $0x28] sm:$0xff]
  %v4805 = vld [vmem:[%s4649 + $0x30] sm:$0xff]
  %v4806 = vld [vmem:[%s4649 + $0x38] sm:$0xff]
  %v4807 = vld [vmem:[%s4649 + $0x40] sm:$0xff]
  %v4808 = vld [vmem:[%s4649 + $0x48] sm:$0xff]
  %v4809 = vld [vmem:[%s4649 + $0x50] sm:$0xff]
  %v4810 = vld [vmem:[%s4649 + $0x58] sm:$0xff]
  %v4811 = vld [vmem:[%s4649 + $0x60] sm:$0xff]
  %v4812 = vld [vmem:[%s4649 + $0x68] sm:$0xff]
  %v4813 = vld [vmem:[%s4649 + $0x70] sm:$0xff]
  %v4814 = vld [vmem:[%s4649 + $0x78] sm:$0xff]
  %v4815 = vld [vmem:[%s4649 + $0x80] sm:$0xff]
  %v4816 = vld [vmem:[%s4649 + $0x88] sm:$0xff]
  %v4817 = vld [vmem:[%s4649 + $0x90] sm:$0xff]
  %v4818 = vld [vmem:[%s4649 + $0x98] sm:$0xff]
  %v4819 = vld [vmem:[%s4649 + $0xa0] sm:$0xff]
  %v4820 = vmul.f32 %v4799, %v4708
  %v4821 = vmul.f32 %v4800, %v4708
  %v4822 = vmul.f32 %v4801, %v4708
  %v4823 = vmul.f32 %v4802, %v4708
  %v4824 = vmul.f32 %v4803, %v4708
  %v4825 = vmul.f32 %v4804, %v4708
  %v4826 = vmul.f32 %v4805, %v4708
  %v4827 = vmul.f32 %v4806, %v4708
  %v4828 = vmul.f32 %v4807, %v4708
  %v4829 = vmul.f32 %v4808, %v4708
  %v4830 = vmul.f32 %v4809, %v4708
  %v4831 = vmul.f32 %v4810, %v4708
  %v4832 = vmul.f32 %v4811, %v4708
  %v4833 = vmul.f32 %v4812, %v4708
  %v4834 = vmul.f32 %v4813, %v4708
  %v4835 = vmul.f32 %v4814, %v4708
  %v4836 = vmul.f32 %v4815, %v4708
  %v4837 = vmul.f32 %v4816, %v4708
  %v4838 = vmul.f32 %v4817, %v4708
  %v4839 = vmul.f32 %v4818, %v4708
  %v4840 = vmul.f32 %v4819, %v4708
  %v4841 = vadd.f32 %v4820, %v4734
  %v4842 = vadd.f32 %v4821, %v4734
  %v4843 = vadd.f32 %v4822, %v4734
  %v4844 = vadd.f32 %v4823, %v4734
  %v4845 = vadd.f32 %v4824, %v4734
  %v4846 = vadd.f32 %v4825, %v4734
  %v4847 = vadd.f32 %v4826, %v4734
  %v4848 = vadd.f32 %v4827, %v4734
  %v4849 = vadd.f32 %v4828, %v4734
  %v4850 = vadd.f32 %v4829, %v4734
  %v4851 = vadd.f32 %v4830, %v4734
  %v4852 = vadd.f32 %v4831, %v4734
  %v4853 = vadd.f32 %v4832, %v4734
  %v4854 = vadd.f32 %v4833, %v4734
  %v4855 = vadd.f32 %v4834, %v4734
  %v4856 = vadd.f32 %v4835, %v4734
  %v4857 = vadd.f32 %v4836, %v4734
  %v4858 = vadd.f32 %v4837, %v4734
  %v4859 = vadd.f32 %v4838, %v4734
  %v4860 = vadd.f32 %v4839, %v4734
  %v4861 = vadd.f32 %v4840, %v4734
  %v4862 = vmax.f32 %v4841, 0.0
  %v4863 = vmax.f32 %v4842, 0.0
  %v4864 = vmax.f32 %v4843, 0.0
  %v4865 = vmax.f32 %v4844, 0.0
  %v4866 = vmax.f32 %v4845, 0.0
  %v4867 = vmax.f32 %v4846, 0.0
  %v4868 = vmax.f32 %v4847, 0.0
  %v4869 = vmax.f32 %v4848, 0.0
  %v4870 = vmax.f32 %v4849, 0.0
  %v4871 = vmax.f32 %v4850, 0.0
  %v4872 = vmax.f32 %v4851, 0.0
  %v4873 = vmax.f32 %v4852, 0.0
  %v4874 = vmax.f32 %v4853, 0.0
  %v4875 = vmax.f32 %v4854, 0.0
  %v4876 = vmax.f32 %v4855, 0.0
  %v4877 = vmax.f32 %v4856, 0.0
  %v4878 = vmax.f32 %v4857, 0.0
  %v4879 = vmax.f32 %v4858, 0.0
  %v4880 = vmax.f32 %v4859, 0.0
  %v4881 = vmax.f32 %v4860, 0.0
  %v4882 = vmax.f32 %v4861, 0.0
  %4883 = vst [vmem:[%s4649] sm:$0xff] %v4862
  %4884 = vst [vmem:[%s4649 + $0x8] sm:$0xff] %v4863
  %4885 = vst [vmem:[%s4649 + $0x10] sm:$0xff] %v4864
  %4886 = vst [vmem:[%s4649 + $0x18] sm:$0xff] %v4865
  %4887 = vst [vmem:[%s4649 + $0x20] sm:$0xff] %v4866
  %4888 = vst [vmem:[%s4649 + $0x28] sm:$0xff] %v4867
  %4889 = vst [vmem:[%s4649 + $0x30] sm:$0xff] %v4868
  %4890 = vst [vmem:[%s4649 + $0x38] sm:$0xff] %v4869
  %4891 = vst [vmem:[%s4649 + $0x40] sm:$0xff] %v4870
  %4892 = vst [vmem:[%s4649 + $0x48] sm:$0xff] %v4871
  %4893 = vst [vmem:[%s4649 + $0x50] sm:$0xff] %v4872
  %4894 = vst [vmem:[%s4649 + $0x58] sm:$0xff] %v4873
  %4895 = vst [vmem:[%s4649 + $0x60] sm:$0xff] %v4874
  %4896 = vst [vmem:[%s4649 + $0x68] sm:$0xff] %v4875
  %4897 = vst [vmem:[%s4649 + $0x70] sm:$0xff] %v4876
  %4898 = vst [vmem:[%s4649 + $0x78] sm:$0xff] %v4877
  %4899 = vst [vmem:[%s4649 + $0x80] sm:$0xff] %v4878
  %4900 = vst [vmem:[%s4649 + $0x88] sm:$0xff] %v4879
  %4901 = vst [vmem:[%s4649 + $0x90] sm:$0xff] %v4880
  %4902 = vst [vmem:[%s4649 + $0x98] sm:$0xff] %v4881
  %4903 = vst [vmem:[%s4649 + $0xa0] sm:$0xff] %v4882
  // Predicated region
  $region26: #{decoder_block_forward.4} parent=0 // pred_check
    _
  $region27: #{decoder_block_forward.4} parent=0 // pred_check_branch
    %4905 = sbr.rel (0) target = $region29
  $region28: #{decoder_block_forward.4} parent=0 // pred_region
    _
  $region29: #{decoder_block_forward.4} parent=0 // pred_fallthru
    _
  // Predicated region
  $region30: #{decoder_block_forward.4} parent=0 // pred_check
    _
  $region31: #{decoder_block_forward.4} parent=0 // pred_check_branch
    %4907 = sbr.rel (0) target = $region33
  $region32: #{decoder_block_forward.4} parent=0 // pred_region
    _
  $region33: #{decoder_block_forward.4} parent=0 // pred_fallthru
    _

</llo_original>
